<compile_context>
chip_gen: v6e
topology: v6e:2x2x1
jax: 0.10.0
libtpu: 0.0.40
codegen_flags: <defaults>
</compile_context>

<pallas_src>
import functools
from typing import NamedTuple, Tuple

import jax
import jax.numpy as jnp
from jax.experimental import pallas as pl
from jax.experimental.pallas import tpu as pltpu


# ----------------------------------------------------------------------------
# Small helpers
# ----------------------------------------------------------------------------

def _round_up(x, m):
    return (x + m - 1) // m * m


def _row_tiling(m, max_tm=512):
    """Pad row count to a sublane-friendly multiple and pick a row tile."""
    mp = _round_up(m, 8)
    if mp <= max_tm:
        return mp, mp
    return _round_up(m, max_tm), max_tm


def _detect_vmem_limit():
    # 3/4 of physical VMEM (96 MiB on v5e/v6e, 48 MiB on v7x); conservative
    # fallback if the query is unavailable on this jax version.
    try:
        cap = int(pltpu.get_tpu_info().vmem_capacity_bytes)
        return max(32 * 1024 * 1024, min(100 * 1024 * 1024, (cap * 3) // 4))
    except Exception:
        return 48 * 1024 * 1024


_VMEM_LIMIT = _detect_vmem_limit()


def _compiler_params(*dims):
    return pltpu.CompilerParams(dimension_semantics=dims,
                                vmem_limit_bytes=_VMEM_LIMIT)


def _gelu(x):
    # tanh-approximate GELU: the cubic is cheap VPU work and the tanh goes to
    # the EUP slot.  (Exact-erf nn.GELU differs by <~1e-3.)
    c = 0.7978845608028654  # sqrt(2/pi)
    return 0.5 * x * (1.0 + jnp.tanh(c * (x + 0.044715 * x * x * x)))


# ----------------------------------------------------------------------------
# Static model configuration (kept OUT of the traced params pytree)
# ----------------------------------------------------------------------------

class LayerConfig(NamedTuple):
    heads: int
    dim_key: int
    dim_value: int
    reduction_factor: int
    has_peg: bool


class StageConfig(NamedTuple):
    layers: Tuple[LayerConfig, ...]
    is_last: bool


# ----------------------------------------------------------------------------
# Generic tiled matmul (+ bias) kernel
# ----------------------------------------------------------------------------

def _matmul_bias_kernel(x_ref, w_ref, b_ref, o_ref, acc_ref):
    @pl.when(pl.program_id(2) == 0)
    def _():
        acc_ref[...] = jnp.zeros_like(acc_ref)

    acc_ref[...] += jnp.dot(x_ref[...], w_ref[...],
                            preferred_element_type=jnp.float32)

    @pl.when(pl.program_id(2) == pl.num_programs(2) - 1)
    def _():
        o_ref[...] = (acc_ref[...] + b_ref[...]).astype(o_ref.dtype)


def matmul_bias(x, w, b=None, out_dtype=jnp.bfloat16):
    """(M, K) @ (K, N) + b with a tiled, pipelined MXU kernel.

    Operands are cast to bf16 in the wrapper (so DMA'd tiles are already half
    width) and zero-padded to tile-friendly shapes; accumulation stays f32.
    """
    M, K = x.shape
    N = w.shape[1]
    Mp, tm = _row_tiling(M)
    Np = _round_up(N, 128)
    tn = 256 if (Np % 256 == 0 and Np >= 256) else 128
    Kp = _round_up(K, 128)
    if Kp <= 2048:
        tk = Kp
    else:
        tk = 512
        Kp = _round_up(Kp, tk)

    xp = x.astype(jnp.bfloat16)
    if Mp != M or Kp != K:
        xp = jnp.pad(xp, ((0, Mp - M), (0, Kp - K)))
    wp = w.astype(jnp.bfloat16)
    if Kp != K or Np != N:
        wp = jnp.pad(wp, ((0, Kp - K), (0, Np - N)))
    bv = jnp.zeros((N,), jnp.float32) if b is None else b.astype(jnp.float32)
    bp = jnp.pad(bv, (0, Np - N)).reshape(1, Np)

    out_isz = jnp.dtype(out_dtype).itemsize
    out = pl.pallas_call(
        _matmul_bias_kernel,
        out_shape=jax.ShapeDtypeStruct((Mp, Np), out_dtype),
        grid=(Mp // tm, Np // tn, Kp // tk),
        in_specs=[pl.BlockSpec((tm, tk), lambda i, j, k: (i, k)),
                  pl.BlockSpec((tk, tn), lambda i, j, k: (k, j)),
                  pl.BlockSpec((1, tn), lambda i, j, k: (0, j))],
        out_specs=pl.BlockSpec((tm, tn), lambda i, j, k: (i, j)),
        scratch_shapes=[pltpu.VMEM((tm, tn), jnp.float32)],
        compiler_params=_compiler_params("parallel", "parallel", "arbitrary"),
        cost_estimate=pl.CostEstimate(
            flops=2 * Mp * Np * Kp, transcendentals=0,
            bytes_accessed=Mp * Kp * 2 + Kp * Np * 2 + Mp * Np * out_isz),
    )(xp, wp, bp)
    if Mp != M or Np != N:
        out = out[:M, :N]
    return out


# ----------------------------------------------------------------------------
# LayerNorm over rows (channel-last)
# ----------------------------------------------------------------------------

def _layernorm_kernel(x_ref, g_ref, b_ref, o_ref, *, eps):
    # Per-row layer norm over the channel axis (torch var(unbiased=False)).
    x = x_ref[...].astype(jnp.float32)
    mean = jnp.mean(x, axis=-1, keepdims=True)
    var = jnp.mean(x * x, axis=-1, keepdims=True) - mean * mean
    o_ref[...] = ((x - mean) * jax.lax.rsqrt(var + eps) * g_ref[...]
                  + b_ref[...]).astype(o_ref.dtype)


def layernorm_rows(x, g, b, eps=1e-5):
    M, C = x.shape
    Mp, tm = _row_tiling(M)
    xp = x if Mp == M else jnp.pad(x, ((0, Mp - M), (0, 0)))
    out = pl.pallas_call(
        functools.partial(_layernorm_kernel, eps=eps),
        out_shape=jax.ShapeDtypeStruct((Mp, C), x.dtype),
        grid=(Mp // tm,),
        in_specs=[pl.BlockSpec((tm, C), lambda i: (i, 0)),
                  pl.BlockSpec((1, C), lambda i: (0, 0)),
                  pl.BlockSpec((1, C), lambda i: (0, 0))],
        out_specs=pl.BlockSpec((tm, C), lambda i: (i, 0)),
        compiler_params=_compiler_params("parallel"),
    )(xp, g.reshape(1, C).astype(jnp.float32), b.reshape(1, C).astype(jnp.float32))
    return out[:M] if Mp != M else out


def chan_layernorm(x, g, b, eps=1e-5):
    B, H, W, C = x.shape
    y = layernorm_rows(x.reshape(B * H * W, C), g, b, eps)
    return y.reshape(B, H, W, C)


# ----------------------------------------------------------------------------
# Fused scalable self-attention (q/k/v proj + attention + out proj + residual)
# ----------------------------------------------------------------------------

def _ssa_kernel(xn_ref, kv_ref, xr_ref, wq_ref, wk_ref, wv_ref, wo_ref, bo_ref,
                o_ref, acc_ref, *, scale):
    h = pl.program_id(2)

    @pl.when(h == 0)
    def _():
        acc_ref[...] = bo_ref[...] + xr_ref[0].astype(jnp.float32)

    xn = xn_ref[0]                                     # (tq, C)   bf16 (normed)
    kvn = kv_ref[0]                                    # (Nk, rrC) bf16 (normed)
    q = jnp.dot(xn, wq_ref[0], preferred_element_type=jnp.float32)   # (tq, dk)
    k = jnp.dot(kvn, wk_ref[0], preferred_element_type=jnp.float32)  # (Nk, dk)
    v = jnp.dot(kvn, wv_ref[0], preferred_element_type=jnp.float32)  # (Nk, dv)

    s = jax.lax.dot_general(q.astype(jnp.bfloat16), k.astype(jnp.bfloat16),
                            (((1,), (1,)), ((), ())),
                            preferred_element_type=jnp.float32) * scale
    s = s - jnp.max(s, axis=-1, keepdims=True)
    p = jnp.exp(s)
    p = p * pl.reciprocal(jnp.sum(p, axis=-1, keepdims=True), approx=True)

    oh = jnp.dot(p.astype(jnp.bfloat16), v.astype(jnp.bfloat16),
                 preferred_element_type=jnp.float32)               # (tq, dv)
    acc_ref[...] += jnp.dot(oh.astype(jnp.bfloat16), wo_ref[0],
                            preferred_element_type=jnp.float32)    # (tq, C)

    @pl.when(h == pl.num_programs(2) - 1)
    def _():
        o_ref[0] = acc_ref[...].astype(o_ref.dtype)


def _space_to_depth(x, r):
    """Exact input rearrangement for Conv2d(kernel=r, stride=r, pad=0):
    non-overlapping r x r patches to channels (no data expansion)."""
    B, H, W, C = x.shape
    Hr, Wr = H // r, W // r
    if r == 1:
        return x.reshape(B, H * W, C), Hr, Wr
    x = x[:, :Hr * r, :Wr * r, :]
    x = x.reshape(B, Hr, r, Wr, r, C).transpose(0, 1, 3, 2, 4, 5)
    return x.reshape(B, Hr * Wr, r * r * C), Hr, Wr


def scalable_self_attention(x_raw, x_norm, p, cfg: LayerConfig):
    """Computes SSA(x_norm) + x_raw in one fused kernel per (batch, q-tile, head)."""
    B, H, W, C = x_raw.shape
    heads, dk, dv, r = cfg.heads, cfg.dim_key, cfg.dim_value, cfg.reduction_factor
    N = H * W
    scale = dk ** -0.5

    kv_in, Hr, Wr = _space_to_depth(x_norm, r)                  # (B, Nk, r*r*C)
    Nk = Hr * Wr
    rrC = r * r * C

    xq = x_norm.reshape(B, N, C)
    xres = x_raw.reshape(B, N, C)
    if N > 512:
        tq = 512
        Np = _round_up(N, tq)
    else:
        tq = _round_up(N, 8)
        Np = tq
    if Np != N:
        xq = jnp.pad(xq, ((0, 0), (0, Np - N), (0, 0)))
        xres = jnp.pad(xres, ((0, 0), (0, Np - N), (0, 0)))

    # Head-major 3-D weights so each head is a full-dim block (no in-kernel
    # lane slicing, no JAX-side head-split transposes of the activations).
    wq3 = p['to_q_w'].reshape(C, heads, dk).transpose(1, 0, 2).astype(jnp.bfloat16)
    wk3 = p['to_k_w'].reshape(rrC, heads, dk).transpose(1, 0, 2).astype(jnp.bfloat16)
    wv3 = p['to_v_w'].reshape(rrC, heads, dv).transpose(1, 0, 2).astype(jnp.bfloat16)
    wo3 = p['to_out_w'].reshape(heads, dv, C).astype(jnp.bfloat16)
    bo = p['to_out_b'].reshape(1, C).astype(jnp.float32)

    out = pl.pallas_call(
        functools.partial(_ssa_kernel, scale=scale),
        out_shape=jax.ShapeDtypeStruct((B, Np, C), x_raw.dtype),
        grid=(B, Np // tq, heads),
        in_specs=[pl.BlockSpec((1, tq, C), lambda b, t, h: (b, t, 0)),
                  pl.BlockSpec((1, Nk, rrC), lambda b, t, h: (b, 0, 0)),
                  pl.BlockSpec((1, tq, C), lambda b, t, h: (b, t, 0)),
                  pl.BlockSpec((1, C, dk), lambda b, t, h: (h, 0, 0)),
                  pl.BlockSpec((1, rrC, dk), lambda b, t, h: (h, 0, 0)),
                  pl.BlockSpec((1, rrC, dv), lambda b, t, h: (h, 0, 0)),
                  pl.BlockSpec((1, dv, C), lambda b, t, h: (h, 0, 0)),
                  pl.BlockSpec((1, C), lambda b, t, h: (0, 0))],
        out_specs=pl.BlockSpec((1, tq, C), lambda b, t, h: (b, t, 0)),
        scratch_shapes=[pltpu.VMEM((tq, C), jnp.float32)],
        compiler_params=_compiler_params("parallel", "parallel", "arbitrary"),
        cost_estimate=pl.CostEstimate(
            flops=2 * B * heads * (Np * C * dk + Nk * rrC * (dk + dv)
                                   + Np * Nk * (dk + dv) + Np * dv * C),
            transcendentals=B * heads * Np * Nk,
            bytes_accessed=2 * B * (3 * Np * C + Nk * rrC)),
    )(xq, kv_in, xres, wq3, wk3, wv3, wo3, bo)
    if Np != N:
        out = out[:, :N]
    return out.reshape(B, H, W, C)


# ----------------------------------------------------------------------------
# Fused pre-norm feed-forward (ChanLayerNorm -> Linear -> GELU -> Linear -> +x)
# ----------------------------------------------------------------------------

def _ffn_kernel(x_ref, g_ref, b_ref, w1_ref, b1_ref, w2_ref, b2_ref, o_ref, *, eps):
    x = x_ref[...].astype(jnp.float32)
    mean = jnp.mean(x, axis=-1, keepdims=True)
    var = jnp.mean(x * x, axis=-1, keepdims=True) - mean * mean
    y = (x - mean) * jax.lax.rsqrt(var + eps) * g_ref[...] + b_ref[...]
    h = jnp.dot(y.astype(jnp.bfloat16), w1_ref[...],
                preferred_element_type=jnp.float32) + b1_ref[...]
    h = _gelu(h)
    out = jnp.dot(h.astype(jnp.bfloat16), w2_ref[...],
                  preferred_element_type=jnp.float32) + b2_ref[...]
    o_ref[...] = (out + x).astype(o_ref.dtype)


def prenorm_feed_forward(x, ln_g, ln_b, p, eps=1e-5):
    """Computes FeedForward(ChanLayerNorm(x)) + x in one fused kernel."""
    B, H, W, C = x.shape
    M = B * H * W
    inner = p['w1'].shape[1]

    if 2 * C * inner * 2 > 16 * 1024 * 1024:
        # TODO(synk): tile the fused FFN over inner-dim chunks instead of this
        # unfused fallback for very wide models (keeps v7x 64 MiB VMEM happy).
        y = chan_layernorm(x, ln_g, ln_b, eps).reshape(M, C)
        h = matmul_bias(y, p['w1'], p['b1'])
        h = jax.nn.gelu(h.astype(jnp.float32), approximate=True).astype(jnp.bfloat16)
        out = matmul_bias(h, p['w2'], p['b2']).reshape(B, H, W, C)
        return (out.astype(jnp.float32) + x.astype(jnp.float32)).astype(x.dtype)

    Mp, tm = _row_tiling(M)
    xf = x.reshape(M, C)
    xp = xf if Mp == M else jnp.pad(xf, ((0, Mp - M), (0, 0)))
    out = pl.pallas_call(
        functools.partial(_ffn_kernel, eps=eps),
        out_shape=jax.ShapeDtypeStruct((Mp, C), x.dtype),
        grid=(Mp // tm,),
        in_specs=[pl.BlockSpec((tm, C), lambda i: (i, 0)),
                  pl.BlockSpec((1, C), lambda i: (0, 0)),
                  pl.BlockSpec((1, C), lambda i: (0, 0)),
                  pl.BlockSpec((C, inner), lambda i: (0, 0)),
                  pl.BlockSpec((1, inner), lambda i: (0, 0)),
                  pl.BlockSpec((inner, C), lambda i: (0, 0)),
                  pl.BlockSpec((1, C), lambda i: (0, 0))],
        out_specs=pl.BlockSpec((tm, C), lambda i: (i, 0)),
        compiler_params=_compiler_params("parallel"),
        cost_estimate=pl.CostEstimate(
            flops=4 * Mp * C * inner, transcendentals=Mp * inner,
            bytes_accessed=2 * Mp * C * 2 + 2 * C * inner * 2),
    )(xp,
      ln_g.reshape(1, C).astype(jnp.float32),
      ln_b.reshape(1, C).astype(jnp.float32),
      p['w1'].astype(jnp.bfloat16),
      p['b1'].reshape(1, inner).astype(jnp.float32),
      p['w2'].astype(jnp.bfloat16),
      p['b2'].reshape(1, C).astype(jnp.float32))
    if Mp != M:
        out = out[:M]
    return out.reshape(B, H, W, C)


# ----------------------------------------------------------------------------
# PEG: 3x3 depthwise conv + bias + residual (fused VPU kernel)
# ----------------------------------------------------------------------------

def _peg_kernel(xp_ref, x_ref, w_ref, b_ref, o_ref):
    H, W = o_ref.shape[1], o_ref.shape[2]
    acc = x_ref[0].astype(jnp.float32) + b_ref[0]
    for t in range(9):
        dh, dw = divmod(t, 3)
        acc = acc + xp_ref[0, dh:dh + H, dw:dw + W, :].astype(jnp.float32) * w_ref[t]
    o_ref[0] = acc.astype(o_ref.dtype)


def peg(x, w, b):
    B, H, W, C = x.shape
    xpad = jnp.pad(x, ((0, 0), (1, 1), (1, 1), (0, 0)))
    return pl.pallas_call(
        _peg_kernel,
        out_shape=jax.ShapeDtypeStruct((B, H, W, C), x.dtype),
        grid=(B,),
        in_specs=[pl.BlockSpec((1, H + 2, W + 2, C), lambda i: (i, 0, 0, 0)),
                  pl.BlockSpec((1, H, W, C), lambda i: (i, 0, 0, 0)),
                  pl.BlockSpec((9, C), lambda i: (0, 0)),
                  pl.BlockSpec((1, C), lambda i: (0, 0))],
        out_specs=pl.BlockSpec((1, H, W, C), lambda i: (i, 0, 0, 0)),
        compiler_params=_compiler_params("parallel"),
    )(xpad, x, w.astype(jnp.float32), b.reshape(1, C).astype(jnp.float32))


# ----------------------------------------------------------------------------
# Convolution helpers (reshape / pad glue in plain JAX, matmuls in Pallas)
# ----------------------------------------------------------------------------

def im2col(x, kh, kw, stride, pad):
    """x: (B, H, W, C) -> (B, Ho, Wo, kh*kw, C) patches, tap order kh-major."""
    B, H, W, C = x.shape
    xp = jnp.pad(x, ((0, 0), (pad, pad), (pad, pad), (0, 0)))
    Ho = (H + 2 * pad - kh) // stride + 1
    Wo = (W + 2 * pad - kw) // stride + 1
    cols = []
    for i in range(kh):
        for j in range(kw):
            cols.append(xp[:, i:i + stride * Ho:stride,
                           j:j + stride * Wo:stride, :])
    patches = jnp.stack(cols, axis=3)
    return patches, Ho, Wo


def conv2d_im2col(x, w, b, stride, pad):
    """Dense conv via im2col + tiled Pallas matmul. w: (kh, kw, Cin, Cout)."""
    # TODO(synk): patch-embed / downsample still build a small (2-3x) bf16
    # im2col expansion in plain JAX before the tiled matmul; a fused
    # direct-conv kernel would remove that remaining HBM traffic.
    kh, kw, cin, cout = w.shape
    B = x.shape[0]
    patches, Ho, Wo = im2col(x, kh, kw, stride, pad)
    cols = patches.reshape(B * Ho * Wo, kh * kw * cin)
    out = matmul_bias(cols, w.reshape(kh * kw * cin, cout), b)
    return out.reshape(B, Ho, Wo, cout)


# ----------------------------------------------------------------------------
# Model
# ----------------------------------------------------------------------------

def transformer(x, sp, cfg: StageConfig):
    for lp, lc in zip(sp['layers'], cfg.layers):
        y = chan_layernorm(x, lp['ssa_norm_g'], lp['ssa_norm_b'])
        x = scalable_self_attention(x, y, lp['ssa'], lc)        # + residual inside
        x = prenorm_feed_forward(x, lp['ff_norm_g'], lp['ff_norm_b'], lp['ff'])
        if lc.has_peg:
            x = peg(x, lp['peg']['w'], lp['peg']['b'])
    if not cfg.is_last:
        x = chan_layernorm(x, sp['out_norm_g'], sp['out_norm_b'])
    return x


def scalable_vit_forward(params, img_nchw, config):
    # img_nchw: (B, C, H, W) to match the PyTorch interface.
    x = jnp.transpose(img_nchw, (0, 2, 3, 1)).astype(jnp.bfloat16)   # -> NHWC bf16
    x = conv2d_im2col(x, params['patch_w'], params['patch_b'], stride=4, pad=3)
    for sp, cfg in zip(params['stages'], config):
        x = transformer(x, sp, cfg)
        if not cfg.is_last:
            x = conv2d_im2col(x, sp['down_w'], sp['down_b'], stride=2, pad=1)
    # mlp head: Reduce('b d h w -> b d', 'mean') -> LayerNorm -> Linear
    pooled = jnp.mean(x.astype(jnp.float32), axis=(1, 2))            # (B, C)
    pooled = layernorm_rows(pooled, params['head_ln_g'], params['head_ln_b'])
    return matmul_bias(pooled, params['head_w'], params['head_b'],
                       out_dtype=jnp.float32)


# TODO(synk): Dropout layers (p=0.0) are identity at inference and are omitted.


# ----------------------------------------------------------------------------
# Deterministic synthetic parameters + static config (matches module shapes)
# ----------------------------------------------------------------------------

def init_model(key, *, num_classes=10, dim=8, depth=(1, 1), heads=2,
               reduction_factor=2, ssa_dim_key=4, ssa_dim_value=4,
               ff_expansion_factor=2, channels=3):
    keys = iter(jax.random.split(key, 256))
    bf16 = jnp.bfloat16

    def nrm(shape, scale=0.05, dtype=jnp.float32):
        return (scale * jax.random.normal(next(keys), shape)).astype(dtype)

    params = {
        'patch_w': nrm((7, 7, channels, dim), dtype=bf16),  # Conv2d(ch, dim, 7, s4, p3)
        'patch_b': nrm((dim,)),
    }
    num_stages = len(depth)
    dims = tuple(2 ** i * dim for i in range(num_stages))
    stages_p, stages_c = [], []
    for ind, (d, dep) in enumerate(zip(dims, depth)):
        is_last = ind == num_stages - 1
        inner = d * ff_expansion_factor
        layers_p, layers_c = [], []
        for li in range(dep):
            is_first = li == 0
            layers_p.append({
                'ssa_norm_g': jnp.ones((d,), jnp.float32),
                'ssa_norm_b': jnp.zeros((d,), jnp.float32),
                'ssa': {
                    'to_q_w': nrm((d, heads * ssa_dim_key), dtype=bf16),
                    'to_k_w': nrm((reduction_factor, reduction_factor, d,
                                   heads * ssa_dim_key), dtype=bf16),
                    'to_v_w': nrm((reduction_factor, reduction_factor, d,
                                   heads * ssa_dim_value), dtype=bf16),
                    'to_out_w': nrm((heads * ssa_dim_value, d), dtype=bf16),
                    'to_out_b': nrm((d,)),
                },
                'ff_norm_g': jnp.ones((d,), jnp.float32),
                'ff_norm_b': jnp.zeros((d,), jnp.float32),
                'ff': {
                    'w1': nrm((d, inner), dtype=bf16), 'b1': nrm((inner,)),
                    'w2': nrm((inner, d), dtype=bf16), 'b2': nrm((d,)),
                },
                'peg': ({'w': nrm((9, d)), 'b': nrm((d,))} if is_first else None),
            })
            layers_c.append(LayerConfig(heads, ssa_dim_key, ssa_dim_value,
                                        reduction_factor, is_first))
        sp = {'layers': layers_p}
        if not is_last:
            sp['out_norm_g'] = jnp.ones((d,), jnp.float32)
            sp['out_norm_b'] = jnp.zeros((d,), jnp.float32)
            sp['down_w'] = nrm((3, 3, d, d * 2), dtype=bf16)
            sp['down_b'] = nrm((d * 2,))
        stages_p.append(sp)
        stages_c.append(StageConfig(tuple(layers_c), is_last))
    params['stages'] = stages_p
    params['head_ln_g'] = jnp.ones((dims[-1],), jnp.float32)
    params['head_ln_b'] = jnp.zeros((dims[-1],), jnp.float32)
    params['head_w'] = nrm((dims[-1], num_classes), dtype=bf16)
    params['head_b'] = nrm((num_classes,))
    return params, tuple(stages_c)


if __name__ == "__main__":
    key = jax.random.PRNGKey(0)
    pkey, xkey = jax.random.split(key)
    params, config = init_model(pkey)
    img = jax.random.normal(xkey, (2, 3, 32, 32), dtype=jnp.float32)  # NCHW input

    forward = jax.jit(functools.partial(scalable_vit_forward, config=config))
    logits = forward(params, img)
    jax.block_until_ready(logits)
    assert logits.shape == (2, 10), logits.shape
    assert bool(jnp.all(jnp.isfinite(logits)))
    print("KERNEL_OK")
</pallas_src>

<mosaic_0001>
module attributes {stable_mosaic.version = 11 : i64} {
  func.func @_matmul_bias_kernel(%arg0: i32, %arg1: i32, %arg2: i32, %arg3: memref<128x256xbf16, #tpu.memory_space<vmem>>, %arg4: memref<256x128xbf16, #tpu.memory_space<vmem>>, %arg5: memref<1x128xf32, #tpu.memory_space<vmem>>, %arg6: memref<128x128xbf16, #tpu.memory_space<vmem>>, %arg7: memref<128x128xf32, #tpu.memory_space<vmem>>) attributes {dimension_semantics = [#tpu.dimension_semantics<parallel>, #tpu.dimension_semantics<parallel>, #tpu.dimension_semantics<arbitrary>], iteration_bounds = array<i64: 1, 1, 1>, scalar_prefetch = 0 : i64, scratch_operands = 1 : i64, tpu.core_type = #tpu.core_type<tc>, window_params = [{transform_indices = @transform_0, window_bounds = array<i64: 128, 256>}, {transform_indices = @transform_1, window_bounds = array<i64: 256, 128>}, {transform_indices = @transform_2, window_bounds = array<i64: 1, 128>}, {transform_indices = @transform_3, window_bounds = array<i64: 128, 128>}]} {
    %c0_i32 = arith.constant 0 : i32
    %0 = arith.cmpi eq, %arg2, %c0_i32 : i32
    %1 = arith.extui %0 : i1 to i32
    %c0_i32_0 = arith.constant 0 : i32
    %2 = arith.cmpi ne, %1, %c0_i32_0 : i32
    scf.if %2 {
      %cst_10 = arith.constant 0.000000e+00 : f32
      %12 = vector.broadcast %cst_10 : f32 to vector<128x128xf32>
      %c0_11 = arith.constant 0 : index
      %c0_12 = arith.constant 0 : index
      %13 = vector.load %arg7[%c0_11, %c0_12] : memref<128x128xf32, #tpu.memory_space<vmem>>, vector<128x128xf32>
      tpu.vector_store %arg7[%c0_11, %c0_12], %12 {strides = array<i32>} : memref<128x128xf32, #tpu.memory_space<vmem>>, vector<128x128xf32>,
    } else {
    }
    %c0 = arith.constant 0 : index
    %c0_1 = arith.constant 0 : index
    %3 = vector.load %arg7[%c0, %c0_1] : memref<128x128xf32, #tpu.memory_space<vmem>>, vector<128x128xf32>
    %c0_2 = arith.constant 0 : index
    %c0_3 = arith.constant 0 : index
    %4 = vector.load %arg3[%c0_2, %c0_3] : memref<128x256xbf16, #tpu.memory_space<vmem>>, vector<128x256xbf16>
    %c0_4 = arith.constant 0 : index
    %c0_5 = arith.constant 0 : index
    %5 = vector.load %arg4[%c0_4, %c0_5] : memref<256x128xbf16, #tpu.memory_space<vmem>>, vector<256x128xbf16>
    %cst = arith.constant dense<0.000000e+00> : vector<128x128xf32>
    %6 = tpu.matmul %4, %5, %cst {dimension_numbers = #tpu.dot_dimension_numbers<[1], [0], [0], [1], [0, 0, 1, 1], [], []>} : vector<128x256xbf16>, vector<256x128xbf16>, vector<128x128xf32> -> vector<128x128xf32>
    %7 = arith.addf %3, %6 : vector<128x128xf32>
    %c0_6 = arith.constant 0 : index
    %c0_7 = arith.constant 0 : index
    %8 = vector.load %arg7[%c0_6, %c0_7] : memref<128x128xf32, #tpu.memory_space<vmem>>, vector<128x128xf32>
    tpu.vector_store %arg7[%c0_6, %c0_7], %7 {strides = array<i32>} : memref<128x128xf32, #tpu.memory_space<vmem>>, vector<128x128xf32>,
    %c0_i32_8 = arith.constant 0 : i32
    %9 = arith.cmpi eq, %arg2, %c0_i32_8 : i32
    %10 = arith.extui %9 : i1 to i32
    %c0_i32_9 = arith.constant 0 : i32
    %11 = arith.cmpi ne, %10, %c0_i32_9 : i32
    scf.if %11 {
      %c0_10 = arith.constant 0 : index
      %c0_11 = arith.constant 0 : index
      %12 = vector.load %arg7[%c0_10, %c0_11] : memref<128x128xf32, #tpu.memory_space<vmem>>, vector<128x128xf32>
      %c0_12 = arith.constant 0 : index
      %c0_13 = arith.constant 0 : index
      %13 = vector.load %arg5[%c0_12, %c0_13] : memref<1x128xf32, #tpu.memory_space<vmem>>, vector<1x128xf32>
      %14 = vector.broadcast %13 : vector<1x128xf32> to vector<128x128xf32>
      %15 = arith.addf %12, %14 : vector<128x128xf32>
      %16 = arith.truncf %15 : vector<128x128xf32> to vector<128x128xbf16>
      %c0_14 = arith.constant 0 : index
      %c0_15 = arith.constant 0 : index
      %17 = vector.load %arg6[%c0_14, %c0_15] : memref<128x128xbf16, #tpu.memory_space<vmem>>, vector<128x128xbf16>
      tpu.vector_store %arg6[%c0_14, %c0_15], %16 {strides = array<i32>} : memref<128x128xbf16, #tpu.memory_space<vmem>>, vector<128x128xbf16>,
    } else {
    }
    return
  }
  func.func @transform_0(%arg0: i32, %arg1: i32, %arg2: i32) -> (i32, i32) {
    %c0_i32 = arith.constant 0 : i32
    return %arg0, %arg2 : i32, i32
  }
  func.func @transform_1(%arg0: i32, %arg1: i32, %arg2: i32) -> (i32, i32) {
    %c0_i32 = arith.constant 0 : i32
    return %arg2, %arg1 : i32, i32
  }
  func.func @transform_2(%arg0: i32, %arg1: i32, %arg2: i32) -> (i32, i32) {
    %c0_i32 = arith.constant 0 : i32
    %c0_i32_0 = arith.constant 0 : i32
    return %c0_i32, %arg1 : i32, i32
  }
  func.func @transform_3(%arg0: i32, %arg1: i32, %arg2: i32) -> (i32, i32) {
    %c0_i32 = arith.constant 0 : i32
    return %arg0, %arg1 : i32, i32
  }
}

module attributes {stable_mosaic.version = 11 : i64} {
  func.func @_layernorm_kernel(%arg0: i32, %arg1: memref<128x8xbf16, #tpu.memory_space<vmem>>, %arg2: memref<1x8xf32, #tpu.memory_space<vmem>>, %arg3: memref<1x8xf32, #tpu.memory_space<vmem>>, %arg4: memref<128x8xbf16, #tpu.memory_space<vmem>>) attributes {dimension_semantics = [#tpu.dimension_semantics<parallel>], iteration_bounds = array<i64: 1>, scalar_prefetch = 0 : i64, scratch_operands = 0 : i64, tpu.core_type = #tpu.core_type<tc>, window_params = [{transform_indices = @transform_0, window_bounds = array<i64: 128, 8>}, {pipeline_mode = #tpu.pipeline_mode<synchronous>, transform_indices = @transform_1, window_bounds = array<i64: 1, 8>}, {pipeline_mode = #tpu.pipeline_mode<synchronous>, transform_indices = @transform_2, window_bounds = array<i64: 1, 8>}, {transform_indices = @transform_3, window_bounds = array<i64: 128, 8>}]} {
    %c0 = arith.constant 0 : index
    %c0_0 = arith.constant 0 : index
    %0 = vector.load %arg1[%c0, %c0_0] : memref<128x8xbf16, #tpu.memory_space<vmem>>, vector<128x8xbf16>
    %1 = arith.extf %0 : vector<128x8xbf16> to vector<128x8xf32>
    %cst = arith.constant dense<0.000000e+00> : vector<128xf32>
    %2 = vector.multi_reduction <add>, %1, %cst [1] : vector<128x8xf32> to vector<128xf32>
    %3 = vector.shape_cast %2 : vector<128xf32> to vector<128x1xf32>
    %cst_1 = arith.constant 8.000000e+00 : f32
    %4 = vector.broadcast %cst_1 : f32 to vector<128x1xf32>
    %5 = arith.divf %3, %4 : vector<128x1xf32>
    %6 = arith.mulf %1, %1 : vector<128x8xf32>
    %cst_2 = arith.constant dense<0.000000e+00> : vector<128xf32>
    %7 = vector.multi_reduction <add>, %6, %cst_2 [1] : vector<128x8xf32> to vector<128xf32>
    %8 = vector.shape_cast %7 : vector<128xf32> to vector<128x1xf32>
    %cst_3 = arith.constant 8.000000e+00 : f32
    %9 = vector.broadcast %cst_3 : f32 to vector<128x1xf32>
    %10 = arith.divf %8, %9 : vector<128x1xf32>
    %11 = arith.mulf %5, %5 : vector<128x1xf32>
    %12 = arith.subf %10, %11 : vector<128x1xf32>
    %13 = vector.broadcast %5 : vector<128x1xf32> to vector<128x8xf32>
    %14 = arith.subf %1, %13 : vector<128x8xf32>
    %cst_4 = arith.constant 9.99999974E-6 : f32
    %15 = vector.broadcast %cst_4 : f32 to vector<128x1xf32>
    %16 = arith.addf %12, %15 : vector<128x1xf32>
    %17 = math.rsqrt %16 : vector<128x1xf32>
    %18 = vector.broadcast %17 : vector<128x1xf32> to vector<128x8xf32>
    %19 = arith.mulf %14, %18 : vector<128x8xf32>
    %c0_5 = arith.constant 0 : index
    %c0_6 = arith.constant 0 : index
    %20 = vector.load %arg2[%c0_5, %c0_6] : memref<1x8xf32, #tpu.memory_space<vmem>>, vector<1x8xf32>
    %21 = vector.broadcast %20 : vector<1x8xf32> to vector<128x8xf32>
    %22 = arith.mulf %19, %21 : vector<128x8xf32>
    %c0_7 = arith.constant 0 : index
    %c0_8 = arith.constant 0 : index
    %23 = vector.load %arg3[%c0_7, %c0_8] : memref<1x8xf32, #tpu.memory_space<vmem>>, vector<1x8xf32>
    %24 = vector.broadcast %23 : vector<1x8xf32> to vector<128x8xf32>
    %25 = arith.addf %22, %24 : vector<128x8xf32>
    %26 = arith.truncf %25 : vector<128x8xf32> to vector<128x8xbf16>
    %c0_9 = arith.constant 0 : index
    %c0_10 = arith.constant 0 : index
    %27 = vector.load %arg4[%c0_9, %c0_10] : memref<128x8xbf16, #tpu.memory_space<vmem>>, vector<128x8xbf16>
    tpu.vector_store %arg4[%c0_9, %c0_10], %26 {strides = array<i32>} : memref<128x8xbf16, #tpu.memory_space<vmem>>, vector<128x8xbf16>,
    return
  }
  func.func @transform_0(%arg0: i32) -> (i32, i32) {
    %c0_i32 = arith.constant 0 : i32
    %c0_i32_0 = arith.constant 0 : i32
    return %arg0, %c0_i32 : i32, i32
  }
  func.func @transform_1(%arg0: i32) -> (i32, i32) {
    %c0_i32 = arith.constant 0 : i32
    %c0_i32_0 = arith.constant 0 : i32
    %c0_i32_1 = arith.constant 0 : i32
    return %c0_i32, %c0_i32_0 : i32, i32
  }
  func.func @transform_2(%arg0: i32) -> (i32, i32) {
    %c0_i32 = arith.constant 0 : i32
    %c0_i32_0 = arith.constant 0 : i32
    %c0_i32_1 = arith.constant 0 : i32
    return %c0_i32, %c0_i32_0 : i32, i32
  }
  func.func @transform_3(%arg0: i32) -> (i32, i32) {
    %c0_i32 = arith.constant 0 : i32
    %c0_i32_0 = arith.constant 0 : i32
    return %arg0, %c0_i32 : i32, i32
  }
}

module attributes {stable_mosaic.version = 11 : i64} {
  func.func @_ffn_kernel(%arg0: i32, %arg1: memref<128x8xbf16, #tpu.memory_space<vmem>>, %arg2: memref<1x8xf32, #tpu.memory_space<vmem>>, %arg3: memref<1x8xf32, #tpu.memory_space<vmem>>, %arg4: memref<8x16xbf16, #tpu.memory_space<vmem>>, %arg5: memref<1x16xf32, #tpu.memory_space<vmem>>, %arg6: memref<16x8xbf16, #tpu.memory_space<vmem>>, %arg7: memref<1x8xf32, #tpu.memory_space<vmem>>, %arg8: memref<128x8xbf16, #tpu.memory_space<vmem>>) attributes {dimension_semantics = [#tpu.dimension_semantics<parallel>], iteration_bounds = array<i64: 1>, scalar_prefetch = 0 : i64, scratch_operands = 0 : i64, tpu.core_type = #tpu.core_type<tc>, window_params = [{transform_indices = @transform_0, window_bounds = array<i64: 128, 8>}, {pipeline_mode = #tpu.pipeline_mode<synchronous>, transform_indices = @transform_1, window_bounds = array<i64: 1, 8>}, {pipeline_mode = #tpu.pipeline_mode<synchronous>, transform_indices = @transform_2, window_bounds = array<i64: 1, 8>}, {pipeline_mode = #tpu.pipeline_mode<synchronous>, transform_indices = @transform_3, window_bounds = array<i64: 8, 16>}, {pipeline_mode = #tpu.pipeline_mode<synchronous>, transform_indices = @transform_4, window_bounds = array<i64: 1, 16>}, {pipeline_mode = #tpu.pipeline_mode<synchronous>, transform_indices = @transform_5, window_bounds = array<i64: 16, 8>}, {pipeline_mode = #tpu.pipeline_mode<synchronous>, transform_indices = @transform_6, window_bounds = array<i64: 1, 8>}, {transform_indices = @transform_7, window_bounds = array<i64: 128, 8>}]} {
    %c0 = arith.constant 0 : index
    %c0_0 = arith.constant 0 : index
    %0 = vector.load %arg1[%c0, %c0_0] : memref<128x8xbf16, #tpu.memory_space<vmem>>, vector<128x8xbf16>
    %1 = arith.extf %0 : vector<128x8xbf16> to vector<128x8xf32>
    %cst = arith.constant dense<0.000000e+00> : vector<128xf32>
    %2 = vector.multi_reduction <add>, %1, %cst [1] : vector<128x8xf32> to vector<128xf32>
    %3 = vector.shape_cast %2 : vector<128xf32> to vector<128x1xf32>
    %cst_1 = arith.constant 8.000000e+00 : f32
    %4 = vector.broadcast %cst_1 : f32 to vector<128x1xf32>
    %5 = arith.divf %3, %4 : vector<128x1xf32>
    %6 = arith.mulf %1, %1 : vector<128x8xf32>
    %cst_2 = arith.constant dense<0.000000e+00> : vector<128xf32>
    %7 = vector.multi_reduction <add>, %6, %cst_2 [1] : vector<128x8xf32> to vector<128xf32>
    %8 = vector.shape_cast %7 : vector<128xf32> to vector<128x1xf32>
    %cst_3 = arith.constant 8.000000e+00 : f32
    %9 = vector.broadcast %cst_3 : f32 to vector<128x1xf32>
    %10 = arith.divf %8, %9 : vector<128x1xf32>
    %11 = arith.mulf %5, %5 : vector<128x1xf32>
    %12 = arith.subf %10, %11 : vector<128x1xf32>
    %13 = vector.broadcast %5 : vector<128x1xf32> to vector<128x8xf32>
    %14 = arith.subf %1, %13 : vector<128x8xf32>
    %cst_4 = arith.constant 9.99999974E-6 : f32
    %15 = vector.broadcast %cst_4 : f32 to vector<128x1xf32>
    %16 = arith.addf %12, %15 : vector<128x1xf32>
    %17 = math.rsqrt %16 : vector<128x1xf32>
    %18 = vector.broadcast %17 : vector<128x1xf32> to vector<128x8xf32>
    %19 = arith.mulf %14, %18 : vector<128x8xf32>
    %c0_5 = arith.constant 0 : index
    %c0_6 = arith.constant 0 : index
    %20 = vector.load %arg2[%c0_5, %c0_6] : memref<1x8xf32, #tpu.memory_space<vmem>>, vector<1x8xf32>
    %21 = vector.broadcast %20 : vector<1x8xf32> to vector<128x8xf32>
    %22 = arith.mulf %19, %21 : vector<128x8xf32>
    %c0_7 = arith.constant 0 : index
    %c0_8 = arith.constant 0 : index
    %23 = vector.load %arg3[%c0_7, %c0_8] : memref<1x8xf32, #tpu.memory_space<vmem>>, vector<1x8xf32>
    %24 = vector.broadcast %23 : vector<1x8xf32> to vector<128x8xf32>
    %25 = arith.addf %22, %24 : vector<128x8xf32>
    %26 = arith.truncf %25 : vector<128x8xf32> to vector<128x8xbf16>
    %c0_9 = arith.constant 0 : index
    %c0_10 = arith.constant 0 : index
    %27 = vector.load %arg4[%c0_9, %c0_10] : memref<8x16xbf16, #tpu.memory_space<vmem>>, vector<8x16xbf16>
    %cst_11 = arith.constant dense<0.000000e+00> : vector<128x16xf32>
    %28 = tpu.matmul %26, %27, %cst_11 {dimension_numbers = #tpu.dot_dimension_numbers<[1], [0], [0], [1], [0, 0, 1, 1], [], []>} : vector<128x8xbf16>, vector<8x16xbf16>, vector<128x16xf32> -> vector<128x16xf32>
    %c0_12 = arith.constant 0 : index
    %c0_13 = arith.constant 0 : index
    %29 = vector.load %arg5[%c0_12, %c0_13] : memref<1x16xf32, #tpu.memory_space<vmem>>, vector<1x16xf32>
    %30 = vector.broadcast %29 : vector<1x16xf32> to vector<128x16xf32>
    %31 = arith.addf %28, %30 : vector<128x16xf32>
    %cst_14 = arith.constant 5.000000e-01 : f32
    %32 = vector.broadcast %cst_14 : f32 to vector<128x16xf32>
    %33 = arith.mulf %32, %31 : vector<128x16xf32>
    %cst_15 = arith.constant 4.471500e-02 : f32
    %34 = vector.broadcast %cst_15 : f32 to vector<128x16xf32>
    %35 = arith.mulf %34, %31 : vector<128x16xf32>
    %36 = arith.mulf %35, %31 : vector<128x16xf32>
    %37 = arith.mulf %36, %31 : vector<128x16xf32>
    %38 = arith.addf %31, %37 : vector<128x16xf32>
    %cst_16 = arith.constant 0.797884583 : f32
    %39 = vector.broadcast %cst_16 : f32 to vector<128x16xf32>
    %40 = arith.mulf %39, %38 : vector<128x16xf32>
    %41 = math.tanh %40 : vector<128x16xf32>
    %cst_17 = arith.constant 1.000000e+00 : f32
    %42 = vector.broadcast %cst_17 : f32 to vector<128x16xf32>
    %43 = arith.addf %42, %41 : vector<128x16xf32>
    %44 = arith.mulf %33, %43 : vector<128x16xf32>
    %45 = arith.truncf %44 : vector<128x16xf32> to vector<128x16xbf16>
    %c0_18 = arith.constant 0 : index
    %c0_19 = arith.constant 0 : index
    %46 = vector.load %arg6[%c0_18, %c0_19] : memref<16x8xbf16, #tpu.memory_space<vmem>>, vector<16x8xbf16>
    %cst_20 = arith.constant dense<0.000000e+00> : vector<128x8xf32>
    %47 = tpu.matmul %45, %46, %cst_20 {dimension_numbers = #tpu.dot_dimension_numbers<[1], [0], [0], [1], [0, 0, 1, 1], [], []>} : vector<128x16xbf16>, vector<16x8xbf16>, vector<128x8xf32> -> vector<128x8xf32>
    %c0_21 = arith.constant 0 : index
    %c0_22 = arith.constant 0 : index
    %48 = vector.load %arg7[%c0_21, %c0_22] : memref<1x8xf32, #tpu.memory_space<vmem>>, vector<1x8xf32>
    %49 = vector.broadcast %48 : vector<1x8xf32> to vector<128x8xf32>
    %50 = arith.addf %47, %49 : vector<128x8xf32>
    %51 = arith.addf %50, %1 : vector<128x8xf32>
    %52 = arith.truncf %51 : vector<128x8xf32> to vector<128x8xbf16>
    %c0_23 = arith.constant 0 : index
    %c0_24 = arith.constant 0 : index
    %53 = vector.load %arg8[%c0_23, %c0_24] : memref<128x8xbf16, #tpu.memory_space<vmem>>, vector<128x8xbf16>
    tpu.vector_store %arg8[%c0_23, %c0_24], %52 {strides = array<i32>} : memref<128x8xbf16, #tpu.memory_space<vmem>>, vector<128x8xbf16>,
    return
  }
  func.func @transform_0(%arg0: i32) -> (i32, i32) {
    %c0_i32 = arith.constant 0 : i32
    %c0_i32_0 = arith.constant 0 : i32
    return %arg0, %c0_i32 : i32, i32
  }
  func.func @transform_1(%arg0: i32) -> (i32, i32) {
    %c0_i32 = arith.constant 0 : i32
    %c0_i32_0 = arith.constant 0 : i32
    %c0_i32_1 = arith.constant 0 : i32
    return %c0_i32, %c0_i32_0 : i32, i32
  }
  func.func @transform_2(%arg0: i32) -> (i32, i32) {
    %c0_i32 = arith.constant 0 : i32
    %c0_i32_0 = arith.constant 0 : i32
    %c0_i32_1 = arith.constant 0 : i32
    return %c0_i32, %c0_i32_0 : i32, i32
  }
  func.func @transform_3(%arg0: i32) -> (i32, i32) {
    %c0_i32 = arith.constant 0 : i32
    %c0_i32_0 = arith.constant 0 : i32
    %c0_i32_1 = arith.constant 0 : i32
    return %c0_i32, %c0_i32_0 : i32, i32
  }
  func.func @transform_4(%arg0: i32) -> (i32, i32) {
    %c0_i32 = arith.constant 0 : i32
    %c0_i32_0 = arith.constant 0 : i32
    %c0_i32_1 = arith.constant 0 : i32
    return %c0_i32, %c0_i32_0 : i32, i32
  }
  func.func @transform_5(%arg0: i32) -> (i32, i32) {
    %c0_i32 = arith.constant 0 : i32
    %c0_i32_0 = arith.constant 0 : i32
    %c0_i32_1 = arith.constant 0 : i32
    return %c0_i32, %c0_i32_0 : i32, i32
  }
  func.func @transform_6(%arg0: i32) -> (i32, i32) {
    %c0_i32 = arith.constant 0 : i32
    %c0_i32_0 = arith.constant 0 : i32
    %c0_i32_1 = arith.constant 0 : i32
    return %c0_i32, %c0_i32_0 : i32, i32
  }
  func.func @transform_7(%arg0: i32) -> (i32, i32) {
    %c0_i32 = arith.constant 0 : i32
    %c0_i32_0 = arith.constant 0 : i32
    return %arg0, %c0_i32 : i32, i32
  }
}

module attributes {stable_mosaic.version = 11 : i64} {
  func.func @_ssa_kernel(%arg0: i32, %arg1: i32, %arg2: i32, %arg3: memref<1x64x8xbf16, #tpu.memory_space<vmem>>, %arg4: memref<1x16x32xbf16, #tpu.memory_space<vmem>>, %arg5: memref<1x64x8xbf16, #tpu.memory_space<vmem>>, %arg6: memref<1x8x4xbf16, #tpu.memory_space<vmem>>, %arg7: memref<1x32x4xbf16, #tpu.memory_space<vmem>>, %arg8: memref<1x32x4xbf16, #tpu.memory_space<vmem>>, %arg9: memref<1x4x8xbf16, #tpu.memory_space<vmem>>, %arg10: memref<1x8xf32, #tpu.memory_space<vmem>>, %arg11: memref<1x64x8xbf16, #tpu.memory_space<vmem>>, %arg12: memref<64x8xf32, #tpu.memory_space<vmem>>) attributes {dimension_semantics = [#tpu.dimension_semantics<parallel>, #tpu.dimension_semantics<parallel>, #tpu.dimension_semantics<arbitrary>], iteration_bounds = array<i64: 2, 1, 2>, scalar_prefetch = 0 : i64, scratch_operands = 1 : i64, tpu.core_type = #tpu.core_type<tc>, window_params = [{transform_indices = @transform_0, window_bounds = array<i64: 1, 64, 8>}, {transform_indices = @transform_1, window_bounds = array<i64: 1, 16, 32>}, {transform_indices = @transform_2, window_bounds = array<i64: 1, 64, 8>}, {transform_indices = @transform_3, window_bounds = array<i64: 1, 8, 4>}, {transform_indices = @transform_4, window_bounds = array<i64: 1, 32, 4>}, {transform_indices = @transform_5, window_bounds = array<i64: 1, 32, 4>}, {transform_indices = @transform_6, window_bounds = array<i64: 1, 4, 8>}, {pipeline_mode = #tpu.pipeline_mode<synchronous>, transform_indices = @transform_7, window_bounds = array<i64: 1, 8>}, {transform_indices = @transform_8, window_bounds = array<i64: 1, 64, 8>}]} {
    %c0_i32 = arith.constant 0 : i32
    %0 = arith.cmpi eq, %arg2, %c0_i32 : i32
    %1 = arith.extui %0 : i1 to i32
    %c0_i32_0 = arith.constant 0 : i32
    %2 = arith.cmpi ne, %1, %c0_i32_0 : i32
    scf.if %2 {
      %c0_31 = arith.constant 0 : index
      %c0_32 = arith.constant 0 : index
      %44 = vector.load %arg10[%c0_31, %c0_32] : memref<1x8xf32, #tpu.memory_space<vmem>>, vector<1x8xf32>
      %c0_33 = arith.constant 0 : index
      %c0_34 = arith.constant 0 : index
      %c0_35 = arith.constant 0 : index
      %45 = vector.load %arg5[%c0_33, %c0_34, %c0_35] : memref<1x64x8xbf16, #tpu.memory_space<vmem>>, vector<1x64x8xbf16>
      %46 = vector.shape_cast %45 : vector<1x64x8xbf16> to vector<64x8xbf16>
      %47 = arith.extf %46 : vector<64x8xbf16> to vector<64x8xf32>
      %48 = vector.broadcast %44 : vector<1x8xf32> to vector<64x8xf32>
      %49 = arith.addf %48, %47 : vector<64x8xf32>
      %c0_36 = arith.constant 0 : index
      %c0_37 = arith.constant 0 : index
      %50 = vector.load %arg12[%c0_36, %c0_37] : memref<64x8xf32, #tpu.memory_space<vmem>>, vector<64x8xf32>
      tpu.vector_store %arg12[%c0_36, %c0_37], %49 {strides = array<i32>} : memref<64x8xf32, #tpu.memory_space<vmem>>, vector<64x8xf32>,
    } else {
    }
    %c0 = arith.constant 0 : index
    %c0_1 = arith.constant 0 : index
    %c0_2 = arith.constant 0 : index
    %3 = vector.load %arg3[%c0, %c0_1, %c0_2] : memref<1x64x8xbf16, #tpu.memory_space<vmem>>, vector<1x64x8xbf16>
    %4 = vector.shape_cast %3 : vector<1x64x8xbf16> to vector<64x8xbf16>
    %c0_3 = arith.constant 0 : index
    %c0_4 = arith.constant 0 : index
    %c0_5 = arith.constant 0 : index
    %5 = vector.load %arg4[%c0_3, %c0_4, %c0_5] : memref<1x16x32xbf16, #tpu.memory_space<vmem>>, vector<1x16x32xbf16>
    %6 = vector.shape_cast %5 : vector<1x16x32xbf16> to vector<16x32xbf16>
    %c0_6 = arith.constant 0 : index
    %c0_7 = arith.constant 0 : index
    %c0_8 = arith.constant 0 : index
    %7 = vector.load %arg6[%c0_6, %c0_7, %c0_8] : memref<1x8x4xbf16, #tpu.memory_space<vmem>>, vector<1x8x4xbf16>
    %8 = vector.shape_cast %7 : vector<1x8x4xbf16> to vector<8x4xbf16>
    %cst = arith.constant dense<0.000000e+00> : vector<64x4xf32>
    %9 = tpu.matmul %4, %8, %cst {dimension_numbers = #tpu.dot_dimension_numbers<[1], [0], [0], [1], [0, 0, 1, 1], [], []>} : vector<64x8xbf16>, vector<8x4xbf16>, vector<64x4xf32> -> vector<64x4xf32>
    %c0_9 = arith.constant 0 : index
    %c0_10 = arith.constant 0 : index
    %c0_11 = arith.constant 0 : index
    %10 = vector.load %arg7[%c0_9, %c0_10, %c0_11] : memref<1x32x4xbf16, #tpu.memory_space<vmem>>, vector<1x32x4xbf16>
    %11 = vector.shape_cast %10 : vector<1x32x4xbf16> to vector<32x4xbf16>
    %cst_12 = arith.constant dense<0.000000e+00> : vector<16x4xf32>
    %12 = tpu.matmul %6, %11, %cst_12 {dimension_numbers = #tpu.dot_dimension_numbers<[1], [0], [0], [1], [0, 0, 1, 1], [], []>} : vector<16x32xbf16>, vector<32x4xbf16>, vector<16x4xf32> -> vector<16x4xf32>
    %c0_13 = arith.constant 0 : index
    %c0_14 = arith.constant 0 : index
    %c0_15 = arith.constant 0 : index
    %13 = vector.load %arg8[%c0_13, %c0_14, %c0_15] : memref<1x32x4xbf16, #tpu.memory_space<vmem>>, vector<1x32x4xbf16>
    %14 = vector.shape_cast %13 : vector<1x32x4xbf16> to vector<32x4xbf16>
    %cst_16 = arith.constant dense<0.000000e+00> : vector<16x4xf32>
    %15 = tpu.matmul %6, %14, %cst_16 {dimension_numbers = #tpu.dot_dimension_numbers<[1], [0], [0], [1], [0, 0, 1, 1], [], []>} : vector<16x32xbf16>, vector<32x4xbf16>, vector<16x4xf32> -> vector<16x4xf32>
    %16 = arith.truncf %9 : vector<64x4xf32> to vector<64x4xbf16>
    %17 = arith.truncf %12 : vector<16x4xf32> to vector<16x4xbf16>
    %cst_17 = arith.constant dense<0.000000e+00> : vector<64x16xf32>
    %18 = tpu.matmul %16, %17, %cst_17 {dimension_numbers = #tpu.dot_dimension_numbers<[1], [1], [0], [0], [0, 0, 1, 0], [], []>} : vector<64x4xbf16>, vector<16x4xbf16>, vector<64x16xf32> -> vector<64x16xf32>
    %cst_18 = arith.constant 5.000000e-01 : f32
    %19 = vector.broadcast %cst_18 : f32 to vector<64x16xf32>
    %20 = arith.mulf %18, %19 : vector<64x16xf32>
    %cst_19 = arith.constant dense<0xFF800000> : vector<64xf32>
    %21 = vector.multi_reduction <maximumf>, %20, %cst_19 [1] : vector<64x16xf32> to vector<64xf32>
    %22 = vector.shape_cast %21 : vector<64xf32> to vector<64x1xf32>
    %23 = vector.broadcast %22 : vector<64x1xf32> to vector<64x16xf32>
    %24 = arith.subf %20, %23 : vector<64x16xf32>
    %25 = math.exp %24 : vector<64x16xf32>
    %cst_20 = arith.constant dense<0.000000e+00> : vector<64xf32>
    %26 = vector.multi_reduction <add>, %25, %cst_20 [1] : vector<64x16xf32> to vector<64xf32>
    %27 = vector.shape_cast %26 : vector<64xf32> to vector<64x1xf32>
    %28 = tpu.reciprocal %27 {approx = true} : vector<64x1xf32> -> vector<64x1xf32>
    %29 = vector.broadcast %28 : vector<64x1xf32> to vector<64x16xf32>
    %30 = arith.mulf %25, %29 : vector<64x16xf32>
    %31 = arith.truncf %30 : vector<64x16xf32> to vector<64x16xbf16>
    %32 = arith.truncf %15 : vector<16x4xf32> to vector<16x4xbf16>
    %cst_21 = arith.constant dense<0.000000e+00> : vector<64x4xf32>
    %33 = tpu.matmul %31, %32, %cst_21 {dimension_numbers = #tpu.dot_dimension_numbers<[1], [0], [0], [1], [0, 0, 1, 1], [], []>} : vector<64x16xbf16>, vector<16x4xbf16>, vector<64x4xf32> -> vector<64x4xf32>
    %c0_22 = arith.constant 0 : index
    %c0_23 = arith.constant 0 : index
    %34 = vector.load %arg12[%c0_22, %c0_23] : memref<64x8xf32, #tpu.memory_space<vmem>>, vector<64x8xf32>
    %35 = arith.truncf %33 : vector<64x4xf32> to vector<64x4xbf16>
    %c0_24 = arith.constant 0 : index
    %c0_25 = arith.constant 0 : index
    %c0_26 = arith.constant 0 : index
    %36 = vector.load %arg9[%c0_24, %c0_25, %c0_26] : memref<1x4x8xbf16, #tpu.memory_space<vmem>>, vector<1x4x8xbf16>
    %37 = vector.shape_cast %36 : vector<1x4x8xbf16> to vector<4x8xbf16>
    %cst_27 = arith.constant dense<0.000000e+00> : vector<64x8xf32>
    %38 = tpu.matmul %35, %37, %cst_27 {dimension_numbers = #tpu.dot_dimension_numbers<[1], [0], [0], [1], [0, 0, 1, 1], [], []>} : vector<64x4xbf16>, vector<4x8xbf16>, vector<64x8xf32> -> vector<64x8xf32>
    %39 = arith.addf %34, %38 : vector<64x8xf32>
    %c0_28 = arith.constant 0 : index
    %c0_29 = arith.constant 0 : index
    %40 = vector.load %arg12[%c0_28, %c0_29] : memref<64x8xf32, #tpu.memory_space<vmem>>, vector<64x8xf32>
    tpu.vector_store %arg12[%c0_28, %c0_29], %39 {strides = array<i32>} : memref<64x8xf32, #tpu.memory_space<vmem>>, vector<64x8xf32>,
    %c1_i32 = arith.constant 1 : i32
    %41 = arith.cmpi eq, %arg2, %c1_i32 : i32
    %42 = arith.extui %41 : i1 to i32
    %c0_i32_30 = arith.constant 0 : i32
    %43 = arith.cmpi ne, %42, %c0_i32_30 : i32
    scf.if %43 {
      %c0_31 = arith.constant 0 : index
      %c0_32 = arith.constant 0 : index
      %44 = vector.load %arg12[%c0_31, %c0_32] : memref<64x8xf32, #tpu.memory_space<vmem>>, vector<64x8xf32>
      %45 = arith.truncf %44 : vector<64x8xf32> to vector<64x8xbf16>
      %c0_33 = arith.constant 0 : index
      %c0_34 = arith.constant 0 : index
      %c0_35 = arith.constant 0 : index
      %46 = vector.load %arg11[%c0_33, %c0_34, %c0_35] : memref<1x64x8xbf16, #tpu.memory_space<vmem>>, vector<1x64x8xbf16>
      %47 = vector.shape_cast %46 : vector<1x64x8xbf16> to vector<64x8xbf16>
      %48 = vector.shape_cast %45 : vector<64x8xbf16> to vector<1x64x8xbf16>
      tpu.vector_store %arg11[%c0_33, %c0_34, %c0_35], %48 {strides = array<i32>} : memref<1x64x8xbf16, #tpu.memory_space<vmem>>, vector<1x64x8xbf16>,
    } else {
    }
    return
  }
  func.func @transform_0(%arg0: i32, %arg1: i32, %arg2: i32) -> (i32, i32, i32) {
    %c0_i32 = arith.constant 0 : i32
    %c0_i32_0 = arith.constant 0 : i32
    return %arg0, %arg1, %c0_i32 : i32, i32, i32
  }
  func.func @transform_1(%arg0: i32, %arg1: i32, %arg2: i32) -> (i32, i32, i32) {
    %c0_i32 = arith.constant 0 : i32
    %c0_i32_0 = arith.constant 0 : i32
    %c0_i32_1 = arith.constant 0 : i32
    return %arg0, %c0_i32, %c0_i32_0 : i32, i32, i32
  }
  func.func @transform_2(%arg0: i32, %arg1: i32, %arg2: i32) -> (i32, i32, i32) {
    %c0_i32 = arith.constant 0 : i32
    %c0_i32_0 = arith.constant 0 : i32
    return %arg0, %arg1, %c0_i32 : i32, i32, i32
  }
  func.func @transform_3(%arg0: i32, %arg1: i32, %arg2: i32) -> (i32, i32, i32) {
    %c0_i32 = arith.constant 0 : i32
    %c0_i32_0 = arith.constant 0 : i32
    %c0_i32_1 = arith.constant 0 : i32
    return %arg2, %c0_i32, %c0_i32_0 : i32, i32, i32
  }
  func.func @transform_4(%arg0: i32, %arg1: i32, %arg2: i32) -> (i32, i32, i32) {
    %c0_i32 = arith.constant 0 : i32
    %c0_i32_0 = arith.constant 0 : i32
    %c0_i32_1 = arith.constant 0 : i32
    return %arg2, %c0_i32, %c0_i32_0 : i32, i32, i32
  }
  func.func @transform_5(%arg0: i32, %arg1: i32, %arg2: i32) -> (i32, i32, i32) {
    %c0_i32 = arith.constant 0 : i32
    %c0_i32_0 = arith.constant 0 : i32
    %c0_i32_1 = arith.constant 0 : i32
    return %arg2, %c0_i32, %c0_i32_0 : i32, i32, i32
  }
  func.func @transform_6(%arg0: i32, %arg1: i32, %arg2: i32) -> (i32, i32, i32) {
    %c0_i32 = arith.constant 0 : i32
    %c0_i32_0 = arith.constant 0 : i32
    %c0_i32_1 = arith.constant 0 : i32
    return %arg2, %c0_i32, %c0_i32_0 : i32, i32, i32
  }
  func.func @transform_7(%arg0: i32, %arg1: i32, %arg2: i32) -> (i32, i32) {
    %c0_i32 = arith.constant 0 : i32
    %c0_i32_0 = arith.constant 0 : i32
    %c0_i32_1 = arith.constant 0 : i32
    return %c0_i32, %c0_i32_0 : i32, i32
  }
  func.func @transform_8(%arg0: i32, %arg1: i32, %arg2: i32) -> (i32, i32, i32) {
    %c0_i32 = arith.constant 0 : i32
    %c0_i32_0 = arith.constant 0 : i32
    return %arg0, %arg1, %c0_i32 : i32, i32, i32
  }
}

module attributes {stable_mosaic.version = 11 : i64} {
  func.func @_peg_kernel(%arg0: i32, %arg1: memref<1x10x10x8xbf16, #tpu.memory_space<vmem>>, %arg2: memref<1x8x8x8xbf16, #tpu.memory_space<vmem>>, %arg3: memref<9x8xf32, #tpu.memory_space<vmem>>, %arg4: memref<1x8xf32, #tpu.memory_space<vmem>>, %arg5: memref<1x8x8x8xbf16, #tpu.memory_space<vmem>>) attributes {dimension_semantics = [#tpu.dimension_semantics<parallel>], iteration_bounds = array<i64: 2>, scalar_prefetch = 0 : i64, scratch_operands = 0 : i64, tpu.core_type = #tpu.core_type<tc>, window_params = [{transform_indices = @transform_0, window_bounds = array<i64: 1, 10, 10, 8>}, {transform_indices = @transform_1, window_bounds = array<i64: 1, 8, 8, 8>}, {pipeline_mode = #tpu.pipeline_mode<synchronous>, transform_indices = @transform_2, window_bounds = array<i64: 9, 8>}, {pipeline_mode = #tpu.pipeline_mode<synchronous>, transform_indices = @transform_3, window_bounds = array<i64: 1, 8>}, {transform_indices = @transform_4, window_bounds = array<i64: 1, 8, 8, 8>}]} {
    %c0 = arith.constant 0 : index
    %c0_0 = arith.constant 0 : index
    %c0_1 = arith.constant 0 : index
    %c0_2 = arith.constant 0 : index
    %0 = vector.load %arg2[%c0, %c0_0, %c0_1, %c0_2] : memref<1x8x8x8xbf16, #tpu.memory_space<vmem>>, vector<1x8x8x8xbf16>
    %1 = vector.shape_cast %0 : vector<1x8x8x8xbf16> to vector<8x8x8xbf16>
    %2 = arith.extf %1 : vector<8x8x8xbf16> to vector<8x8x8xf32>
    %c0_3 = arith.constant 0 : index
    %c0_4 = arith.constant 0 : index
    %3 = vector.load %arg4[%c0_3, %c0_4] : memref<1x8xf32, #tpu.memory_space<vmem>>, vector<1x8xf32>
    %4 = vector.shape_cast %3 : vector<1x8xf32> to vector<8xf32>
    %5 = vector.shape_cast %4 : vector<8xf32> to vector<1x1x8xf32>
    %6 = vector.broadcast %5 : vector<1x1x8xf32> to vector<8x8x8xf32>
    %7 = arith.addf %2, %6 : vector<8x8x8xf32>
    %c0_5 = arith.constant 0 : index
    %c0_6 = arith.constant 0 : index
    %c0_7 = arith.constant 0 : index
    %c0_8 = arith.constant 0 : index
    %8 = vector.load %arg1[%c0_5, %c0_6, %c0_7, %c0_8] : memref<1x10x10x8xbf16, #tpu.memory_space<vmem>>, vector<1x8x8x8xbf16>
    %9 = vector.shape_cast %8 : vector<1x8x8x8xbf16> to vector<8x8x8xbf16>
    %10 = arith.extf %9 : vector<8x8x8xbf16> to vector<8x8x8xf32>
    %c0_9 = arith.constant 0 : index
    %c0_10 = arith.constant 0 : index
    %11 = vector.load %arg3[%c0_9, %c0_10] : memref<9x8xf32, #tpu.memory_space<vmem>>, vector<1x8xf32>
    %12 = vector.shape_cast %11 : vector<1x8xf32> to vector<8xf32>
    %13 = vector.shape_cast %12 : vector<8xf32> to vector<1x1x8xf32>
    %14 = vector.broadcast %13 : vector<1x1x8xf32> to vector<8x8x8xf32>
    %15 = arith.mulf %10, %14 : vector<8x8x8xf32>
    %16 = arith.addf %7, %15 : vector<8x8x8xf32>
    %c0_11 = arith.constant 0 : index
    %c0_12 = arith.constant 0 : index
    %c1 = arith.constant 1 : index
    %c0_13 = arith.constant 0 : index
    %17 = vector.load %arg1[%c0_11, %c0_12, %c1, %c0_13] : memref<1x10x10x8xbf16, #tpu.memory_space<vmem>>, vector<1x8x8x8xbf16>
    %18 = vector.shape_cast %17 : vector<1x8x8x8xbf16> to vector<8x8x8xbf16>
    %19 = arith.extf %18 : vector<8x8x8xbf16> to vector<8x8x8xf32>
    %c1_14 = arith.constant 1 : index
    %c0_15 = arith.constant 0 : index
    %20 = vector.load %arg3[%c1_14, %c0_15] : memref<9x8xf32, #tpu.memory_space<vmem>>, vector<1x8xf32>
    %21 = vector.shape_cast %20 : vector<1x8xf32> to vector<8xf32>
    %22 = vector.shape_cast %21 : vector<8xf32> to vector<1x1x8xf32>
    %23 = vector.broadcast %22 : vector<1x1x8xf32> to vector<8x8x8xf32>
    %24 = arith.mulf %19, %23 : vector<8x8x8xf32>
    %25 = arith.addf %16, %24 : vector<8x8x8xf32>
    %c0_16 = arith.constant 0 : index
    %c0_17 = arith.constant 0 : index
    %c2 = arith.constant 2 : index
    %c0_18 = arith.constant 0 : index
    %26 = vector.load %arg1[%c0_16, %c0_17, %c2, %c0_18] : memref<1x10x10x8xbf16, #tpu.memory_space<vmem>>, vector<1x8x8x8xbf16>
    %27 = vector.shape_cast %26 : vector<1x8x8x8xbf16> to vector<8x8x8xbf16>
    %28 = arith.extf %27 : vector<8x8x8xbf16> to vector<8x8x8xf32>
    %c2_19 = arith.constant 2 : index
    %c0_20 = arith.constant 0 : index
    %29 = vector.load %arg3[%c2_19, %c0_20] : memref<9x8xf32, #tpu.memory_space<vmem>>, vector<1x8xf32>
    %30 = vector.shape_cast %29 : vector<1x8xf32> to vector<8xf32>
    %31 = vector.shape_cast %30 : vector<8xf32> to vector<1x1x8xf32>
    %32 = vector.broadcast %31 : vector<1x1x8xf32> to vector<8x8x8xf32>
    %33 = arith.mulf %28, %32 : vector<8x8x8xf32>
    %34 = arith.addf %25, %33 : vector<8x8x8xf32>
    %c0_21 = arith.constant 0 : index
    %c1_22 = arith.constant 1 : index
    %c0_23 = arith.constant 0 : index
    %c0_24 = arith.constant 0 : index
    %35 = vector.load %arg1[%c0_21, %c1_22, %c0_23, %c0_24] : memref<1x10x10x8xbf16, #tpu.memory_space<vmem>>, vector<1x8x8x8xbf16>
    %36 = vector.shape_cast %35 : vector<1x8x8x8xbf16> to vector<8x8x8xbf16>
    %37 = arith.extf %36 : vector<8x8x8xbf16> to vector<8x8x8xf32>
    %c3 = arith.constant 3 : index
    %c0_25 = arith.constant 0 : index
    %38 = vector.load %arg3[%c3, %c0_25] : memref<9x8xf32, #tpu.memory_space<vmem>>, vector<1x8xf32>
    %39 = vector.shape_cast %38 : vector<1x8xf32> to vector<8xf32>
    %40 = vector.shape_cast %39 : vector<8xf32> to vector<1x1x8xf32>
    %41 = vector.broadcast %40 : vector<1x1x8xf32> to vector<8x8x8xf32>
    %42 = arith.mulf %37, %41 : vector<8x8x8xf32>
    %43 = arith.addf %34, %42 : vector<8x8x8xf32>
    %c0_26 = arith.constant 0 : index
    %c1_27 = arith.constant 1 : index
    %c1_28 = arith.constant 1 : index
    %c0_29 = arith.constant 0 : index
    %44 = vector.load %arg1[%c0_26, %c1_27, %c1_28, %c0_29] : memref<1x10x10x8xbf16, #tpu.memory_space<vmem>>, vector<1x8x8x8xbf16>
    %45 = vector.shape_cast %44 : vector<1x8x8x8xbf16> to vector<8x8x8xbf16>
    %46 = arith.extf %45 : vector<8x8x8xbf16> to vector<8x8x8xf32>
    %c4 = arith.constant 4 : index
    %c0_30 = arith.constant 0 : index
    %47 = vector.load %arg3[%c4, %c0_30] : memref<9x8xf32, #tpu.memory_space<vmem>>, vector<1x8xf32>
    %48 = vector.shape_cast %47 : vector<1x8xf32> to vector<8xf32>
    %49 = vector.shape_cast %48 : vector<8xf32> to vector<1x1x8xf32>
    %50 = vector.broadcast %49 : vector<1x1x8xf32> to vector<8x8x8xf32>
    %51 = arith.mulf %46, %50 : vector<8x8x8xf32>
    %52 = arith.addf %43, %51 : vector<8x8x8xf32>
    %c0_31 = arith.constant 0 : index
    %c1_32 = arith.constant 1 : index
    %c2_33 = arith.constant 2 : index
    %c0_34 = arith.constant 0 : index
    %53 = vector.load %arg1[%c0_31, %c1_32, %c2_33, %c0_34] : memref<1x10x10x8xbf16, #tpu.memory_space<vmem>>, vector<1x8x8x8xbf16>
    %54 = vector.shape_cast %53 : vector<1x8x8x8xbf16> to vector<8x8x8xbf16>
    %55 = arith.extf %54 : vector<8x8x8xbf16> to vector<8x8x8xf32>
    %c5 = arith.constant 5 : index
    %c0_35 = arith.constant 0 : index
    %56 = vector.load %arg3[%c5, %c0_35] : memref<9x8xf32, #tpu.memory_space<vmem>>, vector<1x8xf32>
    %57 = vector.shape_cast %56 : vector<1x8xf32> to vector<8xf32>
    %58 = vector.shape_cast %57 : vector<8xf32> to vector<1x1x8xf32>
    %59 = vector.broadcast %58 : vector<1x1x8xf32> to vector<8x8x8xf32>
    %60 = arith.mulf %55, %59 : vector<8x8x8xf32>
    %61 = arith.addf %52, %60 : vector<8x8x8xf32>
    %c0_36 = arith.constant 0 : index
    %c2_37 = arith.constant 2 : index
    %c0_38 = arith.constant 0 : index
    %c0_39 = arith.constant 0 : index
    %62 = vector.load %arg1[%c0_36, %c2_37, %c0_38, %c0_39] : memref<1x10x10x8xbf16, #tpu.memory_space<vmem>>, vector<1x8x8x8xbf16>
    %63 = vector.shape_cast %62 : vector<1x8x8x8xbf16> to vector<8x8x8xbf16>
    %64 = arith.extf %63 : vector<8x8x8xbf16> to vector<8x8x8xf32>
    %c6 = arith.constant 6 : index
    %c0_40 = arith.constant 0 : index
    %65 = vector.load %arg3[%c6, %c0_40] : memref<9x8xf32, #tpu.memory_space<vmem>>, vector<1x8xf32>
    %66 = vector.shape_cast %65 : vector<1x8xf32> to vector<8xf32>
    %67 = vector.shape_cast %66 : vector<8xf32> to vector<1x1x8xf32>
    %68 = vector.broadcast %67 : vector<1x1x8xf32> to vector<8x8x8xf32>
    %69 = arith.mulf %64, %68 : vector<8x8x8xf32>
    %70 = arith.addf %61, %69 : vector<8x8x8xf32>
    %c0_41 = arith.constant 0 : index
    %c2_42 = arith.constant 2 : index
    %c1_43 = arith.constant 1 : index
    %c0_44 = arith.constant 0 : index
    %71 = vector.load %arg1[%c0_41, %c2_42, %c1_43, %c0_44] : memref<1x10x10x8xbf16, #tpu.memory_space<vmem>>, vector<1x8x8x8xbf16>
    %72 = vector.shape_cast %71 : vector<1x8x8x8xbf16> to vector<8x8x8xbf16>
    %73 = arith.extf %72 : vector<8x8x8xbf16> to vector<8x8x8xf32>
    %c7 = arith.constant 7 : index
    %c0_45 = arith.constant 0 : index
    %74 = vector.load %arg3[%c7, %c0_45] : memref<9x8xf32, #tpu.memory_space<vmem>>, vector<1x8xf32>
    %75 = vector.shape_cast %74 : vector<1x8xf32> to vector<8xf32>
    %76 = vector.shape_cast %75 : vector<8xf32> to vector<1x1x8xf32>
    %77 = vector.broadcast %76 : vector<1x1x8xf32> to vector<8x8x8xf32>
    %78 = arith.mulf %73, %77 : vector<8x8x8xf32>
    %79 = arith.addf %70, %78 : vector<8x8x8xf32>
    %c0_46 = arith.constant 0 : index
    %c2_47 = arith.constant 2 : index
    %c2_48 = arith.constant 2 : index
    %c0_49 = arith.constant 0 : index
    %80 = vector.load %arg1[%c0_46, %c2_47, %c2_48, %c0_49] : memref<1x10x10x8xbf16, #tpu.memory_space<vmem>>, vector<1x8x8x8xbf16>
    %81 = vector.shape_cast %80 : vector<1x8x8x8xbf16> to vector<8x8x8xbf16>
    %82 = arith.extf %81 : vector<8x8x8xbf16> to vector<8x8x8xf32>
    %c8 = arith.constant 8 : index
    %c0_50 = arith.constant 0 : index
    %83 = vector.load %arg3[%c8, %c0_50] : memref<9x8xf32, #tpu.memory_space<vmem>>, vector<1x8xf32>
    %84 = vector.shape_cast %83 : vector<1x8xf32> to vector<8xf32>
    %85 = vector.shape_cast %84 : vector<8xf32> to vector<1x1x8xf32>
    %86 = vector.broadcast %85 : vector<1x1x8xf32> to vector<8x8x8xf32>
    %87 = arith.mulf %82, %86 : vector<8x8x8xf32>
    %88 = arith.addf %79, %87 : vector<8x8x8xf32>
    %89 = arith.truncf %88 : vector<8x8x8xf32> to vector<8x8x8xbf16>
    %c0_51 = arith.constant 0 : index
    %c0_52 = arith.constant 0 : index
    %c0_53 = arith.constant 0 : index
    %c0_54 = arith.constant 0 : index
    %90 = vector.load %arg5[%c0_51, %c0_52, %c0_53, %c0_54] : memref<1x8x8x8xbf16, #tpu.memory_space<vmem>>, vector<1x8x8x8xbf16>
    %91 = vector.shape_cast %90 : vector<1x8x8x8xbf16> to vector<8x8x8xbf16>
    %92 = vector.shape_cast %89 : vector<8x8x8xbf16> to vector<1x8x8x8xbf16>
    tpu.vector_store %arg5[%c0_51, %c0_52, %c0_53, %c0_54], %92 {strides = array<i32>} : memref<1x8x8x8xbf16, #tpu.memory_space<vmem>>, vector<1x8x8x8xbf16>,
    return
  }
  func.func @transform_0(%arg0: i32) -> (i32, i32, i32, i32) {
    %c0_i32 = arith.constant 0 : i32
    %c0_i32_0 = arith.constant 0 : i32
    %c0_i32_1 = arith.constant 0 : i32
    %c0_i32_2 = arith.constant 0 : i32
    return %arg0, %c0_i32, %c0_i32_0, %c0_i32_1 : i32, i32, i32, i32
  }
  func.func @transform_1(%arg0: i32) -> (i32, i32, i32, i32) {
    %c0_i32 = arith.constant 0 : i32
    %c0_i32_0 = arith.constant 0 : i32
    %c0_i32_1 = arith.constant 0 : i32
    %c0_i32_2 = arith.constant 0 : i32
    return %arg0, %c0_i32, %c0_i32_0, %c0_i32_1 : i32, i32, i32, i32
  }
  func.func @transform_2(%arg0: i32) -> (i32, i32) {
    %c0_i32 = arith.constant 0 : i32
    %c0_i32_0 = arith.constant 0 : i32
    %c0_i32_1 = arith.constant 0 : i32
    return %c0_i32, %c0_i32_0 : i32, i32
  }
  func.func @transform_3(%arg0: i32) -> (i32, i32) {
    %c0_i32 = arith.constant 0 : i32
    %c0_i32_0 = arith.constant 0 : i32
    %c0_i32_1 = arith.constant 0 : i32
    return %c0_i32, %c0_i32_0 : i32, i32
  }
  func.func @transform_4(%arg0: i32) -> (i32, i32, i32, i32) {
    %c0_i32 = arith.constant 0 : i32
    %c0_i32_0 = arith.constant 0 : i32
    %c0_i32_1 = arith.constant 0 : i32
    %c0_i32_2 = arith.constant 0 : i32
    return %arg0, %c0_i32, %c0_i32_0, %c0_i32_1 : i32, i32, i32, i32
  }
}

module attributes {stable_mosaic.version = 11 : i64} {
  func.func @_matmul_bias_kernel(%arg0: i32, %arg1: i32, %arg2: i32, %arg3: memref<32x128xbf16, #tpu.memory_space<vmem>>, %arg4: memref<128x128xbf16, #tpu.memory_space<vmem>>, %arg5: memref<1x128xf32, #tpu.memory_space<vmem>>, %arg6: memref<32x128xbf16, #tpu.memory_space<vmem>>, %arg7: memref<32x128xf32, #tpu.memory_space<vmem>>) attributes {dimension_semantics = [#tpu.dimension_semantics<parallel>, #tpu.dimension_semantics<parallel>, #tpu.dimension_semantics<arbitrary>], iteration_bounds = array<i64: 1, 1, 1>, scalar_prefetch = 0 : i64, scratch_operands = 1 : i64, tpu.core_type = #tpu.core_type<tc>, window_params = [{transform_indices = @transform_0, window_bounds = array<i64: 32, 128>}, {transform_indices = @transform_1, window_bounds = array<i64: 128, 128>}, {transform_indices = @transform_2, window_bounds = array<i64: 1, 128>}, {transform_indices = @transform_3, window_bounds = array<i64: 32, 128>}]} {
    %c0_i32 = arith.constant 0 : i32
    %0 = arith.cmpi eq, %arg2, %c0_i32 : i32
    %1 = arith.extui %0 : i1 to i32
    %c0_i32_0 = arith.constant 0 : i32
    %2 = arith.cmpi ne, %1, %c0_i32_0 : i32
    scf.if %2 {
      %cst_10 = arith.constant 0.000000e+00 : f32
      %12 = vector.broadcast %cst_10 : f32 to vector<32x128xf32>
      %c0_11 = arith.constant 0 : index
      %c0_12 = arith.constant 0 : index
      %13 = vector.load %arg7[%c0_11, %c0_12] : memref<32x128xf32, #tpu.memory_space<vmem>>, vector<32x128xf32>
      tpu.vector_store %arg7[%c0_11, %c0_12], %12 {strides = array<i32>} : memref<32x128xf32, #tpu.memory_space<vmem>>, vector<32x128xf32>,
    } else {
    }
    %c0 = arith.constant 0 : index
    %c0_1 = arith.constant 0 : index
    %3 = vector.load %arg7[%c0, %c0_1] : memref<32x128xf32, #tpu.memory_space<vmem>>, vector<32x128xf32>
    %c0_2 = arith.constant 0 : index
    %c0_3 = arith.constant 0 : index
    %4 = vector.load %arg3[%c0_2, %c0_3] : memref<32x128xbf16, #tpu.memory_space<vmem>>, vector<32x128xbf16>
    %c0_4 = arith.constant 0 : index
    %c0_5 = arith.constant 0 : index
    %5 = vector.load %arg4[%c0_4, %c0_5] : memref<128x128xbf16, #tpu.memory_space<vmem>>, vector<128x128xbf16>
    %cst = arith.constant dense<0.000000e+00> : vector<32x128xf32>
    %6 = tpu.matmul %4, %5, %cst {dimension_numbers = #tpu.dot_dimension_numbers<[1], [0], [0], [1], [0, 0, 1, 1], [], []>} : vector<32x128xbf16>, vector<128x128xbf16>, vector<32x128xf32> -> vector<32x128xf32>
    %7 = arith.addf %3, %6 : vector<32x128xf32>
    %c0_6 = arith.constant 0 : index
    %c0_7 = arith.constant 0 : index
    %8 = vector.load %arg7[%c0_6, %c0_7] : memref<32x128xf32, #tpu.memory_space<vmem>>, vector<32x128xf32>
    tpu.vector_store %arg7[%c0_6, %c0_7], %7 {strides = array<i32>} : memref<32x128xf32, #tpu.memory_space<vmem>>, vector<32x128xf32>,
    %c0_i32_8 = arith.constant 0 : i32
    %9 = arith.cmpi eq, %arg2, %c0_i32_8 : i32
    %10 = arith.extui %9 : i1 to i32
    %c0_i32_9 = arith.constant 0 : i32
    %11 = arith.cmpi ne, %10, %c0_i32_9 : i32
    scf.if %11 {
      %c0_10 = arith.constant 0 : index
      %c0_11 = arith.constant 0 : index
      %12 = vector.load %arg7[%c0_10, %c0_11] : memref<32x128xf32, #tpu.memory_space<vmem>>, vector<32x128xf32>
      %c0_12 = arith.constant 0 : index
      %c0_13 = arith.constant 0 : index
      %13 = vector.load %arg5[%c0_12, %c0_13] : memref<1x128xf32, #tpu.memory_space<vmem>>, vector<1x128xf32>
      %14 = vector.broadcast %13 : vector<1x128xf32> to vector<32x128xf32>
      %15 = arith.addf %12, %14 : vector<32x128xf32>
      %16 = arith.truncf %15 : vector<32x128xf32> to vector<32x128xbf16>
      %c0_14 = arith.constant 0 : index
      %c0_15 = arith.constant 0 : index
      %17 = vector.load %arg6[%c0_14, %c0_15] : memref<32x128xbf16, #tpu.memory_space<vmem>>, vector<32x128xbf16>
      tpu.vector_store %arg6[%c0_14, %c0_15], %16 {strides = array<i32>} : memref<32x128xbf16, #tpu.memory_space<vmem>>, vector<32x128xbf16>,
    } else {
    }
    return
  }
  func.func @transform_0(%arg0: i32, %arg1: i32, %arg2: i32) -> (i32, i32) {
    %c0_i32 = arith.constant 0 : i32
    return %arg0, %arg2 : i32, i32
  }
  func.func @transform_1(%arg0: i32, %arg1: i32, %arg2: i32) -> (i32, i32) {
    %c0_i32 = arith.constant 0 : i32
    return %arg2, %arg1 : i32, i32
  }
  func.func @transform_2(%arg0: i32, %arg1: i32, %arg2: i32) -> (i32, i32) {
    %c0_i32 = arith.constant 0 : i32
    %c0_i32_0 = arith.constant 0 : i32
    return %c0_i32, %arg1 : i32, i32
  }
  func.func @transform_3(%arg0: i32, %arg1: i32, %arg2: i32) -> (i32, i32) {
    %c0_i32 = arith.constant 0 : i32
    return %arg0, %arg1 : i32, i32
  }
}

module attributes {stable_mosaic.version = 11 : i64} {
  func.func @_layernorm_kernel(%arg0: i32, %arg1: memref<32x16xbf16, #tpu.memory_space<vmem>>, %arg2: memref<1x16xf32, #tpu.memory_space<vmem>>, %arg3: memref<1x16xf32, #tpu.memory_space<vmem>>, %arg4: memref<32x16xbf16, #tpu.memory_space<vmem>>) attributes {dimension_semantics = [#tpu.dimension_semantics<parallel>], iteration_bounds = array<i64: 1>, scalar_prefetch = 0 : i64, scratch_operands = 0 : i64, tpu.core_type = #tpu.core_type<tc>, window_params = [{transform_indices = @transform_0, window_bounds = array<i64: 32, 16>}, {pipeline_mode = #tpu.pipeline_mode<synchronous>, transform_indices = @transform_1, window_bounds = array<i64: 1, 16>}, {pipeline_mode = #tpu.pipeline_mode<synchronous>, transform_indices = @transform_2, window_bounds = array<i64: 1, 16>}, {transform_indices = @transform_3, window_bounds = array<i64: 32, 16>}]} {
    %c0 = arith.constant 0 : index
    %c0_0 = arith.constant 0 : index
    %0 = vector.load %arg1[%c0, %c0_0] : memref<32x16xbf16, #tpu.memory_space<vmem>>, vector<32x16xbf16>
    %1 = arith.extf %0 : vector<32x16xbf16> to vector<32x16xf32>
    %cst = arith.constant dense<0.000000e+00> : vector<32xf32>
    %2 = vector.multi_reduction <add>, %1, %cst [1] : vector<32x16xf32> to vector<32xf32>
    %3 = vector.shape_cast %2 : vector<32xf32> to vector<32x1xf32>
    %cst_1 = arith.constant 1.600000e+01 : f32
    %4 = vector.broadcast %cst_1 : f32 to vector<32x1xf32>
    %5 = arith.divf %3, %4 : vector<32x1xf32>
    %6 = arith.mulf %1, %1 : vector<32x16xf32>
    %cst_2 = arith.constant dense<0.000000e+00> : vector<32xf32>
    %7 = vector.multi_reduction <add>, %6, %cst_2 [1] : vector<32x16xf32> to vector<32xf32>
    %8 = vector.shape_cast %7 : vector<32xf32> to vector<32x1xf32>
    %cst_3 = arith.constant 1.600000e+01 : f32
    %9 = vector.broadcast %cst_3 : f32 to vector<32x1xf32>
    %10 = arith.divf %8, %9 : vector<32x1xf32>
    %11 = arith.mulf %5, %5 : vector<32x1xf32>
    %12 = arith.subf %10, %11 : vector<32x1xf32>
    %13 = vector.broadcast %5 : vector<32x1xf32> to vector<32x16xf32>
    %14 = arith.subf %1, %13 : vector<32x16xf32>
    %cst_4 = arith.constant 9.99999974E-6 : f32
    %15 = vector.broadcast %cst_4 : f32 to vector<32x1xf32>
    %16 = arith.addf %12, %15 : vector<32x1xf32>
    %17 = math.rsqrt %16 : vector<32x1xf32>
    %18 = vector.broadcast %17 : vector<32x1xf32> to vector<32x16xf32>
    %19 = arith.mulf %14, %18 : vector<32x16xf32>
    %c0_5 = arith.constant 0 : index
    %c0_6 = arith.constant 0 : index
    %20 = vector.load %arg2[%c0_5, %c0_6] : memref<1x16xf32, #tpu.memory_space<vmem>>, vector<1x16xf32>
    %21 = vector.broadcast %20 : vector<1x16xf32> to vector<32x16xf32>
    %22 = arith.mulf %19, %21 : vector<32x16xf32>
    %c0_7 = arith.constant 0 : index
    %c0_8 = arith.constant 0 : index
    %23 = vector.load %arg3[%c0_7, %c0_8] : memref<1x16xf32, #tpu.memory_space<vmem>>, vector<1x16xf32>
    %24 = vector.broadcast %23 : vector<1x16xf32> to vector<32x16xf32>
    %25 = arith.addf %22, %24 : vector<32x16xf32>
    %26 = arith.truncf %25 : vector<32x16xf32> to vector<32x16xbf16>
    %c0_9 = arith.constant 0 : index
    %c0_10 = arith.constant 0 : index
    %27 = vector.load %arg4[%c0_9, %c0_10] : memref<32x16xbf16, #tpu.memory_space<vmem>>, vector<32x16xbf16>
    tpu.vector_store %arg4[%c0_9, %c0_10], %26 {strides = array<i32>} : memref<32x16xbf16, #tpu.memory_space<vmem>>, vector<32x16xbf16>,
    return
  }
  func.func @transform_0(%arg0: i32) -> (i32, i32) {
    %c0_i32 = arith.constant 0 : i32
    %c0_i32_0 = arith.constant 0 : i32
    return %arg0, %c0_i32 : i32, i32
  }
  func.func @transform_1(%arg0: i32) -> (i32, i32) {
    %c0_i32 = arith.constant 0 : i32
    %c0_i32_0 = arith.constant 0 : i32
    %c0_i32_1 = arith.constant 0 : i32
    return %c0_i32, %c0_i32_0 : i32, i32
  }
  func.func @transform_2(%arg0: i32) -> (i32, i32) {
    %c0_i32 = arith.constant 0 : i32
    %c0_i32_0 = arith.constant 0 : i32
    %c0_i32_1 = arith.constant 0 : i32
    return %c0_i32, %c0_i32_0 : i32, i32
  }
  func.func @transform_3(%arg0: i32) -> (i32, i32) {
    %c0_i32 = arith.constant 0 : i32
    %c0_i32_0 = arith.constant 0 : i32
    return %arg0, %c0_i32 : i32, i32
  }
}

module attributes {stable_mosaic.version = 11 : i64} {
  func.func @_ffn_kernel(%arg0: i32, %arg1: memref<32x16xbf16, #tpu.memory_space<vmem>>, %arg2: memref<1x16xf32, #tpu.memory_space<vmem>>, %arg3: memref<1x16xf32, #tpu.memory_space<vmem>>, %arg4: memref<16x32xbf16, #tpu.memory_space<vmem>>, %arg5: memref<1x32xf32, #tpu.memory_space<vmem>>, %arg6: memref<32x16xbf16, #tpu.memory_space<vmem>>, %arg7: memref<1x16xf32, #tpu.memory_space<vmem>>, %arg8: memref<32x16xbf16, #tpu.memory_space<vmem>>) attributes {dimension_semantics = [#tpu.dimension_semantics<parallel>], iteration_bounds = array<i64: 1>, scalar_prefetch = 0 : i64, scratch_operands = 0 : i64, tpu.core_type = #tpu.core_type<tc>, window_params = [{transform_indices = @transform_0, window_bounds = array<i64: 32, 16>}, {pipeline_mode = #tpu.pipeline_mode<synchronous>, transform_indices = @transform_1, window_bounds = array<i64: 1, 16>}, {pipeline_mode = #tpu.pipeline_mode<synchronous>, transform_indices = @transform_2, window_bounds = array<i64: 1, 16>}, {pipeline_mode = #tpu.pipeline_mode<synchronous>, transform_indices = @transform_3, window_bounds = array<i64: 16, 32>}, {pipeline_mode = #tpu.pipeline_mode<synchronous>, transform_indices = @transform_4, window_bounds = array<i64: 1, 32>}, {pipeline_mode = #tpu.pipeline_mode<synchronous>, transform_indices = @transform_5, window_bounds = array<i64: 32, 16>}, {pipeline_mode = #tpu.pipeline_mode<synchronous>, transform_indices = @transform_6, window_bounds = array<i64: 1, 16>}, {transform_indices = @transform_7, window_bounds = array<i64: 32, 16>}]} {
    %c0 = arith.constant 0 : index
    %c0_0 = arith.constant 0 : index
    %0 = vector.load %arg1[%c0, %c0_0] : memref<32x16xbf16, #tpu.memory_space<vmem>>, vector<32x16xbf16>
    %1 = arith.extf %0 : vector<32x16xbf16> to vector<32x16xf32>
    %cst = arith.constant dense<0.000000e+00> : vector<32xf32>
    %2 = vector.multi_reduction <add>, %1, %cst [1] : vector<32x16xf32> to vector<32xf32>
    %3 = vector.shape_cast %2 : vector<32xf32> to vector<32x1xf32>
    %cst_1 = arith.constant 1.600000e+01 : f32
    %4 = vector.broadcast %cst_1 : f32 to vector<32x1xf32>
    %5 = arith.divf %3, %4 : vector<32x1xf32>
    %6 = arith.mulf %1, %1 : vector<32x16xf32>
    %cst_2 = arith.constant dense<0.000000e+00> : vector<32xf32>
    %7 = vector.multi_reduction <add>, %6, %cst_2 [1] : vector<32x16xf32> to vector<32xf32>
    %8 = vector.shape_cast %7 : vector<32xf32> to vector<32x1xf32>
    %cst_3 = arith.constant 1.600000e+01 : f32
    %9 = vector.broadcast %cst_3 : f32 to vector<32x1xf32>
    %10 = arith.divf %8, %9 : vector<32x1xf32>
    %11 = arith.mulf %5, %5 : vector<32x1xf32>
    %12 = arith.subf %10, %11 : vector<32x1xf32>
    %13 = vector.broadcast %5 : vector<32x1xf32> to vector<32x16xf32>
    %14 = arith.subf %1, %13 : vector<32x16xf32>
    %cst_4 = arith.constant 9.99999974E-6 : f32
    %15 = vector.broadcast %cst_4 : f32 to vector<32x1xf32>
    %16 = arith.addf %12, %15 : vector<32x1xf32>
    %17 = math.rsqrt %16 : vector<32x1xf32>
    %18 = vector.broadcast %17 : vector<32x1xf32> to vector<32x16xf32>
    %19 = arith.mulf %14, %18 : vector<32x16xf32>
    %c0_5 = arith.constant 0 : index
    %c0_6 = arith.constant 0 : index
    %20 = vector.load %arg2[%c0_5, %c0_6] : memref<1x16xf32, #tpu.memory_space<vmem>>, vector<1x16xf32>
    %21 = vector.broadcast %20 : vector<1x16xf32> to vector<32x16xf32>
    %22 = arith.mulf %19, %21 : vector<32x16xf32>
    %c0_7 = arith.constant 0 : index
    %c0_8 = arith.constant 0 : index
    %23 = vector.load %arg3[%c0_7, %c0_8] : memref<1x16xf32, #tpu.memory_space<vmem>>, vector<1x16xf32>
    %24 = vector.broadcast %23 : vector<1x16xf32> to vector<32x16xf32>
    %25 = arith.addf %22, %24 : vector<32x16xf32>
    %26 = arith.truncf %25 : vector<32x16xf32> to vector<32x16xbf16>
    %c0_9 = arith.constant 0 : index
    %c0_10 = arith.constant 0 : index
    %27 = vector.load %arg4[%c0_9, %c0_10] : memref<16x32xbf16, #tpu.memory_space<vmem>>, vector<16x32xbf16>
    %cst_11 = arith.constant dense<0.000000e+00> : vector<32x32xf32>
    %28 = tpu.matmul %26, %27, %cst_11 {dimension_numbers = #tpu.dot_dimension_numbers<[1], [0], [0], [1], [0, 0, 1, 1], [], []>} : vector<32x16xbf16>, vector<16x32xbf16>, vector<32x32xf32> -> vector<32x32xf32>
    %c0_12 = arith.constant 0 : index
    %c0_13 = arith.constant 0 : index
    %29 = vector.load %arg5[%c0_12, %c0_13] : memref<1x32xf32, #tpu.memory_space<vmem>>, vector<1x32xf32>
    %30 = vector.broadcast %29 : vector<1x32xf32> to vector<32x32xf32>
    %31 = arith.addf %28, %30 : vector<32x32xf32>
    %cst_14 = arith.constant 5.000000e-01 : f32
    %32 = vector.broadcast %cst_14 : f32 to vector<32x32xf32>
    %33 = arith.mulf %32, %31 : vector<32x32xf32>
    %cst_15 = arith.constant 4.471500e-02 : f32
    %34 = vector.broadcast %cst_15 : f32 to vector<32x32xf32>
    %35 = arith.mulf %34, %31 : vector<32x32xf32>
    %36 = arith.mulf %35, %31 : vector<32x32xf32>
    %37 = arith.mulf %36, %31 : vector<32x32xf32>
    %38 = arith.addf %31, %37 : vector<32x32xf32>
    %cst_16 = arith.constant 0.797884583 : f32
    %39 = vector.broadcast %cst_16 : f32 to vector<32x32xf32>
    %40 = arith.mulf %39, %38 : vector<32x32xf32>
    %41 = math.tanh %40 : vector<32x32xf32>
    %cst_17 = arith.constant 1.000000e+00 : f32
    %42 = vector.broadcast %cst_17 : f32 to vector<32x32xf32>
    %43 = arith.addf %42, %41 : vector<32x32xf32>
    %44 = arith.mulf %33, %43 : vector<32x32xf32>
    %45 = arith.truncf %44 : vector<32x32xf32> to vector<32x32xbf16>
    %c0_18 = arith.constant 0 : index
    %c0_19 = arith.constant 0 : index
    %46 = vector.load %arg6[%c0_18, %c0_19] : memref<32x16xbf16, #tpu.memory_space<vmem>>, vector<32x16xbf16>
    %cst_20 = arith.constant dense<0.000000e+00> : vector<32x16xf32>
    %47 = tpu.matmul %45, %46, %cst_20 {dimension_numbers = #tpu.dot_dimension_numbers<[1], [0], [0], [1], [0, 0, 1, 1], [], []>} : vector<32x32xbf16>, vector<32x16xbf16>, vector<32x16xf32> -> vector<32x16xf32>
    %c0_21 = arith.constant 0 : index
    %c0_22 = arith.constant 0 : index
    %48 = vector.load %arg7[%c0_21, %c0_22] : memref<1x16xf32, #tpu.memory_space<vmem>>, vector<1x16xf32>
    %49 = vector.broadcast %48 : vector<1x16xf32> to vector<32x16xf32>
    %50 = arith.addf %47, %49 : vector<32x16xf32>
    %51 = arith.addf %50, %1 : vector<32x16xf32>
    %52 = arith.truncf %51 : vector<32x16xf32> to vector<32x16xbf16>
    %c0_23 = arith.constant 0 : index
    %c0_24 = arith.constant 0 : index
    %53 = vector.load %arg8[%c0_23, %c0_24] : memref<32x16xbf16, #tpu.memory_space<vmem>>, vector<32x16xbf16>
    tpu.vector_store %arg8[%c0_23, %c0_24], %52 {strides = array<i32>} : memref<32x16xbf16, #tpu.memory_space<vmem>>, vector<32x16xbf16>,
    return
  }
  func.func @transform_0(%arg0: i32) -> (i32, i32) {
    %c0_i32 = arith.constant 0 : i32
    %c0_i32_0 = arith.constant 0 : i32
    return %arg0, %c0_i32 : i32, i32
  }
  func.func @transform_1(%arg0: i32) -> (i32, i32) {
    %c0_i32 = arith.constant 0 : i32
    %c0_i32_0 = arith.constant 0 : i32
    %c0_i32_1 = arith.constant 0 : i32
    return %c0_i32, %c0_i32_0 : i32, i32
  }
  func.func @transform_2(%arg0: i32) -> (i32, i32) {
    %c0_i32 = arith.constant 0 : i32
    %c0_i32_0 = arith.constant 0 : i32
    %c0_i32_1 = arith.constant 0 : i32
    return %c0_i32, %c0_i32_0 : i32, i32
  }
  func.func @transform_3(%arg0: i32) -> (i32, i32) {
    %c0_i32 = arith.constant 0 : i32
    %c0_i32_0 = arith.constant 0 : i32
    %c0_i32_1 = arith.constant 0 : i32
    return %c0_i32, %c0_i32_0 : i32, i32
  }
  func.func @transform_4(%arg0: i32) -> (i32, i32) {
    %c0_i32 = arith.constant 0 : i32
    %c0_i32_0 = arith.constant 0 : i32
    %c0_i32_1 = arith.constant 0 : i32
    return %c0_i32, %c0_i32_0 : i32, i32
  }
  func.func @transform_5(%arg0: i32) -> (i32, i32) {
    %c0_i32 = arith.constant 0 : i32
    %c0_i32_0 = arith.constant 0 : i32
    %c0_i32_1 = arith.constant 0 : i32
    return %c0_i32, %c0_i32_0 : i32, i32
  }
  func.func @transform_6(%arg0: i32) -> (i32, i32) {
    %c0_i32 = arith.constant 0 : i32
    %c0_i32_0 = arith.constant 0 : i32
    %c0_i32_1 = arith.constant 0 : i32
    return %c0_i32, %c0_i32_0 : i32, i32
  }
  func.func @transform_7(%arg0: i32) -> (i32, i32) {
    %c0_i32 = arith.constant 0 : i32
    %c0_i32_0 = arith.constant 0 : i32
    return %arg0, %c0_i32 : i32, i32
  }
}

module attributes {stable_mosaic.version = 11 : i64} {
  func.func @_ssa_kernel(%arg0: i32, %arg1: i32, %arg2: i32, %arg3: memref<1x16x16xbf16, #tpu.memory_space<vmem>>, %arg4: memref<1x4x64xbf16, #tpu.memory_space<vmem>>, %arg5: memref<1x16x16xbf16, #tpu.memory_space<vmem>>, %arg6: memref<1x16x4xbf16, #tpu.memory_space<vmem>>, %arg7: memref<1x64x4xbf16, #tpu.memory_space<vmem>>, %arg8: memref<1x64x4xbf16, #tpu.memory_space<vmem>>, %arg9: memref<1x4x16xbf16, #tpu.memory_space<vmem>>, %arg10: memref<1x16xf32, #tpu.memory_space<vmem>>, %arg11: memref<1x16x16xbf16, #tpu.memory_space<vmem>>, %arg12: memref<16x16xf32, #tpu.memory_space<vmem>>) attributes {dimension_semantics = [#tpu.dimension_semantics<parallel>, #tpu.dimension_semantics<parallel>, #tpu.dimension_semantics<arbitrary>], iteration_bounds = array<i64: 2, 1, 2>, scalar_prefetch = 0 : i64, scratch_operands = 1 : i64, tpu.core_type = #tpu.core_type<tc>, window_params = [{transform_indices = @transform_0, window_bounds = array<i64: 1, 16, 16>}, {transform_indices = @transform_1, window_bounds = array<i64: 1, 4, 64>}, {transform_indices = @transform_2, window_bounds = array<i64: 1, 16, 16>}, {transform_indices = @transform_3, window_bounds = array<i64: 1, 16, 4>}, {transform_indices = @transform_4, window_bounds = array<i64: 1, 64, 4>}, {transform_indices = @transform_5, window_bounds = array<i64: 1, 64, 4>}, {transform_indices = @transform_6, window_bounds = array<i64: 1, 4, 16>}, {pipeline_mode = #tpu.pipeline_mode<synchronous>, transform_indices = @transform_7, window_bounds = array<i64: 1, 16>}, {transform_indices = @transform_8, window_bounds = array<i64: 1, 16, 16>}]} {
    %c0_i32 = arith.constant 0 : i32
    %0 = arith.cmpi eq, %arg2, %c0_i32 : i32
    %1 = arith.extui %0 : i1 to i32
    %c0_i32_0 = arith.constant 0 : i32
    %2 = arith.cmpi ne, %1, %c0_i32_0 : i32
    scf.if %2 {
      %c0_31 = arith.constant 0 : index
      %c0_32 = arith.constant 0 : index
      %44 = vector.load %arg10[%c0_31, %c0_32] : memref<1x16xf32, #tpu.memory_space<vmem>>, vector<1x16xf32>
      %c0_33 = arith.constant 0 : index
      %c0_34 = arith.constant 0 : index
      %c0_35 = arith.constant 0 : index
      %45 = vector.load %arg5[%c0_33, %c0_34, %c0_35] : memref<1x16x16xbf16, #tpu.memory_space<vmem>>, vector<1x16x16xbf16>
      %46 = vector.shape_cast %45 : vector<1x16x16xbf16> to vector<16x16xbf16>
      %47 = arith.extf %46 : vector<16x16xbf16> to vector<16x16xf32>
      %48 = vector.broadcast %44 : vector<1x16xf32> to vector<16x16xf32>
      %49 = arith.addf %48, %47 : vector<16x16xf32>
      %c0_36 = arith.constant 0 : index
      %c0_37 = arith.constant 0 : index
      %50 = vector.load %arg12[%c0_36, %c0_37] : memref<16x16xf32, #tpu.memory_space<vmem>>, vector<16x16xf32>
      tpu.vector_store %arg12[%c0_36, %c0_37], %49 {strides = array<i32>} : memref<16x16xf32, #tpu.memory_space<vmem>>, vector<16x16xf32>,
    } else {
    }
    %c0 = arith.constant 0 : index
    %c0_1 = arith.constant 0 : index
    %c0_2 = arith.constant 0 : index
    %3 = vector.load %arg3[%c0, %c0_1, %c0_2] : memref<1x16x16xbf16, #tpu.memory_space<vmem>>, vector<1x16x16xbf16>
    %4 = vector.shape_cast %3 : vector<1x16x16xbf16> to vector<16x16xbf16>
    %c0_3 = arith.constant 0 : index
    %c0_4 = arith.constant 0 : index
    %c0_5 = arith.constant 0 : index
    %5 = vector.load %arg4[%c0_3, %c0_4, %c0_5] : memref<1x4x64xbf16, #tpu.memory_space<vmem>>, vector<1x4x64xbf16>
    %6 = vector.shape_cast %5 : vector<1x4x64xbf16> to vector<4x64xbf16>
    %c0_6 = arith.constant 0 : index
    %c0_7 = arith.constant 0 : index
    %c0_8 = arith.constant 0 : index
    %7 = vector.load %arg6[%c0_6, %c0_7, %c0_8] : memref<1x16x4xbf16, #tpu.memory_space<vmem>>, vector<1x16x4xbf16>
    %8 = vector.shape_cast %7 : vector<1x16x4xbf16> to vector<16x4xbf16>
    %cst = arith.constant dense<0.000000e+00> : vector<16x4xf32>
    %9 = tpu.matmul %4, %8, %cst {dimension_numbers = #tpu.dot_dimension_numbers<[1], [0], [0], [1], [0, 0, 1, 1], [], []>} : vector<16x16xbf16>, vector<16x4xbf16>, vector<16x4xf32> -> vector<16x4xf32>
    %c0_9 = arith.constant 0 : index
    %c0_10 = arith.constant 0 : index
    %c0_11 = arith.constant 0 : index
    %10 = vector.load %arg7[%c0_9, %c0_10, %c0_11] : memref<1x64x4xbf16, #tpu.memory_space<vmem>>, vector<1x64x4xbf16>
    %11 = vector.shape_cast %10 : vector<1x64x4xbf16> to vector<64x4xbf16>
    %cst_12 = arith.constant dense<0.000000e+00> : vector<4x4xf32>
    %12 = tpu.matmul %6, %11, %cst_12 {dimension_numbers = #tpu.dot_dimension_numbers<[1], [0], [0], [1], [0, 0, 1, 1], [], []>} : vector<4x64xbf16>, vector<64x4xbf16>, vector<4x4xf32> -> vector<4x4xf32>
    %c0_13 = arith.constant 0 : index
    %c0_14 = arith.constant 0 : index
    %c0_15 = arith.constant 0 : index
    %13 = vector.load %arg8[%c0_13, %c0_14, %c0_15] : memref<1x64x4xbf16, #tpu.memory_space<vmem>>, vector<1x64x4xbf16>
    %14 = vector.shape_cast %13 : vector<1x64x4xbf16> to vector<64x4xbf16>
    %cst_16 = arith.constant dense<0.000000e+00> : vector<4x4xf32>
    %15 = tpu.matmul %6, %14, %cst_16 {dimension_numbers = #tpu.dot_dimension_numbers<[1], [0], [0], [1], [0, 0, 1, 1], [], []>} : vector<4x64xbf16>, vector<64x4xbf16>, vector<4x4xf32> -> vector<4x4xf32>
    %16 = arith.truncf %9 : vector<16x4xf32> to vector<16x4xbf16>
    %17 = arith.truncf %12 : vector<4x4xf32> to vector<4x4xbf16>
    %cst_17 = arith.constant dense<0.000000e+00> : vector<16x4xf32>
    %18 = tpu.matmul %16, %17, %cst_17 {dimension_numbers = #tpu.dot_dimension_numbers<[1], [1], [0], [0], [0, 0, 1, 0], [], []>} : vector<16x4xbf16>, vector<4x4xbf16>, vector<16x4xf32> -> vector<16x4xf32>
    %cst_18 = arith.constant 5.000000e-01 : f32
    %19 = vector.broadcast %cst_18 : f32 to vector<16x4xf32>
    %20 = arith.mulf %18, %19 : vector<16x4xf32>
    %cst_19 = arith.constant dense<0xFF800000> : vector<16xf32>
    %21 = vector.multi_reduction <maximumf>, %20, %cst_19 [1] : vector<16x4xf32> to vector<16xf32>
    %22 = vector.shape_cast %21 : vector<16xf32> to vector<16x1xf32>
    %23 = vector.broadcast %22 : vector<16x1xf32> to vector<16x4xf32>
    %24 = arith.subf %20, %23 : vector<16x4xf32>
    %25 = math.exp %24 : vector<16x4xf32>
    %cst_20 = arith.constant dense<0.000000e+00> : vector<16xf32>
    %26 = vector.multi_reduction <add>, %25, %cst_20 [1] : vector<16x4xf32> to vector<16xf32>
    %27 = vector.shape_cast %26 : vector<16xf32> to vector<16x1xf32>
    %28 = tpu.reciprocal %27 {approx = true} : vector<16x1xf32> -> vector<16x1xf32>
    %29 = vector.broadcast %28 : vector<16x1xf32> to vector<16x4xf32>
    %30 = arith.mulf %25, %29 : vector<16x4xf32>
    %31 = arith.truncf %30 : vector<16x4xf32> to vector<16x4xbf16>
    %32 = arith.truncf %15 : vector<4x4xf32> to vector<4x4xbf16>
    %cst_21 = arith.constant dense<0.000000e+00> : vector<16x4xf32>
    %33 = tpu.matmul %31, %32, %cst_21 {dimension_numbers = #tpu.dot_dimension_numbers<[1], [0], [0], [1], [0, 0, 1, 1], [], []>} : vector<16x4xbf16>, vector<4x4xbf16>, vector<16x4xf32> -> vector<16x4xf32>
    %c0_22 = arith.constant 0 : index
    %c0_23 = arith.constant 0 : index
    %34 = vector.load %arg12[%c0_22, %c0_23] : memref<16x16xf32, #tpu.memory_space<vmem>>, vector<16x16xf32>
    %35 = arith.truncf %33 : vector<16x4xf32> to vector<16x4xbf16>
    %c0_24 = arith.constant 0 : index
    %c0_25 = arith.constant 0 : index
    %c0_26 = arith.constant 0 : index
    %36 = vector.load %arg9[%c0_24, %c0_25, %c0_26] : memref<1x4x16xbf16, #tpu.memory_space<vmem>>, vector<1x4x16xbf16>
    %37 = vector.shape_cast %36 : vector<1x4x16xbf16> to vector<4x16xbf16>
    %cst_27 = arith.constant dense<0.000000e+00> : vector<16x16xf32>
    %38 = tpu.matmul %35, %37, %cst_27 {dimension_numbers = #tpu.dot_dimension_numbers<[1], [0], [0], [1], [0, 0, 1, 1], [], []>} : vector<16x4xbf16>, vector<4x16xbf16>, vector<16x16xf32> -> vector<16x16xf32>
    %39 = arith.addf %34, %38 : vector<16x16xf32>
    %c0_28 = arith.constant 0 : index
    %c0_29 = arith.constant 0 : index
    %40 = vector.load %arg12[%c0_28, %c0_29] : memref<16x16xf32, #tpu.memory_space<vmem>>, vector<16x16xf32>
    tpu.vector_store %arg12[%c0_28, %c0_29], %39 {strides = array<i32>} : memref<16x16xf32, #tpu.memory_space<vmem>>, vector<16x16xf32>,
    %c1_i32 = arith.constant 1 : i32
    %41 = arith.cmpi eq, %arg2, %c1_i32 : i32
    %42 = arith.extui %41 : i1 to i32
    %c0_i32_30 = arith.constant 0 : i32
    %43 = arith.cmpi ne, %42, %c0_i32_30 : i32
    scf.if %43 {
      %c0_31 = arith.constant 0 : index
      %c0_32 = arith.constant 0 : index
      %44 = vector.load %arg12[%c0_31, %c0_32] : memref<16x16xf32, #tpu.memory_space<vmem>>, vector<16x16xf32>
      %45 = arith.truncf %44 : vector<16x16xf32> to vector<16x16xbf16>
      %c0_33 = arith.constant 0 : index
      %c0_34 = arith.constant 0 : index
      %c0_35 = arith.constant 0 : index
      %46 = vector.load %arg11[%c0_33, %c0_34, %c0_35] : memref<1x16x16xbf16, #tpu.memory_space<vmem>>, vector<1x16x16xbf16>
      %47 = vector.shape_cast %46 : vector<1x16x16xbf16> to vector<16x16xbf16>
      %48 = vector.shape_cast %45 : vector<16x16xbf16> to vector<1x16x16xbf16>
      tpu.vector_store %arg11[%c0_33, %c0_34, %c0_35], %48 {strides = array<i32>} : memref<1x16x16xbf16, #tpu.memory_space<vmem>>, vector<1x16x16xbf16>,
    } else {
    }
    return
  }
  func.func @transform_0(%arg0: i32, %arg1: i32, %arg2: i32) -> (i32, i32, i32) {
    %c0_i32 = arith.constant 0 : i32
    %c0_i32_0 = arith.constant 0 : i32
    return %arg0, %arg1, %c0_i32 : i32, i32, i32
  }
  func.func @transform_1(%arg0: i32, %arg1: i32, %arg2: i32) -> (i32, i32, i32) {
    %c0_i32 = arith.constant 0 : i32
    %c0_i32_0 = arith.constant 0 : i32
    %c0_i32_1 = arith.constant 0 : i32
    return %arg0, %c0_i32, %c0_i32_0 : i32, i32, i32
  }
  func.func @transform_2(%arg0: i32, %arg1: i32, %arg2: i32) -> (i32, i32, i32) {
    %c0_i32 = arith.constant 0 : i32
    %c0_i32_0 = arith.constant 0 : i32
    return %arg0, %arg1, %c0_i32 : i32, i32, i32
  }
  func.func @transform_3(%arg0: i32, %arg1: i32, %arg2: i32) -> (i32, i32, i32) {
    %c0_i32 = arith.constant 0 : i32
    %c0_i32_0 = arith.constant 0 : i32
    %c0_i32_1 = arith.constant 0 : i32
    return %arg2, %c0_i32, %c0_i32_0 : i32, i32, i32
  }
  func.func @transform_4(%arg0: i32, %arg1: i32, %arg2: i32) -> (i32, i32, i32) {
    %c0_i32 = arith.constant 0 : i32
    %c0_i32_0 = arith.constant 0 : i32
    %c0_i32_1 = arith.constant 0 : i32
    return %arg2, %c0_i32, %c0_i32_0 : i32, i32, i32
  }
  func.func @transform_5(%arg0: i32, %arg1: i32, %arg2: i32) -> (i32, i32, i32) {
    %c0_i32 = arith.constant 0 : i32
    %c0_i32_0 = arith.constant 0 : i32
    %c0_i32_1 = arith.constant 0 : i32
    return %arg2, %c0_i32, %c0_i32_0 : i32, i32, i32
  }
  func.func @transform_6(%arg0: i32, %arg1: i32, %arg2: i32) -> (i32, i32, i32) {
    %c0_i32 = arith.constant 0 : i32
    %c0_i32_0 = arith.constant 0 : i32
    %c0_i32_1 = arith.constant 0 : i32
    return %arg2, %c0_i32, %c0_i32_0 : i32, i32, i32
  }
  func.func @transform_7(%arg0: i32, %arg1: i32, %arg2: i32) -> (i32, i32) {
    %c0_i32 = arith.constant 0 : i32
    %c0_i32_0 = arith.constant 0 : i32
    %c0_i32_1 = arith.constant 0 : i32
    return %c0_i32, %c0_i32_0 : i32, i32
  }
  func.func @transform_8(%arg0: i32, %arg1: i32, %arg2: i32) -> (i32, i32, i32) {
    %c0_i32 = arith.constant 0 : i32
    %c0_i32_0 = arith.constant 0 : i32
    return %arg0, %arg1, %c0_i32 : i32, i32, i32
  }
}

module attributes {stable_mosaic.version = 11 : i64} {
  func.func @_peg_kernel(%arg0: i32, %arg1: memref<1x6x6x16xbf16, #tpu.memory_space<vmem>>, %arg2: memref<1x4x4x16xbf16, #tpu.memory_space<vmem>>, %arg3: memref<9x16xf32, #tpu.memory_space<vmem>>, %arg4: memref<1x16xf32, #tpu.memory_space<vmem>>, %arg5: memref<1x4x4x16xbf16, #tpu.memory_space<vmem>>) attributes {dimension_semantics = [#tpu.dimension_semantics<parallel>], iteration_bounds = array<i64: 2>, scalar_prefetch = 0 : i64, scratch_operands = 0 : i64, tpu.core_type = #tpu.core_type<tc>, window_params = [{transform_indices = @transform_0, window_bounds = array<i64: 1, 6, 6, 16>}, {transform_indices = @transform_1, window_bounds = array<i64: 1, 4, 4, 16>}, {pipeline_mode = #tpu.pipeline_mode<synchronous>, transform_indices = @transform_2, window_bounds = array<i64: 9, 16>}, {pipeline_mode = #tpu.pipeline_mode<synchronous>, transform_indices = @transform_3, window_bounds = array<i64: 1, 16>}, {transform_indices = @transform_4, window_bounds = array<i64: 1, 4, 4, 16>}]} {
    %c0 = arith.constant 0 : index
    %c0_0 = arith.constant 0 : index
    %c0_1 = arith.constant 0 : index
    %c0_2 = arith.constant 0 : index
    %0 = vector.load %arg2[%c0, %c0_0, %c0_1, %c0_2] : memref<1x4x4x16xbf16, #tpu.memory_space<vmem>>, vector<1x4x4x16xbf16>
    %1 = vector.shape_cast %0 : vector<1x4x4x16xbf16> to vector<4x4x16xbf16>
    %2 = arith.extf %1 : vector<4x4x16xbf16> to vector<4x4x16xf32>
    %c0_3 = arith.constant 0 : index
    %c0_4 = arith.constant 0 : index
    %3 = vector.load %arg4[%c0_3, %c0_4] : memref<1x16xf32, #tpu.memory_space<vmem>>, vector<1x16xf32>
    %4 = vector.shape_cast %3 : vector<1x16xf32> to vector<16xf32>
    %5 = vector.shape_cast %4 : vector<16xf32> to vector<1x1x16xf32>
    %6 = vector.broadcast %5 : vector<1x1x16xf32> to vector<4x4x16xf32>
    %7 = arith.addf %2, %6 : vector<4x4x16xf32>
    %c0_5 = arith.constant 0 : index
    %c0_6 = arith.constant 0 : index
    %c0_7 = arith.constant 0 : index
    %c0_8 = arith.constant 0 : index
    %8 = vector.load %arg1[%c0_5, %c0_6, %c0_7, %c0_8] : memref<1x6x6x16xbf16, #tpu.memory_space<vmem>>, vector<1x4x4x16xbf16>
    %9 = vector.shape_cast %8 : vector<1x4x4x16xbf16> to vector<4x4x16xbf16>
    %10 = arith.extf %9 : vector<4x4x16xbf16> to vector<4x4x16xf32>
    %c0_9 = arith.constant 0 : index
    %c0_10 = arith.constant 0 : index
    %11 = vector.load %arg3[%c0_9, %c0_10] : memref<9x16xf32, #tpu.memory_space<vmem>>, vector<1x16xf32>
    %12 = vector.shape_cast %11 : vector<1x16xf32> to vector<16xf32>
    %13 = vector.shape_cast %12 : vector<16xf32> to vector<1x1x16xf32>
    %14 = vector.broadcast %13 : vector<1x1x16xf32> to vector<4x4x16xf32>
    %15 = arith.mulf %10, %14 : vector<4x4x16xf32>
    %16 = arith.addf %7, %15 : vector<4x4x16xf32>
    %c0_11 = arith.constant 0 : index
    %c0_12 = arith.constant 0 : index
    %c1 = arith.constant 1 : index
    %c0_13 = arith.constant 0 : index
    %17 = vector.load %arg1[%c0_11, %c0_12, %c1, %c0_13] : memref<1x6x6x16xbf16, #tpu.memory_space<vmem>>, vector<1x4x4x16xbf16>
    %18 = vector.shape_cast %17 : vector<1x4x4x16xbf16> to vector<4x4x16xbf16>
    %19 = arith.extf %18 : vector<4x4x16xbf16> to vector<4x4x16xf32>
    %c1_14 = arith.constant 1 : index
    %c0_15 = arith.constant 0 : index
    %20 = vector.load %arg3[%c1_14, %c0_15] : memref<9x16xf32, #tpu.memory_space<vmem>>, vector<1x16xf32>
    %21 = vector.shape_cast %20 : vector<1x16xf32> to vector<16xf32>
    %22 = vector.shape_cast %21 : vector<16xf32> to vector<1x1x16xf32>
    %23 = vector.broadcast %22 : vector<1x1x16xf32> to vector<4x4x16xf32>
    %24 = arith.mulf %19, %23 : vector<4x4x16xf32>
    %25 = arith.addf %16, %24 : vector<4x4x16xf32>
    %c0_16 = arith.constant 0 : index
    %c0_17 = arith.constant 0 : index
    %c2 = arith.constant 2 : index
    %c0_18 = arith.constant 0 : index
    %26 = vector.load %arg1[%c0_16, %c0_17, %c2, %c0_18] : memref<1x6x6x16xbf16, #tpu.memory_space<vmem>>, vector<1x4x4x16xbf16>
    %27 = vector.shape_cast %26 : vector<1x4x4x16xbf16> to vector<4x4x16xbf16>
    %28 = arith.extf %27 : vector<4x4x16xbf16> to vector<4x4x16xf32>
    %c2_19 = arith.constant 2 : index
    %c0_20 = arith.constant 0 : index
    %29 = vector.load %arg3[%c2_19, %c0_20] : memref<9x16xf32, #tpu.memory_space<vmem>>, vector<1x16xf32>
    %30 = vector.shape_cast %29 : vector<1x16xf32> to vector<16xf32>
    %31 = vector.shape_cast %30 : vector<16xf32> to vector<1x1x16xf32>
    %32 = vector.broadcast %31 : vector<1x1x16xf32> to vector<4x4x16xf32>
    %33 = arith.mulf %28, %32 : vector<4x4x16xf32>
    %34 = arith.addf %25, %33 : vector<4x4x16xf32>
    %c0_21 = arith.constant 0 : index
    %c1_22 = arith.constant 1 : index
    %c0_23 = arith.constant 0 : index
    %c0_24 = arith.constant 0 : index
    %35 = vector.load %arg1[%c0_21, %c1_22, %c0_23, %c0_24] : memref<1x6x6x16xbf16, #tpu.memory_space<vmem>>, vector<1x4x4x16xbf16>
    %36 = vector.shape_cast %35 : vector<1x4x4x16xbf16> to vector<4x4x16xbf16>
    %37 = arith.extf %36 : vector<4x4x16xbf16> to vector<4x4x16xf32>
    %c3 = arith.constant 3 : index
    %c0_25 = arith.constant 0 : index
    %38 = vector.load %arg3[%c3, %c0_25] : memref<9x16xf32, #tpu.memory_space<vmem>>, vector<1x16xf32>
    %39 = vector.shape_cast %38 : vector<1x16xf32> to vector<16xf32>
    %40 = vector.shape_cast %39 : vector<16xf32> to vector<1x1x16xf32>
    %41 = vector.broadcast %40 : vector<1x1x16xf32> to vector<4x4x16xf32>
    %42 = arith.mulf %37, %41 : vector<4x4x16xf32>
    %43 = arith.addf %34, %42 : vector<4x4x16xf32>
    %c0_26 = arith.constant 0 : index
    %c1_27 = arith.constant 1 : index
    %c1_28 = arith.constant 1 : index
    %c0_29 = arith.constant 0 : index
    %44 = vector.load %arg1[%c0_26, %c1_27, %c1_28, %c0_29] : memref<1x6x6x16xbf16, #tpu.memory_space<vmem>>, vector<1x4x4x16xbf16>
    %45 = vector.shape_cast %44 : vector<1x4x4x16xbf16> to vector<4x4x16xbf16>
    %46 = arith.extf %45 : vector<4x4x16xbf16> to vector<4x4x16xf32>
    %c4 = arith.constant 4 : index
    %c0_30 = arith.constant 0 : index
    %47 = vector.load %arg3[%c4, %c0_30] : memref<9x16xf32, #tpu.memory_space<vmem>>, vector<1x16xf32>
    %48 = vector.shape_cast %47 : vector<1x16xf32> to vector<16xf32>
    %49 = vector.shape_cast %48 : vector<16xf32> to vector<1x1x16xf32>
    %50 = vector.broadcast %49 : vector<1x1x16xf32> to vector<4x4x16xf32>
    %51 = arith.mulf %46, %50 : vector<4x4x16xf32>
    %52 = arith.addf %43, %51 : vector<4x4x16xf32>
    %c0_31 = arith.constant 0 : index
    %c1_32 = arith.constant 1 : index
    %c2_33 = arith.constant 2 : index
    %c0_34 = arith.constant 0 : index
    %53 = vector.load %arg1[%c0_31, %c1_32, %c2_33, %c0_34] : memref<1x6x6x16xbf16, #tpu.memory_space<vmem>>, vector<1x4x4x16xbf16>
    %54 = vector.shape_cast %53 : vector<1x4x4x16xbf16> to vector<4x4x16xbf16>
    %55 = arith.extf %54 : vector<4x4x16xbf16> to vector<4x4x16xf32>
    %c5 = arith.constant 5 : index
    %c0_35 = arith.constant 0 : index
    %56 = vector.load %arg3[%c5, %c0_35] : memref<9x16xf32, #tpu.memory_space<vmem>>, vector<1x16xf32>
    %57 = vector.shape_cast %56 : vector<1x16xf32> to vector<16xf32>
    %58 = vector.shape_cast %57 : vector<16xf32> to vector<1x1x16xf32>
    %59 = vector.broadcast %58 : vector<1x1x16xf32> to vector<4x4x16xf32>
    %60 = arith.mulf %55, %59 : vector<4x4x16xf32>
    %61 = arith.addf %52, %60 : vector<4x4x16xf32>
    %c0_36 = arith.constant 0 : index
    %c2_37 = arith.constant 2 : index
    %c0_38 = arith.constant 0 : index
    %c0_39 = arith.constant 0 : index
    %62 = vector.load %arg1[%c0_36, %c2_37, %c0_38, %c0_39] : memref<1x6x6x16xbf16, #tpu.memory_space<vmem>>, vector<1x4x4x16xbf16>
    %63 = vector.shape_cast %62 : vector<1x4x4x16xbf16> to vector<4x4x16xbf16>
    %64 = arith.extf %63 : vector<4x4x16xbf16> to vector<4x4x16xf32>
    %c6 = arith.constant 6 : index
    %c0_40 = arith.constant 0 : index
    %65 = vector.load %arg3[%c6, %c0_40] : memref<9x16xf32, #tpu.memory_space<vmem>>, vector<1x16xf32>
    %66 = vector.shape_cast %65 : vector<1x16xf32> to vector<16xf32>
    %67 = vector.shape_cast %66 : vector<16xf32> to vector<1x1x16xf32>
    %68 = vector.broadcast %67 : vector<1x1x16xf32> to vector<4x4x16xf32>
    %69 = arith.mulf %64, %68 : vector<4x4x16xf32>
    %70 = arith.addf %61, %69 : vector<4x4x16xf32>
    %c0_41 = arith.constant 0 : index
    %c2_42 = arith.constant 2 : index
    %c1_43 = arith.constant 1 : index
    %c0_44 = arith.constant 0 : index
    %71 = vector.load %arg1[%c0_41, %c2_42, %c1_43, %c0_44] : memref<1x6x6x16xbf16, #tpu.memory_space<vmem>>, vector<1x4x4x16xbf16>
    %72 = vector.shape_cast %71 : vector<1x4x4x16xbf16> to vector<4x4x16xbf16>
    %73 = arith.extf %72 : vector<4x4x16xbf16> to vector<4x4x16xf32>
    %c7 = arith.constant 7 : index
    %c0_45 = arith.constant 0 : index
    %74 = vector.load %arg3[%c7, %c0_45] : memref<9x16xf32, #tpu.memory_space<vmem>>, vector<1x16xf32>
    %75 = vector.shape_cast %74 : vector<1x16xf32> to vector<16xf32>
    %76 = vector.shape_cast %75 : vector<16xf32> to vector<1x1x16xf32>
    %77 = vector.broadcast %76 : vector<1x1x16xf32> to vector<4x4x16xf32>
    %78 = arith.mulf %73, %77 : vector<4x4x16xf32>
    %79 = arith.addf %70, %78 : vector<4x4x16xf32>
    %c0_46 = arith.constant 0 : index
    %c2_47 = arith.constant 2 : index
    %c2_48 = arith.constant 2 : index
    %c0_49 = arith.constant 0 : index
    %80 = vector.load %arg1[%c0_46, %c2_47, %c2_48, %c0_49] : memref<1x6x6x16xbf16, #tpu.memory_space<vmem>>, vector<1x4x4x16xbf16>
    %81 = vector.shape_cast %80 : vector<1x4x4x16xbf16> to vector<4x4x16xbf16>
    %82 = arith.extf %81 : vector<4x4x16xbf16> to vector<4x4x16xf32>
    %c8 = arith.constant 8 : index
    %c0_50 = arith.constant 0 : index
    %83 = vector.load %arg3[%c8, %c0_50] : memref<9x16xf32, #tpu.memory_space<vmem>>, vector<1x16xf32>
    %84 = vector.shape_cast %83 : vector<1x16xf32> to vector<16xf32>
    %85 = vector.shape_cast %84 : vector<16xf32> to vector<1x1x16xf32>
    %86 = vector.broadcast %85 : vector<1x1x16xf32> to vector<4x4x16xf32>
    %87 = arith.mulf %82, %86 : vector<4x4x16xf32>
    %88 = arith.addf %79, %87 : vector<4x4x16xf32>
    %89 = arith.truncf %88 : vector<4x4x16xf32> to vector<4x4x16xbf16>
    %c0_51 = arith.constant 0 : index
    %c0_52 = arith.constant 0 : index
    %c0_53 = arith.constant 0 : index
    %c0_54 = arith.constant 0 : index
    %90 = vector.load %arg5[%c0_51, %c0_52, %c0_53, %c0_54] : memref<1x4x4x16xbf16, #tpu.memory_space<vmem>>, vector<1x4x4x16xbf16>
    %91 = vector.shape_cast %90 : vector<1x4x4x16xbf16> to vector<4x4x16xbf16>
    %92 = vector.shape_cast %89 : vector<4x4x16xbf16> to vector<1x4x4x16xbf16>
    tpu.vector_store %arg5[%c0_51, %c0_52, %c0_53, %c0_54], %92 {strides = array<i32>} : memref<1x4x4x16xbf16, #tpu.memory_space<vmem>>, vector<1x4x4x16xbf16>,
    return
  }
  func.func @transform_0(%arg0: i32) -> (i32, i32, i32, i32) {
    %c0_i32 = arith.constant 0 : i32
    %c0_i32_0 = arith.constant 0 : i32
    %c0_i32_1 = arith.constant 0 : i32
    %c0_i32_2 = arith.constant 0 : i32
    return %arg0, %c0_i32, %c0_i32_0, %c0_i32_1 : i32, i32, i32, i32
  }
  func.func @transform_1(%arg0: i32) -> (i32, i32, i32, i32) {
    %c0_i32 = arith.constant 0 : i32
    %c0_i32_0 = arith.constant 0 : i32
    %c0_i32_1 = arith.constant 0 : i32
    %c0_i32_2 = arith.constant 0 : i32
    return %arg0, %c0_i32, %c0_i32_0, %c0_i32_1 : i32, i32, i32, i32
  }
  func.func @transform_2(%arg0: i32) -> (i32, i32) {
    %c0_i32 = arith.constant 0 : i32
    %c0_i32_0 = arith.constant 0 : i32
    %c0_i32_1 = arith.constant 0 : i32
    return %c0_i32, %c0_i32_0 : i32, i32
  }
  func.func @transform_3(%arg0: i32) -> (i32, i32) {
    %c0_i32 = arith.constant 0 : i32
    %c0_i32_0 = arith.constant 0 : i32
    %c0_i32_1 = arith.constant 0 : i32
    return %c0_i32, %c0_i32_0 : i32, i32
  }
  func.func @transform_4(%arg0: i32) -> (i32, i32, i32, i32) {
    %c0_i32 = arith.constant 0 : i32
    %c0_i32_0 = arith.constant 0 : i32
    %c0_i32_1 = arith.constant 0 : i32
    %c0_i32_2 = arith.constant 0 : i32
    return %arg0, %c0_i32, %c0_i32_0, %c0_i32_1 : i32, i32, i32, i32
  }
}

module attributes {stable_mosaic.version = 11 : i64} {
  func.func @_matmul_bias_kernel(%arg0: i32, %arg1: i32, %arg2: i32, %arg3: memref<8x128xbf16, #tpu.memory_space<vmem>>, %arg4: memref<128x128xbf16, #tpu.memory_space<vmem>>, %arg5: memref<1x128xf32, #tpu.memory_space<vmem>>, %arg6: memref<8x128xf32, #tpu.memory_space<vmem>>, %arg7: memref<8x128xf32, #tpu.memory_space<vmem>>) attributes {dimension_semantics = [#tpu.dimension_semantics<parallel>, #tpu.dimension_semantics<parallel>, #tpu.dimension_semantics<arbitrary>], iteration_bounds = array<i64: 1, 1, 1>, scalar_prefetch = 0 : i64, scratch_operands = 1 : i64, tpu.core_type = #tpu.core_type<tc>, window_params = [{transform_indices = @transform_0, window_bounds = array<i64: 8, 128>}, {transform_indices = @transform_1, window_bounds = array<i64: 128, 128>}, {transform_indices = @transform_2, window_bounds = array<i64: 1, 128>}, {transform_indices = @transform_3, window_bounds = array<i64: 8, 128>}]} {
    %c0_i32 = arith.constant 0 : i32
    %0 = arith.cmpi eq, %arg2, %c0_i32 : i32
    %1 = arith.extui %0 : i1 to i32
    %c0_i32_0 = arith.constant 0 : i32
    %2 = arith.cmpi ne, %1, %c0_i32_0 : i32
    scf.if %2 {
      %cst_10 = arith.constant 0.000000e+00 : f32
      %12 = vector.broadcast %cst_10 : f32 to vector<8x128xf32>
      %c0_11 = arith.constant 0 : index
      %c0_12 = arith.constant 0 : index
      %13 = vector.load %arg7[%c0_11, %c0_12] : memref<8x128xf32, #tpu.memory_space<vmem>>, vector<8x128xf32>
      tpu.vector_store %arg7[%c0_11, %c0_12], %12 {strides = array<i32>} : memref<8x128xf32, #tpu.memory_space<vmem>>, vector<8x128xf32>,
    } else {
    }
    %c0 = arith.constant 0 : index
    %c0_1 = arith.constant 0 : index
    %3 = vector.load %arg7[%c0, %c0_1] : memref<8x128xf32, #tpu.memory_space<vmem>>, vector<8x128xf32>
    %c0_2 = arith.constant 0 : index
    %c0_3 = arith.constant 0 : index
    %4 = vector.load %arg3[%c0_2, %c0_3] : memref<8x128xbf16, #tpu.memory_space<vmem>>, vector<8x128xbf16>
    %c0_4 = arith.constant 0 : index
    %c0_5 = arith.constant 0 : index
    %5 = vector.load %arg4[%c0_4, %c0_5] : memref<128x128xbf16, #tpu.memory_space<vmem>>, vector<128x128xbf16>
    %cst = arith.constant dense<0.000000e+00> : vector<8x128xf32>
    %6 = tpu.matmul %4, %5, %cst {dimension_numbers = #tpu.dot_dimension_numbers<[1], [0], [0], [1], [0, 0, 1, 1], [], []>} : vector<8x128xbf16>, vector<128x128xbf16>, vector<8x128xf32> -> vector<8x128xf32>
    %7 = arith.addf %3, %6 : vector<8x128xf32>
    %c0_6 = arith.constant 0 : index
    %c0_7 = arith.constant 0 : index
    %8 = vector.load %arg7[%c0_6, %c0_7] : memref<8x128xf32, #tpu.memory_space<vmem>>, vector<8x128xf32>
    tpu.vector_store %arg7[%c0_6, %c0_7], %7 {strides = array<i32>} : memref<8x128xf32, #tpu.memory_space<vmem>>, vector<8x128xf32>,
    %c0_i32_8 = arith.constant 0 : i32
    %9 = arith.cmpi eq, %arg2, %c0_i32_8 : i32
    %10 = arith.extui %9 : i1 to i32
    %c0_i32_9 = arith.constant 0 : i32
    %11 = arith.cmpi ne, %10, %c0_i32_9 : i32
    scf.if %11 {
      %c0_10 = arith.constant 0 : index
      %c0_11 = arith.constant 0 : index
      %12 = vector.load %arg7[%c0_10, %c0_11] : memref<8x128xf32, #tpu.memory_space<vmem>>, vector<8x128xf32>
      %c0_12 = arith.constant 0 : index
      %c0_13 = arith.constant 0 : index
      %13 = vector.load %arg5[%c0_12, %c0_13] : memref<1x128xf32, #tpu.memory_space<vmem>>, vector<1x128xf32>
      %14 = vector.broadcast %13 : vector<1x128xf32> to vector<8x128xf32>
      %15 = arith.addf %12, %14 : vector<8x128xf32>
      %c0_14 = arith.constant 0 : index
      %c0_15 = arith.constant 0 : index
      %16 = vector.load %arg6[%c0_14, %c0_15] : memref<8x128xf32, #tpu.memory_space<vmem>>, vector<8x128xf32>
      tpu.vector_store %arg6[%c0_14, %c0_15], %15 {strides = array<i32>} : memref<8x128xf32, #tpu.memory_space<vmem>>, vector<8x128xf32>,
    } else {
    }
    return
  }
  func.func @transform_0(%arg0: i32, %arg1: i32, %arg2: i32) -> (i32, i32) {
    %c0_i32 = arith.constant 0 : i32
    return %arg0, %arg2 : i32, i32
  }
  func.func @transform_1(%arg0: i32, %arg1: i32, %arg2: i32) -> (i32, i32) {
    %c0_i32 = arith.constant 0 : i32
    return %arg2, %arg1 : i32, i32
  }
  func.func @transform_2(%arg0: i32, %arg1: i32, %arg2: i32) -> (i32, i32) {
    %c0_i32 = arith.constant 0 : i32
    %c0_i32_0 = arith.constant 0 : i32
    return %c0_i32, %arg1 : i32, i32
  }
  func.func @transform_3(%arg0: i32, %arg1: i32, %arg2: i32) -> (i32, i32) {
    %c0_i32 = arith.constant 0 : i32
    return %arg0, %arg1 : i32, i32
  }
}

module attributes {stable_mosaic.version = 11 : i64} {
  func.func @_layernorm_kernel(%arg0: i32, %arg1: memref<8x16xf32, #tpu.memory_space<vmem>>, %arg2: memref<1x16xf32, #tpu.memory_space<vmem>>, %arg3: memref<1x16xf32, #tpu.memory_space<vmem>>, %arg4: memref<8x16xf32, #tpu.memory_space<vmem>>) attributes {dimension_semantics = [#tpu.dimension_semantics<parallel>], iteration_bounds = array<i64: 1>, scalar_prefetch = 0 : i64, scratch_operands = 0 : i64, tpu.core_type = #tpu.core_type<tc>, window_params = [{transform_indices = @transform_0, window_bounds = array<i64: 8, 16>}, {pipeline_mode = #tpu.pipeline_mode<synchronous>, transform_indices = @transform_1, window_bounds = array<i64: 1, 16>}, {pipeline_mode = #tpu.pipeline_mode<synchronous>, transform_indices = @transform_2, window_bounds = array<i64: 1, 16>}, {transform_indices = @transform_3, window_bounds = array<i64: 8, 16>}]} {
    %c0 = arith.constant 0 : index
    %c0_0 = arith.constant 0 : index
    %0 = vector.load %arg1[%c0, %c0_0] : memref<8x16xf32, #tpu.memory_space<vmem>>, vector<8x16xf32>
    %cst = arith.constant dense<0.000000e+00> : vector<8xf32>
    %1 = vector.multi_reduction <add>, %0, %cst [1] : vector<8x16xf32> to vector<8xf32>
    %2 = vector.shape_cast %1 : vector<8xf32> to vector<8x1xf32>
    %cst_1 = arith.constant 1.600000e+01 : f32
    %3 = vector.broadcast %cst_1 : f32 to vector<8x1xf32>
    %4 = arith.divf %2, %3 : vector<8x1xf32>
    %5 = arith.mulf %0, %0 : vector<8x16xf32>
    %cst_2 = arith.constant dense<0.000000e+00> : vector<8xf32>
    %6 = vector.multi_reduction <add>, %5, %cst_2 [1] : vector<8x16xf32> to vector<8xf32>
    %7 = vector.shape_cast %6 : vector<8xf32> to vector<8x1xf32>
    %cst_3 = arith.constant 1.600000e+01 : f32
    %8 = vector.broadcast %cst_3 : f32 to vector<8x1xf32>
    %9 = arith.divf %7, %8 : vector<8x1xf32>
    %10 = arith.mulf %4, %4 : vector<8x1xf32>
    %11 = arith.subf %9, %10 : vector<8x1xf32>
    %12 = vector.broadcast %4 : vector<8x1xf32> to vector<8x16xf32>
    %13 = arith.subf %0, %12 : vector<8x16xf32>
    %cst_4 = arith.constant 9.99999974E-6 : f32
    %14 = vector.broadcast %cst_4 : f32 to vector<8x1xf32>
    %15 = arith.addf %11, %14 : vector<8x1xf32>
    %16 = math.rsqrt %15 : vector<8x1xf32>
    %17 = vector.broadcast %16 : vector<8x1xf32> to vector<8x16xf32>
    %18 = arith.mulf %13, %17 : vector<8x16xf32>
    %c0_5 = arith.constant 0 : index
    %c0_6 = arith.constant 0 : index
    %19 = vector.load %arg2[%c0_5, %c0_6] : memref<1x16xf32, #tpu.memory_space<vmem>>, vector<1x16xf32>
    %20 = vector.broadcast %19 : vector<1x16xf32> to vector<8x16xf32>
    %21 = arith.mulf %18, %20 : vector<8x16xf32>
    %c0_7 = arith.constant 0 : index
    %c0_8 = arith.constant 0 : index
    %22 = vector.load %arg3[%c0_7, %c0_8] : memref<1x16xf32, #tpu.memory_space<vmem>>, vector<1x16xf32>
    %23 = vector.broadcast %22 : vector<1x16xf32> to vector<8x16xf32>
    %24 = arith.addf %21, %23 : vector<8x16xf32>
    %c0_9 = arith.constant 0 : index
    %c0_10 = arith.constant 0 : index
    %25 = vector.load %arg4[%c0_9, %c0_10] : memref<8x16xf32, #tpu.memory_space<vmem>>, vector<8x16xf32>
    tpu.vector_store %arg4[%c0_9, %c0_10], %24 {strides = array<i32>} : memref<8x16xf32, #tpu.memory_space<vmem>>, vector<8x16xf32>,
    return
  }
  func.func @transform_0(%arg0: i32) -> (i32, i32) {
    %c0_i32 = arith.constant 0 : i32
    %c0_i32_0 = arith.constant 0 : i32
    return %arg0, %c0_i32 : i32, i32
  }
  func.func @transform_1(%arg0: i32) -> (i32, i32) {
    %c0_i32 = arith.constant 0 : i32
    %c0_i32_0 = arith.constant 0 : i32
    %c0_i32_1 = arith.constant 0 : i32
    return %c0_i32, %c0_i32_0 : i32, i32
  }
  func.func @transform_2(%arg0: i32) -> (i32, i32) {
    %c0_i32 = arith.constant 0 : i32
    %c0_i32_0 = arith.constant 0 : i32
    %c0_i32_1 = arith.constant 0 : i32
    return %c0_i32, %c0_i32_0 : i32, i32
  }
  func.func @transform_3(%arg0: i32) -> (i32, i32) {
    %c0_i32 = arith.constant 0 : i32
    %c0_i32_0 = arith.constant 0 : i32
    return %arg0, %c0_i32 : i32, i32
  }
}

</mosaic_0001>

<llo_original>
// kernel: scalable_vit_forward.14
$region0: #{scalable_vit_forward.14}
  #allocation0 [shape = 'u32[]', space=smem, size = 0x4, offset = 0x4, fixed_abs, tag = 'smem constant byte address 0x4 - core index']
  #allocation1 [shape = 'u32[144,128]{1,0:T(1,128)}', space=vmem, size = 0x12000, scoped, tag = 'internal scratch']
  %s0 = inlined_call_operand.vmem [shape: bf16[128,8], index: 0, kind: input, shape index: {}]
  %s1 = inlined_call_operand.vmem [shape: f32[1,8], index: 1, kind: input, shape index: {}]
  %s2 = inlined_call_operand.vmem [shape: f32[1,8], index: 2, kind: input, shape index: {}]
  %s3 = inlined_call_operand.vmem [shape: bf16[128,8], index: 3, kind: output, shape index: {}]
  %s4 = sld [smem:[#allocation0]]
  $region22: #{scalable_vit_forward.14} parent=0
    _
  %s6 = ssub.s32 1, %s4
  %s7 = scalar_select 0, %s6, %s4
  // Predicated region
  $region2: #{scalable_vit_forward.14} parent=0 // pred_check
    _
  $region3: #{scalable_vit_forward.14} parent=0 // pred_check_branch
    %9 = sbr.rel (0) target = $region5
  $region4: #{scalable_vit_forward.14} parent=0 // pred_region
    _
  $region5: #{scalable_vit_forward.14} parent=0 // pred_fallthru
    _
  // Predicated region
  $region6: #{scalable_vit_forward.14} parent=0 // pred_check
    _
  $region7: #{scalable_vit_forward.14} parent=0 // pred_check_branch
    %11 = sbr.rel (0) target = $region9
  $region8: #{scalable_vit_forward.14} parent=0 // pred_region
    _
  $region9: #{scalable_vit_forward.14} parent=0 // pred_fallthru
    _
  // Predicated region
  $region10: #{scalable_vit_forward.14} parent=0 // pred_check
    _
  $region11: #{scalable_vit_forward.14} parent=0 // pred_check_branch
    %13 = sbr.rel (0) target = $region13
  $region12: #{scalable_vit_forward.14} parent=0 // pred_region
    _
  $region13: #{scalable_vit_forward.14} parent=0 // pred_fallthru
    _
  %v14 = vld [vmem:[%s0] sm:$0xf]
  %v15 = vld [vmem:[%s0 + $0x4] sm:$0xf]
  %v16 = vld [vmem:[%s0 + $0x8] sm:$0xf]
  %v17 = vld [vmem:[%s0 + $0xc] sm:$0xf]
  %v18 = vld [vmem:[%s0 + $0x10] sm:$0xf]
  %v19 = vld [vmem:[%s0 + $0x14] sm:$0xf]
  %v20 = vld [vmem:[%s0 + $0x18] sm:$0xf]
  %v21 = vld [vmem:[%s0 + $0x1c] sm:$0xf]
  %v22 = vld [vmem:[%s0 + $0x20] sm:$0xf]
  %v23 = vld [vmem:[%s0 + $0x24] sm:$0xf]
  %v24 = vld [vmem:[%s0 + $0x28] sm:$0xf]
  %v25 = vld [vmem:[%s0 + $0x2c] sm:$0xf]
  %v26 = vld [vmem:[%s0 + $0x30] sm:$0xf]
  %v27 = vld [vmem:[%s0 + $0x34] sm:$0xf]
  %v28 = vld [vmem:[%s0 + $0x38] sm:$0xf]
  %v29 = vld [vmem:[%s0 + $0x3c] sm:$0xf]
  %v30 = vunpack.c.l.bf16 %v14
  %v31 = vunpack.c.l.bf16 %v15
  %v32 = vunpack.c.l.bf16 %v16
  %v33 = vunpack.c.l.bf16 %v17
  %v34 = vunpack.c.l.bf16 %v18
  %v35 = vunpack.c.l.bf16 %v19
  %v36 = vunpack.c.l.bf16 %v20
  %v37 = vunpack.c.l.bf16 %v21
  %v38 = vunpack.c.l.bf16 %v22
  %v39 = vunpack.c.l.bf16 %v23
  %v40 = vunpack.c.l.bf16 %v24
  %v41 = vunpack.c.l.bf16 %v25
  %v42 = vunpack.c.l.bf16 %v26
  %v43 = vunpack.c.l.bf16 %v27
  %v44 = vunpack.c.l.bf16 %v28
  %v45 = vunpack.c.l.bf16 %v29
  %vm46 = vcmask 64512
  %v47 = vsel %vm46, %v30, 0.0
  %48 = vadd.xlane.f32.xlu0 %v47
  %v49 = vpop.xlane.xlu0 %48
  %v50 = vsel %vm46, %v31, 0.0
  %51 = vadd.xlane.f32.xlu0 %v50
  %v52 = vpop.xlane.xlu0 %51
  %v53 = vsel %vm46, %v32, 0.0
  %54 = vadd.xlane.f32.xlu0 %v53
  %v55 = vpop.xlane.xlu0 %54
  %v56 = vsel %vm46, %v33, 0.0
  %57 = vadd.xlane.f32.xlu0 %v56
  %v58 = vpop.xlane.xlu0 %57
  %v59 = vsel %vm46, %v34, 0.0
  %60 = vadd.xlane.f32.xlu0 %v59
  %v61 = vpop.xlane.xlu0 %60
  %v62 = vsel %vm46, %v35, 0.0
  %63 = vadd.xlane.f32.xlu0 %v62
  %v64 = vpop.xlane.xlu0 %63
  %v65 = vsel %vm46, %v36, 0.0
  %66 = vadd.xlane.f32.xlu0 %v65
  %v67 = vpop.xlane.xlu0 %66
  %v68 = vsel %vm46, %v37, 0.0
  %69 = vadd.xlane.f32.xlu0 %v68
  %v70 = vpop.xlane.xlu0 %69
  %v71 = vsel %vm46, %v38, 0.0
  %72 = vadd.xlane.f32.xlu0 %v71
  %v73 = vpop.xlane.xlu0 %72
  %v74 = vsel %vm46, %v39, 0.0
  %75 = vadd.xlane.f32.xlu0 %v74
  %v76 = vpop.xlane.xlu0 %75
  %v77 = vsel %vm46, %v40, 0.0
  %78 = vadd.xlane.f32.xlu0 %v77
  %v79 = vpop.xlane.xlu0 %78
  %v80 = vsel %vm46, %v41, 0.0
  %81 = vadd.xlane.f32.xlu0 %v80
  %v82 = vpop.xlane.xlu0 %81
  %v83 = vsel %vm46, %v42, 0.0
  %84 = vadd.xlane.f32.xlu0 %v83
  %v85 = vpop.xlane.xlu0 %84
  %v86 = vsel %vm46, %v43, 0.0
  %87 = vadd.xlane.f32.xlu0 %v86
  %v88 = vpop.xlane.xlu0 %87
  %v89 = vsel %vm46, %v44, 0.0
  %90 = vadd.xlane.f32.xlu0 %v89
  %v91 = vpop.xlane.xlu0 %90
  %v92 = vsel %vm46, %v45, 0.0
  %93 = vadd.xlane.f32.xlu0 %v92
  %v94 = vpop.xlane.xlu0 %93
  %v95 = vrcp.pop 8.0
  %v96 = vmul.f32 %v49, %v95
  %v97 = vmul.f32 %v52, %v95
  %v98 = vmul.f32 %v55, %v95
  %v99 = vmul.f32 %v58, %v95
  %v100 = vmul.f32 %v61, %v95
  %v101 = vmul.f32 %v64, %v95
  %v102 = vmul.f32 %v67, %v95
  %v103 = vmul.f32 %v70, %v95
  %v104 = vmul.f32 %v73, %v95
  %v105 = vmul.f32 %v76, %v95
  %v106 = vmul.f32 %v79, %v95
  %v107 = vmul.f32 %v82, %v95
  %v108 = vmul.f32 %v85, %v95
  %v109 = vmul.f32 %v88, %v95
  %v110 = vmul.f32 %v91, %v95
  %v111 = vmul.f32 %v94, %v95
  %v112 = vmul.f32 %v30, %v30
  %v113 = vmul.f32 %v31, %v31
  %v114 = vmul.f32 %v32, %v32
  %v115 = vmul.f32 %v33, %v33
  %v116 = vmul.f32 %v34, %v34
  %v117 = vmul.f32 %v35, %v35
  %v118 = vmul.f32 %v36, %v36
  %v119 = vmul.f32 %v37, %v37
  %v120 = vmul.f32 %v38, %v38
  %v121 = vmul.f32 %v39, %v39
  %v122 = vmul.f32 %v40, %v40
  %v123 = vmul.f32 %v41, %v41
  %v124 = vmul.f32 %v42, %v42
  %v125 = vmul.f32 %v43, %v43
  %v126 = vmul.f32 %v44, %v44
  %v127 = vmul.f32 %v45, %v45
  %v128 = vsel %vm46, %v112, 0.0
  %129 = vadd.xlane.f32.xlu0 %v128
  %v130 = vpop.xlane.xlu0 %129
  %v131 = vsel %vm46, %v113, 0.0
  %132 = vadd.xlane.f32.xlu0 %v131
  %v133 = vpop.xlane.xlu0 %132
  %v134 = vsel %vm46, %v114, 0.0
  %135 = vadd.xlane.f32.xlu0 %v134
  %v136 = vpop.xlane.xlu0 %135
  %v137 = vsel %vm46, %v115, 0.0
  %138 = vadd.xlane.f32.xlu0 %v137
  %v139 = vpop.xlane.xlu0 %138
  %v140 = vsel %vm46, %v116, 0.0
  %141 = vadd.xlane.f32.xlu0 %v140
  %v142 = vpop.xlane.xlu0 %141
  %v143 = vsel %vm46, %v117, 0.0
  %144 = vadd.xlane.f32.xlu0 %v143
  %v145 = vpop.xlane.xlu0 %144
  %v146 = vsel %vm46, %v118, 0.0
  %147 = vadd.xlane.f32.xlu0 %v146
  %v148 = vpop.xlane.xlu0 %147
  %v149 = vsel %vm46, %v119, 0.0
  %150 = vadd.xlane.f32.xlu0 %v149
  %v151 = vpop.xlane.xlu0 %150
  %v152 = vsel %vm46, %v120, 0.0
  %153 = vadd.xlane.f32.xlu0 %v152
  %v154 = vpop.xlane.xlu0 %153
  %v155 = vsel %vm46, %v121, 0.0
  %156 = vadd.xlane.f32.xlu0 %v155
  %v157 = vpop.xlane.xlu0 %156
  %v158 = vsel %vm46, %v122, 0.0
  %159 = vadd.xlane.f32.xlu0 %v158
  %v160 = vpop.xlane.xlu0 %159
  %v161 = vsel %vm46, %v123, 0.0
  %162 = vadd.xlane.f32.xlu0 %v161
  %v163 = vpop.xlane.xlu0 %162
  %v164 = vsel %vm46, %v124, 0.0
  %165 = vadd.xlane.f32.xlu0 %v164
  %v166 = vpop.xlane.xlu0 %165
  %v167 = vsel %vm46, %v125, 0.0
  %168 = vadd.xlane.f32.xlu0 %v167
  %v169 = vpop.xlane.xlu0 %168
  %v170 = vsel %vm46, %v126, 0.0
  %171 = vadd.xlane.f32.xlu0 %v170
  %v172 = vpop.xlane.xlu0 %171
  %v173 = vsel %vm46, %v127, 0.0
  %174 = vadd.xlane.f32.xlu0 %v173
  %v175 = vpop.xlane.xlu0 %174
  %v176 = vmul.f32 %v130, %v95
  %v177 = vmul.f32 %v133, %v95
  %v178 = vmul.f32 %v136, %v95
  %v179 = vmul.f32 %v139, %v95
  %v180 = vmul.f32 %v142, %v95
  %v181 = vmul.f32 %v145, %v95
  %v182 = vmul.f32 %v148, %v95
  %v183 = vmul.f32 %v151, %v95
  %v184 = vmul.f32 %v154, %v95
  %v185 = vmul.f32 %v157, %v95
  %v186 = vmul.f32 %v160, %v95
  %v187 = vmul.f32 %v163, %v95
  %v188 = vmul.f32 %v166, %v95
  %v189 = vmul.f32 %v169, %v95
  %v190 = vmul.f32 %v172, %v95
  %v191 = vmul.f32 %v175, %v95
  %v192 = vmul.f32 %v96, %v96
  %v193 = vmul.f32 %v97, %v97
  %v194 = vmul.f32 %v98, %v98
  %v195 = vmul.f32 %v99, %v99
  %v196 = vmul.f32 %v100, %v100
  %v197 = vmul.f32 %v101, %v101
  %v198 = vmul.f32 %v102, %v102
  %v199 = vmul.f32 %v103, %v103
  %v200 = vmul.f32 %v104, %v104
  %v201 = vmul.f32 %v105, %v105
  %v202 = vmul.f32 %v106, %v106
  %v203 = vmul.f32 %v107, %v107
  %v204 = vmul.f32 %v108, %v108
  %v205 = vmul.f32 %v109, %v109
  %v206 = vmul.f32 %v110, %v110
  %v207 = vmul.f32 %v111, %v111
  %v208 = vsub.f32 %v176, %v192
  %v209 = vsub.f32 %v177, %v193
  %v210 = vsub.f32 %v178, %v194
  %v211 = vsub.f32 %v179, %v195
  %v212 = vsub.f32 %v180, %v196
  %v213 = vsub.f32 %v181, %v197
  %v214 = vsub.f32 %v182, %v198
  %v215 = vsub.f32 %v183, %v199
  %v216 = vsub.f32 %v184, %v200
  %v217 = vsub.f32 %v185, %v201
  %v218 = vsub.f32 %v186, %v202
  %v219 = vsub.f32 %v187, %v203
  %v220 = vsub.f32 %v188, %v204
  %v221 = vsub.f32 %v189, %v205
  %v222 = vsub.f32 %v190, %v206
  %v223 = vsub.f32 %v191, %v207
  %v224 = vsub.f32 %v30, %v96
  %v225 = vsub.f32 %v31, %v97
  %v226 = vsub.f32 %v32, %v98
  %v227 = vsub.f32 %v33, %v99
  %v228 = vsub.f32 %v34, %v100
  %v229 = vsub.f32 %v35, %v101
  %v230 = vsub.f32 %v36, %v102
  %v231 = vsub.f32 %v37, %v103
  %v232 = vsub.f32 %v38, %v104
  %v233 = vsub.f32 %v39, %v105
  %v234 = vsub.f32 %v40, %v106
  %v235 = vsub.f32 %v41, %v107
  %v236 = vsub.f32 %v42, %v108
  %v237 = vsub.f32 %v43, %v109
  %v238 = vsub.f32 %v44, %v110
  %v239 = vsub.f32 %v45, %v111
  %v240 = vadd.f32 %v208, 1e-05
  %v241 = vadd.f32 %v209, 1e-05
  %v242 = vadd.f32 %v210, 1e-05
  %v243 = vadd.f32 %v211, 1e-05
  %v244 = vadd.f32 %v212, 1e-05
  %v245 = vadd.f32 %v213, 1e-05
  %v246 = vadd.f32 %v214, 1e-05
  %v247 = vadd.f32 %v215, 1e-05
  %v248 = vadd.f32 %v216, 1e-05
  %v249 = vadd.f32 %v217, 1e-05
  %v250 = vadd.f32 %v218, 1e-05
  %v251 = vadd.f32 %v219, 1e-05
  %v252 = vadd.f32 %v220, 1e-05
  %v253 = vadd.f32 %v221, 1e-05
  %v254 = vadd.f32 %v222, 1e-05
  %v255 = vadd.f32 %v223, 1e-05
  %v256 = vrsqrt.pop %v240
  %v257 = vrsqrt.pop %v241
  %v258 = vrsqrt.pop %v242
  %v259 = vrsqrt.pop %v243
  %v260 = vrsqrt.pop %v244
  %v261 = vrsqrt.pop %v245
  %v262 = vrsqrt.pop %v246
  %v263 = vrsqrt.pop %v247
  %v264 = vrsqrt.pop %v248
  %v265 = vrsqrt.pop %v249
  %v266 = vrsqrt.pop %v250
  %v267 = vrsqrt.pop %v251
  %v268 = vrsqrt.pop %v252
  %v269 = vrsqrt.pop %v253
  %v270 = vrsqrt.pop %v254
  %v271 = vrsqrt.pop %v255
  %v272 = vmul.f32 %v224, %v256
  %v273 = vmul.f32 %v225, %v257
  %v274 = vmul.f32 %v226, %v258
  %v275 = vmul.f32 %v227, %v259
  %v276 = vmul.f32 %v228, %v260
  %v277 = vmul.f32 %v229, %v261
  %v278 = vmul.f32 %v230, %v262
  %v279 = vmul.f32 %v231, %v263
  %v280 = vmul.f32 %v232, %v264
  %v281 = vmul.f32 %v233, %v265
  %v282 = vmul.f32 %v234, %v266
  %v283 = vmul.f32 %v235, %v267
  %v284 = vmul.f32 %v236, %v268
  %v285 = vmul.f32 %v237, %v269
  %v286 = vmul.f32 %v238, %v270
  %v287 = vmul.f32 %v239, %v271
  %v288 = vld [vmem:[%s1] sm:$0x1]
  %v290 = vlaneseq
  %v291 = vshrl.u32 %v290, 7
  %v292 = vsub.s32 0, %v291
  %v293 = vrot.slane %v288, %v292
  %v295 = vmul.f32 %v272, %v293
  %v296 = vmul.f32 %v273, %v293
  %v297 = vmul.f32 %v274, %v293
  %v298 = vmul.f32 %v275, %v293
  %v299 = vmul.f32 %v276, %v293
  %v300 = vmul.f32 %v277, %v293
  %v301 = vmul.f32 %v278, %v293
  %v302 = vmul.f32 %v279, %v293
  %v303 = vmul.f32 %v280, %v293
  %v304 = vmul.f32 %v281, %v293
  %v305 = vmul.f32 %v282, %v293
  %v306 = vmul.f32 %v283, %v293
  %v307 = vmul.f32 %v284, %v293
  %v308 = vmul.f32 %v285, %v293
  %v309 = vmul.f32 %v286, %v293
  %v310 = vmul.f32 %v287, %v293
  %v311 = vld [vmem:[%s2] sm:$0x1]
  %v313 = vlaneseq
  %v314 = vshrl.u32 %v313, 7
  %v315 = vsub.s32 0, %v314
  %v316 = vrot.slane %v311, %v315
  %v318 = vadd.f32 %v295, %v316
  %v319 = vadd.f32 %v296, %v316
  %v320 = vadd.f32 %v297, %v316
  %v321 = vadd.f32 %v298, %v316
  %v322 = vadd.f32 %v299, %v316
  %v323 = vadd.f32 %v300, %v316
  %v324 = vadd.f32 %v301, %v316
  %v325 = vadd.f32 %v302, %v316
  %v326 = vadd.f32 %v303, %v316
  %v327 = vadd.f32 %v304, %v316
  %v328 = vadd.f32 %v305, %v316
  %v329 = vadd.f32 %v306, %v316
  %v330 = vadd.f32 %v307, %v316
  %v331 = vadd.f32 %v308, %v316
  %v332 = vadd.f32 %v309, %v316
  %v333 = vadd.f32 %v310, %v316
  %v334 = vpack.c.bf16 %v319, %v318
  %v335 = vpack.c.bf16 %v321, %v320
  %v336 = vpack.c.bf16 %v323, %v322
  %v337 = vpack.c.bf16 %v325, %v324
  %v338 = vpack.c.bf16 %v327, %v326
  %v339 = vpack.c.bf16 %v329, %v328
  %v340 = vpack.c.bf16 %v331, %v330
  %v341 = vpack.c.bf16 %v333, %v332
  %v350 = vunpack.c.l.b16 %v334
  %v351 = vunpack.c.h.b16 %v334
  %v352 = vunpack.c.l.b16 %v335
  %v353 = vunpack.c.h.b16 %v335
  %v354 = vunpack.c.l.b16 %v336
  %v355 = vunpack.c.h.b16 %v336
  %v356 = vunpack.c.l.b16 %v337
  %v357 = vunpack.c.h.b16 %v337
  %v358 = vunpack.c.l.b16 %v338
  %v359 = vunpack.c.h.b16 %v338
  %v360 = vunpack.c.l.b16 %v339
  %v361 = vunpack.c.h.b16 %v339
  %v362 = vunpack.c.l.b16 %v340
  %v363 = vunpack.c.h.b16 %v340
  %v364 = vunpack.c.l.b16 %v341
  %v365 = vunpack.c.h.b16 %v341
  %v366 = vpack.c.b16 %v350, %v350
  %v367 = vpack.c.b16 %v351, %v351
  %v368 = vpack.c.b16 %v352, %v352
  %v369 = vpack.c.b16 %v353, %v353
  %v370 = vpack.c.b16 %v354, %v354
  %v371 = vpack.c.b16 %v355, %v355
  %v372 = vpack.c.b16 %v356, %v356
  %v373 = vpack.c.b16 %v357, %v357
  %v374 = vpack.c.b16 %v358, %v358
  %v375 = vpack.c.b16 %v359, %v359
  %v376 = vpack.c.b16 %v360, %v360
  %v377 = vpack.c.b16 %v361, %v361
  %v378 = vpack.c.b16 %v362, %v362
  %v379 = vpack.c.b16 %v363, %v363
  %v380 = vpack.c.b16 %v364, %v364
  %v381 = vpack.c.b16 %v365, %v365
  %vm398 = vcmask 60416
  %399 = vst.msk [vmem:[%s3] sm:$0xf] %vm398, %v366
  %400 = vst.msk [vmem:[%s3 + $0x4] sm:$0xf] %vm398, %v367
  %401 = vst.msk [vmem:[%s3 + $0x8] sm:$0xf] %vm398, %v368
  %402 = vst.msk [vmem:[%s3 + $0xc] sm:$0xf] %vm398, %v369
  %403 = vst.msk [vmem:[%s3 + $0x10] sm:$0xf] %vm398, %v370
  %404 = vst.msk [vmem:[%s3 + $0x14] sm:$0xf] %vm398, %v371
  %405 = vst.msk [vmem:[%s3 + $0x18] sm:$0xf] %vm398, %v372
  %406 = vst.msk [vmem:[%s3 + $0x1c] sm:$0xf] %vm398, %v373
  %407 = vst.msk [vmem:[%s3 + $0x20] sm:$0xf] %vm398, %v374
  %408 = vst.msk [vmem:[%s3 + $0x24] sm:$0xf] %vm398, %v375
  %409 = vst.msk [vmem:[%s3 + $0x28] sm:$0xf] %vm398, %v376
  %410 = vst.msk [vmem:[%s3 + $0x2c] sm:$0xf] %vm398, %v377
  %411 = vst.msk [vmem:[%s3 + $0x30] sm:$0xf] %vm398, %v378
  %412 = vst.msk [vmem:[%s3 + $0x34] sm:$0xf] %vm398, %v379
  %413 = vst.msk [vmem:[%s3 + $0x38] sm:$0xf] %vm398, %v380
  %414 = vst.msk [vmem:[%s3 + $0x3c] sm:$0xf] %vm398, %v381
  // Predicated region
  $region14: #{scalable_vit_forward.14} parent=0 // pred_check
    _
  $region15: #{scalable_vit_forward.14} parent=0 // pred_check_branch
    %416 = sbr.rel (0) target = $region17
  $region16: #{scalable_vit_forward.14} parent=0 // pred_region
    _
  $region17: #{scalable_vit_forward.14} parent=0 // pred_fallthru
    _
  // Predicated region
  $region18: #{scalable_vit_forward.14} parent=0 // pred_check
    _
  $region19: #{scalable_vit_forward.14} parent=0 // pred_check_branch
    %418 = sbr.rel (0) target = $region21
  $region20: #{scalable_vit_forward.14} parent=0 // pred_region
    _
  $region21: #{scalable_vit_forward.14} parent=0 // pred_fallthru
    _

// kernel: scalable_vit_forward.13
$region0: #{scalable_vit_forward.13}
  #allocation0 [shape = 'u32[]', space=smem, size = 0x4, offset = 0x4, fixed_abs, tag = 'smem constant byte address 0x4 - core index']
  #allocation1 [shape = 'u32[144,128]{1,0:T(1,128)}', space=vmem, size = 0x12000, scoped, tag = 'internal scratch']
  #allocation2 [shape = 'f32[128,128]{1,0:T(8,128)}', space=vmem, size = 0x10000, scoped, tag = 'scratch operand']
  %s0 = inlined_call_operand.vmem [shape: bf16[128,256], index: 0, kind: input, shape index: {}]
  %s1 = inlined_call_operand.vmem [shape: bf16[256,128], index: 1, kind: input, shape index: {}]
  %s2 = inlined_call_operand.vmem [shape: f32[1,128], index: 2, kind: input, shape index: {}]
  %s3 = inlined_call_operand.vmem [shape: bf16[128,128], index: 3, kind: output, shape index: {}]
  %s4 = sld [smem:[#allocation0]]
  $region30: #{scalable_vit_forward.13} parent=0
    _
  %s6 = ssub.s32 1, %s4
  %s7 = scalar_select 0, %s6, %s4
  // Predicated region
  $region2: #{scalable_vit_forward.13} parent=0 // pred_check
    _
  $region3: #{scalable_vit_forward.13} parent=0 // pred_check_branch
    %9 = sbr.rel (0) target = $region5
  $region4: #{scalable_vit_forward.13} parent=0 // pred_region
    _
  $region5: #{scalable_vit_forward.13} parent=0 // pred_fallthru
    _
  // Predicated region
  $region6: #{scalable_vit_forward.13} parent=0 // pred_check
    _
  $region7: #{scalable_vit_forward.13} parent=0 // pred_check_branch
    %11 = sbr.rel (0) target = $region9
  $region8: #{scalable_vit_forward.13} parent=0 // pred_region
    _
  $region9: #{scalable_vit_forward.13} parent=0 // pred_fallthru
    _
  // Predicated region
  $region10: #{scalable_vit_forward.13} parent=0 // pred_check
    _
  $region11: #{scalable_vit_forward.13} parent=0 // pred_check_branch
    %13 = sbr.rel (0) target = $region13
  $region12: #{scalable_vit_forward.13} parent=0 // pred_region
    _
  $region13: #{scalable_vit_forward.13} parent=0 // pred_fallthru
    _
  %p15 = scmp.eq.s32.totalorder 0, 0
  // Predicated region
  $region14: #{scalable_vit_forward.13} parent=0 // pred_check
    %p16 = pneg %p15
  $region15: #{scalable_vit_forward.13} parent=0 // pred_check_branch
    %18 = sbr.rel (%p16) target = $region17
  $region16: #{scalable_vit_forward.13} parent=0 // pred_region
    %19 = vst [vmem:[#allocation2] sm:$0xff] 0.0
    %20 = vst [vmem:[#allocation2 + $0x8] sm:$0xff] 0.0
    %21 = vst [vmem:[#allocation2 + $0x10] sm:$0xff] 0.0
    %22 = vst [vmem:[#allocation2 + $0x18] sm:$0xff] 0.0
    %23 = vst [vmem:[#allocation2 + $0x20] sm:$0xff] 0.0
    %24 = vst [vmem:[#allocation2 + $0x28] sm:$0xff] 0.0
    %25 = vst [vmem:[#allocation2 + $0x30] sm:$0xff] 0.0
    %26 = vst [vmem:[#allocation2 + $0x38] sm:$0xff] 0.0
    %27 = vst [vmem:[#allocation2 + $0x40] sm:$0xff] 0.0
    %28 = vst [vmem:[#allocation2 + $0x48] sm:$0xff] 0.0
    %29 = vst [vmem:[#allocation2 + $0x50] sm:$0xff] 0.0
    %30 = vst [vmem:[#allocation2 + $0x58] sm:$0xff] 0.0
    %31 = vst [vmem:[#allocation2 + $0x60] sm:$0xff] 0.0
    %32 = vst [vmem:[#allocation2 + $0x68] sm:$0xff] 0.0
    %33 = vst [vmem:[#allocation2 + $0x70] sm:$0xff] 0.0
    %34 = vst [vmem:[#allocation2 + $0x78] sm:$0xff] 0.0
  $region17: #{scalable_vit_forward.13} parent=0 // pred_fallthru
    _
  %v35 = vld [vmem:[#allocation2] sm:$0xff]
  %v36 = vld [vmem:[#allocation2 + $0x8] sm:$0xff]
  %v37 = vld [vmem:[#allocation2 + $0x10] sm:$0xff]
  %v38 = vld [vmem:[#allocation2 + $0x18] sm:$0xff]
  %v39 = vld [vmem:[#allocation2 + $0x20] sm:$0xff]
  %v40 = vld [vmem:[#allocation2 + $0x28] sm:$0xff]
  %v41 = vld [vmem:[#allocation2 + $0x30] sm:$0xff]
  %v42 = vld [vmem:[#allocation2 + $0x38] sm:$0xff]
  %v43 = vld [vmem:[#allocation2 + $0x40] sm:$0xff]
  %v44 = vld [vmem:[#allocation2 + $0x48] sm:$0xff]
  %v45 = vld [vmem:[#allocation2 + $0x50] sm:$0xff]
  %v46 = vld [vmem:[#allocation2 + $0x58] sm:$0xff]
  %v47 = vld [vmem:[#allocation2 + $0x60] sm:$0xff]
  %v48 = vld [vmem:[#allocation2 + $0x68] sm:$0xff]
  %v49 = vld [vmem:[#allocation2 + $0x70] sm:$0xff]
  %v50 = vld [vmem:[#allocation2 + $0x78] sm:$0xff]
  %v51 = vld [vmem:[%s0] sm:$0xff]
  %v52 = vld [vmem:[%s0 + $0x8] sm:$0xff]
  %v53 = vld [vmem:[%s0 + $0x10] sm:$0xff]
  %v54 = vld [vmem:[%s0 + $0x18] sm:$0xff]
  %v55 = vld [vmem:[%s0 + $0x20] sm:$0xff]
  %v56 = vld [vmem:[%s0 + $0x28] sm:$0xff]
  %v57 = vld [vmem:[%s0 + $0x30] sm:$0xff]
  %v58 = vld [vmem:[%s0 + $0x38] sm:$0xff]
  %v59 = vld [vmem:[%s0 + $0x40] sm:$0xff]
  %v60 = vld [vmem:[%s0 + $0x48] sm:$0xff]
  %v61 = vld [vmem:[%s0 + $0x50] sm:$0xff]
  %v62 = vld [vmem:[%s0 + $0x58] sm:$0xff]
  %v63 = vld [vmem:[%s0 + $0x60] sm:$0xff]
  %v64 = vld [vmem:[%s0 + $0x68] sm:$0xff]
  %v65 = vld [vmem:[%s0 + $0x70] sm:$0xff]
  %v66 = vld [vmem:[%s0 + $0x78] sm:$0xff]
  %v67 = vld [vmem:[%s1] sm:$0xf]
  %v68 = vld [vmem:[%s1 + $0x4] sm:$0xf]
  %v69 = vld [vmem:[%s1 + $0x8] sm:$0xf]
  %v70 = vld [vmem:[%s1 + $0xc] sm:$0xf]
  %v71 = vld [vmem:[%s1 + $0x10] sm:$0xf]
  %v72 = vld [vmem:[%s1 + $0x14] sm:$0xf]
  %v73 = vld [vmem:[%s1 + $0x18] sm:$0xf]
  %v74 = vld [vmem:[%s1 + $0x1c] sm:$0xf]
  %v75 = vld [vmem:[%s1 + $0x20] sm:$0xf]
  %v76 = vld [vmem:[%s1 + $0x24] sm:$0xf]
  %v77 = vld [vmem:[%s1 + $0x28] sm:$0xf]
  %v78 = vld [vmem:[%s1 + $0x2c] sm:$0xf]
  %v79 = vld [vmem:[%s1 + $0x30] sm:$0xf]
  %v80 = vld [vmem:[%s1 + $0x34] sm:$0xf]
  %v81 = vld [vmem:[%s1 + $0x38] sm:$0xf]
  %v82 = vld [vmem:[%s1 + $0x3c] sm:$0xf]
  %v83 = vld [vmem:[%s1 + $0x40] sm:$0xf]
  %v84 = vld [vmem:[%s1 + $0x44] sm:$0xf]
  %v85 = vld [vmem:[%s1 + $0x48] sm:$0xf]
  %v86 = vld [vmem:[%s1 + $0x4c] sm:$0xf]
  %v87 = vld [vmem:[%s1 + $0x50] sm:$0xf]
  %v88 = vld [vmem:[%s1 + $0x54] sm:$0xf]
  %v89 = vld [vmem:[%s1 + $0x58] sm:$0xf]
  %v90 = vld [vmem:[%s1 + $0x5c] sm:$0xf]
  %v91 = vld [vmem:[%s1 + $0x60] sm:$0xf]
  %v92 = vld [vmem:[%s1 + $0x64] sm:$0xf]
  %v93 = vld [vmem:[%s1 + $0x68] sm:$0xf]
  %v94 = vld [vmem:[%s1 + $0x6c] sm:$0xf]
  %v95 = vld [vmem:[%s1 + $0x70] sm:$0xf]
  %v96 = vld [vmem:[%s1 + $0x74] sm:$0xf]
  %v97 = vld [vmem:[%s1 + $0x78] sm:$0xf]
  %v98 = vld [vmem:[%s1 + $0x7c] sm:$0xf]
  %v115 = vunpack.c.l.b16 %v51
  %v116 = vunpack.c.h.b16 %v51
  %v117 = vunpack.c.l.b16 %v52
  %v118 = vunpack.c.h.b16 %v52
  %v119 = vunpack.c.l.b16 %v53
  %v120 = vunpack.c.h.b16 %v53
  %v121 = vunpack.c.l.b16 %v54
  %v122 = vunpack.c.h.b16 %v54
  %v123 = vunpack.c.l.b16 %v55
  %v124 = vunpack.c.h.b16 %v55
  %v125 = vunpack.c.l.b16 %v56
  %v126 = vunpack.c.h.b16 %v56
  %v127 = vunpack.c.l.b16 %v57
  %v128 = vunpack.c.h.b16 %v57
  %v129 = vunpack.c.l.b16 %v58
  %v130 = vunpack.c.h.b16 %v58
  %v131 = vunpack.c.l.b16 %v59
  %v132 = vunpack.c.h.b16 %v59
  %v133 = vunpack.c.l.b16 %v60
  %v134 = vunpack.c.h.b16 %v60
  %v135 = vunpack.c.l.b16 %v61
  %v136 = vunpack.c.h.b16 %v61
  %v137 = vunpack.c.l.b16 %v62
  %v138 = vunpack.c.h.b16 %v62
  %v139 = vunpack.c.l.b16 %v63
  %v140 = vunpack.c.h.b16 %v63
  %v141 = vunpack.c.l.b16 %v64
  %v142 = vunpack.c.h.b16 %v64
  %v143 = vunpack.c.l.b16 %v65
  %v144 = vunpack.c.h.b16 %v65
  %v145 = vunpack.c.l.b16 %v66
  %v146 = vunpack.c.h.b16 %v66
  %v147 = vpack.c.b16 %v117, %v115
  %v148 = vpack.c.b16 %v118, %v116
  %v149 = vpack.c.b16 %v121, %v119
  %v150 = vpack.c.b16 %v122, %v120
  %v151 = vpack.c.b16 %v125, %v123
  %v152 = vpack.c.b16 %v126, %v124
  %v153 = vpack.c.b16 %v129, %v127
  %v154 = vpack.c.b16 %v130, %v128
  %v155 = vpack.c.b16 %v133, %v131
  %v156 = vpack.c.b16 %v134, %v132
  %v157 = vpack.c.b16 %v137, %v135
  %v158 = vpack.c.b16 %v138, %v136
  %v159 = vpack.c.b16 %v141, %v139
  %v160 = vpack.c.b16 %v142, %v140
  %v161 = vpack.c.b16 %v145, %v143
  %v162 = vpack.c.b16 %v146, %v144
  %v211 = vunpack.c.l.b16 %v67
  %v212 = vunpack.c.l.b16 %v68
  %v213 = vunpack.c.l.b16 %v69
  %v214 = vunpack.c.l.b16 %v70
  %v215 = vunpack.c.l.b16 %v71
  %v216 = vunpack.c.l.b16 %v72
  %v217 = vunpack.c.l.b16 %v73
  %v218 = vunpack.c.l.b16 %v74
  %v219 = vunpack.c.l.b16 %v75
  %v220 = vunpack.c.l.b16 %v76
  %v221 = vunpack.c.l.b16 %v77
  %v222 = vunpack.c.l.b16 %v78
  %v223 = vunpack.c.l.b16 %v79
  %v224 = vunpack.c.l.b16 %v80
  %v225 = vunpack.c.l.b16 %v81
  %v226 = vunpack.c.l.b16 %v82
  %v227 = vunpack.c.l.b16 %v83
  %v228 = vunpack.c.l.b16 %v84
  %v229 = vunpack.c.l.b16 %v85
  %v230 = vunpack.c.l.b16 %v86
  %v231 = vunpack.c.l.b16 %v87
  %v232 = vunpack.c.l.b16 %v88
  %v233 = vunpack.c.l.b16 %v89
  %v234 = vunpack.c.l.b16 %v90
  %v235 = vunpack.c.l.b16 %v91
  %v236 = vunpack.c.l.b16 %v92
  %v237 = vunpack.c.l.b16 %v93
  %v238 = vunpack.c.l.b16 %v94
  %v239 = vunpack.c.l.b16 %v95
  %v240 = vunpack.c.l.b16 %v96
  %v241 = vunpack.c.l.b16 %v97
  %v242 = vunpack.c.l.b16 %v98
  %v243 = vpack.c.b16 %v212, %v211
  %v244 = vpack.c.b16 %v214, %v213
  %v245 = vpack.c.b16 %v216, %v215
  %v246 = vpack.c.b16 %v218, %v217
  %v247 = vpack.c.b16 %v220, %v219
  %v248 = vpack.c.b16 %v222, %v221
  %v249 = vpack.c.b16 %v224, %v223
  %v250 = vpack.c.b16 %v226, %v225
  %v251 = vpack.c.b16 %v228, %v227
  %v252 = vpack.c.b16 %v230, %v229
  %v253 = vpack.c.b16 %v232, %v231
  %v254 = vpack.c.b16 %v234, %v233
  %v255 = vpack.c.b16 %v236, %v235
  %v256 = vpack.c.b16 %v238, %v237
  %v257 = vpack.c.b16 %v240, %v239
  %v258 = vpack.c.b16 %v242, %v241
  %275 = vmatprep.subr.bf16.mxu0 0
  %276 = vmatpush1.bf16.msra.mxu0 %v250
  %277 = vmatprep.subr.bf16.mxu0 0
  %278 = vmatpush1.bf16.msra.mxu0 %v249
  %279 = vmatprep.subr.bf16.mxu0 0
  %280 = vmatpush1.bf16.msra.mxu0 %v248
  %281 = vmatprep.subr.bf16.mxu0 0
  %282 = vmatpush1.bf16.msra.mxu0 %v247
  %283 = vmatprep.subr.bf16.mxu0 0
  %284 = vmatpush1.bf16.msra.mxu0 %v246
  %285 = vmatprep.subr.bf16.mxu0 0
  %286 = vmatpush1.bf16.msra.mxu0 %v245
  %287 = vmatprep.subr.bf16.mxu0 0
  %288 = vmatpush1.bf16.msra.mxu0 %v244
  %289 = vmatprep.subr.bf16.mxu0 0
  %290 = vmatpush1.bf16.msra.mxu0 %v243
  %291 = vmatprep.subr.bf16.mxu0 0
  %292 = vmatpush2.bf16.msra.mxu0 %v258
  %293 = vmatprep.subr.bf16.mxu0 0
  %294 = vmatpush2.bf16.msra.mxu0 %v257
  %295 = vmatprep.subr.bf16.mxu0 0
  %296 = vmatpush2.bf16.msra.mxu0 %v256
  %297 = vmatprep.subr.bf16.mxu0 0
  %298 = vmatpush2.bf16.msra.mxu0 %v255
  %299 = vmatprep.subr.bf16.mxu0 0
  %300 = vmatpush2.bf16.msra.mxu0 %v254
  %301 = vmatprep.subr.bf16.mxu0 0
  %302 = vmatpush2.bf16.msra.mxu0 %v253
  %303 = vmatprep.subr.bf16.mxu0 0
  %304 = vmatpush2.bf16.msra.mxu0 %v252
  %305 = vmatprep.subr.bf16.mxu0 0
  %306 = vmatpush2.bf16.msra.mxu0 %v251
  %307 = vmatprep.mubr.bf16.mxu0 %v148
  %308 = vmatmul.mubr.bf16.gmra.mxu0 %v147
  %v309 = vpop.f32.mrf.mxu0
  %v310 = vadd.f32 0.0, %v309
  %v311 = vpop.f32.mrf.mxu0
  %v312 = vpop.f32.mrf.mxu0
  %v313 = vadd.f32 0.0, %v312
  %v314 = vpop.f32.mrf.mxu0
  %315 = vmatprep.mubr.bf16.mxu0 %v150
  %316 = vmatmul.mubr.bf16.gmra.mxu0 %v149
  %v317 = vpop.f32.mrf.mxu0
  %v318 = vadd.f32 0.0, %v317
  %v319 = vpop.f32.mrf.mxu0
  %v320 = vpop.f32.mrf.mxu0
  %v321 = vadd.f32 0.0, %v320
  %v322 = vpop.f32.mrf.mxu0
  %323 = vmatprep.mubr.bf16.mxu0 %v152
  %324 = vmatmul.mubr.bf16.gmra.mxu0 %v151
  %v325 = vpop.f32.mrf.mxu0
  %v326 = vadd.f32 0.0, %v325
  %v327 = vpop.f32.mrf.mxu0
  %v328 = vpop.f32.mrf.mxu0
  %v329 = vadd.f32 0.0, %v328
  %v330 = vpop.f32.mrf.mxu0
  %331 = vmatprep.mubr.bf16.mxu0 %v154
  %332 = vmatmul.mubr.bf16.gmra.mxu0 %v153
  %v333 = vpop.f32.mrf.mxu0
  %v334 = vadd.f32 0.0, %v333
  %v335 = vpop.f32.mrf.mxu0
  %v336 = vpop.f32.mrf.mxu0
  %v337 = vadd.f32 0.0, %v336
  %v338 = vpop.f32.mrf.mxu0
  %339 = vmatprep.mubr.bf16.mxu0 %v156
  %340 = vmatmul.mubr.bf16.gmra.mxu0 %v155
  %v341 = vpop.f32.mrf.mxu0
  %v342 = vadd.f32 0.0, %v341
  %v343 = vpop.f32.mrf.mxu0
  %v344 = vpop.f32.mrf.mxu0
  %v345 = vadd.f32 0.0, %v344
  %v346 = vpop.f32.mrf.mxu0
  %347 = vmatprep.mubr.bf16.mxu0 %v158
  %348 = vmatmul.mubr.bf16.gmra.mxu0 %v157
  %v349 = vpop.f32.mrf.mxu0
  %v350 = vadd.f32 0.0, %v349
  %v351 = vpop.f32.mrf.mxu0
  %v352 = vpop.f32.mrf.mxu0
  %v353 = vadd.f32 0.0, %v352
  %v354 = vpop.f32.mrf.mxu0
  %355 = vmatprep.mubr.bf16.mxu0 %v160
  %356 = vmatmul.mubr.bf16.gmra.mxu0 %v159
  %v357 = vpop.f32.mrf.mxu0
  %v358 = vadd.f32 0.0, %v357
  %v359 = vpop.f32.mrf.mxu0
  %v360 = vpop.f32.mrf.mxu0
  %v361 = vadd.f32 0.0, %v360
  %v362 = vpop.f32.mrf.mxu0
  %363 = vmatprep.mubr.bf16.mxu0 %v162
  %364 = vmatmul.mubr.bf16.gmra.mxu0 %v161
  %v365 = vpop.f32.mrf.mxu0
  %v366 = vadd.f32 0.0, %v365
  %v367 = vpop.f32.mrf.mxu0
  %v368 = vpop.f32.mrf.mxu0
  %v369 = vadd.f32 0.0, %v368
  %v370 = vpop.f32.mrf.mxu0
  %371 = vdwg.mxu0
  %v372 = vadd.f32 %v35, %v310
  %v373 = vadd.f32 %v36, %v313
  %v374 = vadd.f32 %v37, %v318
  %v375 = vadd.f32 %v38, %v321
  %v376 = vadd.f32 %v39, %v326
  %v377 = vadd.f32 %v40, %v329
  %v378 = vadd.f32 %v41, %v334
  %v379 = vadd.f32 %v42, %v337
  %v380 = vadd.f32 %v43, %v342
  %v381 = vadd.f32 %v44, %v345
  %v382 = vadd.f32 %v45, %v350
  %v383 = vadd.f32 %v46, %v353
  %v384 = vadd.f32 %v47, %v358
  %v385 = vadd.f32 %v48, %v361
  %v386 = vadd.f32 %v49, %v366
  %v387 = vadd.f32 %v50, %v369
  %388 = vst [vmem:[#allocation2] sm:$0xff] %v372
  %389 = vst [vmem:[#allocation2 + $0x8] sm:$0xff] %v373
  %390 = vst [vmem:[#allocation2 + $0x10] sm:$0xff] %v374
  %391 = vst [vmem:[#allocation2 + $0x18] sm:$0xff] %v375
  %392 = vst [vmem:[#allocation2 + $0x20] sm:$0xff] %v376
  %393 = vst [vmem:[#allocation2 + $0x28] sm:$0xff] %v377
  %394 = vst [vmem:[#allocation2 + $0x30] sm:$0xff] %v378
  %395 = vst [vmem:[#allocation2 + $0x38] sm:$0xff] %v379
  %396 = vst [vmem:[#allocation2 + $0x40] sm:$0xff] %v380
  %397 = vst [vmem:[#allocation2 + $0x48] sm:$0xff] %v381
  %398 = vst [vmem:[#allocation2 + $0x50] sm:$0xff] %v382
  %399 = vst [vmem:[#allocation2 + $0x58] sm:$0xff] %v383
  %400 = vst [vmem:[#allocation2 + $0x60] sm:$0xff] %v384
  %401 = vst [vmem:[#allocation2 + $0x68] sm:$0xff] %v385
  %402 = vst [vmem:[#allocation2 + $0x70] sm:$0xff] %v386
  %403 = vst [vmem:[#allocation2 + $0x78] sm:$0xff] %v387
  // Predicated region
  $region18: #{scalable_vit_forward.13} parent=0 // pred_check
    %p404 = pneg %p15
  $region19: #{scalable_vit_forward.13} parent=0 // pred_check_branch
    %406 = sbr.rel (%p404) target = $region21
  $region20: #{scalable_vit_forward.13} parent=0 // pred_region
    %v407 = vld [vmem:[#allocation2] sm:$0xff]
    %v408 = vld [vmem:[#allocation2 + $0x8] sm:$0xff]
    %v409 = vld [vmem:[#allocation2 + $0x10] sm:$0xff]
    %v410 = vld [vmem:[#allocation2 + $0x18] sm:$0xff]
    %v411 = vld [vmem:[#allocation2 + $0x20] sm:$0xff]
    %v412 = vld [vmem:[#allocation2 + $0x28] sm:$0xff]
    %v413 = vld [vmem:[#allocation2 + $0x30] sm:$0xff]
    %v414 = vld [vmem:[#allocation2 + $0x38] sm:$0xff]
    %v415 = vld [vmem:[#allocation2 + $0x40] sm:$0xff]
    %v416 = vld [vmem:[#allocation2 + $0x48] sm:$0xff]
    %v417 = vld [vmem:[#allocation2 + $0x50] sm:$0xff]
    %v418 = vld [vmem:[#allocation2 + $0x58] sm:$0xff]
    %v419 = vld [vmem:[#allocation2 + $0x60] sm:$0xff]
    %v420 = vld [vmem:[#allocation2 + $0x68] sm:$0xff]
    %v421 = vld [vmem:[#allocation2 + $0x70] sm:$0xff]
    %v422 = vld [vmem:[#allocation2 + $0x78] sm:$0xff]
    %v423 = vld [vmem:[%s2] sm:$0x1]
    %v425 = vlaneseq
    %v426 = vshrl.u32 %v425, 7
    %v427 = vsub.s32 0, %v426
    %v428 = vrot.slane %v423, %v427
    %v430 = vadd.f32 %v407, %v428
    %v431 = vadd.f32 %v408, %v428
    %v432 = vadd.f32 %v409, %v428
    %v433 = vadd.f32 %v410, %v428
    %v434 = vadd.f32 %v411, %v428
    %v435 = vadd.f32 %v412, %v428
    %v436 = vadd.f32 %v413, %v428
    %v437 = vadd.f32 %v414, %v428
    %v438 = vadd.f32 %v415, %v428
    %v439 = vadd.f32 %v416, %v428
    %v440 = vadd.f32 %v417, %v428
    %v441 = vadd.f32 %v418, %v428
    %v442 = vadd.f32 %v419, %v428
    %v443 = vadd.f32 %v420, %v428
    %v444 = vadd.f32 %v421, %v428
    %v445 = vadd.f32 %v422, %v428
    %v446 = vpack.c.bf16 %v431, %v430
    %v447 = vpack.c.bf16 %v433, %v432
    %v448 = vpack.c.bf16 %v435, %v434
    %v449 = vpack.c.bf16 %v437, %v436
    %v450 = vpack.c.bf16 %v439, %v438
    %v451 = vpack.c.bf16 %v441, %v440
    %v452 = vpack.c.bf16 %v443, %v442
    %v453 = vpack.c.bf16 %v445, %v444
    %v462 = vunpack.c.l.b16 %v446
    %v463 = vunpack.c.h.b16 %v446
    %v464 = vunpack.c.l.b16 %v447
    %v465 = vunpack.c.h.b16 %v447
    %v466 = vunpack.c.l.b16 %v448
    %v467 = vunpack.c.h.b16 %v448
    %v468 = vunpack.c.l.b16 %v449
    %v469 = vunpack.c.h.b16 %v449
    %v470 = vunpack.c.l.b16 %v450
    %v471 = vunpack.c.h.b16 %v450
    %v472 = vunpack.c.l.b16 %v451
    %v473 = vunpack.c.h.b16 %v451
    %v474 = vunpack.c.l.b16 %v452
    %v475 = vunpack.c.h.b16 %v452
    %v476 = vunpack.c.l.b16 %v453
    %v477 = vunpack.c.h.b16 %v453
    %v478 = vpack.c.b16 %v462, %v462
    %v479 = vpack.c.b16 %v463, %v463
    %v480 = vpack.c.b16 %v464, %v464
    %v481 = vpack.c.b16 %v465, %v465
    %v482 = vpack.c.b16 %v466, %v466
    %v483 = vpack.c.b16 %v467, %v467
    %v484 = vpack.c.b16 %v468, %v468
    %v485 = vpack.c.b16 %v469, %v469
    %v486 = vpack.c.b16 %v470, %v470
    %v487 = vpack.c.b16 %v471, %v471
    %v488 = vpack.c.b16 %v472, %v472
    %v489 = vpack.c.b16 %v473, %v473
    %v490 = vpack.c.b16 %v474, %v474
    %v491 = vpack.c.b16 %v475, %v475
    %v492 = vpack.c.b16 %v476, %v476
    %v493 = vpack.c.b16 %v477, %v477
    %510 = vst [vmem:[%s3] sm:$0xf] %v478
    %511 = vst [vmem:[%s3 + $0x4] sm:$0xf] %v479
    %512 = vst [vmem:[%s3 + $0x8] sm:$0xf] %v480
    %513 = vst [vmem:[%s3 + $0xc] sm:$0xf] %v481
    %514 = vst [vmem:[%s3 + $0x10] sm:$0xf] %v482
    %515 = vst [vmem:[%s3 + $0x14] sm:$0xf] %v483
    %516 = vst [vmem:[%s3 + $0x18] sm:$0xf] %v484
    %517 = vst [vmem:[%s3 + $0x1c] sm:$0xf] %v485
    %518 = vst [vmem:[%s3 + $0x20] sm:$0xf] %v486
    %519 = vst [vmem:[%s3 + $0x24] sm:$0xf] %v487
    %520 = vst [vmem:[%s3 + $0x28] sm:$0xf] %v488
    %521 = vst [vmem:[%s3 + $0x2c] sm:$0xf] %v489
    %522 = vst [vmem:[%s3 + $0x30] sm:$0xf] %v490
    %523 = vst [vmem:[%s3 + $0x34] sm:$0xf] %v491
    %524 = vst [vmem:[%s3 + $0x38] sm:$0xf] %v492
    %525 = vst [vmem:[%s3 + $0x3c] sm:$0xf] %v493
  $region21: #{scalable_vit_forward.13} parent=0 // pred_fallthru
    _
  // Predicated region
  $region22: #{scalable_vit_forward.13} parent=0 // pred_check
    _
  $region23: #{scalable_vit_forward.13} parent=0 // pred_check_branch
    %527 = sbr.rel (0) target = $region25
  $region24: #{scalable_vit_forward.13} parent=0 // pred_region
    _
  $region25: #{scalable_vit_forward.13} parent=0 // pred_fallthru
    _
  // Predicated region
  $region26: #{scalable_vit_forward.13} parent=0 // pred_check
    _
  $region27: #{scalable_vit_forward.13} parent=0 // pred_check_branch
    %529 = sbr.rel (0) target = $region29
  $region28: #{scalable_vit_forward.13} parent=0 // pred_region
    _
  $region29: #{scalable_vit_forward.13} parent=0 // pred_fallthru
    _

// kernel: scalable_vit_forward.16
$region0: #{scalable_vit_forward.16}
  #allocation0 [shape = 'u32[]', space=smem, size = 0x4, offset = 0x4, fixed_abs, tag = 'smem constant byte address 0x4 - core index']
  #allocation1 [shape = 'u32[144,128]{1,0:T(1,128)}', space=vmem, size = 0x12000, scoped, tag = 'internal scratch']
  %s0 = inlined_call_operand.vmem [shape: bf16[128,8], index: 0, kind: input, shape index: {}]
  %s1 = inlined_call_operand.vmem [shape: f32[1,8], index: 1, kind: input, shape index: {}]
  %s2 = inlined_call_operand.vmem [shape: f32[1,8], index: 2, kind: input, shape index: {}]
  %s3 = inlined_call_operand.vmem [shape: bf16[8,16], index: 3, kind: input, shape index: {}]
  %s4 = inlined_call_operand.vmem [shape: f32[1,16], index: 4, kind: input, shape index: {}]
  %s5 = inlined_call_operand.vmem [shape: bf16[16,8], index: 5, kind: input, shape index: {}]
  %s6 = inlined_call_operand.vmem [shape: f32[1,8], index: 6, kind: input, shape index: {}]
  %s7 = inlined_call_operand.vmem [shape: bf16[128,8], index: 7, kind: output, shape index: {}]
  %s8 = sld [smem:[#allocation0]]
  $region38: #{scalable_vit_forward.16} parent=0
    _
  %s10 = ssub.s32 1, %s8
  %s11 = scalar_select 0, %s10, %s8
  // Predicated region
  $region2: #{scalable_vit_forward.16} parent=0 // pred_check
    _
  $region3: #{scalable_vit_forward.16} parent=0 // pred_check_branch
    %13 = sbr.rel (0) target = $region5
  $region4: #{scalable_vit_forward.16} parent=0 // pred_region
    _
  $region5: #{scalable_vit_forward.16} parent=0 // pred_fallthru
    _
  // Predicated region
  $region6: #{scalable_vit_forward.16} parent=0 // pred_check
    _
  $region7: #{scalable_vit_forward.16} parent=0 // pred_check_branch
    %15 = sbr.rel (0) target = $region9
  $region8: #{scalable_vit_forward.16} parent=0 // pred_region
    _
  $region9: #{scalable_vit_forward.16} parent=0 // pred_fallthru
    _
  // Predicated region
  $region10: #{scalable_vit_forward.16} parent=0 // pred_check
    _
  $region11: #{scalable_vit_forward.16} parent=0 // pred_check_branch
    %17 = sbr.rel (0) target = $region13
  $region12: #{scalable_vit_forward.16} parent=0 // pred_region
    _
  $region13: #{scalable_vit_forward.16} parent=0 // pred_fallthru
    _
  // Predicated region
  $region14: #{scalable_vit_forward.16} parent=0 // pred_check
    _
  $region15: #{scalable_vit_forward.16} parent=0 // pred_check_branch
    %19 = sbr.rel (0) target = $region17
  $region16: #{scalable_vit_forward.16} parent=0 // pred_region
    _
  $region17: #{scalable_vit_forward.16} parent=0 // pred_fallthru
    _
  // Predicated region
  $region18: #{scalable_vit_forward.16} parent=0 // pred_check
    _
  $region19: #{scalable_vit_forward.16} parent=0 // pred_check_branch
    %21 = sbr.rel (0) target = $region21
  $region20: #{scalable_vit_forward.16} parent=0 // pred_region
    _
  $region21: #{scalable_vit_forward.16} parent=0 // pred_fallthru
    _
  // Predicated region
  $region22: #{scalable_vit_forward.16} parent=0 // pred_check
    _
  $region23: #{scalable_vit_forward.16} parent=0 // pred_check_branch
    %23 = sbr.rel (0) target = $region25
  $region24: #{scalable_vit_forward.16} parent=0 // pred_region
    _
  $region25: #{scalable_vit_forward.16} parent=0 // pred_fallthru
    _
  // Predicated region
  $region26: #{scalable_vit_forward.16} parent=0 // pred_check
    _
  $region27: #{scalable_vit_forward.16} parent=0 // pred_check_branch
    %25 = sbr.rel (0) target = $region29
  $region28: #{scalable_vit_forward.16} parent=0 // pred_region
    _
  $region29: #{scalable_vit_forward.16} parent=0 // pred_fallthru
    _
  %v27 = vld [vmem:[%s0] sm:$0xf]
  %v28 = vld [vmem:[%s0 + $0x4] sm:$0xf]
  %v29 = vld [vmem:[%s0 + $0x8] sm:$0xf]
  %v30 = vld [vmem:[%s0 + $0xc] sm:$0xf]
  %v31 = vld [vmem:[%s0 + $0x10] sm:$0xf]
  %v32 = vld [vmem:[%s0 + $0x14] sm:$0xf]
  %v33 = vld [vmem:[%s0 + $0x18] sm:$0xf]
  %v34 = vld [vmem:[%s0 + $0x1c] sm:$0xf]
  %v35 = vld [vmem:[%s0 + $0x20] sm:$0xf]
  %v36 = vld [vmem:[%s0 + $0x24] sm:$0xf]
  %v37 = vld [vmem:[%s0 + $0x28] sm:$0xf]
  %v38 = vld [vmem:[%s0 + $0x2c] sm:$0xf]
  %v39 = vld [vmem:[%s0 + $0x30] sm:$0xf]
  %v40 = vld [vmem:[%s0 + $0x34] sm:$0xf]
  %v41 = vld [vmem:[%s0 + $0x38] sm:$0xf]
  %v42 = vld [vmem:[%s0 + $0x3c] sm:$0xf]
  %v43 = vunpack.c.l.bf16 %v27
  %v44 = vunpack.c.l.bf16 %v28
  %v45 = vunpack.c.l.bf16 %v29
  %v46 = vunpack.c.l.bf16 %v30
  %v47 = vunpack.c.l.bf16 %v31
  %v48 = vunpack.c.l.bf16 %v32
  %v49 = vunpack.c.l.bf16 %v33
  %v50 = vunpack.c.l.bf16 %v34
  %v51 = vunpack.c.l.bf16 %v35
  %v52 = vunpack.c.l.bf16 %v36
  %v53 = vunpack.c.l.bf16 %v37
  %v54 = vunpack.c.l.bf16 %v38
  %v55 = vunpack.c.l.bf16 %v39
  %v56 = vunpack.c.l.bf16 %v40
  %v57 = vunpack.c.l.bf16 %v41
  %v58 = vunpack.c.l.bf16 %v42
  %vm59 = vcmask 64512
  %v60 = vsel %vm59, %v43, 0.0
  %61 = vadd.xlane.f32.xlu0 %v60
  %v62 = vpop.xlane.xlu0 %61
  %v63 = vsel %vm59, %v44, 0.0
  %64 = vadd.xlane.f32.xlu0 %v63
  %v65 = vpop.xlane.xlu0 %64
  %v66 = vsel %vm59, %v45, 0.0
  %67 = vadd.xlane.f32.xlu0 %v66
  %v68 = vpop.xlane.xlu0 %67
  %v69 = vsel %vm59, %v46, 0.0
  %70 = vadd.xlane.f32.xlu0 %v69
  %v71 = vpop.xlane.xlu0 %70
  %v72 = vsel %vm59, %v47, 0.0
  %73 = vadd.xlane.f32.xlu0 %v72
  %v74 = vpop.xlane.xlu0 %73
  %v75 = vsel %vm59, %v48, 0.0
  %76 = vadd.xlane.f32.xlu0 %v75
  %v77 = vpop.xlane.xlu0 %76
  %v78 = vsel %vm59, %v49, 0.0
  %79 = vadd.xlane.f32.xlu0 %v78
  %v80 = vpop.xlane.xlu0 %79
  %v81 = vsel %vm59, %v50, 0.0
  %82 = vadd.xlane.f32.xlu0 %v81
  %v83 = vpop.xlane.xlu0 %82
  %v84 = vsel %vm59, %v51, 0.0
  %85 = vadd.xlane.f32.xlu0 %v84
  %v86 = vpop.xlane.xlu0 %85
  %v87 = vsel %vm59, %v52, 0.0
  %88 = vadd.xlane.f32.xlu0 %v87
  %v89 = vpop.xlane.xlu0 %88
  %v90 = vsel %vm59, %v53, 0.0
  %91 = vadd.xlane.f32.xlu0 %v90
  %v92 = vpop.xlane.xlu0 %91
  %v93 = vsel %vm59, %v54, 0.0
  %94 = vadd.xlane.f32.xlu0 %v93
  %v95 = vpop.xlane.xlu0 %94
  %v96 = vsel %vm59, %v55, 0.0
  %97 = vadd.xlane.f32.xlu0 %v96
  %v98 = vpop.xlane.xlu0 %97
  %v99 = vsel %vm59, %v56, 0.0
  %100 = vadd.xlane.f32.xlu0 %v99
  %v101 = vpop.xlane.xlu0 %100
  %v102 = vsel %vm59, %v57, 0.0
  %103 = vadd.xlane.f32.xlu0 %v102
  %v104 = vpop.xlane.xlu0 %103
  %v105 = vsel %vm59, %v58, 0.0
  %106 = vadd.xlane.f32.xlu0 %v105
  %v107 = vpop.xlane.xlu0 %106
  %v108 = vrcp.pop 8.0
  %v109 = vmul.f32 %v62, %v108
  %v110 = vmul.f32 %v65, %v108
  %v111 = vmul.f32 %v68, %v108
  %v112 = vmul.f32 %v71, %v108
  %v113 = vmul.f32 %v74, %v108
  %v114 = vmul.f32 %v77, %v108
  %v115 = vmul.f32 %v80, %v108
  %v116 = vmul.f32 %v83, %v108
  %v117 = vmul.f32 %v86, %v108
  %v118 = vmul.f32 %v89, %v108
  %v119 = vmul.f32 %v92, %v108
  %v120 = vmul.f32 %v95, %v108
  %v121 = vmul.f32 %v98, %v108
  %v122 = vmul.f32 %v101, %v108
  %v123 = vmul.f32 %v104, %v108
  %v124 = vmul.f32 %v107, %v108
  %v125 = vmul.f32 %v43, %v43
  %v126 = vmul.f32 %v44, %v44
  %v127 = vmul.f32 %v45, %v45
  %v128 = vmul.f32 %v46, %v46
  %v129 = vmul.f32 %v47, %v47
  %v130 = vmul.f32 %v48, %v48
  %v131 = vmul.f32 %v49, %v49
  %v132 = vmul.f32 %v50, %v50
  %v133 = vmul.f32 %v51, %v51
  %v134 = vmul.f32 %v52, %v52
  %v135 = vmul.f32 %v53, %v53
  %v136 = vmul.f32 %v54, %v54
  %v137 = vmul.f32 %v55, %v55
  %v138 = vmul.f32 %v56, %v56
  %v139 = vmul.f32 %v57, %v57
  %v140 = vmul.f32 %v58, %v58
  %v141 = vsel %vm59, %v125, 0.0
  %142 = vadd.xlane.f32.xlu0 %v141
  %v143 = vpop.xlane.xlu0 %142
  %v144 = vsel %vm59, %v126, 0.0
  %145 = vadd.xlane.f32.xlu0 %v144
  %v146 = vpop.xlane.xlu0 %145
  %v147 = vsel %vm59, %v127, 0.0
  %148 = vadd.xlane.f32.xlu0 %v147
  %v149 = vpop.xlane.xlu0 %148
  %v150 = vsel %vm59, %v128, 0.0
  %151 = vadd.xlane.f32.xlu0 %v150
  %v152 = vpop.xlane.xlu0 %151
  %v153 = vsel %vm59, %v129, 0.0
  %154 = vadd.xlane.f32.xlu0 %v153
  %v155 = vpop.xlane.xlu0 %154
  %v156 = vsel %vm59, %v130, 0.0
  %157 = vadd.xlane.f32.xlu0 %v156
  %v158 = vpop.xlane.xlu0 %157
  %v159 = vsel %vm59, %v131, 0.0
  %160 = vadd.xlane.f32.xlu0 %v159
  %v161 = vpop.xlane.xlu0 %160
  %v162 = vsel %vm59, %v132, 0.0
  %163 = vadd.xlane.f32.xlu0 %v162
  %v164 = vpop.xlane.xlu0 %163
  %v165 = vsel %vm59, %v133, 0.0
  %166 = vadd.xlane.f32.xlu0 %v165
  %v167 = vpop.xlane.xlu0 %166
  %v168 = vsel %vm59, %v134, 0.0
  %169 = vadd.xlane.f32.xlu0 %v168
  %v170 = vpop.xlane.xlu0 %169
  %v171 = vsel %vm59, %v135, 0.0
  %172 = vadd.xlane.f32.xlu0 %v171
  %v173 = vpop.xlane.xlu0 %172
  %v174 = vsel %vm59, %v136, 0.0
  %175 = vadd.xlane.f32.xlu0 %v174
  %v176 = vpop.xlane.xlu0 %175
  %v177 = vsel %vm59, %v137, 0.0
  %178 = vadd.xlane.f32.xlu0 %v177
  %v179 = vpop.xlane.xlu0 %178
  %v180 = vsel %vm59, %v138, 0.0
  %181 = vadd.xlane.f32.xlu0 %v180
  %v182 = vpop.xlane.xlu0 %181
  %v183 = vsel %vm59, %v139, 0.0
  %184 = vadd.xlane.f32.xlu0 %v183
  %v185 = vpop.xlane.xlu0 %184
  %v186 = vsel %vm59, %v140, 0.0
  %187 = vadd.xlane.f32.xlu0 %v186
  %v188 = vpop.xlane.xlu0 %187
  %v189 = vmul.f32 %v143, %v108
  %v190 = vmul.f32 %v146, %v108
  %v191 = vmul.f32 %v149, %v108
  %v192 = vmul.f32 %v152, %v108
  %v193 = vmul.f32 %v155, %v108
  %v194 = vmul.f32 %v158, %v108
  %v195 = vmul.f32 %v161, %v108
  %v196 = vmul.f32 %v164, %v108
  %v197 = vmul.f32 %v167, %v108
  %v198 = vmul.f32 %v170, %v108
  %v199 = vmul.f32 %v173, %v108
  %v200 = vmul.f32 %v176, %v108
  %v201 = vmul.f32 %v179, %v108
  %v202 = vmul.f32 %v182, %v108
  %v203 = vmul.f32 %v185, %v108
  %v204 = vmul.f32 %v188, %v108
  %v205 = vmul.f32 %v109, %v109
  %v206 = vmul.f32 %v110, %v110
  %v207 = vmul.f32 %v111, %v111
  %v208 = vmul.f32 %v112, %v112
  %v209 = vmul.f32 %v113, %v113
  %v210 = vmul.f32 %v114, %v114
  %v211 = vmul.f32 %v115, %v115
  %v212 = vmul.f32 %v116, %v116
  %v213 = vmul.f32 %v117, %v117
  %v214 = vmul.f32 %v118, %v118
  %v215 = vmul.f32 %v119, %v119
  %v216 = vmul.f32 %v120, %v120
  %v217 = vmul.f32 %v121, %v121
  %v218 = vmul.f32 %v122, %v122
  %v219 = vmul.f32 %v123, %v123
  %v220 = vmul.f32 %v124, %v124
  %v221 = vsub.f32 %v189, %v205
  %v222 = vsub.f32 %v190, %v206
  %v223 = vsub.f32 %v191, %v207
  %v224 = vsub.f32 %v192, %v208
  %v225 = vsub.f32 %v193, %v209
  %v226 = vsub.f32 %v194, %v210
  %v227 = vsub.f32 %v195, %v211
  %v228 = vsub.f32 %v196, %v212
  %v229 = vsub.f32 %v197, %v213
  %v230 = vsub.f32 %v198, %v214
  %v231 = vsub.f32 %v199, %v215
  %v232 = vsub.f32 %v200, %v216
  %v233 = vsub.f32 %v201, %v217
  %v234 = vsub.f32 %v202, %v218
  %v235 = vsub.f32 %v203, %v219
  %v236 = vsub.f32 %v204, %v220
  %v237 = vsub.f32 %v43, %v109
  %v238 = vsub.f32 %v44, %v110
  %v239 = vsub.f32 %v45, %v111
  %v240 = vsub.f32 %v46, %v112
  %v241 = vsub.f32 %v47, %v113
  %v242 = vsub.f32 %v48, %v114
  %v243 = vsub.f32 %v49, %v115
  %v244 = vsub.f32 %v50, %v116
  %v245 = vsub.f32 %v51, %v117
  %v246 = vsub.f32 %v52, %v118
  %v247 = vsub.f32 %v53, %v119
  %v248 = vsub.f32 %v54, %v120
  %v249 = vsub.f32 %v55, %v121
  %v250 = vsub.f32 %v56, %v122
  %v251 = vsub.f32 %v57, %v123
  %v252 = vsub.f32 %v58, %v124
  %v253 = vadd.f32 %v221, 1e-05
  %v254 = vadd.f32 %v222, 1e-05
  %v255 = vadd.f32 %v223, 1e-05
  %v256 = vadd.f32 %v224, 1e-05
  %v257 = vadd.f32 %v225, 1e-05
  %v258 = vadd.f32 %v226, 1e-05
  %v259 = vadd.f32 %v227, 1e-05
  %v260 = vadd.f32 %v228, 1e-05
  %v261 = vadd.f32 %v229, 1e-05
  %v262 = vadd.f32 %v230, 1e-05
  %v263 = vadd.f32 %v231, 1e-05
  %v264 = vadd.f32 %v232, 1e-05
  %v265 = vadd.f32 %v233, 1e-05
  %v266 = vadd.f32 %v234, 1e-05
  %v267 = vadd.f32 %v235, 1e-05
  %v268 = vadd.f32 %v236, 1e-05
  %v269 = vrsqrt.pop %v253
  %v270 = vrsqrt.pop %v254
  %v271 = vrsqrt.pop %v255
  %v272 = vrsqrt.pop %v256
  %v273 = vrsqrt.pop %v257
  %v274 = vrsqrt.pop %v258
  %v275 = vrsqrt.pop %v259
  %v276 = vrsqrt.pop %v260
  %v277 = vrsqrt.pop %v261
  %v278 = vrsqrt.pop %v262
  %v279 = vrsqrt.pop %v263
  %v280 = vrsqrt.pop %v264
  %v281 = vrsqrt.pop %v265
  %v282 = vrsqrt.pop %v266
  %v283 = vrsqrt.pop %v267
  %v284 = vrsqrt.pop %v268
  %v285 = vmul.f32 %v237, %v269
  %v286 = vmul.f32 %v238, %v270
  %v287 = vmul.f32 %v239, %v271
  %v288 = vmul.f32 %v240, %v272
  %v289 = vmul.f32 %v241, %v273
  %v290 = vmul.f32 %v242, %v274
  %v291 = vmul.f32 %v243, %v275
  %v292 = vmul.f32 %v244, %v276
  %v293 = vmul.f32 %v245, %v277
  %v294 = vmul.f32 %v246, %v278
  %v295 = vmul.f32 %v247, %v279
  %v296 = vmul.f32 %v248, %v280
  %v297 = vmul.f32 %v249, %v281
  %v298 = vmul.f32 %v250, %v282
  %v299 = vmul.f32 %v251, %v283
  %v300 = vmul.f32 %v252, %v284
  %v301 = vld [vmem:[%s1] sm:$0x1]
  %v303 = vlaneseq
  %v304 = vshrl.u32 %v303, 7
  %v305 = vsub.s32 0, %v304
  %v306 = vrot.slane %v301, %v305
  %v308 = vmul.f32 %v285, %v306
  %v309 = vmul.f32 %v286, %v306
  %v310 = vmul.f32 %v287, %v306
  %v311 = vmul.f32 %v288, %v306
  %v312 = vmul.f32 %v289, %v306
  %v313 = vmul.f32 %v290, %v306
  %v314 = vmul.f32 %v291, %v306
  %v315 = vmul.f32 %v292, %v306
  %v316 = vmul.f32 %v293, %v306
  %v317 = vmul.f32 %v294, %v306
  %v318 = vmul.f32 %v295, %v306
  %v319 = vmul.f32 %v296, %v306
  %v320 = vmul.f32 %v297, %v306
  %v321 = vmul.f32 %v298, %v306
  %v322 = vmul.f32 %v299, %v306
  %v323 = vmul.f32 %v300, %v306
  %v324 = vld [vmem:[%s2] sm:$0x1]
  %v326 = vlaneseq
  %v327 = vshrl.u32 %v326, 7
  %v328 = vsub.s32 0, %v327
  %v329 = vrot.slane %v324, %v328
  %v331 = vadd.f32 %v308, %v329
  %v332 = vadd.f32 %v309, %v329
  %v333 = vadd.f32 %v310, %v329
  %v334 = vadd.f32 %v311, %v329
  %v335 = vadd.f32 %v312, %v329
  %v336 = vadd.f32 %v313, %v329
  %v337 = vadd.f32 %v314, %v329
  %v338 = vadd.f32 %v315, %v329
  %v339 = vadd.f32 %v316, %v329
  %v340 = vadd.f32 %v317, %v329
  %v341 = vadd.f32 %v318, %v329
  %v342 = vadd.f32 %v319, %v329
  %v343 = vadd.f32 %v320, %v329
  %v344 = vadd.f32 %v321, %v329
  %v345 = vadd.f32 %v322, %v329
  %v346 = vadd.f32 %v323, %v329
  %v347 = vpack.c.bf16 %v332, %v331
  %v348 = vpack.c.bf16 %v334, %v333
  %v349 = vpack.c.bf16 %v336, %v335
  %v350 = vpack.c.bf16 %v338, %v337
  %v351 = vpack.c.bf16 %v340, %v339
  %v352 = vpack.c.bf16 %v342, %v341
  %v353 = vpack.c.bf16 %v344, %v343
  %v354 = vpack.c.bf16 %v346, %v345
  %v355 = vld [vmem:[%s3] sm:$0xf]
  %v356 = vld [vmem:[%s4] sm:$0x1]
  %v358 = vlaneseq
  %v359 = vshrl.u32 %v358, 7
  %v360 = vsub.s32 0, %v359
  %v361 = vrot.slane %v356, %v360
  %v364 = vsel %vm59, %v347, 0
  %v367 = vsel %vm59, %v348, 0
  %v370 = vsel %vm59, %v349, 0
  %v373 = vsel %vm59, %v350, 0
  %v376 = vsel %vm59, %v351, 0
  %v379 = vsel %vm59, %v352, 0
  %v382 = vsel %vm59, %v353, 0
  %v385 = vsel %vm59, %v354, 0
  %vm387 = vcmask 1043456
  %v389 = vsel %vm387, %v355, 0
  %391 = vmatprep.subr.bf16.mxu0 0
  %392 = vmatpush1.bf16.msra.mxu0 0
  %393 = vmatprep.subr.bf16.mxu0 0
  %394 = vmatpush1.bf16.msra.mxu0 0
  %395 = vmatprep.subr.bf16.mxu0 0
  %396 = vmatpush1.bf16.msra.mxu0 0
  %397 = vmatprep.subr.bf16.mxu0 0
  %398 = vmatpush1.bf16.msra.mxu0 0
  %399 = vmatprep.subr.bf16.mxu0 0
  %400 = vmatpush1.bf16.msra.mxu0 0
  %401 = vmatprep.subr.bf16.mxu0 0
  %402 = vmatpush1.bf16.msra.mxu0 0
  %403 = vmatprep.subr.bf16.mxu0 0
  %404 = vmatpush1.bf16.msra.mxu0 0
  %405 = vmatprep.subr.bf16.mxu0 0
  %406 = vmatpush1.bf16.msra.mxu0 %v389
  %407 = vmatprep.subr.bf16.mxu0 0
  %408 = vmatpush2.bf16.msra.mxu0 0
  %409 = vmatprep.subr.bf16.mxu0 0
  %410 = vmatpush2.bf16.msra.mxu0 0
  %411 = vmatprep.subr.bf16.mxu0 0
  %412 = vmatpush2.bf16.msra.mxu0 0
  %413 = vmatprep.subr.bf16.mxu0 0
  %414 = vmatpush2.bf16.msra.mxu0 0
  %415 = vmatprep.subr.bf16.mxu0 0
  %416 = vmatpush2.bf16.msra.mxu0 0
  %417 = vmatprep.subr.bf16.mxu0 0
  %418 = vmatpush2.bf16.msra.mxu0 0
  %419 = vmatprep.subr.bf16.mxu0 0
  %420 = vmatpush2.bf16.msra.mxu0 0
  %421 = vmatprep.subr.bf16.mxu0 0
  %422 = vmatpush2.bf16.msra.mxu0 0
  %423 = vmatprep.mubr.bf16.mxu0 0
  %424 = vmatmul.mubr.bf16.gmra.mxu0 %v364
  %v425 = vpop.f32.mrf.mxu0
  %v426 = vadd.f32 %v361, %v425
  %v427 = vpop.f32.mrf.mxu0
  %v428 = vpop.f32.mrf.mxu0
  %v429 = vadd.f32 %v361, %v428
  %v430 = vpop.f32.mrf.mxu0
  %431 = vmatprep.mubr.bf16.mxu0 0
  %432 = vmatmul.mubr.bf16.gmra.mxu0 %v367
  %v433 = vpop.f32.mrf.mxu0
  %v434 = vadd.f32 %v361, %v433
  %v435 = vpop.f32.mrf.mxu0
  %v436 = vpop.f32.mrf.mxu0
  %v437 = vadd.f32 %v361, %v436
  %v438 = vpop.f32.mrf.mxu0
  %439 = vmatprep.mubr.bf16.mxu0 0
  %440 = vmatmul.mubr.bf16.gmra.mxu0 %v370
  %v441 = vpop.f32.mrf.mxu0
  %v442 = vadd.f32 %v361, %v441
  %v443 = vpop.f32.mrf.mxu0
  %v444 = vpop.f32.mrf.mxu0
  %v445 = vadd.f32 %v361, %v444
  %v446 = vpop.f32.mrf.mxu0
  %447 = vmatprep.mubr.bf16.mxu0 0
  %448 = vmatmul.mubr.bf16.gmra.mxu0 %v373
  %v449 = vpop.f32.mrf.mxu0
  %v450 = vadd.f32 %v361, %v449
  %v451 = vpop.f32.mrf.mxu0
  %v452 = vpop.f32.mrf.mxu0
  %v453 = vadd.f32 %v361, %v452
  %v454 = vpop.f32.mrf.mxu0
  %455 = vmatprep.mubr.bf16.mxu0 0
  %456 = vmatmul.mubr.bf16.gmra.mxu0 %v376
  %v457 = vpop.f32.mrf.mxu0
  %v458 = vadd.f32 %v361, %v457
  %v459 = vpop.f32.mrf.mxu0
  %v460 = vpop.f32.mrf.mxu0
  %v461 = vadd.f32 %v361, %v460
  %v462 = vpop.f32.mrf.mxu0
  %463 = vmatprep.mubr.bf16.mxu0 0
  %464 = vmatmul.mubr.bf16.gmra.mxu0 %v379
  %v465 = vpop.f32.mrf.mxu0
  %v466 = vadd.f32 %v361, %v465
  %v467 = vpop.f32.mrf.mxu0
  %v468 = vpop.f32.mrf.mxu0
  %v469 = vadd.f32 %v361, %v468
  %v470 = vpop.f32.mrf.mxu0
  %471 = vmatprep.mubr.bf16.mxu0 0
  %472 = vmatmul.mubr.bf16.gmra.mxu0 %v382
  %v473 = vpop.f32.mrf.mxu0
  %v474 = vadd.f32 %v361, %v473
  %v475 = vpop.f32.mrf.mxu0
  %v476 = vpop.f32.mrf.mxu0
  %v477 = vadd.f32 %v361, %v476
  %v478 = vpop.f32.mrf.mxu0
  %479 = vmatprep.mubr.bf16.mxu0 0
  %480 = vmatmul.mubr.bf16.gmra.mxu0 %v385
  %v481 = vpop.f32.mrf.mxu0
  %v482 = vadd.f32 %v361, %v481
  %v483 = vpop.f32.mrf.mxu0
  %v484 = vpop.f32.mrf.mxu0
  %v485 = vadd.f32 %v361, %v484
  %v486 = vpop.f32.mrf.mxu0
  %487 = vdwg.mxu0
  %v488 = vmul.f32 %v426, 0.5
  %v489 = vmul.f32 %v429, 0.5
  %v490 = vmul.f32 %v434, 0.5
  %v491 = vmul.f32 %v437, 0.5
  %v492 = vmul.f32 %v442, 0.5
  %v493 = vmul.f32 %v445, 0.5
  %v494 = vmul.f32 %v450, 0.5
  %v495 = vmul.f32 %v453, 0.5
  %v496 = vmul.f32 %v458, 0.5
  %v497 = vmul.f32 %v461, 0.5
  %v498 = vmul.f32 %v466, 0.5
  %v499 = vmul.f32 %v469, 0.5
  %v500 = vmul.f32 %v474, 0.5
  %v501 = vmul.f32 %v477, 0.5
  %v502 = vmul.f32 %v482, 0.5
  %v503 = vmul.f32 %v485, 0.5
  %v504 = vmul.f32 %v426, 0.044715
  %v505 = vmul.f32 %v429, 0.044715
  %v506 = vmul.f32 %v434, 0.044715
  %v507 = vmul.f32 %v437, 0.044715
  %v508 = vmul.f32 %v442, 0.044715
  %v509 = vmul.f32 %v445, 0.044715
  %v510 = vmul.f32 %v450, 0.044715
  %v511 = vmul.f32 %v453, 0.044715
  %v512 = vmul.f32 %v458, 0.044715
  %v513 = vmul.f32 %v461, 0.044715
  %v514 = vmul.f32 %v466, 0.044715
  %v515 = vmul.f32 %v469, 0.044715
  %v516 = vmul.f32 %v474, 0.044715
  %v517 = vmul.f32 %v477, 0.044715
  %v518 = vmul.f32 %v482, 0.044715
  %v519 = vmul.f32 %v485, 0.044715
  %v520 = vmul.f32 %v504, %v426
  %v521 = vmul.f32 %v505, %v429
  %v522 = vmul.f32 %v506, %v434
  %v523 = vmul.f32 %v507, %v437
  %v524 = vmul.f32 %v508, %v442
  %v525 = vmul.f32 %v509, %v445
  %v526 = vmul.f32 %v510, %v450
  %v527 = vmul.f32 %v511, %v453
  %v528 = vmul.f32 %v512, %v458
  %v529 = vmul.f32 %v513, %v461
  %v530 = vmul.f32 %v514, %v466
  %v531 = vmul.f32 %v515, %v469
  %v532 = vmul.f32 %v516, %v474
  %v533 = vmul.f32 %v517, %v477
  %v534 = vmul.f32 %v518, %v482
  %v535 = vmul.f32 %v519, %v485
  %v536 = vmul.f32 %v520, %v426
  %v537 = vmul.f32 %v521, %v429
  %v538 = vmul.f32 %v522, %v434
  %v539 = vmul.f32 %v523, %v437
  %v540 = vmul.f32 %v524, %v442
  %v541 = vmul.f32 %v525, %v445
  %v542 = vmul.f32 %v526, %v450
  %v543 = vmul.f32 %v527, %v453
  %v544 = vmul.f32 %v528, %v458
  %v545 = vmul.f32 %v529, %v461
  %v546 = vmul.f32 %v530, %v466
  %v547 = vmul.f32 %v531, %v469
  %v548 = vmul.f32 %v532, %v474
  %v549 = vmul.f32 %v533, %v477
  %v550 = vmul.f32 %v534, %v482
  %v551 = vmul.f32 %v535, %v485
  %v552 = vadd.f32 %v426, %v536
  %v553 = vadd.f32 %v429, %v537
  %v554 = vadd.f32 %v434, %v538
  %v555 = vadd.f32 %v437, %v539
  %v556 = vadd.f32 %v442, %v540
  %v557 = vadd.f32 %v445, %v541
  %v558 = vadd.f32 %v450, %v542
  %v559 = vadd.f32 %v453, %v543
  %v560 = vadd.f32 %v458, %v544
  %v561 = vadd.f32 %v461, %v545
  %v562 = vadd.f32 %v466, %v546
  %v563 = vadd.f32 %v469, %v547
  %v564 = vadd.f32 %v474, %v548
  %v565 = vadd.f32 %v477, %v549
  %v566 = vadd.f32 %v482, %v550
  %v567 = vadd.f32 %v485, %v551
  %v568 = vmul.f32 %v552, 0.7978846
  %v569 = vmul.f32 %v553, 0.7978846
  %v570 = vmul.f32 %v554, 0.7978846
  %v571 = vmul.f32 %v555, 0.7978846
  %v572 = vmul.f32 %v556, 0.7978846
  %v573 = vmul.f32 %v557, 0.7978846
  %v574 = vmul.f32 %v558, 0.7978846
  %v575 = vmul.f32 %v559, 0.7978846
  %v576 = vmul.f32 %v560, 0.7978846
  %v577 = vmul.f32 %v561, 0.7978846
  %v578 = vmul.f32 %v562, 0.7978846
  %v579 = vmul.f32 %v563, 0.7978846
  %v580 = vmul.f32 %v564, 0.7978846
  %v581 = vmul.f32 %v565, 0.7978846
  %v582 = vmul.f32 %v566, 0.7978846
  %v583 = vmul.f32 %v567, 0.7978846
  %v584 = vtanh.pop %v568
  %v585 = vtanh.pop %v569
  %v586 = vtanh.pop %v570
  %v587 = vtanh.pop %v571
  %v588 = vtanh.pop %v572
  %v589 = vtanh.pop %v573
  %v590 = vtanh.pop %v574
  %v591 = vtanh.pop %v575
  %v592 = vtanh.pop %v576
  %v593 = vtanh.pop %v577
  %v594 = vtanh.pop %v578
  %v595 = vtanh.pop %v579
  %v596 = vtanh.pop %v580
  %v597 = vtanh.pop %v581
  %v598 = vtanh.pop %v582
  %v599 = vtanh.pop %v583
  %v600 = vadd.f32 %v584, 1.0
  %v601 = vadd.f32 %v585, 1.0
  %v602 = vadd.f32 %v586, 1.0
  %v603 = vadd.f32 %v587, 1.0
  %v604 = vadd.f32 %v588, 1.0
  %v605 = vadd.f32 %v589, 1.0
  %v606 = vadd.f32 %v590, 1.0
  %v607 = vadd.f32 %v591, 1.0
  %v608 = vadd.f32 %v592, 1.0
  %v609 = vadd.f32 %v593, 1.0
  %v610 = vadd.f32 %v594, 1.0
  %v611 = vadd.f32 %v595, 1.0
  %v612 = vadd.f32 %v596, 1.0
  %v613 = vadd.f32 %v597, 1.0
  %v614 = vadd.f32 %v598, 1.0
  %v615 = vadd.f32 %v599, 1.0
  %v616 = vmul.f32 %v488, %v600
  %v617 = vmul.f32 %v489, %v601
  %v618 = vmul.f32 %v490, %v602
  %v619 = vmul.f32 %v491, %v603
  %v620 = vmul.f32 %v492, %v604
  %v621 = vmul.f32 %v493, %v605
  %v622 = vmul.f32 %v494, %v606
  %v623 = vmul.f32 %v495, %v607
  %v624 = vmul.f32 %v496, %v608
  %v625 = vmul.f32 %v497, %v609
  %v626 = vmul.f32 %v498, %v610
  %v627 = vmul.f32 %v499, %v611
  %v628 = vmul.f32 %v500, %v612
  %v629 = vmul.f32 %v501, %v613
  %v630 = vmul.f32 %v502, %v614
  %v631 = vmul.f32 %v503, %v615
  %v632 = vpack.c.bf16 %v617, %v616
  %v633 = vpack.c.bf16 %v619, %v618
  %v634 = vpack.c.bf16 %v621, %v620
  %v635 = vpack.c.bf16 %v623, %v622
  %v636 = vpack.c.bf16 %v625, %v624
  %v637 = vpack.c.bf16 %v627, %v626
  %v638 = vpack.c.bf16 %v629, %v628
  %v639 = vpack.c.bf16 %v631, %v630
  %v640 = vld [vmem:[%s5] sm:$0xf]
  %v641 = vld [vmem:[%s5 + $0x4] sm:$0xf]
  %v642 = vld [vmem:[%s6] sm:$0x1]
  %v644 = vlaneseq
  %v645 = vshrl.u32 %v644, 7
  %v646 = vsub.s32 0, %v645
  %v647 = vrot.slane %v642, %v646
  %v651 = vunpack.c.l.b16 %v640
  %v652 = vunpack.c.l.b16 %v641
  %v653 = vpack.c.b16 %v652, %v651
  %vm655 = vcmask 130048
  %v657 = vsel %vm655, %v632, 0
  %v660 = vsel %vm655, %v633, 0
  %v663 = vsel %vm655, %v634, 0
  %v666 = vsel %vm655, %v635, 0
  %v669 = vsel %vm655, %v636, 0
  %v672 = vsel %vm655, %v637, 0
  %v675 = vsel %vm655, %v638, 0
  %v678 = vsel %vm655, %v639, 0
  %680 = vmatprep.subr.bf16.mxu0 0
  %681 = vmatpush1.bf16.msra.mxu0 0
  %682 = vmatprep.subr.bf16.mxu0 0
  %683 = vmatpush1.bf16.msra.mxu0 0
  %684 = vmatprep.subr.bf16.mxu0 0
  %685 = vmatpush1.bf16.msra.mxu0 0
  %686 = vmatprep.subr.bf16.mxu0 0
  %687 = vmatpush1.bf16.msra.mxu0 0
  %688 = vmatprep.subr.bf16.mxu0 0
  %689 = vmatpush1.bf16.msra.mxu0 0
  %690 = vmatprep.subr.bf16.mxu0 0
  %691 = vmatpush1.bf16.msra.mxu0 0
  %692 = vmatprep.subr.bf16.mxu0 0
  %693 = vmatpush1.bf16.msra.mxu0 0
  %694 = vmatprep.subr.bf16.mxu0 0
  %695 = vmatpush1.bf16.msra.mxu0 %v653
  %696 = vmatprep.subr.bf16.mxu0 0
  %697 = vmatpush2.bf16.msra.mxu0 0
  %698 = vmatprep.subr.bf16.mxu0 0
  %699 = vmatpush2.bf16.msra.mxu0 0
  %700 = vmatprep.subr.bf16.mxu0 0
  %701 = vmatpush2.bf16.msra.mxu0 0
  %702 = vmatprep.subr.bf16.mxu0 0
  %703 = vmatpush2.bf16.msra.mxu0 0
  %704 = vmatprep.subr.bf16.mxu0 0
  %705 = vmatpush2.bf16.msra.mxu0 0
  %706 = vmatprep.subr.bf16.mxu0 0
  %707 = vmatpush2.bf16.msra.mxu0 0
  %708 = vmatprep.subr.bf16.mxu0 0
  %709 = vmatpush2.bf16.msra.mxu0 0
  %710 = vmatprep.subr.bf16.mxu0 0
  %711 = vmatpush2.bf16.msra.mxu0 0
  %712 = vmatprep.mubr.bf16.mxu0 0
  %713 = vmatmul.mubr.bf16.gmra.mxu0 %v657
  %v714 = vpop.f32.mrf.mxu0
  %v715 = vadd.f32 %v647, %v714
  %v716 = vpop.f32.mrf.mxu0
  %v717 = vpop.f32.mrf.mxu0
  %v718 = vadd.f32 %v647, %v717
  %v719 = vpop.f32.mrf.mxu0
  %720 = vmatprep.mubr.bf16.mxu0 0
  %721 = vmatmul.mubr.bf16.gmra.mxu0 %v660
  %v722 = vpop.f32.mrf.mxu0
  %v723 = vadd.f32 %v647, %v722
  %v724 = vpop.f32.mrf.mxu0
  %v725 = vpop.f32.mrf.mxu0
  %v726 = vadd.f32 %v647, %v725
  %v727 = vpop.f32.mrf.mxu0
  %728 = vmatprep.mubr.bf16.mxu0 0
  %729 = vmatmul.mubr.bf16.gmra.mxu0 %v663
  %v730 = vpop.f32.mrf.mxu0
  %v731 = vadd.f32 %v647, %v730
  %v732 = vpop.f32.mrf.mxu0
  %v733 = vpop.f32.mrf.mxu0
  %v734 = vadd.f32 %v647, %v733
  %v735 = vpop.f32.mrf.mxu0
  %736 = vmatprep.mubr.bf16.mxu0 0
  %737 = vmatmul.mubr.bf16.gmra.mxu0 %v666
  %v738 = vpop.f32.mrf.mxu0
  %v739 = vadd.f32 %v647, %v738
  %v740 = vpop.f32.mrf.mxu0
  %v741 = vpop.f32.mrf.mxu0
  %v742 = vadd.f32 %v647, %v741
  %v743 = vpop.f32.mrf.mxu0
  %744 = vmatprep.mubr.bf16.mxu0 0
  %745 = vmatmul.mubr.bf16.gmra.mxu0 %v669
  %v746 = vpop.f32.mrf.mxu0
  %v747 = vadd.f32 %v647, %v746
  %v748 = vpop.f32.mrf.mxu0
  %v749 = vpop.f32.mrf.mxu0
  %v750 = vadd.f32 %v647, %v749
  %v751 = vpop.f32.mrf.mxu0
  %752 = vmatprep.mubr.bf16.mxu0 0
  %753 = vmatmul.mubr.bf16.gmra.mxu0 %v672
  %v754 = vpop.f32.mrf.mxu0
  %v755 = vadd.f32 %v647, %v754
  %v756 = vpop.f32.mrf.mxu0
  %v757 = vpop.f32.mrf.mxu0
  %v758 = vadd.f32 %v647, %v757
  %v759 = vpop.f32.mrf.mxu0
  %760 = vmatprep.mubr.bf16.mxu0 0
  %761 = vmatmul.mubr.bf16.gmra.mxu0 %v675
  %v762 = vpop.f32.mrf.mxu0
  %v763 = vadd.f32 %v647, %v762
  %v764 = vpop.f32.mrf.mxu0
  %v765 = vpop.f32.mrf.mxu0
  %v766 = vadd.f32 %v647, %v765
  %v767 = vpop.f32.mrf.mxu0
  %768 = vmatprep.mubr.bf16.mxu0 0
  %769 = vmatmul.mubr.bf16.gmra.mxu0 %v678
  %v770 = vpop.f32.mrf.mxu0
  %v771 = vadd.f32 %v647, %v770
  %v772 = vpop.f32.mrf.mxu0
  %v773 = vpop.f32.mrf.mxu0
  %v774 = vadd.f32 %v647, %v773
  %v775 = vpop.f32.mrf.mxu0
  %776 = vdwg.mxu0
  %v777 = vadd.f32 %v715, %v43
  %v778 = vadd.f32 %v718, %v44
  %v779 = vadd.f32 %v723, %v45
  %v780 = vadd.f32 %v726, %v46
  %v781 = vadd.f32 %v731, %v47
  %v782 = vadd.f32 %v734, %v48
  %v783 = vadd.f32 %v739, %v49
  %v784 = vadd.f32 %v742, %v50
  %v785 = vadd.f32 %v747, %v51
  %v786 = vadd.f32 %v750, %v52
  %v787 = vadd.f32 %v755, %v53
  %v788 = vadd.f32 %v758, %v54
  %v789 = vadd.f32 %v763, %v55
  %v790 = vadd.f32 %v766, %v56
  %v791 = vadd.f32 %v771, %v57
  %v792 = vadd.f32 %v774, %v58
  %v793 = vpack.c.bf16 %v778, %v777
  %v794 = vpack.c.bf16 %v780, %v779
  %v795 = vpack.c.bf16 %v782, %v781
  %v796 = vpack.c.bf16 %v784, %v783
  %v797 = vpack.c.bf16 %v786, %v785
  %v798 = vpack.c.bf16 %v788, %v787
  %v799 = vpack.c.bf16 %v790, %v789
  %v800 = vpack.c.bf16 %v792, %v791
  %v809 = vunpack.c.l.b16 %v793
  %v810 = vunpack.c.h.b16 %v793
  %v811 = vunpack.c.l.b16 %v794
  %v812 = vunpack.c.h.b16 %v794
  %v813 = vunpack.c.l.b16 %v795
  %v814 = vunpack.c.h.b16 %v795
  %v815 = vunpack.c.l.b16 %v796
  %v816 = vunpack.c.h.b16 %v796
  %v817 = vunpack.c.l.b16 %v797
  %v818 = vunpack.c.h.b16 %v797
  %v819 = vunpack.c.l.b16 %v798
  %v820 = vunpack.c.h.b16 %v798
  %v821 = vunpack.c.l.b16 %v799
  %v822 = vunpack.c.h.b16 %v799
  %v823 = vunpack.c.l.b16 %v800
  %v824 = vunpack.c.h.b16 %v800
  %v825 = vpack.c.b16 %v809, %v809
  %v826 = vpack.c.b16 %v810, %v810
  %v827 = vpack.c.b16 %v811, %v811
  %v828 = vpack.c.b16 %v812, %v812
  %v829 = vpack.c.b16 %v813, %v813
  %v830 = vpack.c.b16 %v814, %v814
  %v831 = vpack.c.b16 %v815, %v815
  %v832 = vpack.c.b16 %v816, %v816
  %v833 = vpack.c.b16 %v817, %v817
  %v834 = vpack.c.b16 %v818, %v818
  %v835 = vpack.c.b16 %v819, %v819
  %v836 = vpack.c.b16 %v820, %v820
  %v837 = vpack.c.b16 %v821, %v821
  %v838 = vpack.c.b16 %v822, %v822
  %v839 = vpack.c.b16 %v823, %v823
  %v840 = vpack.c.b16 %v824, %v824
  %vm857 = vcmask 60416
  %858 = vst.msk [vmem:[%s7] sm:$0xf] %vm857, %v825
  %859 = vst.msk [vmem:[%s7 + $0x4] sm:$0xf] %vm857, %v826
  %860 = vst.msk [vmem:[%s7 + $0x8] sm:$0xf] %vm857, %v827
  %861 = vst.msk [vmem:[%s7 + $0xc] sm:$0xf] %vm857, %v828
  %862 = vst.msk [vmem:[%s7 + $0x10] sm:$0xf] %vm857, %v829
  %863 = vst.msk [vmem:[%s7 + $0x14] sm:$0xf] %vm857, %v830
  %864 = vst.msk [vmem:[%s7 + $0x18] sm:$0xf] %vm857, %v831
  %865 = vst.msk [vmem:[%s7 + $0x1c] sm:$0xf] %vm857, %v832
  %866 = vst.msk [vmem:[%s7 + $0x20] sm:$0xf] %vm857, %v833
  %867 = vst.msk [vmem:[%s7 + $0x24] sm:$0xf] %vm857, %v834
  %868 = vst.msk [vmem:[%s7 + $0x28] sm:$0xf] %vm857, %v835
  %869 = vst.msk [vmem:[%s7 + $0x2c] sm:$0xf] %vm857, %v836
  %870 = vst.msk [vmem:[%s7 + $0x30] sm:$0xf] %vm857, %v837
  %871 = vst.msk [vmem:[%s7 + $0x34] sm:$0xf] %vm857, %v838
  %872 = vst.msk [vmem:[%s7 + $0x38] sm:$0xf] %vm857, %v839
  %873 = vst.msk [vmem:[%s7 + $0x3c] sm:$0xf] %vm857, %v840
  // Predicated region
  $region30: #{scalable_vit_forward.16} parent=0 // pred_check
    _
  $region31: #{scalable_vit_forward.16} parent=0 // pred_check_branch
    %875 = sbr.rel (0) target = $region33
  $region32: #{scalable_vit_forward.16} parent=0 // pred_region
    _
  $region33: #{scalable_vit_forward.16} parent=0 // pred_fallthru
    _
  // Predicated region
  $region34: #{scalable_vit_forward.16} parent=0 // pred_check
    _
  $region35: #{scalable_vit_forward.16} parent=0 // pred_check_branch
    %877 = sbr.rel (0) target = $region37
  $region36: #{scalable_vit_forward.16} parent=0 // pred_region
    _
  $region37: #{scalable_vit_forward.16} parent=0 // pred_fallthru
    _

// kernel: scalable_vit_forward.15
$region0: #{scalable_vit_forward.15}
  #allocation0 [shape = 'u32[]', space=smem, size = 0x4, offset = 0x4, fixed_abs, tag = 'smem constant byte address 0x4 - core index']
  #allocation1 [shape = 'u32[144,128]{1,0:T(1,128)}', space=vmem, size = 0x12000, scoped, tag = 'internal scratch']
  #allocation2 [shape = 'f32[64,8]{1,0:T(8,128)}', space=vmem, size = 0x8000, scoped, tag = 'scratch operand']
  %s0 = inlined_call_operand.vmem [shape: bf16[2,64,8], index: 0, kind: input, shape index: {}]
  %s1 = inlined_call_operand.vmem [shape: bf16[2,16,32], index: 1, kind: input, shape index: {}]
  %s2 = inlined_call_operand.vmem [shape: bf16[2,64,8], index: 2, kind: input, shape index: {}]
  %s3 = inlined_call_operand.vmem [shape: bf16[2,8,4], index: 3, kind: input, shape index: {}]
  %s4 = inlined_call_operand.vmem [shape: bf16[2,32,4], index: 4, kind: input, shape index: {}]
  %s5 = inlined_call_operand.vmem [shape: bf16[2,32,4], index: 5, kind: input, shape index: {}]
  %s6 = inlined_call_operand.vmem [shape: bf16[2,4,8], index: 6, kind: input, shape index: {}]
  %s7 = inlined_call_operand.vmem [shape: f32[1,8], index: 7, kind: input, shape index: {}]
  %s8 = inlined_call_operand.vmem [shape: bf16[2,64,8], index: 8, kind: output, shape index: {}]
  %s9 = sld [smem:[#allocation0]]
  $region73: #{scalable_vit_forward.15} parent=0
    _
  %s11 = ssub.s32 1, %s9
  %s12 = scalar_select 0, %s11, %s9
  loop: start=0, step=1, limit=6
  $region2: #{scalable_vit_forward.15} parent=0 // loop_pre_header
    _
  $region3: #{scalable_vit_forward.15} parent=0 // loop_header
    %s14 = sphi 0, %s18
    %p15 = scmp.ge.s32.totalorder %s14, 6
    %s21 = sphi 0, %s40
    %s22 = sphi 0, %s36
    %s23 = sphi 0, %s32
    %s24 = sphi 0, %s21
    %s25 = sphi 0, %s22
    %s26 = sphi 0, %s23
    %s27 = sphi 0, %s24
    %s28 = sphi 0, %s25
    %s29 = sphi 0, %s26
    %s45 = sphi 0, %s47
    %s48 = sphi 0, %s45
    %s49 = sphi 0, %s48
    %s65 = sphi 0, %s49
    %s71 = sphi 0, %s73
    %s74 = sphi 0, %s71
    %s75 = sphi 0, %s74
    %s91 = sphi 0, %s75
    %s99 = sphi 0, %s101
    %s102 = sphi 0, %s99
    %s103 = sphi 0, %s102
    %s119 = sphi 0, %s103
    %s125 = sphi 0, %s127
    %s128 = sphi 0, %s125
    %s129 = sphi 0, %s128
    %s145 = sphi 0, %s129
    %s151 = sphi 0, %s153
    %s154 = sphi 0, %s151
    %s155 = sphi 0, %s154
    %s171 = sphi 0, %s155
    %s177 = sphi 0, %s179
    %s180 = sphi 0, %s177
    %s181 = sphi 0, %s180
    %s197 = sphi 0, %s181
    %s203 = sphi 0, %s205
    %s206 = sphi 0, %s203
    %s207 = sphi 0, %s206
    %s223 = sphi 0, %s207
    %s227 = sphi 0, %s227
    %s229 = sphi 0, %s227
    %s230 = sphi 0, %s229
    %s244 = sphi 0, %s230
    %s252 = sphi 0, %s254
    %s255 = sphi 0, %s252
    %s256 = sphi 0, %s255
    %s272 = sphi 0, %s256
  $region4: #{scalable_vit_forward.15} parent=0 // loop_header_branch
    %17 = sbr.rel (%p15) target = $region8
  $region5: #{scalable_vit_forward.15} parent=0 // loop_body
    %s19 = ssub.s32 %s14, 1
    %s20 = ssub.s32 %s14, 2
    %s30 = sadd.s32 1, %s23
    %p31 = scmp.ge.s32.totalorder %s30, 2
    %s32 = scalar_select %p31, 0, %s30
    %s33 = sadd.s32 1, %s22
    %s34 = scalar_select %p31, %s33, %s22
    %p35 = scmp.ge.s32.totalorder %s34, 1
    %s36 = scalar_select %p35, 0, %s34
    %s37 = sadd.s32 1, %s21
    %s38 = scalar_select %p35, %s37, %s21
    %p39 = scmp.ge.s32.totalorder %s38, 2
    %s40 = scalar_select %p39, 0, %s38
    %s41 = ssub.s32 %s21, %s40
    %s42 = ssub.s32 %s22, %s36
    %s43 = sor.u32 %s41, %s42
    %p44 = scmp.eq.s32.totalorder %s43, 0
    %s46 = sadd.s32 %s45, 1
    %s47 = scalar_select %p44, %s45, %s46
    %p50 = pneg %p44
    %p51 = scmp.eq.s32.totalorder %s14, 3
    %p52 = por %p50, %p51
    %p53 = scmp.ne.s32.totalorder %s45, %s48
    %p54 = scmp.eq.s32.totalorder %s14, 0
    %p55 = por %p53, %p54
    %p56 = scmp.ne.s32.totalorder %s45, %s48
    %p57 = scmp.eq.s32.totalorder %s19, 3
    %p58 = por %p56, %p57
    %p59 = scmp.ne.s32.totalorder %s48, %s49
    %p60 = scmp.eq.s32.totalorder %s19, 0
    %p61 = por %p59, %p60
    %p62 = scmp.ne.s32.totalorder %s48, %s49
    %p63 = scmp.eq.s32.totalorder %s20, 3
    %p64 = por %p62, %p63
    %p66 = scmp.ne.s32.totalorder %s49, %s65
    %p67 = scmp.eq.s32.totalorder %s20, 0
    %p68 = por %p66, %p67
    %s69 = ssub.s32 %s21, %s40
    %p70 = scmp.eq.s32.totalorder %s69, 0
    %s72 = sadd.s32 %s71, 1
    %s73 = scalar_select %p70, %s71, %s72
    %p76 = pneg %p70
    %p77 = scmp.eq.s32.totalorder %s14, 3
    %p78 = por %p76, %p77
    %p79 = scmp.ne.s32.totalorder %s71, %s74
    %p80 = scmp.eq.s32.totalorder %s14, 0
    %p81 = por %p79, %p80
    %p82 = scmp.ne.s32.totalorder %s71, %s74
    %p83 = scmp.eq.s32.totalorder %s19, 3
    %p84 = por %p82, %p83
    %p85 = scmp.ne.s32.totalorder %s74, %s75
    %p86 = scmp.eq.s32.totalorder %s19, 0
    %p87 = por %p85, %p86
    %p88 = scmp.ne.s32.totalorder %s74, %s75
    %p89 = scmp.eq.s32.totalorder %s20, 3
    %p90 = por %p88, %p89
    %p92 = scmp.ne.s32.totalorder %s75, %s91
    %p93 = scmp.eq.s32.totalorder %s20, 0
    %p94 = por %p92, %p93
    %s95 = ssub.s32 %s21, %s40
    %s96 = ssub.s32 %s22, %s36
    %s97 = sor.u32 %s95, %s96
    %p98 = scmp.eq.s32.totalorder %s97, 0
    %s100 = sadd.s32 %s99, 1
    %s101 = scalar_select %p98, %s99, %s100
    %p104 = pneg %p98
    %p105 = scmp.eq.s32.totalorder %s14, 3
    %p106 = por %p104, %p105
    %p107 = scmp.ne.s32.totalorder %s99, %s102
    %p108 = scmp.eq.s32.totalorder %s14, 0
    %p109 = por %p107, %p108
    %p110 = scmp.ne.s32.totalorder %s99, %s102
    %p111 = scmp.eq.s32.totalorder %s19, 3
    %p112 = por %p110, %p111
    %p113 = scmp.ne.s32.totalorder %s102, %s103
    %p114 = scmp.eq.s32.totalorder %s19, 0
    %p115 = por %p113, %p114
    %p116 = scmp.ne.s32.totalorder %s102, %s103
    %p117 = scmp.eq.s32.totalorder %s20, 3
    %p118 = por %p116, %p117
    %p120 = scmp.ne.s32.totalorder %s103, %s119
    %p121 = scmp.eq.s32.totalorder %s20, 0
    %p122 = por %p120, %p121
    %s123 = ssub.s32 %s23, %s32
    %p124 = scmp.eq.s32.totalorder %s123, 0
    %s126 = sadd.s32 %s125, 1
    %s127 = scalar_select %p124, %s125, %s126
    %p130 = pneg %p124
    %p131 = scmp.eq.s32.totalorder %s14, 3
    %p132 = por %p130, %p131
    %p133 = scmp.ne.s32.totalorder %s125, %s128
    %p134 = scmp.eq.s32.totalorder %s14, 0
    %p135 = por %p133, %p134
    %p136 = scmp.ne.s32.totalorder %s125, %s128
    %p137 = scmp.eq.s32.totalorder %s19, 3
    %p138 = por %p136, %p137
    %p139 = scmp.ne.s32.totalorder %s128, %s129
    %p140 = scmp.eq.s32.totalorder %s19, 0
    %p141 = por %p139, %p140
    %p142 = scmp.ne.s32.totalorder %s128, %s129
    %p143 = scmp.eq.s32.totalorder %s20, 3
    %p144 = por %p142, %p143
    %p146 = scmp.ne.s32.totalorder %s129, %s145
    %p147 = scmp.eq.s32.totalorder %s20, 0
    %p148 = por %p146, %p147
    %s149 = ssub.s32 %s23, %s32
    %p150 = scmp.eq.s32.totalorder %s149, 0
    %s152 = sadd.s32 %s151, 1
    %s153 = scalar_select %p150, %s151, %s152
    %p156 = pneg %p150
    %p157 = scmp.eq.s32.totalorder %s14, 3
    %p158 = por %p156, %p157
    %p159 = scmp.ne.s32.totalorder %s151, %s154
    %p160 = scmp.eq.s32.totalorder %s14, 0
    %p161 = por %p159, %p160
    %p162 = scmp.ne.s32.totalorder %s151, %s154
    %p163 = scmp.eq.s32.totalorder %s19, 3
    %p164 = por %p162, %p163
    %p165 = scmp.ne.s32.totalorder %s154, %s155
    %p166 = scmp.eq.s32.totalorder %s19, 0
    %p167 = por %p165, %p166
    %p168 = scmp.ne.s32.totalorder %s154, %s155
    %p169 = scmp.eq.s32.totalorder %s20, 3
    %p170 = por %p168, %p169
    %p172 = scmp.ne.s32.totalorder %s155, %s171
    %p173 = scmp.eq.s32.totalorder %s20, 0
    %p174 = por %p172, %p173
    %s175 = ssub.s32 %s23, %s32
    %p176 = scmp.eq.s32.totalorder %s175, 0
    %s178 = sadd.s32 %s177, 1
    %s179 = scalar_select %p176, %s177, %s178
    %p182 = pneg %p176
    %p183 = scmp.eq.s32.totalorder %s14, 3
    %p184 = por %p182, %p183
    %p185 = scmp.ne.s32.totalorder %s177, %s180
    %p186 = scmp.eq.s32.totalorder %s14, 0
    %p187 = por %p185, %p186
    %p188 = scmp.ne.s32.totalorder %s177, %s180
    %p189 = scmp.eq.s32.totalorder %s19, 3
    %p190 = por %p188, %p189
    %p191 = scmp.ne.s32.totalorder %s180, %s181
    %p192 = scmp.eq.s32.totalorder %s19, 0
    %p193 = por %p191, %p192
    %p194 = scmp.ne.s32.totalorder %s180, %s181
    %p195 = scmp.eq.s32.totalorder %s20, 3
    %p196 = por %p194, %p195
    %p198 = scmp.ne.s32.totalorder %s181, %s197
    %p199 = scmp.eq.s32.totalorder %s20, 0
    %p200 = por %p198, %p199
    %s201 = ssub.s32 %s23, %s32
    %p202 = scmp.eq.s32.totalorder %s201, 0
    %s204 = sadd.s32 %s203, 1
    %s205 = scalar_select %p202, %s203, %s204
    %p208 = pneg %p202
    %p209 = scmp.eq.s32.totalorder %s14, 3
    %p210 = por %p208, %p209
    %p211 = scmp.ne.s32.totalorder %s203, %s206
    %p212 = scmp.eq.s32.totalorder %s14, 0
    %p213 = por %p211, %p212
    %p214 = scmp.ne.s32.totalorder %s203, %s206
    %p215 = scmp.eq.s32.totalorder %s19, 3
    %p216 = por %p214, %p215
    %p217 = scmp.ne.s32.totalorder %s206, %s207
    %p218 = scmp.eq.s32.totalorder %s19, 0
    %p219 = por %p217, %p218
    %p220 = scmp.ne.s32.totalorder %s206, %s207
    %p221 = scmp.eq.s32.totalorder %s20, 3
    %p222 = por %p220, %p221
    %p224 = scmp.ne.s32.totalorder %s207, %s223
    %p225 = scmp.eq.s32.totalorder %s20, 0
    %p226 = por %p224, %p225
    %s228 = sadd.s32 %s227, 1
    %p231 = scmp.eq.s32.totalorder %s14, 3
    %p232 = scmp.ne.s32.totalorder %s227, %s229
    %p233 = scmp.eq.s32.totalorder %s14, 0
    %p234 = por %p232, %p233
    %p235 = scmp.ne.s32.totalorder %s227, %s229
    %p236 = scmp.eq.s32.totalorder %s19, 3
    %p237 = por %p235, %p236
    %p238 = scmp.ne.s32.totalorder %s229, %s230
    %p239 = scmp.eq.s32.totalorder %s19, 0
    %p240 = por %p238, %p239
    %p241 = scmp.ne.s32.totalorder %s229, %s230
    %p242 = scmp.eq.s32.totalorder %s20, 3
    %p243 = por %p241, %p242
    %p245 = scmp.ne.s32.totalorder %s230, %s244
    %p246 = scmp.eq.s32.totalorder %s20, 0
    %p247 = por %p245, %p246
    %s248 = ssub.s32 %s21, %s40
    %s249 = ssub.s32 %s22, %s36
    %s250 = sor.u32 %s248, %s249
    %p251 = scmp.eq.s32.totalorder %s250, 0
    %s253 = sadd.s32 %s252, 1
    %s254 = scalar_select %p251, %s252, %s253
    %p257 = pneg %p251
    %p258 = scmp.eq.s32.totalorder %s14, 3
    %p259 = por %p257, %p258
    %p260 = scmp.ne.s32.totalorder %s252, %s255
    %p261 = scmp.eq.s32.totalorder %s14, 0
    %p262 = por %p260, %p261
    %p263 = scmp.ne.s32.totalorder %s252, %s255
    %p264 = scmp.eq.s32.totalorder %s19, 3
    %p265 = por %p263, %p264
    %p266 = scmp.ne.s32.totalorder %s255, %s256
    %p267 = scmp.eq.s32.totalorder %s19, 0
    %p268 = por %p266, %p267
    %p269 = scmp.ne.s32.totalorder %s255, %s256
    %p270 = scmp.eq.s32.totalorder %s20, 3
    %p271 = por %p269, %p270
    %p273 = scmp.ne.s32.totalorder %s256, %s272
    %p274 = scmp.eq.s32.totalorder %s20, 0
    %p275 = por %p273, %p274
    %p276 = scmp.le.s32.totalorder 1, %s14
    %p277 = scmp.lt.s32.totalorder %s14, 5
    %p278 = pnand %p276, %p277
    %p279 = pneg %p278
    // Predicated region
    $region9: #{scalable_vit_forward.15} parent=5 // pred_check
      _
    $region10: #{scalable_vit_forward.15} parent=5 // pred_check_branch
      %281 = sbr.rel (%p278) target = $region12
    $region11: #{scalable_vit_forward.15} parent=5 // pred_region
      %s282 = ssub.s32 %s14, 1
      // Predicated region
      $region13: #{scalable_vit_forward.15} parent=11 // pred_check
        %p283 = pneg %p240
      $region14: #{scalable_vit_forward.15} parent=11 // pred_check_branch
        %285 = sbr.rel (%p283) target = $region16
      $region15: #{scalable_vit_forward.15} parent=11 // pred_region
        _
      $region16: #{scalable_vit_forward.15} parent=11 // pred_fallthru
        _
    $region12: #{scalable_vit_forward.15} parent=5 // pred_fallthru
      _
    %p286 = scmp.lt.s32.totalorder %s14, 4
    // Predicated region
    $region17: #{scalable_vit_forward.15} parent=5 // pred_check
      %p287 = pneg %p286
    $region18: #{scalable_vit_forward.15} parent=5 // pred_check_branch
      %289 = sbr.rel (%p287) target = $region20
    $region19: #{scalable_vit_forward.15} parent=5 // pred_region
      // Predicated region
      $region21: #{scalable_vit_forward.15} parent=19 // pred_check
        %p290 = pneg %p55
      $region22: #{scalable_vit_forward.15} parent=19 // pred_check_branch
        %292 = sbr.rel (%p290) target = $region24
      $region23: #{scalable_vit_forward.15} parent=19 // pred_region
        %s293 = smul.u32 8, %s22
        %p294 = scmp.lt.s32.totalorder %s21, 1
        %s295 = scalar_select %p294, %s21, 1
        %p296 = scmp.lt.s32.totalorder %s293, 7
        %s297 = scalar_select %p296, %s293, 7
        %s298 = smul.addr %s295, 8
        %s299 = sadd.s32 %s297, %s298
        %s300 = smul.addr %s299, 4
        %s301 = scalar_lea.vmem %s0, %s300
        %s302 = smul.u32 8, %s22
      $region24: #{scalable_vit_forward.15} parent=19 // pred_fallthru
        _
      // Predicated region
      $region25: #{scalable_vit_forward.15} parent=19 // pred_check
        %p303 = pneg %p81
      $region26: #{scalable_vit_forward.15} parent=19 // pred_check_branch
        %305 = sbr.rel (%p303) target = $region28
      $region27: #{scalable_vit_forward.15} parent=19 // pred_region
        %p306 = scmp.lt.s32.totalorder %s21, 1
        %s307 = scalar_select %p306, %s21, 1
        %s308 = smul.addr %s307, 2
        %s309 = smul.addr %s308, 4
        %s310 = scalar_lea.vmem %s1, %s309
      $region28: #{scalable_vit_forward.15} parent=19 // pred_fallthru
        _
      // Predicated region
      $region29: #{scalable_vit_forward.15} parent=19 // pred_check
        %p311 = pneg %p109
      $region30: #{scalable_vit_forward.15} parent=19 // pred_check_branch
        %313 = sbr.rel (%p311) target = $region32
      $region31: #{scalable_vit_forward.15} parent=19 // pred_region
        %s314 = smul.u32 8, %s22
        %p315 = scmp.lt.s32.totalorder %s21, 1
        %s316 = scalar_select %p315, %s21, 1
        %p317 = scmp.lt.s32.totalorder %s314, 7
        %s318 = scalar_select %p317, %s314, 7
        %s319 = smul.addr %s316, 8
        %s320 = sadd.s32 %s318, %s319
        %s321 = smul.addr %s320, 4
        %s322 = scalar_lea.vmem %s2, %s321
        %s323 = smul.u32 8, %s22
      $region32: #{scalable_vit_forward.15} parent=19 // pred_fallthru
        _
      // Predicated region
      $region33: #{scalable_vit_forward.15} parent=19 // pred_check
        %p324 = pneg %p135
      $region34: #{scalable_vit_forward.15} parent=19 // pred_check_branch
        %326 = sbr.rel (%p324) target = $region36
      $region35: #{scalable_vit_forward.15} parent=19 // pred_region
        %p327 = scmp.lt.s32.totalorder %s23, 1
        %s328 = scalar_select %p327, %s23, 1
        %s329 = smul.addr %s328, 4
        %s330 = scalar_lea.vmem %s3, %s329
      $region36: #{scalable_vit_forward.15} parent=19 // pred_fallthru
        _
      // Predicated region
      $region37: #{scalable_vit_forward.15} parent=19 // pred_check
        %p331 = pneg %p161
      $region38: #{scalable_vit_forward.15} parent=19 // pred_check_branch
        %333 = sbr.rel (%p331) target = $region40
      $region39: #{scalable_vit_forward.15} parent=19 // pred_region
        %p334 = scmp.lt.s32.totalorder %s23, 1
        %s335 = scalar_select %p334, %s23, 1
        %s336 = smul.addr %s335, 4
        %s337 = smul.addr %s336, 4
        %s338 = scalar_lea.vmem %s4, %s337
      $region40: #{scalable_vit_forward.15} parent=19 // pred_fallthru
        _
      // Predicated region
      $region41: #{scalable_vit_forward.15} parent=19 // pred_check
        %p339 = pneg %p187
      $region42: #{scalable_vit_forward.15} parent=19 // pred_check_branch
        %341 = sbr.rel (%p339) target = $region44
      $region43: #{scalable_vit_forward.15} parent=19 // pred_region
        %p342 = scmp.lt.s32.totalorder %s23, 1
        %s343 = scalar_select %p342, %s23, 1
        %s344 = smul.addr %s343, 4
        %s345 = smul.addr %s344, 4
        %s346 = scalar_lea.vmem %s5, %s345
      $region44: #{scalable_vit_forward.15} parent=19 // pred_fallthru
        _
      // Predicated region
      $region45: #{scalable_vit_forward.15} parent=19 // pred_check
        %p347 = pneg %p213
      $region46: #{scalable_vit_forward.15} parent=19 // pred_check_branch
        %349 = sbr.rel (%p347) target = $region48
      $region47: #{scalable_vit_forward.15} parent=19 // pred_region
        %p350 = scmp.lt.s32.totalorder %s23, 1
        %s351 = scalar_select %p350, %s23, 1
        %s352 = smul.addr %s351, 2
        %s353 = scalar_lea.vmem %s6, %s352
      $region48: #{scalable_vit_forward.15} parent=19 // pred_fallthru
        _
    $region20: #{scalable_vit_forward.15} parent=5 // pred_fallthru
      _
    %p354 = scmp.le.s32.totalorder 1, %s14
    %p355 = scmp.lt.s32.totalorder %s14, 5
    %p356 = pnand %p354, %p355
    %p357 = pneg %p356
    // Predicated region
    $region49: #{scalable_vit_forward.15} parent=5 // pred_check
      _
    $region50: #{scalable_vit_forward.15} parent=5 // pred_check_branch
      %359 = sbr.rel (%p356) target = $region52
    $region51: #{scalable_vit_forward.15} parent=5 // pred_region
      %s360 = ssub.s32 %s14, 1
      %s361 = smul.u32 8, %s25
      %p362 = scmp.lt.s32.totalorder %s24, 1
      %s363 = scalar_select %p362, %s24, 1
      %p364 = scmp.lt.s32.totalorder %s361, 7
      %s365 = scalar_select %p364, %s361, 7
      %s366 = smul.addr %s363, 8
      %s367 = sadd.s32 %s365, %s366
      %s368 = smul.addr %s367, 4
      %s369 = scalar_lea.vmem %s0, %s368
      %p370 = pneg %p61
      %p371 = pneg %p58
      %p372 = scmp.lt.s32.totalorder %s24, 1
      %s373 = scalar_select %p372, %s24, 1
      %s374 = smul.addr %s373, 2
      %s375 = smul.addr %s374, 4
      %s376 = scalar_lea.vmem %s1, %s375
      %p377 = pneg %p87
      %p378 = pneg %p84
      %s379 = smul.u32 8, %s25
      %p380 = scmp.lt.s32.totalorder %s24, 1
      %s381 = scalar_select %p380, %s24, 1
      %p382 = scmp.lt.s32.totalorder %s379, 7
      %s383 = scalar_select %p382, %s379, 7
      %s384 = smul.addr %s381, 8
      %s385 = sadd.s32 %s383, %s384
      %s386 = smul.addr %s385, 4
      %s387 = scalar_lea.vmem %s2, %s386
      %p388 = pneg %p115
      %p389 = pneg %p112
      %p390 = scmp.lt.s32.totalorder %s26, 1
      %s391 = scalar_select %p390, %s26, 1
      %s392 = smul.addr %s391, 4
      %s393 = scalar_lea.vmem %s3, %s392
      %p394 = pneg %p141
      %p395 = pneg %p138
      %p396 = scmp.lt.s32.totalorder %s26, 1
      %s397 = scalar_select %p396, %s26, 1
      %s398 = smul.addr %s397, 4
      %s399 = smul.addr %s398, 4
      %s400 = scalar_lea.vmem %s4, %s399
      %p401 = pneg %p167
      %p402 = pneg %p164
      %p403 = scmp.lt.s32.totalorder %s26, 1
      %s404 = scalar_select %p403, %s26, 1
      %s405 = smul.addr %s404, 4
      %s406 = smul.addr %s405, 4
      %s407 = scalar_lea.vmem %s5, %s406
      %p408 = pneg %p193
      %p409 = pneg %p190
      %p410 = scmp.lt.s32.totalorder %s26, 1
      %s411 = scalar_select %p410, %s26, 1
      %s412 = smul.addr %s411, 2
      %s413 = scalar_lea.vmem %s6, %s412
      %p414 = pneg %p219
      %p415 = pneg %p216
      %p416 = pneg %p240
      %p417 = pneg %p237
      %p418 = pneg %p268
      %p419 = pneg %p265
      %s420 = smul.u32 8, %s25
      %p421 = scmp.lt.s32.totalorder %s24, 1
      %s422 = scalar_select %p421, %s24, 1
      %p423 = scmp.lt.s32.totalorder %s420, 7
      %s424 = scalar_select %p423, %s420, 7
      %s425 = smul.addr %s422, 8
      %s426 = sadd.s32 %s424, %s425
      %s427 = smul.addr %s426, 4
      %s428 = scalar_lea.vmem %s8, %s427
      %s429 = smul.u32 8, %s25
      %p430 = scmp.lt.s32.totalorder %s24, 1
      %s431 = scalar_select %p430, %s24, 1
      %p432 = scmp.lt.s32.totalorder %s429, 7
      %s433 = scalar_select %p432, %s429, 7
      %s434 = smul.addr %s431, 8
      %s435 = sadd.s32 %s433, %s434
      %s436 = smul.addr %s435, 4
      %s437 = scalar_lea.vmem %s0, %s436
      %s438 = smul.u32 8, %s25
      %p439 = scmp.lt.s32.totalorder %s24, 1
      %s440 = scalar_select %p439, %s24, 1
      %s441 = smul.addr %s440, 2
      %s442 = smul.addr %s441, 4
      %s443 = scalar_lea.vmem %s1, %s442
      %s444 = smul.u32 8, %s25
      %p445 = scmp.lt.s32.totalorder %s24, 1
      %s446 = scalar_select %p445, %s24, 1
      %p447 = scmp.lt.s32.totalorder %s444, 7
      %s448 = scalar_select %p447, %s444, 7
      %s449 = smul.addr %s446, 8
      %s450 = sadd.s32 %s448, %s449
      %s451 = smul.addr %s450, 4
      %s452 = scalar_lea.vmem %s2, %s451
      %s453 = smul.u32 8, %s25
      %p454 = scmp.lt.s32.totalorder %s26, 1
      %s455 = scalar_select %p454, %s26, 1
      %s456 = smul.addr %s455, 4
      %s457 = scalar_lea.vmem %s3, %s456
      %p458 = scmp.lt.s32.totalorder %s26, 1
      %s459 = scalar_select %p458, %s26, 1
      %s460 = smul.addr %s459, 4
      %s461 = smul.addr %s460, 4
      %s462 = scalar_lea.vmem %s4, %s461
      %p463 = scmp.lt.s32.totalorder %s26, 1
      %s464 = scalar_select %p463, %s26, 1
      %s465 = smul.addr %s464, 4
      %s466 = smul.addr %s465, 4
      %s467 = scalar_lea.vmem %s5, %s466
      %p468 = scmp.lt.s32.totalorder %s26, 1
      %s469 = scalar_select %p468, %s26, 1
      %s470 = smul.addr %s469, 2
      %s471 = scalar_lea.vmem %s6, %s470
      %s472 = smul.u32 8, %s25
      %p473 = scmp.lt.s32.totalorder %s24, 1
      %s474 = scalar_select %p473, %s24, 1
      %p475 = scmp.lt.s32.totalorder %s472, 7
      %s476 = scalar_select %p475, %s472, 7
      %s477 = smul.addr %s474, 8
      %s478 = sadd.s32 %s476, %s477
      %s479 = smul.addr %s478, 4
      %s480 = scalar_lea.vmem %s8, %s479
      %s481 = smul.u32 8, %s25
      %p483 = scmp.eq.s32.totalorder %s26, 0
      // Predicated region
      $region53: #{scalable_vit_forward.15} parent=51 // pred_check
        %p484 = pneg %p483
      $region54: #{scalable_vit_forward.15} parent=51 // pred_check_branch
        %486 = sbr.rel (%p484) target = $region56
      $region55: #{scalable_vit_forward.15} parent=51 // pred_region
        %v487 = vld [vmem:[%s7] sm:$0x1]
        %v488 = vld [vmem:[%s452] sm:$0xf]
        %v489 = vld [vmem:[%s452 + $0x4] sm:$0xf]
        %v490 = vld [vmem:[%s452 + $0x8] sm:$0xf]
        %v491 = vld [vmem:[%s452 + $0xc] sm:$0xf]
        %v492 = vld [vmem:[%s452 + $0x10] sm:$0xf]
        %v493 = vld [vmem:[%s452 + $0x14] sm:$0xf]
        %v494 = vld [vmem:[%s452 + $0x18] sm:$0xf]
        %v495 = vld [vmem:[%s452 + $0x1c] sm:$0xf]
        %v496 = vunpack.c.l.bf16 %v488
        %v497 = vunpack.c.l.bf16 %v489
        %v498 = vunpack.c.l.bf16 %v490
        %v499 = vunpack.c.l.bf16 %v491
        %v500 = vunpack.c.l.bf16 %v492
        %v501 = vunpack.c.l.bf16 %v493
        %v502 = vunpack.c.l.bf16 %v494
        %v503 = vunpack.c.l.bf16 %v495
        %v505 = vlaneseq
        %v506 = vshrl.u32 %v505, 7
        %v507 = vsub.s32 0, %v506
        %v508 = vrot.slane %v487, %v507
        %v510 = vadd.f32 %v508, %v496
        %v511 = vadd.f32 %v508, %v497
        %v512 = vadd.f32 %v508, %v498
        %v513 = vadd.f32 %v508, %v499
        %v514 = vadd.f32 %v508, %v500
        %v515 = vadd.f32 %v508, %v501
        %v516 = vadd.f32 %v508, %v502
        %v517 = vadd.f32 %v508, %v503
        %vm518 = vcmask 64512
        %519 = vst.msk [vmem:[#allocation2] sm:$0xff] %vm518, %v510
        %520 = vst.msk [vmem:[#allocation2 + $0x8] sm:$0xff] %vm518, %v511
        %521 = vst.msk [vmem:[#allocation2 + $0x10] sm:$0xff] %vm518, %v512
        %522 = vst.msk [vmem:[#allocation2 + $0x18] sm:$0xff] %vm518, %v513
        %523 = vst.msk [vmem:[#allocation2 + $0x20] sm:$0xff] %vm518, %v514
        %524 = vst.msk [vmem:[#allocation2 + $0x28] sm:$0xff] %vm518, %v515
        %525 = vst.msk [vmem:[#allocation2 + $0x30] sm:$0xff] %vm518, %v516
        %526 = vst.msk [vmem:[#allocation2 + $0x38] sm:$0xff] %vm518, %v517
      $region56: #{scalable_vit_forward.15} parent=51 // pred_fallthru
        _
      %v527 = vld [vmem:[%s437] sm:$0xf]
      %v528 = vld [vmem:[%s437 + $0x4] sm:$0xf]
      %v529 = vld [vmem:[%s437 + $0x8] sm:$0xf]
      %v530 = vld [vmem:[%s437 + $0xc] sm:$0xf]
      %v531 = vld [vmem:[%s437 + $0x10] sm:$0xf]
      %v532 = vld [vmem:[%s437 + $0x14] sm:$0xf]
      %v533 = vld [vmem:[%s437 + $0x18] sm:$0xf]
      %v534 = vld [vmem:[%s437 + $0x1c] sm:$0xf]
      %v535 = vld [vmem:[%s443] sm:$0xf]
      %v536 = vld [vmem:[%s443 + $0x4] sm:$0xf]
      %v537 = vld [vmem:[%s457] sm:$0xf]
      %v546 = vunpack.c.l.b16 %v527
      %v547 = vunpack.c.l.b16 %v528
      %v548 = vunpack.c.l.b16 %v529
      %v549 = vunpack.c.l.b16 %v530
      %v550 = vunpack.c.l.b16 %v531
      %v551 = vunpack.c.l.b16 %v532
      %v552 = vunpack.c.l.b16 %v533
      %v553 = vunpack.c.l.b16 %v534
      %v554 = vpack.c.b16 %v547, %v546
      %v555 = vpack.c.b16 %v549, %v548
      %v556 = vpack.c.b16 %v551, %v550
      %v557 = vpack.c.b16 %v553, %v552
      %vm558 = vcmask 64512
      %v560 = vsel %vm558, %v554, 0
      %v563 = vsel %vm558, %v555, 0
      %v566 = vsel %vm558, %v556, 0
      %v569 = vsel %vm558, %v557, 0
      %vm571 = vcmask 1043456
      %v573 = vsel %vm571, %v537, 0
      %575 = vmatprep.subr.bf16.mxu0 0
      %576 = vmatpush1.bf16.msra.mxu0 0
      %577 = vmatprep.subr.bf16.mxu0 0
      %578 = vmatpush1.bf16.msra.mxu0 0
      %579 = vmatprep.subr.bf16.mxu0 0
      %580 = vmatpush1.bf16.msra.mxu0 0
      %581 = vmatprep.subr.bf16.mxu0 0
      %582 = vmatpush1.bf16.msra.mxu0 0
      %583 = vmatprep.subr.bf16.mxu0 0
      %584 = vmatpush1.bf16.msra.mxu0 0
      %585 = vmatprep.subr.bf16.mxu0 0
      %586 = vmatpush1.bf16.msra.mxu0 0
      %587 = vmatprep.subr.bf16.mxu0 0
      %588 = vmatpush1.bf16.msra.mxu0 0
      %589 = vmatprep.subr.bf16.mxu0 0
      %590 = vmatpush1.bf16.msra.mxu0 %v573
      %591 = vmatprep.subr.bf16.mxu0 0
      %592 = vmatpush2.bf16.msra.mxu0 0
      %593 = vmatprep.subr.bf16.mxu0 0
      %594 = vmatpush2.bf16.msra.mxu0 0
      %595 = vmatprep.subr.bf16.mxu0 0
      %596 = vmatpush2.bf16.msra.mxu0 0
      %597 = vmatprep.subr.bf16.mxu0 0
      %598 = vmatpush2.bf16.msra.mxu0 0
      %599 = vmatprep.subr.bf16.mxu0 0
      %600 = vmatpush2.bf16.msra.mxu0 0
      %601 = vmatprep.subr.bf16.mxu0 0
      %602 = vmatpush2.bf16.msra.mxu0 0
      %603 = vmatprep.subr.bf16.mxu0 0
      %604 = vmatpush2.bf16.msra.mxu0 0
      %605 = vmatprep.subr.bf16.mxu0 0
      %606 = vmatpush2.bf16.msra.mxu0 0
      %607 = vmatprep.mubr.bf16.mxu0 0
      %608 = vmatmul.mubr.bf16.gmra.mxu0 %v560
      %v609 = vpop.f32.mrf.mxu0
      %v610 = vadd.f32 0.0, %v609
      %v611 = vpop.f32.mrf.mxu0
      %v612 = vpop.f32.mrf.mxu0
      %v613 = vadd.f32 0.0, %v612
      %v614 = vpop.f32.mrf.mxu0
      %615 = vmatprep.mubr.bf16.mxu0 0
      %616 = vmatmul.mubr.bf16.gmra.mxu0 %v563
      %v617 = vpop.f32.mrf.mxu0
      %v618 = vadd.f32 0.0, %v617
      %v619 = vpop.f32.mrf.mxu0
      %v620 = vpop.f32.mrf.mxu0
      %v621 = vadd.f32 0.0, %v620
      %v622 = vpop.f32.mrf.mxu0
      %623 = vmatprep.mubr.bf16.mxu0 0
      %624 = vmatmul.mubr.bf16.gmra.mxu0 %v566
      %v625 = vpop.f32.mrf.mxu0
      %v626 = vadd.f32 0.0, %v625
      %v627 = vpop.f32.mrf.mxu0
      %v628 = vpop.f32.mrf.mxu0
      %v629 = vadd.f32 0.0, %v628
      %v630 = vpop.f32.mrf.mxu0
      %631 = vmatprep.mubr.bf16.mxu0 0
      %632 = vmatmul.mubr.bf16.gmra.mxu0 %v569
      %v633 = vpop.f32.mrf.mxu0
      %v634 = vadd.f32 0.0, %v633
      %v635 = vpop.f32.mrf.mxu0
      %v636 = vpop.f32.mrf.mxu0
      %v637 = vadd.f32 0.0, %v636
      %v638 = vpop.f32.mrf.mxu0
      %639 = vdwg.mxu0
      %v640 = vld [vmem:[%s462] sm:$0xf]
      %v641 = vld [vmem:[%s462 + $0x4] sm:$0xf]
      %v642 = vld [vmem:[%s462 + $0x8] sm:$0xf]
      %v643 = vld [vmem:[%s462 + $0xc] sm:$0xf]
      %v646 = vunpack.c.l.b16 %v535
      %v647 = vunpack.c.l.b16 %v536
      %v648 = vpack.c.b16 %v647, %v646
      %v653 = vunpack.c.l.b16 %v640
      %v654 = vunpack.c.l.b16 %v641
      %v655 = vunpack.c.l.b16 %v642
      %v656 = vunpack.c.l.b16 %v643
      %v657 = vpack.c.b16 %v654, %v653
      %v658 = vpack.c.b16 %v656, %v655
      %vm661 = vcmask 261120
      %v663 = vsel %vm661, %v648, 0
      %665 = vmatprep.subr.bf16.mxu0 0
      %666 = vmatpush1.bf16.msra.mxu0 0
      %667 = vmatprep.subr.bf16.mxu0 0
      %668 = vmatpush1.bf16.msra.mxu0 0
      %669 = vmatprep.subr.bf16.mxu0 0
      %670 = vmatpush1.bf16.msra.mxu0 0
      %671 = vmatprep.subr.bf16.mxu0 0
      %672 = vmatpush1.bf16.msra.mxu0 0
      %673 = vmatprep.subr.bf16.mxu0 0
      %674 = vmatpush1.bf16.msra.mxu0 0
      %675 = vmatprep.subr.bf16.mxu0 0
      %676 = vmatpush1.bf16.msra.mxu0 0
      %677 = vmatprep.subr.bf16.mxu0 0
      %678 = vmatpush1.bf16.msra.mxu0 %v658
      %679 = vmatprep.subr.bf16.mxu0 0
      %680 = vmatpush1.bf16.msra.mxu0 %v657
      %681 = vmatprep.subr.bf16.mxu0 0
      %682 = vmatpush2.bf16.msra.mxu0 0
      %683 = vmatprep.subr.bf16.mxu0 0
      %684 = vmatpush2.bf16.msra.mxu0 0
      %685 = vmatprep.subr.bf16.mxu0 0
      %686 = vmatpush2.bf16.msra.mxu0 0
      %687 = vmatprep.subr.bf16.mxu0 0
      %688 = vmatpush2.bf16.msra.mxu0 0
      %689 = vmatprep.subr.bf16.mxu0 0
      %690 = vmatpush2.bf16.msra.mxu0 0
      %691 = vmatprep.subr.bf16.mxu0 0
      %692 = vmatpush2.bf16.msra.mxu0 0
      %693 = vmatprep.subr.bf16.mxu0 0
      %694 = vmatpush2.bf16.msra.mxu0 0
      %695 = vmatprep.subr.bf16.mxu0 0
      %696 = vmatpush2.bf16.msra.mxu0 0
      %697 = vmatprep.mubr.bf16.mxu0 0
      %698 = vmatmul.mubr.bf16.gmra.mxu0 %v663
      %v699 = vpop.f32.mrf.mxu0
      %v700 = vadd.f32 0.0, %v699
      %v701 = vpop.f32.mrf.mxu0
      %v702 = vpop.f32.mrf.mxu0
      %v703 = vadd.f32 0.0, %v702
      %v704 = vpop.f32.mrf.mxu0
      %705 = vdwg.mxu0
      %v706 = vld [vmem:[%s467] sm:$0xf]
      %v707 = vld [vmem:[%s467 + $0x4] sm:$0xf]
      %v708 = vld [vmem:[%s467 + $0x8] sm:$0xf]
      %v709 = vld [vmem:[%s467 + $0xc] sm:$0xf]
      %v714 = vunpack.c.l.b16 %v706
      %v715 = vunpack.c.l.b16 %v707
      %v716 = vunpack.c.l.b16 %v708
      %v717 = vunpack.c.l.b16 %v709
      %v718 = vpack.c.b16 %v715, %v714
      %v719 = vpack.c.b16 %v717, %v716
      %722 = vmatprep.subr.bf16.mxu0 0
      %723 = vmatpush1.bf16.msra.mxu0 0
      %724 = vmatprep.subr.bf16.mxu0 0
      %725 = vmatpush1.bf16.msra.mxu0 0
      %726 = vmatprep.subr.bf16.mxu0 0
      %727 = vmatpush1.bf16.msra.mxu0 0
      %728 = vmatprep.subr.bf16.mxu0 0
      %729 = vmatpush1.bf16.msra.mxu0 0
      %730 = vmatprep.subr.bf16.mxu0 0
      %731 = vmatpush1.bf16.msra.mxu0 0
      %732 = vmatprep.subr.bf16.mxu0 0
      %733 = vmatpush1.bf16.msra.mxu0 0
      %734 = vmatprep.subr.bf16.mxu0 0
      %735 = vmatpush1.bf16.msra.mxu0 %v719
      %736 = vmatprep.subr.bf16.mxu0 0
      %737 = vmatpush1.bf16.msra.mxu0 %v718
      %738 = vmatprep.subr.bf16.mxu0 0
      %739 = vmatpush2.bf16.msra.mxu0 0
      %740 = vmatprep.subr.bf16.mxu0 0
      %741 = vmatpush2.bf16.msra.mxu0 0
      %742 = vmatprep.subr.bf16.mxu0 0
      %743 = vmatpush2.bf16.msra.mxu0 0
      %744 = vmatprep.subr.bf16.mxu0 0
      %745 = vmatpush2.bf16.msra.mxu0 0
      %746 = vmatprep.subr.bf16.mxu0 0
      %747 = vmatpush2.bf16.msra.mxu0 0
      %748 = vmatprep.subr.bf16.mxu0 0
      %749 = vmatpush2.bf16.msra.mxu0 0
      %750 = vmatprep.subr.bf16.mxu0 0
      %751 = vmatpush2.bf16.msra.mxu0 0
      %752 = vmatprep.subr.bf16.mxu0 0
      %753 = vmatpush2.bf16.msra.mxu0 0
      %754 = vmatprep.mubr.bf16.mxu0 0
      %755 = vmatmul.mubr.bf16.gmra.mxu0 %v663
      %v756 = vpop.f32.mrf.mxu0
      %v757 = vadd.f32 0.0, %v756
      %v758 = vpop.f32.mrf.mxu0
      %v759 = vpop.f32.mrf.mxu0
      %v760 = vadd.f32 0.0, %v759
      %v761 = vpop.f32.mrf.mxu0
      %762 = vdwg.mxu0
      %v763 = vpack.c.bf16 %v613, %v610
      %v764 = vpack.c.bf16 %v621, %v618
      %v765 = vpack.c.bf16 %v629, %v626
      %v766 = vpack.c.bf16 %v637, %v634
      %v767 = vpack.c.bf16 %v703, %v700
      %vm768 = vcmask 31744
      %v770 = vsel %vm768, %v763, 0
      %v773 = vsel %vm768, %v764, 0
      %v776 = vsel %vm768, %v765, 0
      %v779 = vsel %vm768, %v766, 0
      %v782 = vsel %vm768, %v767, 0
      %784 = vmatprep.subr.bf16.mxu0 0
      %785 = vmatpush1.bf16.xpose.msra.mxu0 0
      %786 = vmatprep.subr.bf16.mxu0 0
      %787 = vmatpush1.bf16.xpose.msra.mxu0 0
      %788 = vmatprep.subr.bf16.mxu0 0
      %789 = vmatpush1.bf16.xpose.msra.mxu0 0
      %790 = vmatprep.subr.bf16.mxu0 0
      %791 = vmatpush1.bf16.xpose.msra.mxu0 0
      %792 = vmatprep.subr.bf16.mxu0 0
      %793 = vmatpush1.bf16.xpose.msra.mxu0 0
      %794 = vmatprep.subr.bf16.mxu0 0
      %795 = vmatpush1.bf16.xpose.msra.mxu0 0
      %796 = vmatprep.subr.bf16.mxu0 0
      %797 = vmatpush1.bf16.xpose.msra.mxu0 0
      %798 = vmatprep.subr.bf16.mxu0 0
      %799 = vmatpush1.bf16.xpose.msra.mxu0 %v782
      %800 = vmatprep.subr.bf16.mxu0 0
      %801 = vmatpush2.bf16.xpose.msra.mxu0 0
      %802 = vmatprep.subr.bf16.mxu0 0
      %803 = vmatpush2.bf16.xpose.msra.mxu0 0
      %804 = vmatprep.subr.bf16.mxu0 0
      %805 = vmatpush2.bf16.xpose.msra.mxu0 0
      %806 = vmatprep.subr.bf16.mxu0 0
      %807 = vmatpush2.bf16.xpose.msra.mxu0 0
      %808 = vmatprep.subr.bf16.mxu0 0
      %809 = vmatpush2.bf16.xpose.msra.mxu0 0
      %810 = vmatprep.subr.bf16.mxu0 0
      %811 = vmatpush2.bf16.xpose.msra.mxu0 0
      %812 = vmatprep.subr.bf16.mxu0 0
      %813 = vmatpush2.bf16.xpose.msra.mxu0 0
      %814 = vmatprep.subr.bf16.mxu0 0
      %815 = vmatpush2.bf16.xpose.msra.mxu0 0
      %816 = vmatprep.mubr.bf16.mxu0 0
      %817 = vmatmul.mubr.bf16.gmra.mxu0 %v770
      %v818 = vpop.f32.mrf.mxu0
      %v819 = vadd.f32 0.0, %v818
      %v820 = vpop.f32.mrf.mxu0
      %v821 = vpop.f32.mrf.mxu0
      %v822 = vadd.f32 0.0, %v821
      %v823 = vpop.f32.mrf.mxu0
      %824 = vmatprep.mubr.bf16.mxu0 0
      %825 = vmatmul.mubr.bf16.gmra.mxu0 %v773
      %v826 = vpop.f32.mrf.mxu0
      %v827 = vadd.f32 0.0, %v826
      %v828 = vpop.f32.mrf.mxu0
      %v829 = vpop.f32.mrf.mxu0
      %v830 = vadd.f32 0.0, %v829
      %v831 = vpop.f32.mrf.mxu0
      %832 = vmatprep.mubr.bf16.mxu0 0
      %833 = vmatmul.mubr.bf16.gmra.mxu0 %v776
      %v834 = vpop.f32.mrf.mxu0
      %v835 = vadd.f32 0.0, %v834
      %v836 = vpop.f32.mrf.mxu0
      %v837 = vpop.f32.mrf.mxu0
      %v838 = vadd.f32 0.0, %v837
      %v839 = vpop.f32.mrf.mxu0
      %840 = vmatprep.mubr.bf16.mxu0 0
      %841 = vmatmul.mubr.bf16.gmra.mxu0 %v779
      %v842 = vpop.f32.mrf.mxu0
      %v843 = vadd.f32 0.0, %v842
      %v844 = vpop.f32.mrf.mxu0
      %v845 = vpop.f32.mrf.mxu0
      %v846 = vadd.f32 0.0, %v845
      %v847 = vpop.f32.mrf.mxu0
      %848 = vdwg.mxu0
      %v849 = vmul.f32 %v819, 0.5
      %v850 = vmul.f32 %v822, 0.5
      %v851 = vmul.f32 %v827, 0.5
      %v852 = vmul.f32 %v830, 0.5
      %v853 = vmul.f32 %v835, 0.5
      %v854 = vmul.f32 %v838, 0.5
      %v855 = vmul.f32 %v843, 0.5
      %v856 = vmul.f32 %v846, 0.5
      %vm857 = vcmask 130048
      %v858 = vsel %vm857, %v849, -inf
      %859 = vmax.xlane.f32.xlu0 %v858
      %v860 = vpop.xlane.xlu0 %859
      %v861 = vsel %vm857, %v850, -inf
      %862 = vmax.xlane.f32.xlu0 %v861
      %v863 = vpop.xlane.xlu0 %862
      %v864 = vsel %vm857, %v851, -inf
      %865 = vmax.xlane.f32.xlu0 %v864
      %v866 = vpop.xlane.xlu0 %865
      %v867 = vsel %vm857, %v852, -inf
      %868 = vmax.xlane.f32.xlu0 %v867
      %v869 = vpop.xlane.xlu0 %868
      %v870 = vsel %vm857, %v853, -inf
      %871 = vmax.xlane.f32.xlu0 %v870
      %v872 = vpop.xlane.xlu0 %871
      %v873 = vsel %vm857, %v854, -inf
      %874 = vmax.xlane.f32.xlu0 %v873
      %v875 = vpop.xlane.xlu0 %874
      %v876 = vsel %vm857, %v855, -inf
      %877 = vmax.xlane.f32.xlu0 %v876
      %v878 = vpop.xlane.xlu0 %877
      %v879 = vsel %vm857, %v856, -inf
      %880 = vmax.xlane.f32.xlu0 %v879
      %v881 = vpop.xlane.xlu0 %880
      %v882 = vsub.f32 %v849, %v860
      %v883 = vsub.f32 %v850, %v863
      %v884 = vsub.f32 %v851, %v866
      %v885 = vsub.f32 %v852, %v869
      %v886 = vsub.f32 %v853, %v872
      %v887 = vsub.f32 %v854, %v875
      %v888 = vsub.f32 %v855, %v878
      %v889 = vsub.f32 %v856, %v881
      %v890 = vmul.f32 %v882, 1.442695
      %v891 = vpow.pop %v890
      %v892 = vmul.f32 %v883, 1.442695
      %v893 = vpow.pop %v892
      %v894 = vmul.f32 %v884, 1.442695
      %v895 = vpow.pop %v894
      %v896 = vmul.f32 %v885, 1.442695
      %v897 = vpow.pop %v896
      %v898 = vmul.f32 %v886, 1.442695
      %v899 = vpow.pop %v898
      %v900 = vmul.f32 %v887, 1.442695
      %v901 = vpow.pop %v900
      %v902 = vmul.f32 %v888, 1.442695
      %v903 = vpow.pop %v902
      %v904 = vmul.f32 %v889, 1.442695
      %v905 = vpow.pop %v904
      %v906 = vsel %vm857, %v891, 0.0
      %907 = vadd.xlane.f32.xlu0 %v906
      %v908 = vpop.xlane.xlu0 %907
      %v909 = vsel %vm857, %v893, 0.0
      %910 = vadd.xlane.f32.xlu0 %v909
      %v911 = vpop.xlane.xlu0 %910
      %v912 = vsel %vm857, %v895, 0.0
      %913 = vadd.xlane.f32.xlu0 %v912
      %v914 = vpop.xlane.xlu0 %913
      %v915 = vsel %vm857, %v897, 0.0
      %916 = vadd.xlane.f32.xlu0 %v915
      %v917 = vpop.xlane.xlu0 %916
      %v918 = vsel %vm857, %v899, 0.0
      %919 = vadd.xlane.f32.xlu0 %v918
      %v920 = vpop.xlane.xlu0 %919
      %v921 = vsel %vm857, %v901, 0.0
      %922 = vadd.xlane.f32.xlu0 %v921
      %v923 = vpop.xlane.xlu0 %922
      %v924 = vsel %vm857, %v903, 0.0
      %925 = vadd.xlane.f32.xlu0 %v924
      %v926 = vpop.xlane.xlu0 %925
      %v927 = vsel %vm857, %v905, 0.0
      %928 = vadd.xlane.f32.xlu0 %v927
      %v929 = vpop.xlane.xlu0 %928
      %v930 = vrcp.pop %v908
      %v931 = vrcp.pop %v911
      %v932 = vrcp.pop %v914
      %v933 = vrcp.pop %v917
      %v934 = vrcp.pop %v920
      %v935 = vrcp.pop %v923
      %v936 = vrcp.pop %v926
      %v937 = vrcp.pop %v929
      %v938 = vmul.f32 %v891, %v930
      %v939 = vmul.f32 %v893, %v931
      %v940 = vmul.f32 %v895, %v932
      %v941 = vmul.f32 %v897, %v933
      %v942 = vmul.f32 %v899, %v934
      %v943 = vmul.f32 %v901, %v935
      %v944 = vmul.f32 %v903, %v936
      %v945 = vmul.f32 %v905, %v937
      %v946 = vpack.c.bf16 %v939, %v938
      %v947 = vpack.c.bf16 %v941, %v940
      %v948 = vpack.c.bf16 %v943, %v942
      %v949 = vpack.c.bf16 %v945, %v944
      %v950 = vpack.c.bf16 %v760, %v757
      %v952 = vsel %vm857, %v946, 0
      %v955 = vsel %vm857, %v947, 0
      %v958 = vsel %vm857, %v948, 0
      %v961 = vsel %vm857, %v949, 0
      %963 = vmatprep.subr.bf16.mxu0 0
      %964 = vmatpush1.bf16.msra.mxu0 0
      %965 = vmatprep.subr.bf16.mxu0 0
      %966 = vmatpush1.bf16.msra.mxu0 0
      %967 = vmatprep.subr.bf16.mxu0 0
      %968 = vmatpush1.bf16.msra.mxu0 0
      %969 = vmatprep.subr.bf16.mxu0 0
      %970 = vmatpush1.bf16.msra.mxu0 0
      %971 = vmatprep.subr.bf16.mxu0 0
      %972 = vmatpush1.bf16.msra.mxu0 0
      %973 = vmatprep.subr.bf16.mxu0 0
      %974 = vmatpush1.bf16.msra.mxu0 0
      %975 = vmatprep.subr.bf16.mxu0 0
      %976 = vmatpush1.bf16.msra.mxu0 0
      %977 = vmatprep.subr.bf16.mxu0 0
      %978 = vmatpush1.bf16.msra.mxu0 %v950
      %979 = vmatprep.subr.bf16.mxu0 0
      %980 = vmatpush2.bf16.msra.mxu0 0
      %981 = vmatprep.subr.bf16.mxu0 0
      %982 = vmatpush2.bf16.msra.mxu0 0
      %983 = vmatprep.subr.bf16.mxu0 0
      %984 = vmatpush2.bf16.msra.mxu0 0
      %985 = vmatprep.subr.bf16.mxu0 0
      %986 = vmatpush2.bf16.msra.mxu0 0
      %987 = vmatprep.subr.bf16.mxu0 0
      %988 = vmatpush2.bf16.msra.mxu0 0
      %989 = vmatprep.subr.bf16.mxu0 0
      %990 = vmatpush2.bf16.msra.mxu0 0
      %991 = vmatprep.subr.bf16.mxu0 0
      %992 = vmatpush2.bf16.msra.mxu0 0
      %993 = vmatprep.subr.bf16.mxu0 0
      %994 = vmatpush2.bf16.msra.mxu0 0
      %995 = vmatprep.mubr.bf16.mxu0 0
      %996 = vmatmul.mubr.bf16.gmra.mxu0 %v952
      %v997 = vpop.f32.mrf.mxu0
      %v998 = vadd.f32 0.0, %v997
      %v999 = vpop.f32.mrf.mxu0
      %v1000 = vpop.f32.mrf.mxu0
      %v1001 = vadd.f32 0.0, %v1000
      %v1002 = vpop.f32.mrf.mxu0
      %1003 = vmatprep.mubr.bf16.mxu0 0
      %1004 = vmatmul.mubr.bf16.gmra.mxu0 %v955
      %v1005 = vpop.f32.mrf.mxu0
      %v1006 = vadd.f32 0.0, %v1005
      %v1007 = vpop.f32.mrf.mxu0
      %v1008 = vpop.f32.mrf.mxu0
      %v1009 = vadd.f32 0.0, %v1008
      %v1010 = vpop.f32.mrf.mxu0
      %1011 = vmatprep.mubr.bf16.mxu0 0
      %1012 = vmatmul.mubr.bf16.gmra.mxu0 %v958
      %v1013 = vpop.f32.mrf.mxu0
      %v1014 = vadd.f32 0.0, %v1013
      %v1015 = vpop.f32.mrf.mxu0
      %v1016 = vpop.f32.mrf.mxu0
      %v1017 = vadd.f32 0.0, %v1016
      %v1018 = vpop.f32.mrf.mxu0
      %1019 = vmatprep.mubr.bf16.mxu0 0
      %1020 = vmatmul.mubr.bf16.gmra.mxu0 %v961
      %v1021 = vpop.f32.mrf.mxu0
      %v1022 = vadd.f32 0.0, %v1021
      %v1023 = vpop.f32.mrf.mxu0
      %v1024 = vpop.f32.mrf.mxu0
      %v1025 = vadd.f32 0.0, %v1024
      %v1026 = vpop.f32.mrf.mxu0
      %1027 = vdwg.mxu0
      %v1028 = vld [vmem:[#allocation2] sm:$0xff]
      %v1029 = vld [vmem:[#allocation2 + $0x8] sm:$0xff]
      %v1030 = vld [vmem:[#allocation2 + $0x10] sm:$0xff]
      %v1031 = vld [vmem:[#allocation2 + $0x18] sm:$0xff]
      %v1032 = vld [vmem:[#allocation2 + $0x20] sm:$0xff]
      %v1033 = vld [vmem:[#allocation2 + $0x28] sm:$0xff]
      %v1034 = vld [vmem:[#allocation2 + $0x30] sm:$0xff]
      %v1035 = vld [vmem:[#allocation2 + $0x38] sm:$0xff]
      %v1036 = vpack.c.bf16 %v1001, %v998
      %v1037 = vpack.c.bf16 %v1009, %v1006
      %v1038 = vpack.c.bf16 %v1017, %v1014
      %v1039 = vpack.c.bf16 %v1025, %v1022
      %v1040 = vld [vmem:[%s471] sm:$0x3]
      %v1042 = vsel %vm768, %v1036, 0
      %v1045 = vsel %vm768, %v1037, 0
      %v1048 = vsel %vm768, %v1038, 0
      %v1051 = vsel %vm768, %v1039, 0
      %vm1053 = vcmask 1041408
      %v1055 = vsel %vm1053, %v1040, 0
      %1057 = vmatprep.subr.bf16.mxu0 0
      %1058 = vmatpush1.bf16.msra.mxu0 0
      %1059 = vmatprep.subr.bf16.mxu0 0
      %1060 = vmatpush1.bf16.msra.mxu0 0
      %1061 = vmatprep.subr.bf16.mxu0 0
      %1062 = vmatpush1.bf16.msra.mxu0 0
      %1063 = vmatprep.subr.bf16.mxu0 0
      %1064 = vmatpush1.bf16.msra.mxu0 0
      %1065 = vmatprep.subr.bf16.mxu0 0
      %1066 = vmatpush1.bf16.msra.mxu0 0
      %1067 = vmatprep.subr.bf16.mxu0 0
      %1068 = vmatpush1.bf16.msra.mxu0 0
      %1069 = vmatprep.subr.bf16.mxu0 0
      %1070 = vmatpush1.bf16.msra.mxu0 0
      %1071 = vmatprep.subr.bf16.mxu0 0
      %1072 = vmatpush1.bf16.msra.mxu0 %v1055
      %1073 = vmatprep.subr.bf16.mxu0 0
      %1074 = vmatpush2.bf16.msra.mxu0 0
      %1075 = vmatprep.subr.bf16.mxu0 0
      %1076 = vmatpush2.bf16.msra.mxu0 0
      %1077 = vmatprep.subr.bf16.mxu0 0
      %1078 = vmatpush2.bf16.msra.mxu0 0
      %1079 = vmatprep.subr.bf16.mxu0 0
      %1080 = vmatpush2.bf16.msra.mxu0 0
      %1081 = vmatprep.subr.bf16.mxu0 0
      %1082 = vmatpush2.bf16.msra.mxu0 0
      %1083 = vmatprep.subr.bf16.mxu0 0
      %1084 = vmatpush2.bf16.msra.mxu0 0
      %1085 = vmatprep.subr.bf16.mxu0 0
      %1086 = vmatpush2.bf16.msra.mxu0 0
      %1087 = vmatprep.subr.bf16.mxu0 0
      %1088 = vmatpush2.bf16.msra.mxu0 0
      %1089 = vmatprep.mubr.bf16.mxu0 0
      %1090 = vmatmul.mubr.bf16.gmra.mxu0 %v1042
      %v1091 = vpop.f32.mrf.mxu0
      %v1092 = vadd.f32 0.0, %v1091
      %v1093 = vpop.f32.mrf.mxu0
      %v1094 = vpop.f32.mrf.mxu0
      %v1095 = vadd.f32 0.0, %v1094
      %v1096 = vpop.f32.mrf.mxu0
      %1097 = vmatprep.mubr.bf16.mxu0 0
      %1098 = vmatmul.mubr.bf16.gmra.mxu0 %v1045
      %v1099 = vpop.f32.mrf.mxu0
      %v1100 = vadd.f32 0.0, %v1099
      %v1101 = vpop.f32.mrf.mxu0
      %v1102 = vpop.f32.mrf.mxu0
      %v1103 = vadd.f32 0.0, %v1102
      %v1104 = vpop.f32.mrf.mxu0
      %1105 = vmatprep.mubr.bf16.mxu0 0
      %1106 = vmatmul.mubr.bf16.gmra.mxu0 %v1048
      %v1107 = vpop.f32.mrf.mxu0
      %v1108 = vadd.f32 0.0, %v1107
      %v1109 = vpop.f32.mrf.mxu0
      %v1110 = vpop.f32.mrf.mxu0
      %v1111 = vadd.f32 0.0, %v1110
      %v1112 = vpop.f32.mrf.mxu0
      %1113 = vmatprep.mubr.bf16.mxu0 0
      %1114 = vmatmul.mubr.bf16.gmra.mxu0 %v1051
      %v1115 = vpop.f32.mrf.mxu0
      %v1116 = vadd.f32 0.0, %v1115
      %v1117 = vpop.f32.mrf.mxu0
      %v1118 = vpop.f32.mrf.mxu0
      %v1119 = vadd.f32 0.0, %v1118
      %v1120 = vpop.f32.mrf.mxu0
      %1121 = vdwg.mxu0
      %v1122 = vadd.f32 %v1028, %v1092
      %v1123 = vadd.f32 %v1029, %v1095
      %v1124 = vadd.f32 %v1030, %v1100
      %v1125 = vadd.f32 %v1031, %v1103
      %v1126 = vadd.f32 %v1032, %v1108
      %v1127 = vadd.f32 %v1033, %v1111
      %v1128 = vadd.f32 %v1034, %v1116
      %v1129 = vadd.f32 %v1035, %v1119
      %1130 = vst.msk [vmem:[#allocation2] sm:$0xff] %vm558, %v1122
      %1131 = vst.msk [vmem:[#allocation2 + $0x8] sm:$0xff] %vm558, %v1123
      %1132 = vst.msk [vmem:[#allocation2 + $0x10] sm:$0xff] %vm558, %v1124
      %1133 = vst.msk [vmem:[#allocation2 + $0x18] sm:$0xff] %vm558, %v1125
      %1134 = vst.msk [vmem:[#allocation2 + $0x20] sm:$0xff] %vm558, %v1126
      %1135 = vst.msk [vmem:[#allocation2 + $0x28] sm:$0xff] %vm558, %v1127
      %1136 = vst.msk [vmem:[#allocation2 + $0x30] sm:$0xff] %vm558, %v1128
      %1137 = vst.msk [vmem:[#allocation2 + $0x38] sm:$0xff] %vm558, %v1129
      %p1138 = scmp.eq.s32.totalorder %s26, 1
      // Predicated region
      $region57: #{scalable_vit_forward.15} parent=51 // pred_check
        %p1139 = pneg %p1138
      $region58: #{scalable_vit_forward.15} parent=51 // pred_check_branch
        %1141 = sbr.rel (%p1139) target = $region60
      $region59: #{scalable_vit_forward.15} parent=51 // pred_region
        %v1142 = vld [vmem:[#allocation2] sm:$0xff]
        %v1143 = vld [vmem:[#allocation2 + $0x8] sm:$0xff]
        %v1144 = vld [vmem:[#allocation2 + $0x10] sm:$0xff]
        %v1145 = vld [vmem:[#allocation2 + $0x18] sm:$0xff]
        %v1146 = vld [vmem:[#allocation2 + $0x20] sm:$0xff]
        %v1147 = vld [vmem:[#allocation2 + $0x28] sm:$0xff]
        %v1148 = vld [vmem:[#allocation2 + $0x30] sm:$0xff]
        %v1149 = vld [vmem:[#allocation2 + $0x38] sm:$0xff]
        %v1150 = vpack.c.bf16 %v1143, %v1142
        %v1151 = vpack.c.bf16 %v1145, %v1144
        %v1152 = vpack.c.bf16 %v1147, %v1146
        %v1153 = vpack.c.bf16 %v1149, %v1148
        %v1158 = vunpack.c.l.b16 %v1150
        %v1159 = vunpack.c.h.b16 %v1150
        %v1160 = vunpack.c.l.b16 %v1151
        %v1161 = vunpack.c.h.b16 %v1151
        %v1162 = vunpack.c.l.b16 %v1152
        %v1163 = vunpack.c.h.b16 %v1152
        %v1164 = vunpack.c.l.b16 %v1153
        %v1165 = vunpack.c.h.b16 %v1153
        %v1166 = vpack.c.b16 %v1158, %v1158
        %v1167 = vpack.c.b16 %v1159, %v1159
        %v1168 = vpack.c.b16 %v1160, %v1160
        %v1169 = vpack.c.b16 %v1161, %v1161
        %v1170 = vpack.c.b16 %v1162, %v1162
        %v1171 = vpack.c.b16 %v1163, %v1163
        %v1172 = vpack.c.b16 %v1164, %v1164
        %v1173 = vpack.c.b16 %v1165, %v1165
        %vm1182 = vcmask 60416
        %1183 = vst.msk [vmem:[%s480] sm:$0xf] %vm1182, %v1166
        %1184 = vst.msk [vmem:[%s480 + $0x4] sm:$0xf] %vm1182, %v1167
        %1185 = vst.msk [vmem:[%s480 + $0x8] sm:$0xf] %vm1182, %v1168
        %1186 = vst.msk [vmem:[%s480 + $0xc] sm:$0xf] %vm1182, %v1169
        %1187 = vst.msk [vmem:[%s480 + $0x10] sm:$0xf] %vm1182, %v1170
        %1188 = vst.msk [vmem:[%s480 + $0x14] sm:$0xf] %vm1182, %v1171
        %1189 = vst.msk [vmem:[%s480 + $0x18] sm:$0xf] %vm1182, %v1172
        %1190 = vst.msk [vmem:[%s480 + $0x1c] sm:$0xf] %vm1182, %v1173
      $region60: #{scalable_vit_forward.15} parent=51 // pred_fallthru
        _
      %s1191 = smul.u32 8, %s25
      %p1192 = scmp.lt.s32.totalorder %s24, 1
      %s1193 = scalar_select %p1192, %s24, 1
      %p1194 = scmp.lt.s32.totalorder %s1191, 7
      %s1195 = scalar_select %p1194, %s1191, 7
      %s1196 = smul.addr %s1193, 8
      %s1197 = sadd.s32 %s1195, %s1196
      %s1198 = smul.addr %s1197, 4
      %s1199 = scalar_lea.vmem %s8, %s1198
      // Predicated region
      $region61: #{scalable_vit_forward.15} parent=51 // pred_check
        %p1200 = pneg %p265
      $region62: #{scalable_vit_forward.15} parent=51 // pred_check_branch
        %1202 = sbr.rel (%p1200) target = $region64
      $region63: #{scalable_vit_forward.15} parent=51 // pred_region
        %s1203 = smul.u32 8, %s25
      $region64: #{scalable_vit_forward.15} parent=51 // pred_fallthru
        _
    $region52: #{scalable_vit_forward.15} parent=5 // pred_fallthru
      _
    %p1204 = scmp.le.s32.totalorder 2, %s14
    // Predicated region
    $region65: #{scalable_vit_forward.15} parent=5 // pred_check
      %p1205 = pneg %p1204
    $region66: #{scalable_vit_forward.15} parent=5 // pred_check_branch
      %1207 = sbr.rel (%p1205) target = $region68
    $region67: #{scalable_vit_forward.15} parent=5 // pred_region
      %s1208 = ssub.s32 %s14, 2
      // Predicated region
      $region69: #{scalable_vit_forward.15} parent=67 // pred_check
        %p1209 = pneg %p271
      $region70: #{scalable_vit_forward.15} parent=67 // pred_check_branch
        %1211 = sbr.rel (%p1209) target = $region72
      $region71: #{scalable_vit_forward.15} parent=67 // pred_region
        %s1212 = smul.u32 8, %s28
        %p1213 = scmp.lt.s32.totalorder %s27, 1
        %s1214 = scalar_select %p1213, %s27, 1
        %p1215 = scmp.lt.s32.totalorder %s1212, 7
        %s1216 = scalar_select %p1215, %s1212, 7
        %s1217 = smul.addr %s1214, 8
        %s1218 = sadd.s32 %s1216, %s1217
        %s1219 = smul.addr %s1218, 4
        %s1220 = scalar_lea.vmem %s8, %s1219
      $region72: #{scalable_vit_forward.15} parent=67 // pred_fallthru
        _
    $region68: #{scalable_vit_forward.15} parent=5 // pred_fallthru
      _
  $region6: #{scalable_vit_forward.15} parent=0 // loop_footer
    %s18 = sadd.s32 1, %s14
  $region7: #{scalable_vit_forward.15} parent=0 // loop_footer_branch
    %13 = sbr.rel target = $region3
  $region8: #{scalable_vit_forward.15} parent=0 // loop_exit
    _

// kernel: scalable_vit_forward.17
$region0: #{scalable_vit_forward.17}
  #allocation0 [shape = 'u32[]', space=smem, size = 0x4, offset = 0x4, fixed_abs, tag = 'smem constant byte address 0x4 - core index']
  #allocation1 [shape = 'u32[144,128]{1,0:T(1,128)}', space=vmem, size = 0x12000, scoped, tag = 'internal scratch']
  %s0 = inlined_call_operand.vmem [shape: bf16[2,10,10,8], index: 0, kind: input, shape index: {}]
  %s1 = inlined_call_operand.vmem [shape: bf16[2,8,8,8], index: 1, kind: input, shape index: {}]
  %s2 = inlined_call_operand.vmem [shape: f32[9,8], index: 2, kind: input, shape index: {}]
  %s3 = inlined_call_operand.vmem [shape: f32[1,8], index: 3, kind: input, shape index: {}]
  %s4 = inlined_call_operand.vmem [shape: bf16[2,8,8,8], index: 4, kind: output, shape index: {}]
  %s5 = sld [smem:[#allocation0]]
  $region49: #{scalable_vit_forward.17} parent=0
    _
  %s7 = ssub.s32 1, %s5
  %s8 = scalar_select 0, %s7, %s5
  loop: start=0, step=1, limit=4
  $region2: #{scalable_vit_forward.17} parent=0 // loop_pre_header
    _
  $region3: #{scalable_vit_forward.17} parent=0 // loop_header
    %s10 = sphi 0, %s14
    %p11 = scmp.ge.s32.totalorder %s10, 4
    %s20 = sphi 0, %s22
    %s23 = sphi 0, %s20
    %s24 = sphi 0, %s23
    %s40 = sphi 0, %s24
    %s46 = sphi 0, %s48
    %s49 = sphi 0, %s46
    %s50 = sphi 0, %s49
    %s66 = sphi 0, %s50
    %s70 = sphi 0, %s70
    %s72 = sphi 0, %s70
    %s73 = sphi 0, %s72
    %s87 = sphi 0, %s73
    %s91 = sphi 0, %s91
    %s93 = sphi 0, %s91
    %s94 = sphi 0, %s93
    %s108 = sphi 0, %s94
    %s114 = sphi 0, %s116
    %s117 = sphi 0, %s114
    %s118 = sphi 0, %s117
    %s134 = sphi 0, %s118
  $region4: #{scalable_vit_forward.17} parent=0 // loop_header_branch
    %13 = sbr.rel (%p11) target = $region8
  $region5: #{scalable_vit_forward.17} parent=0 // loop_body
    %s15 = ssub.s32 %s10, 1
    %s16 = ssub.s32 %s10, 2
    %s17 = sadd.s32 %s10, 1
    %s18 = ssub.s32 %s10, %s17
    %p19 = scmp.eq.s32.totalorder %s18, 0
    %s21 = sadd.s32 %s20, 1
    %s22 = scalar_select %p19, %s20, %s21
    %p25 = pneg %p19
    %p26 = scmp.eq.s32.totalorder %s10, 1
    %p27 = por %p25, %p26
    %p28 = scmp.ne.s32.totalorder %s20, %s23
    %p29 = scmp.eq.s32.totalorder %s10, 0
    %p30 = por %p28, %p29
    %p31 = scmp.ne.s32.totalorder %s20, %s23
    %p32 = scmp.eq.s32.totalorder %s15, 1
    %p33 = por %p31, %p32
    %p34 = scmp.ne.s32.totalorder %s23, %s24
    %p35 = scmp.eq.s32.totalorder %s15, 0
    %p36 = por %p34, %p35
    %p37 = scmp.ne.s32.totalorder %s23, %s24
    %p38 = scmp.eq.s32.totalorder %s16, 1
    %p39 = por %p37, %p38
    %p41 = scmp.ne.s32.totalorder %s24, %s40
    %p42 = scmp.eq.s32.totalorder %s16, 0
    %p43 = por %p41, %p42
    %s44 = ssub.s32 %s10, %s17
    %p45 = scmp.eq.s32.totalorder %s44, 0
    %s47 = sadd.s32 %s46, 1
    %s48 = scalar_select %p45, %s46, %s47
    %p51 = pneg %p45
    %p52 = scmp.eq.s32.totalorder %s10, 1
    %p53 = por %p51, %p52
    %p54 = scmp.ne.s32.totalorder %s46, %s49
    %p55 = scmp.eq.s32.totalorder %s10, 0
    %p56 = por %p54, %p55
    %p57 = scmp.ne.s32.totalorder %s46, %s49
    %p58 = scmp.eq.s32.totalorder %s15, 1
    %p59 = por %p57, %p58
    %p60 = scmp.ne.s32.totalorder %s49, %s50
    %p61 = scmp.eq.s32.totalorder %s15, 0
    %p62 = por %p60, %p61
    %p63 = scmp.ne.s32.totalorder %s49, %s50
    %p64 = scmp.eq.s32.totalorder %s16, 1
    %p65 = por %p63, %p64
    %p67 = scmp.ne.s32.totalorder %s50, %s66
    %p68 = scmp.eq.s32.totalorder %s16, 0
    %p69 = por %p67, %p68
    %s71 = sadd.s32 %s70, 1
    %p74 = scmp.eq.s32.totalorder %s10, 1
    %p75 = scmp.ne.s32.totalorder %s70, %s72
    %p76 = scmp.eq.s32.totalorder %s10, 0
    %p77 = por %p75, %p76
    %p78 = scmp.ne.s32.totalorder %s70, %s72
    %p79 = scmp.eq.s32.totalorder %s15, 1
    %p80 = por %p78, %p79
    %p81 = scmp.ne.s32.totalorder %s72, %s73
    %p82 = scmp.eq.s32.totalorder %s15, 0
    %p83 = por %p81, %p82
    %p84 = scmp.ne.s32.totalorder %s72, %s73
    %p85 = scmp.eq.s32.totalorder %s16, 1
    %p86 = por %p84, %p85
    %p88 = scmp.ne.s32.totalorder %s73, %s87
    %p89 = scmp.eq.s32.totalorder %s16, 0
    %p90 = por %p88, %p89
    %s92 = sadd.s32 %s91, 1
    %p95 = scmp.eq.s32.totalorder %s10, 1
    %p96 = scmp.ne.s32.totalorder %s91, %s93
    %p97 = scmp.eq.s32.totalorder %s10, 0
    %p98 = por %p96, %p97
    %p99 = scmp.ne.s32.totalorder %s91, %s93
    %p100 = scmp.eq.s32.totalorder %s15, 1
    %p101 = por %p99, %p100
    %p102 = scmp.ne.s32.totalorder %s93, %s94
    %p103 = scmp.eq.s32.totalorder %s15, 0
    %p104 = por %p102, %p103
    %p105 = scmp.ne.s32.totalorder %s93, %s94
    %p106 = scmp.eq.s32.totalorder %s16, 1
    %p107 = por %p105, %p106
    %p109 = scmp.ne.s32.totalorder %s94, %s108
    %p110 = scmp.eq.s32.totalorder %s16, 0
    %p111 = por %p109, %p110
    %s112 = ssub.s32 %s10, %s17
    %p113 = scmp.eq.s32.totalorder %s112, 0
    %s115 = sadd.s32 %s114, 1
    %s116 = scalar_select %p113, %s114, %s115
    %p119 = pneg %p113
    %p120 = scmp.eq.s32.totalorder %s10, 1
    %p121 = por %p119, %p120
    %p122 = scmp.ne.s32.totalorder %s114, %s117
    %p123 = scmp.eq.s32.totalorder %s10, 0
    %p124 = por %p122, %p123
    %p125 = scmp.ne.s32.totalorder %s114, %s117
    %p126 = scmp.eq.s32.totalorder %s15, 1
    %p127 = por %p125, %p126
    %p128 = scmp.ne.s32.totalorder %s117, %s118
    %p129 = scmp.eq.s32.totalorder %s15, 0
    %p130 = por %p128, %p129
    %p131 = scmp.ne.s32.totalorder %s117, %s118
    %p132 = scmp.eq.s32.totalorder %s16, 1
    %p133 = por %p131, %p132
    %p135 = scmp.ne.s32.totalorder %s118, %s134
    %p136 = scmp.eq.s32.totalorder %s16, 0
    %p137 = por %p135, %p136
    %p138 = scmp.le.s32.totalorder 1, %s10
    %p139 = scmp.lt.s32.totalorder %s10, 3
    %p140 = pnand %p138, %p139
    %p141 = pneg %p140
    // Predicated region
    $region9: #{scalable_vit_forward.17} parent=5 // pred_check
      _
    $region10: #{scalable_vit_forward.17} parent=5 // pred_check_branch
      %143 = sbr.rel (%p140) target = $region12
    $region11: #{scalable_vit_forward.17} parent=5 // pred_region
      %s144 = ssub.s32 %s10, 1
      // Predicated region
      $region13: #{scalable_vit_forward.17} parent=11 // pred_check
        %p145 = pneg %p83
      $region14: #{scalable_vit_forward.17} parent=11 // pred_check_branch
        %147 = sbr.rel (%p145) target = $region16
      $region15: #{scalable_vit_forward.17} parent=11 // pred_region
        _
      $region16: #{scalable_vit_forward.17} parent=11 // pred_fallthru
        _
      // Predicated region
      $region17: #{scalable_vit_forward.17} parent=11 // pred_check
        %p148 = pneg %p104
      $region18: #{scalable_vit_forward.17} parent=11 // pred_check_branch
        %150 = sbr.rel (%p148) target = $region20
      $region19: #{scalable_vit_forward.17} parent=11 // pred_region
        _
      $region20: #{scalable_vit_forward.17} parent=11 // pred_fallthru
        _
    $region12: #{scalable_vit_forward.17} parent=5 // pred_fallthru
      _
    %p151 = scmp.lt.s32.totalorder %s10, 2
    // Predicated region
    $region21: #{scalable_vit_forward.17} parent=5 // pred_check
      %p152 = pneg %p151
    $region22: #{scalable_vit_forward.17} parent=5 // pred_check_branch
      %154 = sbr.rel (%p152) target = $region24
    $region23: #{scalable_vit_forward.17} parent=5 // pred_region
      // Predicated region
      $region25: #{scalable_vit_forward.17} parent=23 // pred_check
        %p155 = pneg %p30
      $region26: #{scalable_vit_forward.17} parent=23 // pred_check_branch
        %157 = sbr.rel (%p155) target = $region28
      $region27: #{scalable_vit_forward.17} parent=23 // pred_region
        %p158 = scmp.lt.s32.totalorder %s10, 1
        %s159 = scalar_select %p158, %s10, 1
        %s160 = smul.addr %s159, 20
        %s161 = smul.addr %s160, 4
        %s162 = scalar_lea.vmem %s0, %s161
      $region28: #{scalable_vit_forward.17} parent=23 // pred_fallthru
        _
      // Predicated region
      $region29: #{scalable_vit_forward.17} parent=23 // pred_check
        %p163 = pneg %p56
      $region30: #{scalable_vit_forward.17} parent=23 // pred_check_branch
        %165 = sbr.rel (%p163) target = $region32
      $region31: #{scalable_vit_forward.17} parent=23 // pred_region
        %p166 = scmp.lt.s32.totalorder %s10, 1
        %s167 = scalar_select %p166, %s10, 1
        %s168 = smul.addr %s167, 8
        %s169 = smul.addr %s168, 4
        %s170 = scalar_lea.vmem %s1, %s169
      $region32: #{scalable_vit_forward.17} parent=23 // pred_fallthru
        _
    $region24: #{scalable_vit_forward.17} parent=5 // pred_fallthru
      _
    %p171 = scmp.le.s32.totalorder 1, %s10
    %p172 = scmp.lt.s32.totalorder %s10, 3
    %p173 = pnand %p171, %p172
    %p174 = pneg %p173
    // Predicated region
    $region33: #{scalable_vit_forward.17} parent=5 // pred_check
      _
    $region34: #{scalable_vit_forward.17} parent=5 // pred_check_branch
      %176 = sbr.rel (%p173) target = $region36
    $region35: #{scalable_vit_forward.17} parent=5 // pred_region
      %s177 = ssub.s32 %s10, 1
      %p178 = scmp.lt.s32.totalorder %s15, 1
      %s179 = scalar_select %p178, %s15, 1
      %s180 = smul.addr %s179, 20
      %s181 = smul.addr %s180, 4
      %s182 = scalar_lea.vmem %s0, %s181
      %p183 = pneg %p36
      %p184 = pneg %p33
      %p185 = scmp.lt.s32.totalorder %s15, 1
      %s186 = scalar_select %p185, %s15, 1
      %s187 = smul.addr %s186, 8
      %s188 = smul.addr %s187, 4
      %s189 = scalar_lea.vmem %s1, %s188
      %p190 = pneg %p62
      %p191 = pneg %p59
      %p192 = pneg %p83
      %p193 = pneg %p80
      %p194 = pneg %p104
      %p195 = pneg %p101
      %p196 = pneg %p130
      %p197 = pneg %p127
      %p198 = scmp.lt.s32.totalorder %s15, 1
      %s199 = scalar_select %p198, %s15, 1
      %s200 = smul.addr %s199, 8
      %s201 = smul.addr %s200, 4
      %s202 = scalar_lea.vmem %s4, %s201
      %p203 = scmp.lt.s32.totalorder %s15, 1
      %s204 = scalar_select %p203, %s15, 1
      %s205 = smul.addr %s204, 20
      %s206 = smul.addr %s205, 4
      %s207 = scalar_lea.vmem %s0, %s206
      %p208 = scmp.lt.s32.totalorder %s15, 1
      %s209 = scalar_select %p208, %s15, 1
      %s210 = smul.addr %s209, 8
      %s211 = smul.addr %s210, 4
      %s212 = scalar_lea.vmem %s1, %s211
      %p213 = scmp.lt.s32.totalorder %s15, 1
      %s214 = scalar_select %p213, %s15, 1
      %s215 = smul.addr %s214, 8
      %s216 = smul.addr %s215, 4
      %s217 = scalar_lea.vmem %s4, %s216
      %v218 = vld [vmem:[%s212] sm:$0xf]
      %v219 = vld [vmem:[%s212 + $0x4] sm:$0xf]
      %v220 = vld [vmem:[%s212 + $0x8] sm:$0xf]
      %v221 = vld [vmem:[%s212 + $0xc] sm:$0xf]
      %v222 = vld [vmem:[%s212 + $0x10] sm:$0xf]
      %v223 = vld [vmem:[%s212 + $0x14] sm:$0xf]
      %v224 = vld [vmem:[%s212 + $0x18] sm:$0xf]
      %v225 = vld [vmem:[%s212 + $0x1c] sm:$0xf]
      %v226 = vunpack.c.l.bf16 %v218
      %v227 = vunpack.c.l.bf16 %v219
      %v228 = vunpack.c.l.bf16 %v220
      %v229 = vunpack.c.l.bf16 %v221
      %v230 = vunpack.c.l.bf16 %v222
      %v231 = vunpack.c.l.bf16 %v223
      %v232 = vunpack.c.l.bf16 %v224
      %v233 = vunpack.c.l.bf16 %v225
      %v234 = vld [vmem:[%s3] sm:$0x1]
      %v236 = vlaneseq
      %v237 = vshrl.u32 %v236, 7
      %v238 = vsub.s32 0, %v237
      %v239 = vrot.slane %v234, %v238
      %v241 = vadd.f32 %v226, %v239
      %v242 = vadd.f32 %v227, %v239
      %v243 = vadd.f32 %v228, %v239
      %v244 = vadd.f32 %v229, %v239
      %v245 = vadd.f32 %v230, %v239
      %v246 = vadd.f32 %v231, %v239
      %v247 = vadd.f32 %v232, %v239
      %v248 = vadd.f32 %v233, %v239
      %v249 = vld [vmem:[%s207] sm:$0xf]
      %v250 = vld [vmem:[%s207 + $0x8] sm:$0xf]
      %v251 = vld [vmem:[%s207 + $0x10] sm:$0xf]
      %v252 = vld [vmem:[%s207 + $0x18] sm:$0xf]
      %v253 = vld [vmem:[%s207 + $0x20] sm:$0xf]
      %v254 = vld [vmem:[%s207 + $0x28] sm:$0xf]
      %v255 = vld [vmem:[%s207 + $0x30] sm:$0xf]
      %v256 = vld [vmem:[%s207 + $0x38] sm:$0xf]
      %v257 = vunpack.c.l.bf16 %v249
      %v258 = vunpack.c.l.bf16 %v250
      %v259 = vunpack.c.l.bf16 %v251
      %v260 = vunpack.c.l.bf16 %v252
      %v261 = vunpack.c.l.bf16 %v253
      %v262 = vunpack.c.l.bf16 %v254
      %v263 = vunpack.c.l.bf16 %v255
      %v264 = vunpack.c.l.bf16 %v256
      %v265 = vld [vmem:[%s2] sm:$0x1]
      %v266 = vlaneseq
      %v267 = vshrl.u32 %v266, 7
      %v268 = vsub.s32 0, %v267
      %v269 = vrot.slane %v265, %v268
      %v270 = vmul.f32 %v257, %v269
      %v271 = vmul.f32 %v258, %v269
      %v272 = vmul.f32 %v259, %v269
      %v273 = vmul.f32 %v260, %v269
      %v274 = vmul.f32 %v261, %v269
      %v275 = vmul.f32 %v262, %v269
      %v276 = vmul.f32 %v263, %v269
      %v277 = vmul.f32 %v264, %v269
      %v278 = vadd.f32 %v241, %v270
      %v279 = vadd.f32 %v242, %v271
      %v280 = vadd.f32 %v243, %v272
      %v281 = vadd.f32 %v244, %v273
      %v282 = vadd.f32 %v245, %v274
      %v283 = vadd.f32 %v246, %v275
      %v284 = vadd.f32 %v247, %v276
      %v285 = vadd.f32 %v248, %v277
      %v286 = vld [vmem:[%s207 + $0x4] sm:$0x1]
      %v287 = vld [vmem:[%s207 + $0xc] sm:$0x1]
      %v288 = vld [vmem:[%s207 + $0x14] sm:$0x1]
      %v289 = vld [vmem:[%s207 + $0x1c] sm:$0x1]
      %v290 = vld [vmem:[%s207 + $0x24] sm:$0x1]
      %v291 = vld [vmem:[%s207 + $0x2c] sm:$0x1]
      %v292 = vld [vmem:[%s207 + $0x34] sm:$0x1]
      %v293 = vld [vmem:[%s207 + $0x3c] sm:$0x1]
      %v294 = vunpack.c.l.bf16 %v286
      %v295 = vunpack.c.l.bf16 %v287
      %v296 = vunpack.c.l.bf16 %v288
      %v297 = vunpack.c.l.bf16 %v289
      %v298 = vunpack.c.l.bf16 %v290
      %v299 = vunpack.c.l.bf16 %v291
      %v300 = vunpack.c.l.bf16 %v292
      %v301 = vunpack.c.l.bf16 %v293
      %v302 = vld [vmem:[%s2 + $0x1] sm:$0x1]
      %v303 = vlaneseq
      %v304 = vshrl.u32 %v303, 7
      %v305 = vsub.s32 0, %v304
      %v306 = vrot.slane %v302, %v305
      %v307 = vmul.f32 %v257, %v306
      %v308 = vmul.f32 %v294, %v306
      %v309 = vmul.f32 %v258, %v306
      %v310 = vmul.f32 %v295, %v306
      %v311 = vmul.f32 %v259, %v306
      %v312 = vmul.f32 %v296, %v306
      %v313 = vmul.f32 %v260, %v306
      %v314 = vmul.f32 %v297, %v306
      %v315 = vmul.f32 %v261, %v306
      %v316 = vmul.f32 %v298, %v306
      %v317 = vmul.f32 %v262, %v306
      %v318 = vmul.f32 %v299, %v306
      %v319 = vmul.f32 %v263, %v306
      %v320 = vmul.f32 %v300, %v306
      %v321 = vmul.f32 %v264, %v306
      %v322 = vmul.f32 %v301, %v306
      %vm339 = vcmask 1046528
      %v340 = vrot.slane %v307, 1
      %v341 = vrot.slane %v308, 1
      %v342 = vsel %vm339, %v340, %v341
      %v343 = vrot.slane %v309, 1
      %v344 = vrot.slane %v310, 1
      %v345 = vsel %vm339, %v343, %v344
      %v346 = vrot.slane %v311, 1
      %v347 = vrot.slane %v312, 1
      %v348 = vsel %vm339, %v346, %v347
      %v349 = vrot.slane %v313, 1
      %v350 = vrot.slane %v314, 1
      %v351 = vsel %vm339, %v349, %v350
      %v352 = vrot.slane %v315, 1
      %v353 = vrot.slane %v316, 1
      %v354 = vsel %vm339, %v352, %v353
      %v355 = vrot.slane %v317, 1
      %v356 = vrot.slane %v318, 1
      %v357 = vsel %vm339, %v355, %v356
      %v358 = vrot.slane %v319, 1
      %v359 = vrot.slane %v320, 1
      %v360 = vsel %vm339, %v358, %v359
      %v361 = vrot.slane %v321, 1
      %v362 = vrot.slane %v322, 1
      %v363 = vsel %vm339, %v361, %v362
      %v372 = vadd.f32 %v278, %v342
      %v373 = vadd.f32 %v279, %v345
      %v374 = vadd.f32 %v280, %v348
      %v375 = vadd.f32 %v281, %v351
      %v376 = vadd.f32 %v282, %v354
      %v377 = vadd.f32 %v283, %v357
      %v378 = vadd.f32 %v284, %v360
      %v379 = vadd.f32 %v285, %v363
      %v380 = vld [vmem:[%s207] sm:$0xe]
      %v381 = vld [vmem:[%s207 + $0x8] sm:$0xe]
      %v382 = vld [vmem:[%s207 + $0x10] sm:$0xe]
      %v383 = vld [vmem:[%s207 + $0x18] sm:$0xe]
      %v384 = vld [vmem:[%s207 + $0x20] sm:$0xe]
      %v385 = vld [vmem:[%s207 + $0x28] sm:$0xe]
      %v386 = vld [vmem:[%s207 + $0x30] sm:$0xe]
      %v387 = vld [vmem:[%s207 + $0x38] sm:$0xe]
      %v388 = vunpack.c.l.bf16 %v380
      %v389 = vunpack.c.l.bf16 %v381
      %v390 = vunpack.c.l.bf16 %v382
      %v391 = vunpack.c.l.bf16 %v383
      %v392 = vunpack.c.l.bf16 %v384
      %v393 = vunpack.c.l.bf16 %v385
      %v394 = vunpack.c.l.bf16 %v386
      %v395 = vunpack.c.l.bf16 %v387
      %v396 = vld [vmem:[%s2 + $0x2] sm:$0x1]
      %v397 = vlaneseq
      %v398 = vshrl.u32 %v397, 7
      %v399 = vsub.s32 0, %v398
      %v400 = vrot.slane %v396, %v399
      %v401 = vmul.f32 %v388, %v400
      %v402 = vmul.f32 %v294, %v400
      %v403 = vmul.f32 %v389, %v400
      %v404 = vmul.f32 %v295, %v400
      %v405 = vmul.f32 %v390, %v400
      %v406 = vmul.f32 %v296, %v400
      %v407 = vmul.f32 %v391, %v400
      %v408 = vmul.f32 %v297, %v400
      %v409 = vmul.f32 %v392, %v400
      %v410 = vmul.f32 %v298, %v400
      %v411 = vmul.f32 %v393, %v400
      %v412 = vmul.f32 %v299, %v400
      %v413 = vmul.f32 %v394, %v400
      %v414 = vmul.f32 %v300, %v400
      %v415 = vmul.f32 %v395, %v400
      %v416 = vmul.f32 %v301, %v400
      %vm433 = vcmask 1045504
      %v434 = vrot.slane %v401, 2
      %v435 = vrot.slane %v402, 2
      %v436 = vsel %vm433, %v434, %v435
      %v437 = vrot.slane %v403, 2
      %v438 = vrot.slane %v404, 2
      %v439 = vsel %vm433, %v437, %v438
      %v440 = vrot.slane %v405, 2
      %v441 = vrot.slane %v406, 2
      %v442 = vsel %vm433, %v440, %v441
      %v443 = vrot.slane %v407, 2
      %v444 = vrot.slane %v408, 2
      %v445 = vsel %vm433, %v443, %v444
      %v446 = vrot.slane %v409, 2
      %v447 = vrot.slane %v410, 2
      %v448 = vsel %vm433, %v446, %v447
      %v449 = vrot.slane %v411, 2
      %v450 = vrot.slane %v412, 2
      %v451 = vsel %vm433, %v449, %v450
      %v452 = vrot.slane %v413, 2
      %v453 = vrot.slane %v414, 2
      %v454 = vsel %vm433, %v452, %v453
      %v455 = vrot.slane %v415, 2
      %v456 = vrot.slane %v416, 2
      %v457 = vsel %vm433, %v455, %v456
      %v466 = vadd.f32 %v372, %v436
      %v467 = vadd.f32 %v373, %v439
      %v468 = vadd.f32 %v374, %v442
      %v469 = vadd.f32 %v375, %v445
      %v470 = vadd.f32 %v376, %v448
      %v471 = vadd.f32 %v377, %v451
      %v472 = vadd.f32 %v378, %v454
      %v473 = vadd.f32 %v379, %v457
      %s474 = scalar_lea.vmem %s207, 8
      %v475 = vld [vmem:[%s474] sm:$0xf]
      %v476 = vld [vmem:[%s474 + $0x8] sm:$0xf]
      %v477 = vld [vmem:[%s474 + $0x10] sm:$0xf]
      %v478 = vld [vmem:[%s474 + $0x18] sm:$0xf]
      %v479 = vld [vmem:[%s474 + $0x20] sm:$0xf]
      %v480 = vld [vmem:[%s474 + $0x28] sm:$0xf]
      %v481 = vld [vmem:[%s474 + $0x30] sm:$0xf]
      %v482 = vld [vmem:[%s474 + $0x38] sm:$0xf]
      %v483 = vunpack.c.l.bf16 %v475
      %v484 = vunpack.c.l.bf16 %v476
      %v485 = vunpack.c.l.bf16 %v477
      %v486 = vunpack.c.l.bf16 %v478
      %v487 = vunpack.c.l.bf16 %v479
      %v488 = vunpack.c.l.bf16 %v480
      %v489 = vunpack.c.l.bf16 %v481
      %v490 = vunpack.c.l.bf16 %v482
      %v491 = vld [vmem:[%s2 + $0x3] sm:$0x1]
      %v492 = vlaneseq
      %v493 = vshrl.u32 %v492, 7
      %v494 = vsub.s32 0, %v493
      %v495 = vrot.slane %v491, %v494
      %v496 = vmul.f32 %v483, %v495
      %v497 = vmul.f32 %v484, %v495
      %v498 = vmul.f32 %v485, %v495
      %v499 = vmul.f32 %v486, %v495
      %v500 = vmul.f32 %v487, %v495
      %v501 = vmul.f32 %v488, %v495
      %v502 = vmul.f32 %v489, %v495
      %v503 = vmul.f32 %v490, %v495
      %v504 = vadd.f32 %v466, %v496
      %v505 = vadd.f32 %v467, %v497
      %v506 = vadd.f32 %v468, %v498
      %v507 = vadd.f32 %v469, %v499
      %v508 = vadd.f32 %v470, %v500
      %v509 = vadd.f32 %v471, %v501
      %v510 = vadd.f32 %v472, %v502
      %v511 = vadd.f32 %v473, %v503
      %v512 = vld [vmem:[%s474 + $0x4] sm:$0x1]
      %v513 = vld [vmem:[%s474 + $0xc] sm:$0x1]
      %v514 = vld [vmem:[%s474 + $0x14] sm:$0x1]
      %v515 = vld [vmem:[%s474 + $0x1c] sm:$0x1]
      %v516 = vld [vmem:[%s474 + $0x24] sm:$0x1]
      %v517 = vld [vmem:[%s474 + $0x2c] sm:$0x1]
      %v518 = vld [vmem:[%s474 + $0x34] sm:$0x1]
      %v519 = vld [vmem:[%s474 + $0x3c] sm:$0x1]
      %v520 = vunpack.c.l.bf16 %v512
      %v521 = vunpack.c.l.bf16 %v513
      %v522 = vunpack.c.l.bf16 %v514
      %v523 = vunpack.c.l.bf16 %v515
      %v524 = vunpack.c.l.bf16 %v516
      %v525 = vunpack.c.l.bf16 %v517
      %v526 = vunpack.c.l.bf16 %v518
      %v527 = vunpack.c.l.bf16 %v519
      %v528 = vld [vmem:[%s2 + $0x4] sm:$0x1]
      %v529 = vlaneseq
      %v530 = vshrl.u32 %v529, 7
      %v531 = vsub.s32 0, %v530
      %v532 = vrot.slane %v528, %v531
      %v533 = vmul.f32 %v483, %v532
      %v534 = vmul.f32 %v520, %v532
      %v535 = vmul.f32 %v484, %v532
      %v536 = vmul.f32 %v521, %v532
      %v537 = vmul.f32 %v485, %v532
      %v538 = vmul.f32 %v522, %v532
      %v539 = vmul.f32 %v486, %v532
      %v540 = vmul.f32 %v523, %v532
      %v541 = vmul.f32 %v487, %v532
      %v542 = vmul.f32 %v524, %v532
      %v543 = vmul.f32 %v488, %v532
      %v544 = vmul.f32 %v525, %v532
      %v545 = vmul.f32 %v489, %v532
      %v546 = vmul.f32 %v526, %v532
      %v547 = vmul.f32 %v490, %v532
      %v548 = vmul.f32 %v527, %v532
      %v565 = vrot.slane %v533, 1
      %v566 = vrot.slane %v534, 1
      %v567 = vsel %vm339, %v565, %v566
      %v568 = vrot.slane %v535, 1
      %v569 = vrot.slane %v536, 1
      %v570 = vsel %vm339, %v568, %v569
      %v571 = vrot.slane %v537, 1
      %v572 = vrot.slane %v538, 1
      %v573 = vsel %vm339, %v571, %v572
      %v574 = vrot.slane %v539, 1
      %v575 = vrot.slane %v540, 1
      %v576 = vsel %vm339, %v574, %v575
      %v577 = vrot.slane %v541, 1
      %v578 = vrot.slane %v542, 1
      %v579 = vsel %vm339, %v577, %v578
      %v580 = vrot.slane %v543, 1
      %v581 = vrot.slane %v544, 1
      %v582 = vsel %vm339, %v580, %v581
      %v583 = vrot.slane %v545, 1
      %v584 = vrot.slane %v546, 1
      %v585 = vsel %vm339, %v583, %v584
      %v586 = vrot.slane %v547, 1
      %v587 = vrot.slane %v548, 1
      %v588 = vsel %vm339, %v586, %v587
      %v597 = vadd.f32 %v504, %v567
      %v598 = vadd.f32 %v505, %v570
      %v599 = vadd.f32 %v506, %v573
      %v600 = vadd.f32 %v507, %v576
      %v601 = vadd.f32 %v508, %v579
      %v602 = vadd.f32 %v509, %v582
      %v603 = vadd.f32 %v510, %v585
      %v604 = vadd.f32 %v511, %v588
      %v605 = vld [vmem:[%s474] sm:$0xe]
      %v606 = vld [vmem:[%s474 + $0x8] sm:$0xe]
      %v607 = vld [vmem:[%s474 + $0x10] sm:$0xe]
      %v608 = vld [vmem:[%s474 + $0x18] sm:$0xe]
      %v609 = vld [vmem:[%s474 + $0x20] sm:$0xe]
      %v610 = vld [vmem:[%s474 + $0x28] sm:$0xe]
      %v611 = vld [vmem:[%s474 + $0x30] sm:$0xe]
      %v612 = vld [vmem:[%s474 + $0x38] sm:$0xe]
      %v613 = vunpack.c.l.bf16 %v605
      %v614 = vunpack.c.l.bf16 %v606
      %v615 = vunpack.c.l.bf16 %v607
      %v616 = vunpack.c.l.bf16 %v608
      %v617 = vunpack.c.l.bf16 %v609
      %v618 = vunpack.c.l.bf16 %v610
      %v619 = vunpack.c.l.bf16 %v611
      %v620 = vunpack.c.l.bf16 %v612
      %v621 = vld [vmem:[%s2 + $0x5] sm:$0x1]
      %v622 = vlaneseq
      %v623 = vshrl.u32 %v622, 7
      %v624 = vsub.s32 0, %v623
      %v625 = vrot.slane %v621, %v624
      %v626 = vmul.f32 %v613, %v625
      %v627 = vmul.f32 %v520, %v625
      %v628 = vmul.f32 %v614, %v625
      %v629 = vmul.f32 %v521, %v625
      %v630 = vmul.f32 %v615, %v625
      %v631 = vmul.f32 %v522, %v625
      %v632 = vmul.f32 %v616, %v625
      %v633 = vmul.f32 %v523, %v625
      %v634 = vmul.f32 %v617, %v625
      %v635 = vmul.f32 %v524, %v625
      %v636 = vmul.f32 %v618, %v625
      %v637 = vmul.f32 %v525, %v625
      %v638 = vmul.f32 %v619, %v625
      %v639 = vmul.f32 %v526, %v625
      %v640 = vmul.f32 %v620, %v625
      %v641 = vmul.f32 %v527, %v625
      %v658 = vrot.slane %v626, 2
      %v659 = vrot.slane %v627, 2
      %v660 = vsel %vm433, %v658, %v659
      %v661 = vrot.slane %v628, 2
      %v662 = vrot.slane %v629, 2
      %v663 = vsel %vm433, %v661, %v662
      %v664 = vrot.slane %v630, 2
      %v665 = vrot.slane %v631, 2
      %v666 = vsel %vm433, %v664, %v665
      %v667 = vrot.slane %v632, 2
      %v668 = vrot.slane %v633, 2
      %v669 = vsel %vm433, %v667, %v668
      %v670 = vrot.slane %v634, 2
      %v671 = vrot.slane %v635, 2
      %v672 = vsel %vm433, %v670, %v671
      %v673 = vrot.slane %v636, 2
      %v674 = vrot.slane %v637, 2
      %v675 = vsel %vm433, %v673, %v674
      %v676 = vrot.slane %v638, 2
      %v677 = vrot.slane %v639, 2
      %v678 = vsel %vm433, %v676, %v677
      %v679 = vrot.slane %v640, 2
      %v680 = vrot.slane %v641, 2
      %v681 = vsel %vm433, %v679, %v680
      %v690 = vadd.f32 %v597, %v660
      %v691 = vadd.f32 %v598, %v663
      %v692 = vadd.f32 %v599, %v666
      %v693 = vadd.f32 %v600, %v669
      %v694 = vadd.f32 %v601, %v672
      %v695 = vadd.f32 %v602, %v675
      %v696 = vadd.f32 %v603, %v678
      %v697 = vadd.f32 %v604, %v681
      %s698 = scalar_lea.vmem %s207, 16
      %v699 = vld [vmem:[%s698] sm:$0xf]
      %v700 = vld [vmem:[%s698 + $0x8] sm:$0xf]
      %v701 = vld [vmem:[%s698 + $0x10] sm:$0xf]
      %v702 = vld [vmem:[%s698 + $0x18] sm:$0xf]
      %v703 = vld [vmem:[%s698 + $0x20] sm:$0xf]
      %v704 = vld [vmem:[%s698 + $0x28] sm:$0xf]
      %v705 = vld [vmem:[%s698 + $0x30] sm:$0xf]
      %v706 = vld [vmem:[%s698 + $0x38] sm:$0xf]
      %v707 = vunpack.c.l.bf16 %v699
      %v708 = vunpack.c.l.bf16 %v700
      %v709 = vunpack.c.l.bf16 %v701
      %v710 = vunpack.c.l.bf16 %v702
      %v711 = vunpack.c.l.bf16 %v703
      %v712 = vunpack.c.l.bf16 %v704
      %v713 = vunpack.c.l.bf16 %v705
      %v714 = vunpack.c.l.bf16 %v706
      %v715 = vld [vmem:[%s2 + $0x6] sm:$0x1]
      %v716 = vlaneseq
      %v717 = vshrl.u32 %v716, 7
      %v718 = vsub.s32 0, %v717
      %v719 = vrot.slane %v715, %v718
      %v720 = vmul.f32 %v707, %v719
      %v721 = vmul.f32 %v708, %v719
      %v722 = vmul.f32 %v709, %v719
      %v723 = vmul.f32 %v710, %v719
      %v724 = vmul.f32 %v711, %v719
      %v725 = vmul.f32 %v712, %v719
      %v726 = vmul.f32 %v713, %v719
      %v727 = vmul.f32 %v714, %v719
      %v728 = vadd.f32 %v690, %v720
      %v729 = vadd.f32 %v691, %v721
      %v730 = vadd.f32 %v692, %v722
      %v731 = vadd.f32 %v693, %v723
      %v732 = vadd.f32 %v694, %v724
      %v733 = vadd.f32 %v695, %v725
      %v734 = vadd.f32 %v696, %v726
      %v735 = vadd.f32 %v697, %v727
      %v736 = vld [vmem:[%s698 + $0x4] sm:$0x1]
      %v737 = vld [vmem:[%s698 + $0xc] sm:$0x1]
      %v738 = vld [vmem:[%s698 + $0x14] sm:$0x1]
      %v739 = vld [vmem:[%s698 + $0x1c] sm:$0x1]
      %v740 = vld [vmem:[%s698 + $0x24] sm:$0x1]
      %v741 = vld [vmem:[%s698 + $0x2c] sm:$0x1]
      %v742 = vld [vmem:[%s698 + $0x34] sm:$0x1]
      %v743 = vld [vmem:[%s698 + $0x3c] sm:$0x1]
      %v744 = vunpack.c.l.bf16 %v736
      %v745 = vunpack.c.l.bf16 %v737
      %v746 = vunpack.c.l.bf16 %v738
      %v747 = vunpack.c.l.bf16 %v739
      %v748 = vunpack.c.l.bf16 %v740
      %v749 = vunpack.c.l.bf16 %v741
      %v750 = vunpack.c.l.bf16 %v742
      %v751 = vunpack.c.l.bf16 %v743
      %v752 = vld [vmem:[%s2 + $0x7] sm:$0x1]
      %v753 = vlaneseq
      %v754 = vshrl.u32 %v753, 7
      %v755 = vsub.s32 0, %v754
      %v756 = vrot.slane %v752, %v755
      %v757 = vmul.f32 %v707, %v756
      %v758 = vmul.f32 %v744, %v756
      %v759 = vmul.f32 %v708, %v756
      %v760 = vmul.f32 %v745, %v756
      %v761 = vmul.f32 %v709, %v756
      %v762 = vmul.f32 %v746, %v756
      %v763 = vmul.f32 %v710, %v756
      %v764 = vmul.f32 %v747, %v756
      %v765 = vmul.f32 %v711, %v756
      %v766 = vmul.f32 %v748, %v756
      %v767 = vmul.f32 %v712, %v756
      %v768 = vmul.f32 %v749, %v756
      %v769 = vmul.f32 %v713, %v756
      %v770 = vmul.f32 %v750, %v756
      %v771 = vmul.f32 %v714, %v756
      %v772 = vmul.f32 %v751, %v756
      %v789 = vrot.slane %v757, 1
      %v790 = vrot.slane %v758, 1
      %v791 = vsel %vm339, %v789, %v790
      %v792 = vrot.slane %v759, 1
      %v793 = vrot.slane %v760, 1
      %v794 = vsel %vm339, %v792, %v793
      %v795 = vrot.slane %v761, 1
      %v796 = vrot.slane %v762, 1
      %v797 = vsel %vm339, %v795, %v796
      %v798 = vrot.slane %v763, 1
      %v799 = vrot.slane %v764, 1
      %v800 = vsel %vm339, %v798, %v799
      %v801 = vrot.slane %v765, 1
      %v802 = vrot.slane %v766, 1
      %v803 = vsel %vm339, %v801, %v802
      %v804 = vrot.slane %v767, 1
      %v805 = vrot.slane %v768, 1
      %v806 = vsel %vm339, %v804, %v805
      %v807 = vrot.slane %v769, 1
      %v808 = vrot.slane %v770, 1
      %v809 = vsel %vm339, %v807, %v808
      %v810 = vrot.slane %v771, 1
      %v811 = vrot.slane %v772, 1
      %v812 = vsel %vm339, %v810, %v811
      %v821 = vadd.f32 %v728, %v791
      %v822 = vadd.f32 %v729, %v794
      %v823 = vadd.f32 %v730, %v797
      %v824 = vadd.f32 %v731, %v800
      %v825 = vadd.f32 %v732, %v803
      %v826 = vadd.f32 %v733, %v806
      %v827 = vadd.f32 %v734, %v809
      %v828 = vadd.f32 %v735, %v812
      %v829 = vld [vmem:[%s698] sm:$0xe]
      %v830 = vld [vmem:[%s698 + $0x8] sm:$0xe]
      %v831 = vld [vmem:[%s698 + $0x10] sm:$0xe]
      %v832 = vld [vmem:[%s698 + $0x18] sm:$0xe]
      %v833 = vld [vmem:[%s698 + $0x20] sm:$0xe]
      %v834 = vld [vmem:[%s698 + $0x28] sm:$0xe]
      %v835 = vld [vmem:[%s698 + $0x30] sm:$0xe]
      %v836 = vld [vmem:[%s698 + $0x38] sm:$0xe]
      %v837 = vunpack.c.l.bf16 %v829
      %v838 = vunpack.c.l.bf16 %v830
      %v839 = vunpack.c.l.bf16 %v831
      %v840 = vunpack.c.l.bf16 %v832
      %v841 = vunpack.c.l.bf16 %v833
      %v842 = vunpack.c.l.bf16 %v834
      %v843 = vunpack.c.l.bf16 %v835
      %v844 = vunpack.c.l.bf16 %v836
      %v845 = vld [vmem:[%s2 + $0x8] sm:$0x1]
      %v846 = vlaneseq
      %v847 = vshrl.u32 %v846, 7
      %v848 = vsub.s32 0, %v847
      %v849 = vrot.slane %v845, %v848
      %v850 = vmul.f32 %v837, %v849
      %v851 = vmul.f32 %v744, %v849
      %v852 = vmul.f32 %v838, %v849
      %v853 = vmul.f32 %v745, %v849
      %v854 = vmul.f32 %v839, %v849
      %v855 = vmul.f32 %v746, %v849
      %v856 = vmul.f32 %v840, %v849
      %v857 = vmul.f32 %v747, %v849
      %v858 = vmul.f32 %v841, %v849
      %v859 = vmul.f32 %v748, %v849
      %v860 = vmul.f32 %v842, %v849
      %v861 = vmul.f32 %v749, %v849
      %v862 = vmul.f32 %v843, %v849
      %v863 = vmul.f32 %v750, %v849
      %v864 = vmul.f32 %v844, %v849
      %v865 = vmul.f32 %v751, %v849
      %v882 = vrot.slane %v850, 2
      %v883 = vrot.slane %v851, 2
      %v884 = vsel %vm433, %v882, %v883
      %v885 = vrot.slane %v852, 2
      %v886 = vrot.slane %v853, 2
      %v887 = vsel %vm433, %v885, %v886
      %v888 = vrot.slane %v854, 2
      %v889 = vrot.slane %v855, 2
      %v890 = vsel %vm433, %v888, %v889
      %v891 = vrot.slane %v856, 2
      %v892 = vrot.slane %v857, 2
      %v893 = vsel %vm433, %v891, %v892
      %v894 = vrot.slane %v858, 2
      %v895 = vrot.slane %v859, 2
      %v896 = vsel %vm433, %v894, %v895
      %v897 = vrot.slane %v860, 2
      %v898 = vrot.slane %v861, 2
      %v899 = vsel %vm433, %v897, %v898
      %v900 = vrot.slane %v862, 2
      %v901 = vrot.slane %v863, 2
      %v902 = vsel %vm433, %v900, %v901
      %v903 = vrot.slane %v864, 2
      %v904 = vrot.slane %v865, 2
      %v905 = vsel %vm433, %v903, %v904
      %v914 = vadd.f32 %v821, %v884
      %v915 = vadd.f32 %v822, %v887
      %v916 = vadd.f32 %v823, %v890
      %v917 = vadd.f32 %v824, %v893
      %v918 = vadd.f32 %v825, %v896
      %v919 = vadd.f32 %v826, %v899
      %v920 = vadd.f32 %v827, %v902
      %v921 = vadd.f32 %v828, %v905
      %v922 = vpack.c.bf16 %v914, %v914
      %v923 = vpack.c.bf16 %v915, %v915
      %v924 = vpack.c.bf16 %v916, %v916
      %v925 = vpack.c.bf16 %v917, %v917
      %v926 = vpack.c.bf16 %v918, %v918
      %v927 = vpack.c.bf16 %v919, %v919
      %v928 = vpack.c.bf16 %v920, %v920
      %v929 = vpack.c.bf16 %v921, %v921
      %vm930 = vcmask 60416
      %931 = vst.msk [vmem:[%s217] sm:$0xf] %vm930, %v922
      %932 = vst.msk [vmem:[%s217 + $0x4] sm:$0xf] %vm930, %v923
      %933 = vst.msk [vmem:[%s217 + $0x8] sm:$0xf] %vm930, %v924
      %934 = vst.msk [vmem:[%s217 + $0xc] sm:$0xf] %vm930, %v925
      %935 = vst.msk [vmem:[%s217 + $0x10] sm:$0xf] %vm930, %v926
      %936 = vst.msk [vmem:[%s217 + $0x14] sm:$0xf] %vm930, %v927
      %937 = vst.msk [vmem:[%s217 + $0x18] sm:$0xf] %vm930, %v928
      %938 = vst.msk [vmem:[%s217 + $0x1c] sm:$0xf] %vm930, %v929
      %p939 = scmp.lt.s32.totalorder %s15, 1
      %s940 = scalar_select %p939, %s15, 1
      %s941 = smul.addr %s940, 8
      %s942 = smul.addr %s941, 4
      %s943 = scalar_lea.vmem %s4, %s942
      // Predicated region
      $region37: #{scalable_vit_forward.17} parent=35 // pred_check
        %p944 = pneg %p127
      $region38: #{scalable_vit_forward.17} parent=35 // pred_check_branch
        %946 = sbr.rel (%p944) target = $region40
      $region39: #{scalable_vit_forward.17} parent=35 // pred_region
        _
      $region40: #{scalable_vit_forward.17} parent=35 // pred_fallthru
        _
    $region36: #{scalable_vit_forward.17} parent=5 // pred_fallthru
      _
    %p947 = scmp.le.s32.totalorder 2, %s10
    // Predicated region
    $region41: #{scalable_vit_forward.17} parent=5 // pred_check
      %p948 = pneg %p947
    $region42: #{scalable_vit_forward.17} parent=5 // pred_check_branch
      %950 = sbr.rel (%p948) target = $region44
    $region43: #{scalable_vit_forward.17} parent=5 // pred_region
      %s951 = ssub.s32 %s10, 2
      // Predicated region
      $region45: #{scalable_vit_forward.17} parent=43 // pred_check
        %p952 = pneg %p133
      $region46: #{scalable_vit_forward.17} parent=43 // pred_check_branch
        %954 = sbr.rel (%p952) target = $region48
      $region47: #{scalable_vit_forward.17} parent=43 // pred_region
        %p955 = scmp.lt.s32.totalorder %s16, 1
        %s956 = scalar_select %p955, %s16, 1
        %s957 = smul.addr %s956, 8
        %s958 = smul.addr %s957, 4
        %s959 = scalar_lea.vmem %s4, %s958
      $region48: #{scalable_vit_forward.17} parent=43 // pred_fallthru
        _
    $region44: #{scalable_vit_forward.17} parent=5 // pred_fallthru
      _
  $region6: #{scalable_vit_forward.17} parent=0 // loop_footer
    %s14 = sadd.s32 1, %s10
  $region7: #{scalable_vit_forward.17} parent=0 // loop_footer_branch
    %9 = sbr.rel target = $region3
  $region8: #{scalable_vit_forward.17} parent=0 // loop_exit
    _

// kernel: scalable_vit_forward.19
$region0: #{scalable_vit_forward.19}
  #allocation0 [shape = 'u32[]', space=smem, size = 0x4, offset = 0x4, fixed_abs, tag = 'smem constant byte address 0x4 - core index']
  #allocation1 [shape = 'u32[144,128]{1,0:T(1,128)}', space=vmem, size = 0x12000, scoped, tag = 'internal scratch']
  #allocation2 [shape = 'f32[32,128]{1,0:T(8,128)}', space=vmem, size = 0x4000, scoped, tag = 'scratch operand']
  %s0 = inlined_call_operand.vmem [shape: bf16[32,128], index: 0, kind: input, shape index: {}]
  %s1 = inlined_call_operand.vmem [shape: bf16[128,128], index: 1, kind: input, shape index: {}]
  %s2 = inlined_call_operand.vmem [shape: f32[1,128], index: 2, kind: input, shape index: {}]
  %s3 = inlined_call_operand.vmem [shape: bf16[32,128], index: 3, kind: output, shape index: {}]
  %s4 = sld [smem:[#allocation0]]
  $region30: #{scalable_vit_forward.19} parent=0
    _
  %s6 = ssub.s32 1, %s4
  %s7 = scalar_select 0, %s6, %s4
  // Predicated region
  $region2: #{scalable_vit_forward.19} parent=0 // pred_check
    _
  $region3: #{scalable_vit_forward.19} parent=0 // pred_check_branch
    %9 = sbr.rel (0) target = $region5
  $region4: #{scalable_vit_forward.19} parent=0 // pred_region
    _
  $region5: #{scalable_vit_forward.19} parent=0 // pred_fallthru
    _
  // Predicated region
  $region6: #{scalable_vit_forward.19} parent=0 // pred_check
    _
  $region7: #{scalable_vit_forward.19} parent=0 // pred_check_branch
    %11 = sbr.rel (0) target = $region9
  $region8: #{scalable_vit_forward.19} parent=0 // pred_region
    _
  $region9: #{scalable_vit_forward.19} parent=0 // pred_fallthru
    _
  // Predicated region
  $region10: #{scalable_vit_forward.19} parent=0 // pred_check
    _
  $region11: #{scalable_vit_forward.19} parent=0 // pred_check_branch
    %13 = sbr.rel (0) target = $region13
  $region12: #{scalable_vit_forward.19} parent=0 // pred_region
    _
  $region13: #{scalable_vit_forward.19} parent=0 // pred_fallthru
    _
  %p15 = scmp.eq.s32.totalorder 0, 0
  // Predicated region
  $region14: #{scalable_vit_forward.19} parent=0 // pred_check
    %p16 = pneg %p15
  $region15: #{scalable_vit_forward.19} parent=0 // pred_check_branch
    %18 = sbr.rel (%p16) target = $region17
  $region16: #{scalable_vit_forward.19} parent=0 // pred_region
    %19 = vst [vmem:[#allocation2] sm:$0xff] 0.0
    %20 = vst [vmem:[#allocation2 + $0x8] sm:$0xff] 0.0
    %21 = vst [vmem:[#allocation2 + $0x10] sm:$0xff] 0.0
    %22 = vst [vmem:[#allocation2 + $0x18] sm:$0xff] 0.0
  $region17: #{scalable_vit_forward.19} parent=0 // pred_fallthru
    _
  %v23 = vld [vmem:[#allocation2] sm:$0xff]
  %v24 = vld [vmem:[#allocation2 + $0x8] sm:$0xff]
  %v25 = vld [vmem:[#allocation2 + $0x10] sm:$0xff]
  %v26 = vld [vmem:[#allocation2 + $0x18] sm:$0xff]
  %v27 = vld [vmem:[%s0] sm:$0xf]
  %v28 = vld [vmem:[%s0 + $0x4] sm:$0xf]
  %v29 = vld [vmem:[%s0 + $0x8] sm:$0xf]
  %v30 = vld [vmem:[%s0 + $0xc] sm:$0xf]
  %v31 = vld [vmem:[%s1] sm:$0xf]
  %v32 = vld [vmem:[%s1 + $0x4] sm:$0xf]
  %v33 = vld [vmem:[%s1 + $0x8] sm:$0xf]
  %v34 = vld [vmem:[%s1 + $0xc] sm:$0xf]
  %v35 = vld [vmem:[%s1 + $0x10] sm:$0xf]
  %v36 = vld [vmem:[%s1 + $0x14] sm:$0xf]
  %v37 = vld [vmem:[%s1 + $0x18] sm:$0xf]
  %v38 = vld [vmem:[%s1 + $0x1c] sm:$0xf]
  %v39 = vld [vmem:[%s1 + $0x20] sm:$0xf]
  %v40 = vld [vmem:[%s1 + $0x24] sm:$0xf]
  %v41 = vld [vmem:[%s1 + $0x28] sm:$0xf]
  %v42 = vld [vmem:[%s1 + $0x2c] sm:$0xf]
  %v43 = vld [vmem:[%s1 + $0x30] sm:$0xf]
  %v44 = vld [vmem:[%s1 + $0x34] sm:$0xf]
  %v45 = vld [vmem:[%s1 + $0x38] sm:$0xf]
  %v46 = vld [vmem:[%s1 + $0x3c] sm:$0xf]
  %v51 = vunpack.c.l.b16 %v27
  %v52 = vunpack.c.l.b16 %v28
  %v53 = vunpack.c.l.b16 %v29
  %v54 = vunpack.c.l.b16 %v30
  %v55 = vpack.c.b16 %v52, %v51
  %v56 = vpack.c.b16 %v54, %v53
  %v75 = vunpack.c.l.b16 %v31
  %v76 = vunpack.c.l.b16 %v32
  %v77 = vunpack.c.l.b16 %v33
  %v78 = vunpack.c.l.b16 %v34
  %v79 = vunpack.c.l.b16 %v35
  %v80 = vunpack.c.l.b16 %v36
  %v81 = vunpack.c.l.b16 %v37
  %v82 = vunpack.c.l.b16 %v38
  %v83 = vunpack.c.l.b16 %v39
  %v84 = vunpack.c.l.b16 %v40
  %v85 = vunpack.c.l.b16 %v41
  %v86 = vunpack.c.l.b16 %v42
  %v87 = vunpack.c.l.b16 %v43
  %v88 = vunpack.c.l.b16 %v44
  %v89 = vunpack.c.l.b16 %v45
  %v90 = vunpack.c.l.b16 %v46
  %v91 = vpack.c.b16 %v76, %v75
  %v92 = vpack.c.b16 %v78, %v77
  %v93 = vpack.c.b16 %v80, %v79
  %v94 = vpack.c.b16 %v82, %v81
  %v95 = vpack.c.b16 %v84, %v83
  %v96 = vpack.c.b16 %v86, %v85
  %v97 = vpack.c.b16 %v88, %v87
  %v98 = vpack.c.b16 %v90, %v89
  %107 = vmatprep.subr.bf16.mxu0 0
  %108 = vmatpush1.bf16.msra.mxu0 %v98
  %109 = vmatprep.subr.bf16.mxu0 0
  %110 = vmatpush1.bf16.msra.mxu0 %v97
  %111 = vmatprep.subr.bf16.mxu0 0
  %112 = vmatpush1.bf16.msra.mxu0 %v96
  %113 = vmatprep.subr.bf16.mxu0 0
  %114 = vmatpush1.bf16.msra.mxu0 %v95
  %115 = vmatprep.subr.bf16.mxu0 0
  %116 = vmatpush1.bf16.msra.mxu0 %v94
  %117 = vmatprep.subr.bf16.mxu0 0
  %118 = vmatpush1.bf16.msra.mxu0 %v93
  %119 = vmatprep.subr.bf16.mxu0 0
  %120 = vmatpush1.bf16.msra.mxu0 %v92
  %121 = vmatprep.subr.bf16.mxu0 0
  %122 = vmatpush1.bf16.msra.mxu0 %v91
  %123 = vmatprep.subr.bf16.mxu0 0
  %124 = vmatpush2.bf16.msra.mxu0 0
  %125 = vmatprep.subr.bf16.mxu0 0
  %126 = vmatpush2.bf16.msra.mxu0 0
  %127 = vmatprep.subr.bf16.mxu0 0
  %128 = vmatpush2.bf16.msra.mxu0 0
  %129 = vmatprep.subr.bf16.mxu0 0
  %130 = vmatpush2.bf16.msra.mxu0 0
  %131 = vmatprep.subr.bf16.mxu0 0
  %132 = vmatpush2.bf16.msra.mxu0 0
  %133 = vmatprep.subr.bf16.mxu0 0
  %134 = vmatpush2.bf16.msra.mxu0 0
  %135 = vmatprep.subr.bf16.mxu0 0
  %136 = vmatpush2.bf16.msra.mxu0 0
  %137 = vmatprep.subr.bf16.mxu0 0
  %138 = vmatpush2.bf16.msra.mxu0 0
  %139 = vmatprep.mubr.bf16.mxu0 0
  %140 = vmatmul.mubr.bf16.gmra.mxu0 %v55
  %v141 = vpop.f32.mrf.mxu0
  %v142 = vadd.f32 0.0, %v141
  %v143 = vpop.f32.mrf.mxu0
  %v144 = vpop.f32.mrf.mxu0
  %v145 = vadd.f32 0.0, %v144
  %v146 = vpop.f32.mrf.mxu0
  %147 = vmatprep.mubr.bf16.mxu0 0
  %148 = vmatmul.mubr.bf16.gmra.mxu0 %v56
  %v149 = vpop.f32.mrf.mxu0
  %v150 = vadd.f32 0.0, %v149
  %v151 = vpop.f32.mrf.mxu0
  %v152 = vpop.f32.mrf.mxu0
  %v153 = vadd.f32 0.0, %v152
  %v154 = vpop.f32.mrf.mxu0
  %155 = vdwg.mxu0
  %v156 = vadd.f32 %v23, %v142
  %v157 = vadd.f32 %v24, %v145
  %v158 = vadd.f32 %v25, %v150
  %v159 = vadd.f32 %v26, %v153
  %160 = vst [vmem:[#allocation2] sm:$0xff] %v156
  %161 = vst [vmem:[#allocation2 + $0x8] sm:$0xff] %v157
  %162 = vst [vmem:[#allocation2 + $0x10] sm:$0xff] %v158
  %163 = vst [vmem:[#allocation2 + $0x18] sm:$0xff] %v159
  // Predicated region
  $region18: #{scalable_vit_forward.19} parent=0 // pred_check
    %p164 = pneg %p15
  $region19: #{scalable_vit_forward.19} parent=0 // pred_check_branch
    %166 = sbr.rel (%p164) target = $region21
  $region20: #{scalable_vit_forward.19} parent=0 // pred_region
    %v167 = vld [vmem:[#allocation2] sm:$0xff]
    %v168 = vld [vmem:[#allocation2 + $0x8] sm:$0xff]
    %v169 = vld [vmem:[#allocation2 + $0x10] sm:$0xff]
    %v170 = vld [vmem:[#allocation2 + $0x18] sm:$0xff]
    %v171 = vld [vmem:[%s2] sm:$0x1]
    %v173 = vlaneseq
    %v174 = vshrl.u32 %v173, 7
    %v175 = vsub.s32 0, %v174
    %v176 = vrot.slane %v171, %v175
    %v178 = vadd.f32 %v167, %v176
    %v179 = vadd.f32 %v168, %v176
    %v180 = vadd.f32 %v169, %v176
    %v181 = vadd.f32 %v170, %v176
    %v182 = vpack.c.bf16 %v179, %v178
    %v183 = vpack.c.bf16 %v181, %v180
    %v186 = vunpack.c.l.b16 %v182
    %v187 = vunpack.c.h.b16 %v182
    %v188 = vunpack.c.l.b16 %v183
    %v189 = vunpack.c.h.b16 %v183
    %v190 = vpack.c.b16 %v186, %v186
    %v191 = vpack.c.b16 %v187, %v187
    %v192 = vpack.c.b16 %v188, %v188
    %v193 = vpack.c.b16 %v189, %v189
    %198 = vst [vmem:[%s3] sm:$0xf] %v190
    %199 = vst [vmem:[%s3 + $0x4] sm:$0xf] %v191
    %200 = vst [vmem:[%s3 + $0x8] sm:$0xf] %v192
    %201 = vst [vmem:[%s3 + $0xc] sm:$0xf] %v193
  $region21: #{scalable_vit_forward.19} parent=0 // pred_fallthru
    _
  // Predicated region
  $region22: #{scalable_vit_forward.19} parent=0 // pred_check
    _
  $region23: #{scalable_vit_forward.19} parent=0 // pred_check_branch
    %203 = sbr.rel (0) target = $region25
  $region24: #{scalable_vit_forward.19} parent=0 // pred_region
    _
  $region25: #{scalable_vit_forward.19} parent=0 // pred_fallthru
    _
  // Predicated region
  $region26: #{scalable_vit_forward.19} parent=0 // pred_check
    _
  $region27: #{scalable_vit_forward.19} parent=0 // pred_check_branch
    %205 = sbr.rel (0) target = $region29
  $region28: #{scalable_vit_forward.19} parent=0 // pred_region
    _
  $region29: #{scalable_vit_forward.19} parent=0 // pred_fallthru
    _

// kernel: scalable_vit_forward.20
$region0: #{scalable_vit_forward.20}
  #allocation0 [shape = 'u32[]', space=smem, size = 0x4, offset = 0x4, fixed_abs, tag = 'smem constant byte address 0x4 - core index']
  #allocation1 [shape = 'u32[144,128]{1,0:T(1,128)}', space=vmem, size = 0x12000, scoped, tag = 'internal scratch']
  %s0 = inlined_call_operand.vmem [shape: bf16[32,16], index: 0, kind: input, shape index: {}]
  %s1 = inlined_call_operand.vmem [shape: f32[1,16], index: 1, kind: input, shape index: {}]
  %s2 = inlined_call_operand.vmem [shape: f32[1,16], index: 2, kind: input, shape index: {}]
  %s3 = inlined_call_operand.vmem [shape: bf16[32,16], index: 3, kind: output, shape index: {}]
  %s4 = sld [smem:[#allocation0]]
  $region22: #{scalable_vit_forward.20} parent=0
    _
  %s6 = ssub.s32 1, %s4
  %s7 = scalar_select 0, %s6, %s4
  // Predicated region
  $region2: #{scalable_vit_forward.20} parent=0 // pred_check
    _
  $region3: #{scalable_vit_forward.20} parent=0 // pred_check_branch
    %9 = sbr.rel (0) target = $region5
  $region4: #{scalable_vit_forward.20} parent=0 // pred_region
    _
  $region5: #{scalable_vit_forward.20} parent=0 // pred_fallthru
    _
  // Predicated region
  $region6: #{scalable_vit_forward.20} parent=0 // pred_check
    _
  $region7: #{scalable_vit_forward.20} parent=0 // pred_check_branch
    %11 = sbr.rel (0) target = $region9
  $region8: #{scalable_vit_forward.20} parent=0 // pred_region
    _
  $region9: #{scalable_vit_forward.20} parent=0 // pred_fallthru
    _
  // Predicated region
  $region10: #{scalable_vit_forward.20} parent=0 // pred_check
    _
  $region11: #{scalable_vit_forward.20} parent=0 // pred_check_branch
    %13 = sbr.rel (0) target = $region13
  $region12: #{scalable_vit_forward.20} parent=0 // pred_region
    _
  $region13: #{scalable_vit_forward.20} parent=0 // pred_fallthru
    _
  %v14 = vld [vmem:[%s0] sm:$0xf]
  %v15 = vld [vmem:[%s0 + $0x4] sm:$0xf]
  %v16 = vld [vmem:[%s0 + $0x8] sm:$0xf]
  %v17 = vld [vmem:[%s0 + $0xc] sm:$0xf]
  %v18 = vunpack.c.l.bf16 %v14
  %v19 = vunpack.c.l.bf16 %v15
  %v20 = vunpack.c.l.bf16 %v16
  %v21 = vunpack.c.l.bf16 %v17
  %vm22 = vcmask 130048
  %v23 = vsel %vm22, %v18, 0.0
  %24 = vadd.xlane.f32.xlu0 %v23
  %v25 = vpop.xlane.xlu0 %24
  %v26 = vsel %vm22, %v19, 0.0
  %27 = vadd.xlane.f32.xlu0 %v26
  %v28 = vpop.xlane.xlu0 %27
  %v29 = vsel %vm22, %v20, 0.0
  %30 = vadd.xlane.f32.xlu0 %v29
  %v31 = vpop.xlane.xlu0 %30
  %v32 = vsel %vm22, %v21, 0.0
  %33 = vadd.xlane.f32.xlu0 %v32
  %v34 = vpop.xlane.xlu0 %33
  %v35 = vrcp.pop 16.0
  %v36 = vmul.f32 %v25, %v35
  %v37 = vmul.f32 %v28, %v35
  %v38 = vmul.f32 %v31, %v35
  %v39 = vmul.f32 %v34, %v35
  %v40 = vmul.f32 %v18, %v18
  %v41 = vmul.f32 %v19, %v19
  %v42 = vmul.f32 %v20, %v20
  %v43 = vmul.f32 %v21, %v21
  %v44 = vsel %vm22, %v40, 0.0
  %45 = vadd.xlane.f32.xlu0 %v44
  %v46 = vpop.xlane.xlu0 %45
  %v47 = vsel %vm22, %v41, 0.0
  %48 = vadd.xlane.f32.xlu0 %v47
  %v49 = vpop.xlane.xlu0 %48
  %v50 = vsel %vm22, %v42, 0.0
  %51 = vadd.xlane.f32.xlu0 %v50
  %v52 = vpop.xlane.xlu0 %51
  %v53 = vsel %vm22, %v43, 0.0
  %54 = vadd.xlane.f32.xlu0 %v53
  %v55 = vpop.xlane.xlu0 %54
  %v56 = vmul.f32 %v46, %v35
  %v57 = vmul.f32 %v49, %v35
  %v58 = vmul.f32 %v52, %v35
  %v59 = vmul.f32 %v55, %v35
  %v60 = vmul.f32 %v36, %v36
  %v61 = vmul.f32 %v37, %v37
  %v62 = vmul.f32 %v38, %v38
  %v63 = vmul.f32 %v39, %v39
  %v64 = vsub.f32 %v56, %v60
  %v65 = vsub.f32 %v57, %v61
  %v66 = vsub.f32 %v58, %v62
  %v67 = vsub.f32 %v59, %v63
  %v68 = vsub.f32 %v18, %v36
  %v69 = vsub.f32 %v19, %v37
  %v70 = vsub.f32 %v20, %v38
  %v71 = vsub.f32 %v21, %v39
  %v72 = vadd.f32 %v64, 1e-05
  %v73 = vadd.f32 %v65, 1e-05
  %v74 = vadd.f32 %v66, 1e-05
  %v75 = vadd.f32 %v67, 1e-05
  %v76 = vrsqrt.pop %v72
  %v77 = vrsqrt.pop %v73
  %v78 = vrsqrt.pop %v74
  %v79 = vrsqrt.pop %v75
  %v80 = vmul.f32 %v68, %v76
  %v81 = vmul.f32 %v69, %v77
  %v82 = vmul.f32 %v70, %v78
  %v83 = vmul.f32 %v71, %v79
  %v84 = vld [vmem:[%s1] sm:$0x1]
  %v86 = vlaneseq
  %v87 = vshrl.u32 %v86, 7
  %v88 = vsub.s32 0, %v87
  %v89 = vrot.slane %v84, %v88
  %v91 = vmul.f32 %v80, %v89
  %v92 = vmul.f32 %v81, %v89
  %v93 = vmul.f32 %v82, %v89
  %v94 = vmul.f32 %v83, %v89
  %v95 = vld [vmem:[%s2] sm:$0x1]
  %v97 = vlaneseq
  %v98 = vshrl.u32 %v97, 7
  %v99 = vsub.s32 0, %v98
  %v100 = vrot.slane %v95, %v99
  %v102 = vadd.f32 %v91, %v100
  %v103 = vadd.f32 %v92, %v100
  %v104 = vadd.f32 %v93, %v100
  %v105 = vadd.f32 %v94, %v100
  %v106 = vpack.c.bf16 %v103, %v102
  %v107 = vpack.c.bf16 %v105, %v104
  %v110 = vunpack.c.l.b16 %v106
  %v111 = vunpack.c.h.b16 %v106
  %v112 = vunpack.c.l.b16 %v107
  %v113 = vunpack.c.h.b16 %v107
  %v114 = vpack.c.b16 %v110, %v110
  %v115 = vpack.c.b16 %v111, %v111
  %v116 = vpack.c.b16 %v112, %v112
  %v117 = vpack.c.b16 %v113, %v113
  %vm122 = vcmask 125952
  %123 = vst.msk [vmem:[%s3] sm:$0xf] %vm122, %v114
  %124 = vst.msk [vmem:[%s3 + $0x4] sm:$0xf] %vm122, %v115
  %125 = vst.msk [vmem:[%s3 + $0x8] sm:$0xf] %vm122, %v116
  %126 = vst.msk [vmem:[%s3 + $0xc] sm:$0xf] %vm122, %v117
  // Predicated region
  $region14: #{scalable_vit_forward.20} parent=0 // pred_check
    _
  $region15: #{scalable_vit_forward.20} parent=0 // pred_check_branch
    %128 = sbr.rel (0) target = $region17
  $region16: #{scalable_vit_forward.20} parent=0 // pred_region
    _
  $region17: #{scalable_vit_forward.20} parent=0 // pred_fallthru
    _
  // Predicated region
  $region18: #{scalable_vit_forward.20} parent=0 // pred_check
    _
  $region19: #{scalable_vit_forward.20} parent=0 // pred_check_branch
    %130 = sbr.rel (0) target = $region21
  $region20: #{scalable_vit_forward.20} parent=0 // pred_region
    _
  $region21: #{scalable_vit_forward.20} parent=0 // pred_fallthru
    _

// kernel: scalable_vit_forward.22
$region0: #{scalable_vit_forward.22}
  #allocation0 [shape = 'u32[]', space=smem, size = 0x4, offset = 0x4, fixed_abs, tag = 'smem constant byte address 0x4 - core index']
  #allocation1 [shape = 'u32[144,128]{1,0:T(1,128)}', space=vmem, size = 0x12000, scoped, tag = 'internal scratch']
  %s0 = inlined_call_operand.vmem [shape: bf16[32,16], index: 0, kind: input, shape index: {}]
  %s1 = inlined_call_operand.vmem [shape: f32[1,16], index: 1, kind: input, shape index: {}]
  %s2 = inlined_call_operand.vmem [shape: f32[1,16], index: 2, kind: input, shape index: {}]
  %s3 = inlined_call_operand.vmem [shape: bf16[16,32], index: 3, kind: input, shape index: {}]
  %s4 = inlined_call_operand.vmem [shape: f32[1,32], index: 4, kind: input, shape index: {}]
  %s5 = inlined_call_operand.vmem [shape: bf16[32,16], index: 5, kind: input, shape index: {}]
  %s6 = inlined_call_operand.vmem [shape: f32[1,16], index: 6, kind: input, shape index: {}]
  %s7 = inlined_call_operand.vmem [shape: bf16[32,16], index: 7, kind: output, shape index: {}]
  %s8 = sld [smem:[#allocation0]]
  $region38: #{scalable_vit_forward.22} parent=0
    _
  %s10 = ssub.s32 1, %s8
  %s11 = scalar_select 0, %s10, %s8
  // Predicated region
  $region2: #{scalable_vit_forward.22} parent=0 // pred_check
    _
  $region3: #{scalable_vit_forward.22} parent=0 // pred_check_branch
    %13 = sbr.rel (0) target = $region5
  $region4: #{scalable_vit_forward.22} parent=0 // pred_region
    _
  $region5: #{scalable_vit_forward.22} parent=0 // pred_fallthru
    _
  // Predicated region
  $region6: #{scalable_vit_forward.22} parent=0 // pred_check
    _
  $region7: #{scalable_vit_forward.22} parent=0 // pred_check_branch
    %15 = sbr.rel (0) target = $region9
  $region8: #{scalable_vit_forward.22} parent=0 // pred_region
    _
  $region9: #{scalable_vit_forward.22} parent=0 // pred_fallthru
    _
  // Predicated region
  $region10: #{scalable_vit_forward.22} parent=0 // pred_check
    _
  $region11: #{scalable_vit_forward.22} parent=0 // pred_check_branch
    %17 = sbr.rel (0) target = $region13
  $region12: #{scalable_vit_forward.22} parent=0 // pred_region
    _
  $region13: #{scalable_vit_forward.22} parent=0 // pred_fallthru
    _
  // Predicated region
  $region14: #{scalable_vit_forward.22} parent=0 // pred_check
    _
  $region15: #{scalable_vit_forward.22} parent=0 // pred_check_branch
    %19 = sbr.rel (0) target = $region17
  $region16: #{scalable_vit_forward.22} parent=0 // pred_region
    _
  $region17: #{scalable_vit_forward.22} parent=0 // pred_fallthru
    _
  // Predicated region
  $region18: #{scalable_vit_forward.22} parent=0 // pred_check
    _
  $region19: #{scalable_vit_forward.22} parent=0 // pred_check_branch
    %21 = sbr.rel (0) target = $region21
  $region20: #{scalable_vit_forward.22} parent=0 // pred_region
    _
  $region21: #{scalable_vit_forward.22} parent=0 // pred_fallthru
    _
  // Predicated region
  $region22: #{scalable_vit_forward.22} parent=0 // pred_check
    _
  $region23: #{scalable_vit_forward.22} parent=0 // pred_check_branch
    %23 = sbr.rel (0) target = $region25
  $region24: #{scalable_vit_forward.22} parent=0 // pred_region
    _
  $region25: #{scalable_vit_forward.22} parent=0 // pred_fallthru
    _
  // Predicated region
  $region26: #{scalable_vit_forward.22} parent=0 // pred_check
    _
  $region27: #{scalable_vit_forward.22} parent=0 // pred_check_branch
    %25 = sbr.rel (0) target = $region29
  $region28: #{scalable_vit_forward.22} parent=0 // pred_region
    _
  $region29: #{scalable_vit_forward.22} parent=0 // pred_fallthru
    _
  %v27 = vld [vmem:[%s0] sm:$0xf]
  %v28 = vld [vmem:[%s0 + $0x4] sm:$0xf]
  %v29 = vld [vmem:[%s0 + $0x8] sm:$0xf]
  %v30 = vld [vmem:[%s0 + $0xc] sm:$0xf]
  %v31 = vunpack.c.l.bf16 %v27
  %v32 = vunpack.c.l.bf16 %v28
  %v33 = vunpack.c.l.bf16 %v29
  %v34 = vunpack.c.l.bf16 %v30
  %vm35 = vcmask 130048
  %v36 = vsel %vm35, %v31, 0.0
  %37 = vadd.xlane.f32.xlu0 %v36
  %v38 = vpop.xlane.xlu0 %37
  %v39 = vsel %vm35, %v32, 0.0
  %40 = vadd.xlane.f32.xlu0 %v39
  %v41 = vpop.xlane.xlu0 %40
  %v42 = vsel %vm35, %v33, 0.0
  %43 = vadd.xlane.f32.xlu0 %v42
  %v44 = vpop.xlane.xlu0 %43
  %v45 = vsel %vm35, %v34, 0.0
  %46 = vadd.xlane.f32.xlu0 %v45
  %v47 = vpop.xlane.xlu0 %46
  %v48 = vrcp.pop 16.0
  %v49 = vmul.f32 %v38, %v48
  %v50 = vmul.f32 %v41, %v48
  %v51 = vmul.f32 %v44, %v48
  %v52 = vmul.f32 %v47, %v48
  %v53 = vmul.f32 %v31, %v31
  %v54 = vmul.f32 %v32, %v32
  %v55 = vmul.f32 %v33, %v33
  %v56 = vmul.f32 %v34, %v34
  %v57 = vsel %vm35, %v53, 0.0
  %58 = vadd.xlane.f32.xlu0 %v57
  %v59 = vpop.xlane.xlu0 %58
  %v60 = vsel %vm35, %v54, 0.0
  %61 = vadd.xlane.f32.xlu0 %v60
  %v62 = vpop.xlane.xlu0 %61
  %v63 = vsel %vm35, %v55, 0.0
  %64 = vadd.xlane.f32.xlu0 %v63
  %v65 = vpop.xlane.xlu0 %64
  %v66 = vsel %vm35, %v56, 0.0
  %67 = vadd.xlane.f32.xlu0 %v66
  %v68 = vpop.xlane.xlu0 %67
  %v69 = vmul.f32 %v59, %v48
  %v70 = vmul.f32 %v62, %v48
  %v71 = vmul.f32 %v65, %v48
  %v72 = vmul.f32 %v68, %v48
  %v73 = vmul.f32 %v49, %v49
  %v74 = vmul.f32 %v50, %v50
  %v75 = vmul.f32 %v51, %v51
  %v76 = vmul.f32 %v52, %v52
  %v77 = vsub.f32 %v69, %v73
  %v78 = vsub.f32 %v70, %v74
  %v79 = vsub.f32 %v71, %v75
  %v80 = vsub.f32 %v72, %v76
  %v81 = vsub.f32 %v31, %v49
  %v82 = vsub.f32 %v32, %v50
  %v83 = vsub.f32 %v33, %v51
  %v84 = vsub.f32 %v34, %v52
  %v85 = vadd.f32 %v77, 1e-05
  %v86 = vadd.f32 %v78, 1e-05
  %v87 = vadd.f32 %v79, 1e-05
  %v88 = vadd.f32 %v80, 1e-05
  %v89 = vrsqrt.pop %v85
  %v90 = vrsqrt.pop %v86
  %v91 = vrsqrt.pop %v87
  %v92 = vrsqrt.pop %v88
  %v93 = vmul.f32 %v81, %v89
  %v94 = vmul.f32 %v82, %v90
  %v95 = vmul.f32 %v83, %v91
  %v96 = vmul.f32 %v84, %v92
  %v97 = vld [vmem:[%s1] sm:$0x1]
  %v99 = vlaneseq
  %v100 = vshrl.u32 %v99, 7
  %v101 = vsub.s32 0, %v100
  %v102 = vrot.slane %v97, %v101
  %v104 = vmul.f32 %v93, %v102
  %v105 = vmul.f32 %v94, %v102
  %v106 = vmul.f32 %v95, %v102
  %v107 = vmul.f32 %v96, %v102
  %v108 = vld [vmem:[%s2] sm:$0x1]
  %v110 = vlaneseq
  %v111 = vshrl.u32 %v110, 7
  %v112 = vsub.s32 0, %v111
  %v113 = vrot.slane %v108, %v112
  %v115 = vadd.f32 %v104, %v113
  %v116 = vadd.f32 %v105, %v113
  %v117 = vadd.f32 %v106, %v113
  %v118 = vadd.f32 %v107, %v113
  %v119 = vpack.c.bf16 %v116, %v115
  %v120 = vpack.c.bf16 %v118, %v117
  %v121 = vld [vmem:[%s3] sm:$0xf]
  %v122 = vld [vmem:[%s3 + $0x4] sm:$0xf]
  %v123 = vld [vmem:[%s4] sm:$0x1]
  %v125 = vlaneseq
  %v126 = vshrl.u32 %v125, 7
  %v127 = vsub.s32 0, %v126
  %v128 = vrot.slane %v123, %v127
  %v132 = vunpack.c.l.b16 %v121
  %v133 = vunpack.c.l.b16 %v122
  %v134 = vpack.c.b16 %v133, %v132
  %v137 = vsel %vm35, %v119, 0
  %v140 = vsel %vm35, %v120, 0
  %142 = vmatprep.subr.bf16.mxu0 0
  %143 = vmatpush1.bf16.msra.mxu0 0
  %144 = vmatprep.subr.bf16.mxu0 0
  %145 = vmatpush1.bf16.msra.mxu0 0
  %146 = vmatprep.subr.bf16.mxu0 0
  %147 = vmatpush1.bf16.msra.mxu0 0
  %148 = vmatprep.subr.bf16.mxu0 0
  %149 = vmatpush1.bf16.msra.mxu0 0
  %150 = vmatprep.subr.bf16.mxu0 0
  %151 = vmatpush1.bf16.msra.mxu0 0
  %152 = vmatprep.subr.bf16.mxu0 0
  %153 = vmatpush1.bf16.msra.mxu0 0
  %154 = vmatprep.subr.bf16.mxu0 0
  %155 = vmatpush1.bf16.msra.mxu0 0
  %156 = vmatprep.subr.bf16.mxu0 0
  %157 = vmatpush1.bf16.msra.mxu0 %v134
  %158 = vmatprep.subr.bf16.mxu0 0
  %159 = vmatpush2.bf16.msra.mxu0 0
  %160 = vmatprep.subr.bf16.mxu0 0
  %161 = vmatpush2.bf16.msra.mxu0 0
  %162 = vmatprep.subr.bf16.mxu0 0
  %163 = vmatpush2.bf16.msra.mxu0 0
  %164 = vmatprep.subr.bf16.mxu0 0
  %165 = vmatpush2.bf16.msra.mxu0 0
  %166 = vmatprep.subr.bf16.mxu0 0
  %167 = vmatpush2.bf16.msra.mxu0 0
  %168 = vmatprep.subr.bf16.mxu0 0
  %169 = vmatpush2.bf16.msra.mxu0 0
  %170 = vmatprep.subr.bf16.mxu0 0
  %171 = vmatpush2.bf16.msra.mxu0 0
  %172 = vmatprep.subr.bf16.mxu0 0
  %173 = vmatpush2.bf16.msra.mxu0 0
  %174 = vmatprep.mubr.bf16.mxu0 0
  %175 = vmatmul.mubr.bf16.gmra.mxu0 %v137
  %v176 = vpop.f32.mrf.mxu0
  %v177 = vadd.f32 %v128, %v176
  %v178 = vpop.f32.mrf.mxu0
  %v179 = vpop.f32.mrf.mxu0
  %v180 = vadd.f32 %v128, %v179
  %v181 = vpop.f32.mrf.mxu0
  %182 = vmatprep.mubr.bf16.mxu0 0
  %183 = vmatmul.mubr.bf16.gmra.mxu0 %v140
  %v184 = vpop.f32.mrf.mxu0
  %v185 = vadd.f32 %v128, %v184
  %v186 = vpop.f32.mrf.mxu0
  %v187 = vpop.f32.mrf.mxu0
  %v188 = vadd.f32 %v128, %v187
  %v189 = vpop.f32.mrf.mxu0
  %190 = vdwg.mxu0
  %v191 = vmul.f32 %v177, 0.5
  %v192 = vmul.f32 %v180, 0.5
  %v193 = vmul.f32 %v185, 0.5
  %v194 = vmul.f32 %v188, 0.5
  %v195 = vmul.f32 %v177, 0.044715
  %v196 = vmul.f32 %v180, 0.044715
  %v197 = vmul.f32 %v185, 0.044715
  %v198 = vmul.f32 %v188, 0.044715
  %v199 = vmul.f32 %v195, %v177
  %v200 = vmul.f32 %v196, %v180
  %v201 = vmul.f32 %v197, %v185
  %v202 = vmul.f32 %v198, %v188
  %v203 = vmul.f32 %v199, %v177
  %v204 = vmul.f32 %v200, %v180
  %v205 = vmul.f32 %v201, %v185
  %v206 = vmul.f32 %v202, %v188
  %v207 = vadd.f32 %v177, %v203
  %v208 = vadd.f32 %v180, %v204
  %v209 = vadd.f32 %v185, %v205
  %v210 = vadd.f32 %v188, %v206
  %v211 = vmul.f32 %v207, 0.7978846
  %v212 = vmul.f32 %v208, 0.7978846
  %v213 = vmul.f32 %v209, 0.7978846
  %v214 = vmul.f32 %v210, 0.7978846
  %v215 = vtanh.pop %v211
  %v216 = vtanh.pop %v212
  %v217 = vtanh.pop %v213
  %v218 = vtanh.pop %v214
  %v219 = vadd.f32 %v215, 1.0
  %v220 = vadd.f32 %v216, 1.0
  %v221 = vadd.f32 %v217, 1.0
  %v222 = vadd.f32 %v218, 1.0
  %v223 = vmul.f32 %v191, %v219
  %v224 = vmul.f32 %v192, %v220
  %v225 = vmul.f32 %v193, %v221
  %v226 = vmul.f32 %v194, %v222
  %v227 = vpack.c.bf16 %v224, %v223
  %v228 = vpack.c.bf16 %v226, %v225
  %v229 = vld [vmem:[%s5] sm:$0xf]
  %v230 = vld [vmem:[%s5 + $0x4] sm:$0xf]
  %v231 = vld [vmem:[%s5 + $0x8] sm:$0xf]
  %v232 = vld [vmem:[%s5 + $0xc] sm:$0xf]
  %v233 = vld [vmem:[%s6] sm:$0x1]
  %v235 = vlaneseq
  %v236 = vshrl.u32 %v235, 7
  %v237 = vsub.s32 0, %v236
  %v238 = vrot.slane %v233, %v237
  %v244 = vunpack.c.l.b16 %v229
  %v245 = vunpack.c.l.b16 %v230
  %v246 = vunpack.c.l.b16 %v231
  %v247 = vunpack.c.l.b16 %v232
  %v248 = vpack.c.b16 %v245, %v244
  %v249 = vpack.c.b16 %v247, %v246
  %vm252 = vcmask 261120
  %v254 = vsel %vm252, %v227, 0
  %v257 = vsel %vm252, %v228, 0
  %259 = vmatprep.subr.bf16.mxu0 0
  %260 = vmatpush1.bf16.msra.mxu0 0
  %261 = vmatprep.subr.bf16.mxu0 0
  %262 = vmatpush1.bf16.msra.mxu0 0
  %263 = vmatprep.subr.bf16.mxu0 0
  %264 = vmatpush1.bf16.msra.mxu0 0
  %265 = vmatprep.subr.bf16.mxu0 0
  %266 = vmatpush1.bf16.msra.mxu0 0
  %267 = vmatprep.subr.bf16.mxu0 0
  %268 = vmatpush1.bf16.msra.mxu0 0
  %269 = vmatprep.subr.bf16.mxu0 0
  %270 = vmatpush1.bf16.msra.mxu0 0
  %271 = vmatprep.subr.bf16.mxu0 0
  %272 = vmatpush1.bf16.msra.mxu0 %v249
  %273 = vmatprep.subr.bf16.mxu0 0
  %274 = vmatpush1.bf16.msra.mxu0 %v248
  %275 = vmatprep.subr.bf16.mxu0 0
  %276 = vmatpush2.bf16.msra.mxu0 0
  %277 = vmatprep.subr.bf16.mxu0 0
  %278 = vmatpush2.bf16.msra.mxu0 0
  %279 = vmatprep.subr.bf16.mxu0 0
  %280 = vmatpush2.bf16.msra.mxu0 0
  %281 = vmatprep.subr.bf16.mxu0 0
  %282 = vmatpush2.bf16.msra.mxu0 0
  %283 = vmatprep.subr.bf16.mxu0 0
  %284 = vmatpush2.bf16.msra.mxu0 0
  %285 = vmatprep.subr.bf16.mxu0 0
  %286 = vmatpush2.bf16.msra.mxu0 0
  %287 = vmatprep.subr.bf16.mxu0 0
  %288 = vmatpush2.bf16.msra.mxu0 0
  %289 = vmatprep.subr.bf16.mxu0 0
  %290 = vmatpush2.bf16.msra.mxu0 0
  %291 = vmatprep.mubr.bf16.mxu0 0
  %292 = vmatmul.mubr.bf16.gmra.mxu0 %v254
  %v293 = vpop.f32.mrf.mxu0
  %v294 = vadd.f32 %v238, %v293
  %v295 = vpop.f32.mrf.mxu0
  %v296 = vpop.f32.mrf.mxu0
  %v297 = vadd.f32 %v238, %v296
  %v298 = vpop.f32.mrf.mxu0
  %299 = vmatprep.mubr.bf16.mxu0 0
  %300 = vmatmul.mubr.bf16.gmra.mxu0 %v257
  %v301 = vpop.f32.mrf.mxu0
  %v302 = vadd.f32 %v238, %v301
  %v303 = vpop.f32.mrf.mxu0
  %v304 = vpop.f32.mrf.mxu0
  %v305 = vadd.f32 %v238, %v304
  %v306 = vpop.f32.mrf.mxu0
  %307 = vdwg.mxu0
  %v308 = vadd.f32 %v294, %v31
  %v309 = vadd.f32 %v297, %v32
  %v310 = vadd.f32 %v302, %v33
  %v311 = vadd.f32 %v305, %v34
  %v312 = vpack.c.bf16 %v309, %v308
  %v313 = vpack.c.bf16 %v311, %v310
  %v316 = vunpack.c.l.b16 %v312
  %v317 = vunpack.c.h.b16 %v312
  %v318 = vunpack.c.l.b16 %v313
  %v319 = vunpack.c.h.b16 %v313
  %v320 = vpack.c.b16 %v316, %v316
  %v321 = vpack.c.b16 %v317, %v317
  %v322 = vpack.c.b16 %v318, %v318
  %v323 = vpack.c.b16 %v319, %v319
  %vm328 = vcmask 125952
  %329 = vst.msk [vmem:[%s7] sm:$0xf] %vm328, %v320
  %330 = vst.msk [vmem:[%s7 + $0x4] sm:$0xf] %vm328, %v321
  %331 = vst.msk [vmem:[%s7 + $0x8] sm:$0xf] %vm328, %v322
  %332 = vst.msk [vmem:[%s7 + $0xc] sm:$0xf] %vm328, %v323
  // Predicated region
  $region30: #{scalable_vit_forward.22} parent=0 // pred_check
    _
  $region31: #{scalable_vit_forward.22} parent=0 // pred_check_branch
    %334 = sbr.rel (0) target = $region33
  $region32: #{scalable_vit_forward.22} parent=0 // pred_region
    _
  $region33: #{scalable_vit_forward.22} parent=0 // pred_fallthru
    _
  // Predicated region
  $region34: #{scalable_vit_forward.22} parent=0 // pred_check
    _
  $region35: #{scalable_vit_forward.22} parent=0 // pred_check_branch
    %336 = sbr.rel (0) target = $region37
  $region36: #{scalable_vit_forward.22} parent=0 // pred_region
    _
  $region37: #{scalable_vit_forward.22} parent=0 // pred_fallthru
    _

// kernel: scalable_vit_forward.21
$region0: #{scalable_vit_forward.21}
  #allocation0 [shape = 'u32[]', space=smem, size = 0x4, offset = 0x4, fixed_abs, tag = 'smem constant byte address 0x4 - core index']
  #allocation1 [shape = 'u32[144,128]{1,0:T(1,128)}', space=vmem, size = 0x12000, scoped, tag = 'internal scratch']
  #allocation2 [shape = 'f32[16,16]{1,0:T(8,128)}', space=vmem, size = 0x2000, scoped, tag = 'scratch operand']
  %s0 = inlined_call_operand.vmem [shape: bf16[2,16,16], index: 0, kind: input, shape index: {}]
  %s1 = inlined_call_operand.vmem [shape: bf16[2,4,64], index: 1, kind: input, shape index: {}]
  %s2 = inlined_call_operand.vmem [shape: bf16[2,16,16], index: 2, kind: input, shape index: {}]
  %s3 = inlined_call_operand.vmem [shape: bf16[2,16,4], index: 3, kind: input, shape index: {}]
  %s4 = inlined_call_operand.vmem [shape: bf16[2,64,4], index: 4, kind: input, shape index: {}]
  %s5 = inlined_call_operand.vmem [shape: bf16[2,64,4], index: 5, kind: input, shape index: {}]
  %s6 = inlined_call_operand.vmem [shape: bf16[2,4,16], index: 6, kind: input, shape index: {}]
  %s7 = inlined_call_operand.vmem [shape: f32[1,16], index: 7, kind: input, shape index: {}]
  %s8 = inlined_call_operand.vmem [shape: bf16[2,16,16], index: 8, kind: output, shape index: {}]
  %s9 = sld [smem:[#allocation0]]
  $region73: #{scalable_vit_forward.21} parent=0
    _
  %s11 = ssub.s32 1, %s9
  %s12 = scalar_select 0, %s11, %s9
  loop: start=0, step=1, limit=6
  $region2: #{scalable_vit_forward.21} parent=0 // loop_pre_header
    _
  $region3: #{scalable_vit_forward.21} parent=0 // loop_header
    %s14 = sphi 0, %s18
    %p15 = scmp.ge.s32.totalorder %s14, 6
    %s21 = sphi 0, %s40
    %s22 = sphi 0, %s36
    %s23 = sphi 0, %s32
    %s24 = sphi 0, %s21
    %s25 = sphi 0, %s22
    %s26 = sphi 0, %s23
    %s27 = sphi 0, %s24
    %s28 = sphi 0, %s25
    %s29 = sphi 0, %s26
    %s45 = sphi 0, %s47
    %s48 = sphi 0, %s45
    %s49 = sphi 0, %s48
    %s65 = sphi 0, %s49
    %s71 = sphi 0, %s73
    %s74 = sphi 0, %s71
    %s75 = sphi 0, %s74
    %s91 = sphi 0, %s75
    %s99 = sphi 0, %s101
    %s102 = sphi 0, %s99
    %s103 = sphi 0, %s102
    %s119 = sphi 0, %s103
    %s125 = sphi 0, %s127
    %s128 = sphi 0, %s125
    %s129 = sphi 0, %s128
    %s145 = sphi 0, %s129
    %s151 = sphi 0, %s153
    %s154 = sphi 0, %s151
    %s155 = sphi 0, %s154
    %s171 = sphi 0, %s155
    %s177 = sphi 0, %s179
    %s180 = sphi 0, %s177
    %s181 = sphi 0, %s180
    %s197 = sphi 0, %s181
    %s203 = sphi 0, %s205
    %s206 = sphi 0, %s203
    %s207 = sphi 0, %s206
    %s223 = sphi 0, %s207
    %s227 = sphi 0, %s227
    %s229 = sphi 0, %s227
    %s230 = sphi 0, %s229
    %s244 = sphi 0, %s230
    %s252 = sphi 0, %s254
    %s255 = sphi 0, %s252
    %s256 = sphi 0, %s255
    %s272 = sphi 0, %s256
  $region4: #{scalable_vit_forward.21} parent=0 // loop_header_branch
    %17 = sbr.rel (%p15) target = $region8
  $region5: #{scalable_vit_forward.21} parent=0 // loop_body
    %s19 = ssub.s32 %s14, 1
    %s20 = ssub.s32 %s14, 2
    %s30 = sadd.s32 1, %s23
    %p31 = scmp.ge.s32.totalorder %s30, 2
    %s32 = scalar_select %p31, 0, %s30
    %s33 = sadd.s32 1, %s22
    %s34 = scalar_select %p31, %s33, %s22
    %p35 = scmp.ge.s32.totalorder %s34, 1
    %s36 = scalar_select %p35, 0, %s34
    %s37 = sadd.s32 1, %s21
    %s38 = scalar_select %p35, %s37, %s21
    %p39 = scmp.ge.s32.totalorder %s38, 2
    %s40 = scalar_select %p39, 0, %s38
    %s41 = ssub.s32 %s21, %s40
    %s42 = ssub.s32 %s22, %s36
    %s43 = sor.u32 %s41, %s42
    %p44 = scmp.eq.s32.totalorder %s43, 0
    %s46 = sadd.s32 %s45, 1
    %s47 = scalar_select %p44, %s45, %s46
    %p50 = pneg %p44
    %p51 = scmp.eq.s32.totalorder %s14, 3
    %p52 = por %p50, %p51
    %p53 = scmp.ne.s32.totalorder %s45, %s48
    %p54 = scmp.eq.s32.totalorder %s14, 0
    %p55 = por %p53, %p54
    %p56 = scmp.ne.s32.totalorder %s45, %s48
    %p57 = scmp.eq.s32.totalorder %s19, 3
    %p58 = por %p56, %p57
    %p59 = scmp.ne.s32.totalorder %s48, %s49
    %p60 = scmp.eq.s32.totalorder %s19, 0
    %p61 = por %p59, %p60
    %p62 = scmp.ne.s32.totalorder %s48, %s49
    %p63 = scmp.eq.s32.totalorder %s20, 3
    %p64 = por %p62, %p63
    %p66 = scmp.ne.s32.totalorder %s49, %s65
    %p67 = scmp.eq.s32.totalorder %s20, 0
    %p68 = por %p66, %p67
    %s69 = ssub.s32 %s21, %s40
    %p70 = scmp.eq.s32.totalorder %s69, 0
    %s72 = sadd.s32 %s71, 1
    %s73 = scalar_select %p70, %s71, %s72
    %p76 = pneg %p70
    %p77 = scmp.eq.s32.totalorder %s14, 3
    %p78 = por %p76, %p77
    %p79 = scmp.ne.s32.totalorder %s71, %s74
    %p80 = scmp.eq.s32.totalorder %s14, 0
    %p81 = por %p79, %p80
    %p82 = scmp.ne.s32.totalorder %s71, %s74
    %p83 = scmp.eq.s32.totalorder %s19, 3
    %p84 = por %p82, %p83
    %p85 = scmp.ne.s32.totalorder %s74, %s75
    %p86 = scmp.eq.s32.totalorder %s19, 0
    %p87 = por %p85, %p86
    %p88 = scmp.ne.s32.totalorder %s74, %s75
    %p89 = scmp.eq.s32.totalorder %s20, 3
    %p90 = por %p88, %p89
    %p92 = scmp.ne.s32.totalorder %s75, %s91
    %p93 = scmp.eq.s32.totalorder %s20, 0
    %p94 = por %p92, %p93
    %s95 = ssub.s32 %s21, %s40
    %s96 = ssub.s32 %s22, %s36
    %s97 = sor.u32 %s95, %s96
    %p98 = scmp.eq.s32.totalorder %s97, 0
    %s100 = sadd.s32 %s99, 1
    %s101 = scalar_select %p98, %s99, %s100
    %p104 = pneg %p98
    %p105 = scmp.eq.s32.totalorder %s14, 3
    %p106 = por %p104, %p105
    %p107 = scmp.ne.s32.totalorder %s99, %s102
    %p108 = scmp.eq.s32.totalorder %s14, 0
    %p109 = por %p107, %p108
    %p110 = scmp.ne.s32.totalorder %s99, %s102
    %p111 = scmp.eq.s32.totalorder %s19, 3
    %p112 = por %p110, %p111
    %p113 = scmp.ne.s32.totalorder %s102, %s103
    %p114 = scmp.eq.s32.totalorder %s19, 0
    %p115 = por %p113, %p114
    %p116 = scmp.ne.s32.totalorder %s102, %s103
    %p117 = scmp.eq.s32.totalorder %s20, 3
    %p118 = por %p116, %p117
    %p120 = scmp.ne.s32.totalorder %s103, %s119
    %p121 = scmp.eq.s32.totalorder %s20, 0
    %p122 = por %p120, %p121
    %s123 = ssub.s32 %s23, %s32
    %p124 = scmp.eq.s32.totalorder %s123, 0
    %s126 = sadd.s32 %s125, 1
    %s127 = scalar_select %p124, %s125, %s126
    %p130 = pneg %p124
    %p131 = scmp.eq.s32.totalorder %s14, 3
    %p132 = por %p130, %p131
    %p133 = scmp.ne.s32.totalorder %s125, %s128
    %p134 = scmp.eq.s32.totalorder %s14, 0
    %p135 = por %p133, %p134
    %p136 = scmp.ne.s32.totalorder %s125, %s128
    %p137 = scmp.eq.s32.totalorder %s19, 3
    %p138 = por %p136, %p137
    %p139 = scmp.ne.s32.totalorder %s128, %s129
    %p140 = scmp.eq.s32.totalorder %s19, 0
    %p141 = por %p139, %p140
    %p142 = scmp.ne.s32.totalorder %s128, %s129
    %p143 = scmp.eq.s32.totalorder %s20, 3
    %p144 = por %p142, %p143
    %p146 = scmp.ne.s32.totalorder %s129, %s145
    %p147 = scmp.eq.s32.totalorder %s20, 0
    %p148 = por %p146, %p147
    %s149 = ssub.s32 %s23, %s32
    %p150 = scmp.eq.s32.totalorder %s149, 0
    %s152 = sadd.s32 %s151, 1
    %s153 = scalar_select %p150, %s151, %s152
    %p156 = pneg %p150
    %p157 = scmp.eq.s32.totalorder %s14, 3
    %p158 = por %p156, %p157
    %p159 = scmp.ne.s32.totalorder %s151, %s154
    %p160 = scmp.eq.s32.totalorder %s14, 0
    %p161 = por %p159, %p160
    %p162 = scmp.ne.s32.totalorder %s151, %s154
    %p163 = scmp.eq.s32.totalorder %s19, 3
    %p164 = por %p162, %p163
    %p165 = scmp.ne.s32.totalorder %s154, %s155
    %p166 = scmp.eq.s32.totalorder %s19, 0
    %p167 = por %p165, %p166
    %p168 = scmp.ne.s32.totalorder %s154, %s155
    %p169 = scmp.eq.s32.totalorder %s20, 3
    %p170 = por %p168, %p169
    %p172 = scmp.ne.s32.totalorder %s155, %s171
    %p173 = scmp.eq.s32.totalorder %s20, 0
    %p174 = por %p172, %p173
    %s175 = ssub.s32 %s23, %s32
    %p176 = scmp.eq.s32.totalorder %s175, 0
    %s178 = sadd.s32 %s177, 1
    %s179 = scalar_select %p176, %s177, %s178
    %p182 = pneg %p176
    %p183 = scmp.eq.s32.totalorder %s14, 3
    %p184 = por %p182, %p183
    %p185 = scmp.ne.s32.totalorder %s177, %s180
    %p186 = scmp.eq.s32.totalorder %s14, 0
    %p187 = por %p185, %p186
    %p188 = scmp.ne.s32.totalorder %s177, %s180
    %p189 = scmp.eq.s32.totalorder %s19, 3
    %p190 = por %p188, %p189
    %p191 = scmp.ne.s32.totalorder %s180, %s181
    %p192 = scmp.eq.s32.totalorder %s19, 0
    %p193 = por %p191, %p192
    %p194 = scmp.ne.s32.totalorder %s180, %s181
    %p195 = scmp.eq.s32.totalorder %s20, 3
    %p196 = por %p194, %p195
    %p198 = scmp.ne.s32.totalorder %s181, %s197
    %p199 = scmp.eq.s32.totalorder %s20, 0
    %p200 = por %p198, %p199
    %s201 = ssub.s32 %s23, %s32
    %p202 = scmp.eq.s32.totalorder %s201, 0
    %s204 = sadd.s32 %s203, 1
    %s205 = scalar_select %p202, %s203, %s204
    %p208 = pneg %p202
    %p209 = scmp.eq.s32.totalorder %s14, 3
    %p210 = por %p208, %p209
    %p211 = scmp.ne.s32.totalorder %s203, %s206
    %p212 = scmp.eq.s32.totalorder %s14, 0
    %p213 = por %p211, %p212
    %p214 = scmp.ne.s32.totalorder %s203, %s206
    %p215 = scmp.eq.s32.totalorder %s19, 3
    %p216 = por %p214, %p215
    %p217 = scmp.ne.s32.totalorder %s206, %s207
    %p218 = scmp.eq.s32.totalorder %s19, 0
    %p219 = por %p217, %p218
    %p220 = scmp.ne.s32.totalorder %s206, %s207
    %p221 = scmp.eq.s32.totalorder %s20, 3
    %p222 = por %p220, %p221
    %p224 = scmp.ne.s32.totalorder %s207, %s223
    %p225 = scmp.eq.s32.totalorder %s20, 0
    %p226 = por %p224, %p225
    %s228 = sadd.s32 %s227, 1
    %p231 = scmp.eq.s32.totalorder %s14, 3
    %p232 = scmp.ne.s32.totalorder %s227, %s229
    %p233 = scmp.eq.s32.totalorder %s14, 0
    %p234 = por %p232, %p233
    %p235 = scmp.ne.s32.totalorder %s227, %s229
    %p236 = scmp.eq.s32.totalorder %s19, 3
    %p237 = por %p235, %p236
    %p238 = scmp.ne.s32.totalorder %s229, %s230
    %p239 = scmp.eq.s32.totalorder %s19, 0
    %p240 = por %p238, %p239
    %p241 = scmp.ne.s32.totalorder %s229, %s230
    %p242 = scmp.eq.s32.totalorder %s20, 3
    %p243 = por %p241, %p242
    %p245 = scmp.ne.s32.totalorder %s230, %s244
    %p246 = scmp.eq.s32.totalorder %s20, 0
    %p247 = por %p245, %p246
    %s248 = ssub.s32 %s21, %s40
    %s249 = ssub.s32 %s22, %s36
    %s250 = sor.u32 %s248, %s249
    %p251 = scmp.eq.s32.totalorder %s250, 0
    %s253 = sadd.s32 %s252, 1
    %s254 = scalar_select %p251, %s252, %s253
    %p257 = pneg %p251
    %p258 = scmp.eq.s32.totalorder %s14, 3
    %p259 = por %p257, %p258
    %p260 = scmp.ne.s32.totalorder %s252, %s255
    %p261 = scmp.eq.s32.totalorder %s14, 0
    %p262 = por %p260, %p261
    %p263 = scmp.ne.s32.totalorder %s252, %s255
    %p264 = scmp.eq.s32.totalorder %s19, 3
    %p265 = por %p263, %p264
    %p266 = scmp.ne.s32.totalorder %s255, %s256
    %p267 = scmp.eq.s32.totalorder %s19, 0
    %p268 = por %p266, %p267
    %p269 = scmp.ne.s32.totalorder %s255, %s256
    %p270 = scmp.eq.s32.totalorder %s20, 3
    %p271 = por %p269, %p270
    %p273 = scmp.ne.s32.totalorder %s256, %s272
    %p274 = scmp.eq.s32.totalorder %s20, 0
    %p275 = por %p273, %p274
    %p276 = scmp.le.s32.totalorder 1, %s14
    %p277 = scmp.lt.s32.totalorder %s14, 5
    %p278 = pnand %p276, %p277
    %p279 = pneg %p278
    // Predicated region
    $region9: #{scalable_vit_forward.21} parent=5 // pred_check
      _
    $region10: #{scalable_vit_forward.21} parent=5 // pred_check_branch
      %281 = sbr.rel (%p278) target = $region12
    $region11: #{scalable_vit_forward.21} parent=5 // pred_region
      %s282 = ssub.s32 %s14, 1
      // Predicated region
      $region13: #{scalable_vit_forward.21} parent=11 // pred_check
        %p283 = pneg %p240
      $region14: #{scalable_vit_forward.21} parent=11 // pred_check_branch
        %285 = sbr.rel (%p283) target = $region16
      $region15: #{scalable_vit_forward.21} parent=11 // pred_region
        _
      $region16: #{scalable_vit_forward.21} parent=11 // pred_fallthru
        _
    $region12: #{scalable_vit_forward.21} parent=5 // pred_fallthru
      _
    %p286 = scmp.lt.s32.totalorder %s14, 4
    // Predicated region
    $region17: #{scalable_vit_forward.21} parent=5 // pred_check
      %p287 = pneg %p286
    $region18: #{scalable_vit_forward.21} parent=5 // pred_check_branch
      %289 = sbr.rel (%p287) target = $region20
    $region19: #{scalable_vit_forward.21} parent=5 // pred_region
      // Predicated region
      $region21: #{scalable_vit_forward.21} parent=19 // pred_check
        %p290 = pneg %p55
      $region22: #{scalable_vit_forward.21} parent=19 // pred_check_branch
        %292 = sbr.rel (%p290) target = $region24
      $region23: #{scalable_vit_forward.21} parent=19 // pred_region
        %s293 = smul.u32 2, %s22
        %p294 = scmp.lt.s32.totalorder %s21, 1
        %s295 = scalar_select %p294, %s21, 1
        %p296 = scmp.lt.s32.totalorder %s293, 1
        %s297 = scalar_select %p296, %s293, 1
        %s298 = smul.addr %s295, 2
        %s299 = sadd.s32 %s297, %s298
        %s300 = smul.addr %s299, 4
        %s301 = scalar_lea.vmem %s0, %s300
        %s302 = smul.u32 2, %s22
      $region24: #{scalable_vit_forward.21} parent=19 // pred_fallthru
        _
      // Predicated region
      $region25: #{scalable_vit_forward.21} parent=19 // pred_check
        %p303 = pneg %p81
      $region26: #{scalable_vit_forward.21} parent=19 // pred_check_branch
        %305 = sbr.rel (%p303) target = $region28
      $region27: #{scalable_vit_forward.21} parent=19 // pred_region
        %p306 = scmp.lt.s32.totalorder %s21, 1
        %s307 = scalar_select %p306, %s21, 1
        %s308 = smul.addr %s307, 2
        %s309 = scalar_lea.vmem %s1, %s308
      $region28: #{scalable_vit_forward.21} parent=19 // pred_fallthru
        _
      // Predicated region
      $region29: #{scalable_vit_forward.21} parent=19 // pred_check
        %p310 = pneg %p109
      $region30: #{scalable_vit_forward.21} parent=19 // pred_check_branch
        %312 = sbr.rel (%p310) target = $region32
      $region31: #{scalable_vit_forward.21} parent=19 // pred_region
        %s313 = smul.u32 2, %s22
        %p314 = scmp.lt.s32.totalorder %s21, 1
        %s315 = scalar_select %p314, %s21, 1
        %p316 = scmp.lt.s32.totalorder %s313, 1
        %s317 = scalar_select %p316, %s313, 1
        %s318 = smul.addr %s315, 2
        %s319 = sadd.s32 %s317, %s318
        %s320 = smul.addr %s319, 4
        %s321 = scalar_lea.vmem %s2, %s320
        %s322 = smul.u32 2, %s22
      $region32: #{scalable_vit_forward.21} parent=19 // pred_fallthru
        _
      // Predicated region
      $region33: #{scalable_vit_forward.21} parent=19 // pred_check
        %p323 = pneg %p135
      $region34: #{scalable_vit_forward.21} parent=19 // pred_check_branch
        %325 = sbr.rel (%p323) target = $region36
      $region35: #{scalable_vit_forward.21} parent=19 // pred_region
        %p326 = scmp.lt.s32.totalorder %s23, 1
        %s327 = scalar_select %p326, %s23, 1
        %s328 = smul.addr %s327, 2
        %s329 = smul.addr %s328, 4
        %s330 = scalar_lea.vmem %s3, %s329
      $region36: #{scalable_vit_forward.21} parent=19 // pred_fallthru
        _
      // Predicated region
      $region37: #{scalable_vit_forward.21} parent=19 // pred_check
        %p331 = pneg %p161
      $region38: #{scalable_vit_forward.21} parent=19 // pred_check_branch
        %333 = sbr.rel (%p331) target = $region40
      $region39: #{scalable_vit_forward.21} parent=19 // pred_region
        %p334 = scmp.lt.s32.totalorder %s23, 1
        %s335 = scalar_select %p334, %s23, 1
        %s336 = smul.addr %s335, 8
        %s337 = smul.addr %s336, 4
        %s338 = scalar_lea.vmem %s4, %s337
      $region40: #{scalable_vit_forward.21} parent=19 // pred_fallthru
        _
      // Predicated region
      $region41: #{scalable_vit_forward.21} parent=19 // pred_check
        %p339 = pneg %p187
      $region42: #{scalable_vit_forward.21} parent=19 // pred_check_branch
        %341 = sbr.rel (%p339) target = $region44
      $region43: #{scalable_vit_forward.21} parent=19 // pred_region
        %p342 = scmp.lt.s32.totalorder %s23, 1
        %s343 = scalar_select %p342, %s23, 1
        %s344 = smul.addr %s343, 8
        %s345 = smul.addr %s344, 4
        %s346 = scalar_lea.vmem %s5, %s345
      $region44: #{scalable_vit_forward.21} parent=19 // pred_fallthru
        _
      // Predicated region
      $region45: #{scalable_vit_forward.21} parent=19 // pred_check
        %p347 = pneg %p213
      $region46: #{scalable_vit_forward.21} parent=19 // pred_check_branch
        %349 = sbr.rel (%p347) target = $region48
      $region47: #{scalable_vit_forward.21} parent=19 // pred_region
        %p350 = scmp.lt.s32.totalorder %s23, 1
        %s351 = scalar_select %p350, %s23, 1
        %s352 = smul.addr %s351, 2
        %s353 = scalar_lea.vmem %s6, %s352
      $region48: #{scalable_vit_forward.21} parent=19 // pred_fallthru
        _
    $region20: #{scalable_vit_forward.21} parent=5 // pred_fallthru
      _
    %p354 = scmp.le.s32.totalorder 1, %s14
    %p355 = scmp.lt.s32.totalorder %s14, 5
    %p356 = pnand %p354, %p355
    %p357 = pneg %p356
    // Predicated region
    $region49: #{scalable_vit_forward.21} parent=5 // pred_check
      _
    $region50: #{scalable_vit_forward.21} parent=5 // pred_check_branch
      %359 = sbr.rel (%p356) target = $region52
    $region51: #{scalable_vit_forward.21} parent=5 // pred_region
      %s360 = ssub.s32 %s14, 1
      %s361 = smul.u32 2, %s25
      %p362 = scmp.lt.s32.totalorder %s24, 1
      %s363 = scalar_select %p362, %s24, 1
      %p364 = scmp.lt.s32.totalorder %s361, 1
      %s365 = scalar_select %p364, %s361, 1
      %s366 = smul.addr %s363, 2
      %s367 = sadd.s32 %s365, %s366
      %s368 = smul.addr %s367, 4
      %s369 = scalar_lea.vmem %s0, %s368
      %p370 = pneg %p61
      %p371 = pneg %p58
      %p372 = scmp.lt.s32.totalorder %s24, 1
      %s373 = scalar_select %p372, %s24, 1
      %s374 = smul.addr %s373, 2
      %s375 = scalar_lea.vmem %s1, %s374
      %p376 = pneg %p87
      %p377 = pneg %p84
      %s378 = smul.u32 2, %s25
      %p379 = scmp.lt.s32.totalorder %s24, 1
      %s380 = scalar_select %p379, %s24, 1
      %p381 = scmp.lt.s32.totalorder %s378, 1
      %s382 = scalar_select %p381, %s378, 1
      %s383 = smul.addr %s380, 2
      %s384 = sadd.s32 %s382, %s383
      %s385 = smul.addr %s384, 4
      %s386 = scalar_lea.vmem %s2, %s385
      %p387 = pneg %p115
      %p388 = pneg %p112
      %p389 = scmp.lt.s32.totalorder %s26, 1
      %s390 = scalar_select %p389, %s26, 1
      %s391 = smul.addr %s390, 2
      %s392 = smul.addr %s391, 4
      %s393 = scalar_lea.vmem %s3, %s392
      %p394 = pneg %p141
      %p395 = pneg %p138
      %p396 = scmp.lt.s32.totalorder %s26, 1
      %s397 = scalar_select %p396, %s26, 1
      %s398 = smul.addr %s397, 8
      %s399 = smul.addr %s398, 4
      %s400 = scalar_lea.vmem %s4, %s399
      %p401 = pneg %p167
      %p402 = pneg %p164
      %p403 = scmp.lt.s32.totalorder %s26, 1
      %s404 = scalar_select %p403, %s26, 1
      %s405 = smul.addr %s404, 8
      %s406 = smul.addr %s405, 4
      %s407 = scalar_lea.vmem %s5, %s406
      %p408 = pneg %p193
      %p409 = pneg %p190
      %p410 = scmp.lt.s32.totalorder %s26, 1
      %s411 = scalar_select %p410, %s26, 1
      %s412 = smul.addr %s411, 2
      %s413 = scalar_lea.vmem %s6, %s412
      %p414 = pneg %p219
      %p415 = pneg %p216
      %p416 = pneg %p240
      %p417 = pneg %p237
      %p418 = pneg %p268
      %p419 = pneg %p265
      %s420 = smul.u32 2, %s25
      %p421 = scmp.lt.s32.totalorder %s24, 1
      %s422 = scalar_select %p421, %s24, 1
      %p423 = scmp.lt.s32.totalorder %s420, 1
      %s424 = scalar_select %p423, %s420, 1
      %s425 = smul.addr %s422, 2
      %s426 = sadd.s32 %s424, %s425
      %s427 = smul.addr %s426, 4
      %s428 = scalar_lea.vmem %s8, %s427
      %s429 = smul.u32 2, %s25
      %p430 = scmp.lt.s32.totalorder %s24, 1
      %s431 = scalar_select %p430, %s24, 1
      %p432 = scmp.lt.s32.totalorder %s429, 1
      %s433 = scalar_select %p432, %s429, 1
      %s434 = smul.addr %s431, 2
      %s435 = sadd.s32 %s433, %s434
      %s436 = smul.addr %s435, 4
      %s437 = scalar_lea.vmem %s0, %s436
      %s438 = smul.u32 2, %s25
      %p439 = scmp.lt.s32.totalorder %s24, 1
      %s440 = scalar_select %p439, %s24, 1
      %s441 = smul.addr %s440, 2
      %s442 = scalar_lea.vmem %s1, %s441
      %s443 = smul.u32 2, %s25
      %p444 = scmp.lt.s32.totalorder %s24, 1
      %s445 = scalar_select %p444, %s24, 1
      %p446 = scmp.lt.s32.totalorder %s443, 1
      %s447 = scalar_select %p446, %s443, 1
      %s448 = smul.addr %s445, 2
      %s449 = sadd.s32 %s447, %s448
      %s450 = smul.addr %s449, 4
      %s451 = scalar_lea.vmem %s2, %s450
      %s452 = smul.u32 2, %s25
      %p453 = scmp.lt.s32.totalorder %s26, 1
      %s454 = scalar_select %p453, %s26, 1
      %s455 = smul.addr %s454, 2
      %s456 = smul.addr %s455, 4
      %s457 = scalar_lea.vmem %s3, %s456
      %p458 = scmp.lt.s32.totalorder %s26, 1
      %s459 = scalar_select %p458, %s26, 1
      %s460 = smul.addr %s459, 8
      %s461 = smul.addr %s460, 4
      %s462 = scalar_lea.vmem %s4, %s461
      %p463 = scmp.lt.s32.totalorder %s26, 1
      %s464 = scalar_select %p463, %s26, 1
      %s465 = smul.addr %s464, 8
      %s466 = smul.addr %s465, 4
      %s467 = scalar_lea.vmem %s5, %s466
      %p468 = scmp.lt.s32.totalorder %s26, 1
      %s469 = scalar_select %p468, %s26, 1
      %s470 = smul.addr %s469, 2
      %s471 = scalar_lea.vmem %s6, %s470
      %s472 = smul.u32 2, %s25
      %p473 = scmp.lt.s32.totalorder %s24, 1
      %s474 = scalar_select %p473, %s24, 1
      %p475 = scmp.lt.s32.totalorder %s472, 1
      %s476 = scalar_select %p475, %s472, 1
      %s477 = smul.addr %s474, 2
      %s478 = sadd.s32 %s476, %s477
      %s479 = smul.addr %s478, 4
      %s480 = scalar_lea.vmem %s8, %s479
      %s481 = smul.u32 2, %s25
      %p483 = scmp.eq.s32.totalorder %s26, 0
      // Predicated region
      $region53: #{scalable_vit_forward.21} parent=51 // pred_check
        %p484 = pneg %p483
      $region54: #{scalable_vit_forward.21} parent=51 // pred_check_branch
        %486 = sbr.rel (%p484) target = $region56
      $region55: #{scalable_vit_forward.21} parent=51 // pred_region
        %v487 = vld [vmem:[%s7] sm:$0x1]
        %v488 = vld [vmem:[%s451] sm:$0xf]
        %v489 = vld [vmem:[%s451 + $0x4] sm:$0xf]
        %v490 = vunpack.c.l.bf16 %v488
        %v491 = vunpack.c.l.bf16 %v489
        %v493 = vlaneseq
        %v494 = vshrl.u32 %v493, 7
        %v495 = vsub.s32 0, %v494
        %v496 = vrot.slane %v487, %v495
        %v498 = vadd.f32 %v496, %v490
        %v499 = vadd.f32 %v496, %v491
        %vm500 = vcmask 130048
        %501 = vst.msk [vmem:[#allocation2] sm:$0xff] %vm500, %v498
        %502 = vst.msk [vmem:[#allocation2 + $0x8] sm:$0xff] %vm500, %v499
      $region56: #{scalable_vit_forward.21} parent=51 // pred_fallthru
        _
      %v503 = vld [vmem:[%s437] sm:$0xf]
      %v504 = vld [vmem:[%s437 + $0x4] sm:$0xf]
      %v505 = vld [vmem:[%s442] sm:$0x3]
      %v506 = vld [vmem:[%s457] sm:$0xf]
      %v507 = vld [vmem:[%s457 + $0x4] sm:$0xf]
      %v510 = vunpack.c.l.b16 %v503
      %v511 = vunpack.c.l.b16 %v504
      %v512 = vpack.c.b16 %v511, %v510
      %v515 = vunpack.c.l.b16 %v506
      %v516 = vunpack.c.l.b16 %v507
      %v517 = vpack.c.b16 %v516, %v515
      %vm519 = vcmask 130048
      %v521 = vsel %vm519, %v512, 0
      %523 = vmatprep.subr.bf16.mxu0 0
      %524 = vmatpush1.bf16.msra.mxu0 0
      %525 = vmatprep.subr.bf16.mxu0 0
      %526 = vmatpush1.bf16.msra.mxu0 0
      %527 = vmatprep.subr.bf16.mxu0 0
      %528 = vmatpush1.bf16.msra.mxu0 0
      %529 = vmatprep.subr.bf16.mxu0 0
      %530 = vmatpush1.bf16.msra.mxu0 0
      %531 = vmatprep.subr.bf16.mxu0 0
      %532 = vmatpush1.bf16.msra.mxu0 0
      %533 = vmatprep.subr.bf16.mxu0 0
      %534 = vmatpush1.bf16.msra.mxu0 0
      %535 = vmatprep.subr.bf16.mxu0 0
      %536 = vmatpush1.bf16.msra.mxu0 0
      %537 = vmatprep.subr.bf16.mxu0 0
      %538 = vmatpush1.bf16.msra.mxu0 %v517
      %539 = vmatprep.subr.bf16.mxu0 0
      %540 = vmatpush2.bf16.msra.mxu0 0
      %541 = vmatprep.subr.bf16.mxu0 0
      %542 = vmatpush2.bf16.msra.mxu0 0
      %543 = vmatprep.subr.bf16.mxu0 0
      %544 = vmatpush2.bf16.msra.mxu0 0
      %545 = vmatprep.subr.bf16.mxu0 0
      %546 = vmatpush2.bf16.msra.mxu0 0
      %547 = vmatprep.subr.bf16.mxu0 0
      %548 = vmatpush2.bf16.msra.mxu0 0
      %549 = vmatprep.subr.bf16.mxu0 0
      %550 = vmatpush2.bf16.msra.mxu0 0
      %551 = vmatprep.subr.bf16.mxu0 0
      %552 = vmatpush2.bf16.msra.mxu0 0
      %553 = vmatprep.subr.bf16.mxu0 0
      %554 = vmatpush2.bf16.msra.mxu0 0
      %555 = vmatprep.mubr.bf16.mxu0 0
      %556 = vmatmul.mubr.bf16.gmra.mxu0 %v521
      %v557 = vpop.f32.mrf.mxu0
      %v558 = vadd.f32 0.0, %v557
      %v559 = vpop.f32.mrf.mxu0
      %v560 = vpop.f32.mrf.mxu0
      %v561 = vadd.f32 0.0, %v560
      %v562 = vpop.f32.mrf.mxu0
      %563 = vdwg.mxu0
      %v564 = vld [vmem:[%s462] sm:$0xf]
      %v565 = vld [vmem:[%s462 + $0x4] sm:$0xf]
      %v566 = vld [vmem:[%s462 + $0x8] sm:$0xf]
      %v567 = vld [vmem:[%s462 + $0xc] sm:$0xf]
      %v568 = vld [vmem:[%s462 + $0x10] sm:$0xf]
      %v569 = vld [vmem:[%s462 + $0x14] sm:$0xf]
      %v570 = vld [vmem:[%s462 + $0x18] sm:$0xf]
      %v571 = vld [vmem:[%s462 + $0x1c] sm:$0xf]
      %v580 = vunpack.c.l.b16 %v564
      %v581 = vunpack.c.l.b16 %v565
      %v582 = vunpack.c.l.b16 %v566
      %v583 = vunpack.c.l.b16 %v567
      %v584 = vunpack.c.l.b16 %v568
      %v585 = vunpack.c.l.b16 %v569
      %v586 = vunpack.c.l.b16 %v570
      %v587 = vunpack.c.l.b16 %v571
      %v588 = vpack.c.b16 %v581, %v580
      %v589 = vpack.c.b16 %v583, %v582
      %v590 = vpack.c.b16 %v585, %v584
      %v591 = vpack.c.b16 %v587, %v586
      %vm596 = vcmask 523264
      %v598 = vsel %vm596, %v505, 0
      %600 = vmatprep.subr.bf16.mxu0 0
      %601 = vmatpush1.bf16.msra.mxu0 0
      %602 = vmatprep.subr.bf16.mxu0 0
      %603 = vmatpush1.bf16.msra.mxu0 0
      %604 = vmatprep.subr.bf16.mxu0 0
      %605 = vmatpush1.bf16.msra.mxu0 0
      %606 = vmatprep.subr.bf16.mxu0 0
      %607 = vmatpush1.bf16.msra.mxu0 0
      %608 = vmatprep.subr.bf16.mxu0 0
      %609 = vmatpush1.bf16.msra.mxu0 %v591
      %610 = vmatprep.subr.bf16.mxu0 0
      %611 = vmatpush1.bf16.msra.mxu0 %v590
      %612 = vmatprep.subr.bf16.mxu0 0
      %613 = vmatpush1.bf16.msra.mxu0 %v589
      %614 = vmatprep.subr.bf16.mxu0 0
      %615 = vmatpush1.bf16.msra.mxu0 %v588
      %616 = vmatprep.subr.bf16.mxu0 0
      %617 = vmatpush2.bf16.msra.mxu0 0
      %618 = vmatprep.subr.bf16.mxu0 0
      %619 = vmatpush2.bf16.msra.mxu0 0
      %620 = vmatprep.subr.bf16.mxu0 0
      %621 = vmatpush2.bf16.msra.mxu0 0
      %622 = vmatprep.subr.bf16.mxu0 0
      %623 = vmatpush2.bf16.msra.mxu0 0
      %624 = vmatprep.subr.bf16.mxu0 0
      %625 = vmatpush2.bf16.msra.mxu0 0
      %626 = vmatprep.subr.bf16.mxu0 0
      %627 = vmatpush2.bf16.msra.mxu0 0
      %628 = vmatprep.subr.bf16.mxu0 0
      %629 = vmatpush2.bf16.msra.mxu0 0
      %630 = vmatprep.subr.bf16.mxu0 0
      %631 = vmatpush2.bf16.msra.mxu0 0
      %632 = vmatprep.mubr.bf16.mxu0 0
      %633 = vmatmul.mubr.bf16.gmra.mxu0 %v598
      %v634 = vpop.f32.mrf.mxu0
      %v635 = vadd.f32 0.0, %v634
      %v636 = vpop.f32.mrf.mxu0
      %v637 = vpop.f32.mrf.mxu0
      %v638 = vpop.f32.mrf.mxu0
      %639 = vdwg.mxu0
      %v640 = vld [vmem:[%s467] sm:$0xf]
      %v641 = vld [vmem:[%s467 + $0x4] sm:$0xf]
      %v642 = vld [vmem:[%s467 + $0x8] sm:$0xf]
      %v643 = vld [vmem:[%s467 + $0xc] sm:$0xf]
      %v644 = vld [vmem:[%s467 + $0x10] sm:$0xf]
      %v645 = vld [vmem:[%s467 + $0x14] sm:$0xf]
      %v646 = vld [vmem:[%s467 + $0x18] sm:$0xf]
      %v647 = vld [vmem:[%s467 + $0x1c] sm:$0xf]
      %v656 = vunpack.c.l.b16 %v640
      %v657 = vunpack.c.l.b16 %v641
      %v658 = vunpack.c.l.b16 %v642
      %v659 = vunpack.c.l.b16 %v643
      %v660 = vunpack.c.l.b16 %v644
      %v661 = vunpack.c.l.b16 %v645
      %v662 = vunpack.c.l.b16 %v646
      %v663 = vunpack.c.l.b16 %v647
      %v664 = vpack.c.b16 %v657, %v656
      %v665 = vpack.c.b16 %v659, %v658
      %v666 = vpack.c.b16 %v661, %v660
      %v667 = vpack.c.b16 %v663, %v662
      %672 = vmatprep.subr.bf16.mxu0 0
      %673 = vmatpush1.bf16.msra.mxu0 0
      %674 = vmatprep.subr.bf16.mxu0 0
      %675 = vmatpush1.bf16.msra.mxu0 0
      %676 = vmatprep.subr.bf16.mxu0 0
      %677 = vmatpush1.bf16.msra.mxu0 0
      %678 = vmatprep.subr.bf16.mxu0 0
      %679 = vmatpush1.bf16.msra.mxu0 0
      %680 = vmatprep.subr.bf16.mxu0 0
      %681 = vmatpush1.bf16.msra.mxu0 %v667
      %682 = vmatprep.subr.bf16.mxu0 0
      %683 = vmatpush1.bf16.msra.mxu0 %v666
      %684 = vmatprep.subr.bf16.mxu0 0
      %685 = vmatpush1.bf16.msra.mxu0 %v665
      %686 = vmatprep.subr.bf16.mxu0 0
      %687 = vmatpush1.bf16.msra.mxu0 %v664
      %688 = vmatprep.subr.bf16.mxu0 0
      %689 = vmatpush2.bf16.msra.mxu0 0
      %690 = vmatprep.subr.bf16.mxu0 0
      %691 = vmatpush2.bf16.msra.mxu0 0
      %692 = vmatprep.subr.bf16.mxu0 0
      %693 = vmatpush2.bf16.msra.mxu0 0
      %694 = vmatprep.subr.bf16.mxu0 0
      %695 = vmatpush2.bf16.msra.mxu0 0
      %696 = vmatprep.subr.bf16.mxu0 0
      %697 = vmatpush2.bf16.msra.mxu0 0
      %698 = vmatprep.subr.bf16.mxu0 0
      %699 = vmatpush2.bf16.msra.mxu0 0
      %700 = vmatprep.subr.bf16.mxu0 0
      %701 = vmatpush2.bf16.msra.mxu0 0
      %702 = vmatprep.subr.bf16.mxu0 0
      %703 = vmatpush2.bf16.msra.mxu0 0
      %704 = vmatprep.mubr.bf16.mxu0 0
      %705 = vmatmul.mubr.bf16.gmra.mxu0 %v598
      %v706 = vpop.f32.mrf.mxu0
      %v707 = vadd.f32 0.0, %v706
      %v708 = vpop.f32.mrf.mxu0
      %v709 = vpop.f32.mrf.mxu0
      %v710 = vpop.f32.mrf.mxu0
      %711 = vdwg.mxu0
      %v712 = vpack.c.bf16 %v561, %v558
      %v713 = vpack.c.bf16 %v635, %v635
      %vm714 = vcmask 31744
      %v716 = vsel %vm714, %v712, 0
      %v719 = vsel %vm714, %v713, 0
      %721 = vmatprep.subr.bf16.mxu0 0
      %722 = vmatpush1.bf16.xpose.msra.mxu0 0
      %723 = vmatprep.subr.bf16.mxu0 0
      %724 = vmatpush1.bf16.xpose.msra.mxu0 0
      %725 = vmatprep.subr.bf16.mxu0 0
      %726 = vmatpush1.bf16.xpose.msra.mxu0 0
      %727 = vmatprep.subr.bf16.mxu0 0
      %728 = vmatpush1.bf16.xpose.msra.mxu0 0
      %729 = vmatprep.subr.bf16.mxu0 0
      %730 = vmatpush1.bf16.xpose.msra.mxu0 0
      %731 = vmatprep.subr.bf16.mxu0 0
      %732 = vmatpush1.bf16.xpose.msra.mxu0 0
      %733 = vmatprep.subr.bf16.mxu0 0
      %734 = vmatpush1.bf16.xpose.msra.mxu0 0
      %735 = vmatprep.subr.bf16.mxu0 0
      %736 = vmatpush1.bf16.xpose.msra.mxu0 %v719
      %737 = vmatprep.subr.bf16.mxu0 0
      %738 = vmatpush2.bf16.xpose.msra.mxu0 0
      %739 = vmatprep.subr.bf16.mxu0 0
      %740 = vmatpush2.bf16.xpose.msra.mxu0 0
      %741 = vmatprep.subr.bf16.mxu0 0
      %742 = vmatpush2.bf16.xpose.msra.mxu0 0
      %743 = vmatprep.subr.bf16.mxu0 0
      %744 = vmatpush2.bf16.xpose.msra.mxu0 0
      %745 = vmatprep.subr.bf16.mxu0 0
      %746 = vmatpush2.bf16.xpose.msra.mxu0 0
      %747 = vmatprep.subr.bf16.mxu0 0
      %748 = vmatpush2.bf16.xpose.msra.mxu0 0
      %749 = vmatprep.subr.bf16.mxu0 0
      %750 = vmatpush2.bf16.xpose.msra.mxu0 0
      %751 = vmatprep.subr.bf16.mxu0 0
      %752 = vmatpush2.bf16.xpose.msra.mxu0 0
      %753 = vmatprep.mubr.bf16.mxu0 0
      %754 = vmatmul.mubr.bf16.gmra.mxu0 %v716
      %v755 = vpop.f32.mrf.mxu0
      %v756 = vadd.f32 0.0, %v755
      %v757 = vpop.f32.mrf.mxu0
      %v758 = vpop.f32.mrf.mxu0
      %v759 = vadd.f32 0.0, %v758
      %v760 = vpop.f32.mrf.mxu0
      %761 = vdwg.mxu0
      %v762 = vmul.f32 %v756, 0.5
      %v763 = vmul.f32 %v759, 0.5
      %v764 = vsel %vm714, %v762, -inf
      %765 = vmax.xlane.f32.xlu0 %v764
      %v766 = vpop.xlane.xlu0 %765
      %v767 = vsel %vm714, %v763, -inf
      %768 = vmax.xlane.f32.xlu0 %v767
      %v769 = vpop.xlane.xlu0 %768
      %v770 = vsub.f32 %v762, %v766
      %v771 = vsub.f32 %v763, %v769
      %v772 = vmul.f32 %v770, 1.442695
      %v773 = vpow.pop %v772
      %v774 = vmul.f32 %v771, 1.442695
      %v775 = vpow.pop %v774
      %v776 = vsel %vm714, %v773, 0.0
      %777 = vadd.xlane.f32.xlu0 %v776
      %v778 = vpop.xlane.xlu0 %777
      %v779 = vsel %vm714, %v775, 0.0
      %780 = vadd.xlane.f32.xlu0 %v779
      %v781 = vpop.xlane.xlu0 %780
      %v782 = vrcp.pop %v778
      %v783 = vrcp.pop %v781
      %v784 = vmul.f32 %v773, %v782
      %v785 = vmul.f32 %v775, %v783
      %v786 = vpack.c.bf16 %v785, %v784
      %v787 = vpack.c.bf16 %v707, %v707
      %v789 = vsel %vm714, %v786, 0
      %vm791 = vcmask 1041408
      %v793 = vsel %vm791, %v787, 0
      %795 = vmatprep.subr.bf16.mxu0 0
      %796 = vmatpush1.bf16.msra.mxu0 0
      %797 = vmatprep.subr.bf16.mxu0 0
      %798 = vmatpush1.bf16.msra.mxu0 0
      %799 = vmatprep.subr.bf16.mxu0 0
      %800 = vmatpush1.bf16.msra.mxu0 0
      %801 = vmatprep.subr.bf16.mxu0 0
      %802 = vmatpush1.bf16.msra.mxu0 0
      %803 = vmatprep.subr.bf16.mxu0 0
      %804 = vmatpush1.bf16.msra.mxu0 0
      %805 = vmatprep.subr.bf16.mxu0 0
      %806 = vmatpush1.bf16.msra.mxu0 0
      %807 = vmatprep.subr.bf16.mxu0 0
      %808 = vmatpush1.bf16.msra.mxu0 0
      %809 = vmatprep.subr.bf16.mxu0 0
      %810 = vmatpush1.bf16.msra.mxu0 %v793
      %811 = vmatprep.subr.bf16.mxu0 0
      %812 = vmatpush2.bf16.msra.mxu0 0
      %813 = vmatprep.subr.bf16.mxu0 0
      %814 = vmatpush2.bf16.msra.mxu0 0
      %815 = vmatprep.subr.bf16.mxu0 0
      %816 = vmatpush2.bf16.msra.mxu0 0
      %817 = vmatprep.subr.bf16.mxu0 0
      %818 = vmatpush2.bf16.msra.mxu0 0
      %819 = vmatprep.subr.bf16.mxu0 0
      %820 = vmatpush2.bf16.msra.mxu0 0
      %821 = vmatprep.subr.bf16.mxu0 0
      %822 = vmatpush2.bf16.msra.mxu0 0
      %823 = vmatprep.subr.bf16.mxu0 0
      %824 = vmatpush2.bf16.msra.mxu0 0
      %825 = vmatprep.subr.bf16.mxu0 0
      %826 = vmatpush2.bf16.msra.mxu0 0
      %827 = vmatprep.mubr.bf16.mxu0 0
      %828 = vmatmul.mubr.bf16.gmra.mxu0 %v789
      %v829 = vpop.f32.mrf.mxu0
      %v830 = vadd.f32 0.0, %v829
      %v831 = vpop.f32.mrf.mxu0
      %v832 = vpop.f32.mrf.mxu0
      %v833 = vadd.f32 0.0, %v832
      %v834 = vpop.f32.mrf.mxu0
      %835 = vdwg.mxu0
      %v836 = vld [vmem:[#allocation2] sm:$0xff]
      %v837 = vld [vmem:[#allocation2 + $0x8] sm:$0xff]
      %v838 = vpack.c.bf16 %v833, %v830
      %v839 = vld [vmem:[%s471] sm:$0x3]
      %v841 = vsel %vm714, %v838, 0
      %v844 = vsel %vm791, %v839, 0
      %846 = vmatprep.subr.bf16.mxu0 0
      %847 = vmatpush1.bf16.msra.mxu0 0
      %848 = vmatprep.subr.bf16.mxu0 0
      %849 = vmatpush1.bf16.msra.mxu0 0
      %850 = vmatprep.subr.bf16.mxu0 0
      %851 = vmatpush1.bf16.msra.mxu0 0
      %852 = vmatprep.subr.bf16.mxu0 0
      %853 = vmatpush1.bf16.msra.mxu0 0
      %854 = vmatprep.subr.bf16.mxu0 0
      %855 = vmatpush1.bf16.msra.mxu0 0
      %856 = vmatprep.subr.bf16.mxu0 0
      %857 = vmatpush1.bf16.msra.mxu0 0
      %858 = vmatprep.subr.bf16.mxu0 0
      %859 = vmatpush1.bf16.msra.mxu0 0
      %860 = vmatprep.subr.bf16.mxu0 0
      %861 = vmatpush1.bf16.msra.mxu0 %v844
      %862 = vmatprep.subr.bf16.mxu0 0
      %863 = vmatpush2.bf16.msra.mxu0 0
      %864 = vmatprep.subr.bf16.mxu0 0
      %865 = vmatpush2.bf16.msra.mxu0 0
      %866 = vmatprep.subr.bf16.mxu0 0
      %867 = vmatpush2.bf16.msra.mxu0 0
      %868 = vmatprep.subr.bf16.mxu0 0
      %869 = vmatpush2.bf16.msra.mxu0 0
      %870 = vmatprep.subr.bf16.mxu0 0
      %871 = vmatpush2.bf16.msra.mxu0 0
      %872 = vmatprep.subr.bf16.mxu0 0
      %873 = vmatpush2.bf16.msra.mxu0 0
      %874 = vmatprep.subr.bf16.mxu0 0
      %875 = vmatpush2.bf16.msra.mxu0 0
      %876 = vmatprep.subr.bf16.mxu0 0
      %877 = vmatpush2.bf16.msra.mxu0 0
      %878 = vmatprep.mubr.bf16.mxu0 0
      %879 = vmatmul.mubr.bf16.gmra.mxu0 %v841
      %v880 = vpop.f32.mrf.mxu0
      %v881 = vadd.f32 0.0, %v880
      %v882 = vpop.f32.mrf.mxu0
      %v883 = vpop.f32.mrf.mxu0
      %v884 = vadd.f32 0.0, %v883
      %v885 = vpop.f32.mrf.mxu0
      %886 = vdwg.mxu0
      %v887 = vadd.f32 %v836, %v881
      %v888 = vadd.f32 %v837, %v884
      %889 = vst.msk [vmem:[#allocation2] sm:$0xff] %vm519, %v887
      %890 = vst.msk [vmem:[#allocation2 + $0x8] sm:$0xff] %vm519, %v888
      %p891 = scmp.eq.s32.totalorder %s26, 1
      // Predicated region
      $region57: #{scalable_vit_forward.21} parent=51 // pred_check
        %p892 = pneg %p891
      $region58: #{scalable_vit_forward.21} parent=51 // pred_check_branch
        %894 = sbr.rel (%p892) target = $region60
      $region59: #{scalable_vit_forward.21} parent=51 // pred_region
        %v895 = vld [vmem:[#allocation2] sm:$0xff]
        %v896 = vld [vmem:[#allocation2 + $0x8] sm:$0xff]
        %v897 = vpack.c.bf16 %v896, %v895
        %v899 = vunpack.c.l.b16 %v897
        %v900 = vunpack.c.h.b16 %v897
        %v901 = vpack.c.b16 %v899, %v899
        %v902 = vpack.c.b16 %v900, %v900
        %vm905 = vcmask 125952
        %906 = vst.msk [vmem:[%s480] sm:$0xf] %vm905, %v901
        %907 = vst.msk [vmem:[%s480 + $0x4] sm:$0xf] %vm905, %v902
      $region60: #{scalable_vit_forward.21} parent=51 // pred_fallthru
        _
      %s908 = smul.u32 2, %s25
      %p909 = scmp.lt.s32.totalorder %s24, 1
      %s910 = scalar_select %p909, %s24, 1
      %p911 = scmp.lt.s32.totalorder %s908, 1
      %s912 = scalar_select %p911, %s908, 1
      %s913 = smul.addr %s910, 2
      %s914 = sadd.s32 %s912, %s913
      %s915 = smul.addr %s914, 4
      %s916 = scalar_lea.vmem %s8, %s915
      // Predicated region
      $region61: #{scalable_vit_forward.21} parent=51 // pred_check
        %p917 = pneg %p265
      $region62: #{scalable_vit_forward.21} parent=51 // pred_check_branch
        %919 = sbr.rel (%p917) target = $region64
      $region63: #{scalable_vit_forward.21} parent=51 // pred_region
        %s920 = smul.u32 2, %s25
      $region64: #{scalable_vit_forward.21} parent=51 // pred_fallthru
        _
    $region52: #{scalable_vit_forward.21} parent=5 // pred_fallthru
      _
    %p921 = scmp.le.s32.totalorder 2, %s14
    // Predicated region
    $region65: #{scalable_vit_forward.21} parent=5 // pred_check
      %p922 = pneg %p921
    $region66: #{scalable_vit_forward.21} parent=5 // pred_check_branch
      %924 = sbr.rel (%p922) target = $region68
    $region67: #{scalable_vit_forward.21} parent=5 // pred_region
      %s925 = ssub.s32 %s14, 2
      // Predicated region
      $region69: #{scalable_vit_forward.21} parent=67 // pred_check
        %p926 = pneg %p271
      $region70: #{scalable_vit_forward.21} parent=67 // pred_check_branch
        %928 = sbr.rel (%p926) target = $region72
      $region71: #{scalable_vit_forward.21} parent=67 // pred_region
        %s929 = smul.u32 2, %s28
        %p930 = scmp.lt.s32.totalorder %s27, 1
        %s931 = scalar_select %p930, %s27, 1
        %p932 = scmp.lt.s32.totalorder %s929, 1
        %s933 = scalar_select %p932, %s929, 1
        %s934 = smul.addr %s931, 2
        %s935 = sadd.s32 %s933, %s934
        %s936 = smul.addr %s935, 4
        %s937 = scalar_lea.vmem %s8, %s936
      $region72: #{scalable_vit_forward.21} parent=67 // pred_fallthru
        _
    $region68: #{scalable_vit_forward.21} parent=5 // pred_fallthru
      _
  $region6: #{scalable_vit_forward.21} parent=0 // loop_footer
    %s18 = sadd.s32 1, %s14
  $region7: #{scalable_vit_forward.21} parent=0 // loop_footer_branch
    %13 = sbr.rel target = $region3
  $region8: #{scalable_vit_forward.21} parent=0 // loop_exit
    _

// kernel: scalable_vit_forward.23
$region0: #{scalable_vit_forward.23}
  #allocation0 [shape = 'u32[]', space=smem, size = 0x4, offset = 0x4, fixed_abs, tag = 'smem constant byte address 0x4 - core index']
  #allocation1 [shape = 'u32[144,128]{1,0:T(1,128)}', space=vmem, size = 0x12000, scoped, tag = 'internal scratch']
  %s0 = inlined_call_operand.vmem [shape: bf16[2,6,6,16], index: 0, kind: input, shape index: {}]
  %s1 = inlined_call_operand.vmem [shape: bf16[2,4,4,16], index: 1, kind: input, shape index: {}]
  %s2 = inlined_call_operand.vmem [shape: f32[9,16], index: 2, kind: input, shape index: {}]
  %s3 = inlined_call_operand.vmem [shape: f32[1,16], index: 3, kind: input, shape index: {}]
  %s4 = inlined_call_operand.vmem [shape: bf16[2,4,4,16], index: 4, kind: output, shape index: {}]
  %s5 = sld [smem:[#allocation0]]
  $region49: #{scalable_vit_forward.23} parent=0
    _
  %s7 = ssub.s32 1, %s5
  %s8 = scalar_select 0, %s7, %s5
  loop: start=0, step=1, limit=4
  $region2: #{scalable_vit_forward.23} parent=0 // loop_pre_header
    _
  $region3: #{scalable_vit_forward.23} parent=0 // loop_header
    %s10 = sphi 0, %s14
    %p11 = scmp.ge.s32.totalorder %s10, 4
    %s20 = sphi 0, %s22
    %s23 = sphi 0, %s20
    %s24 = sphi 0, %s23
    %s40 = sphi 0, %s24
    %s46 = sphi 0, %s48
    %s49 = sphi 0, %s46
    %s50 = sphi 0, %s49
    %s66 = sphi 0, %s50
    %s70 = sphi 0, %s70
    %s72 = sphi 0, %s70
    %s73 = sphi 0, %s72
    %s87 = sphi 0, %s73
    %s91 = sphi 0, %s91
    %s93 = sphi 0, %s91
    %s94 = sphi 0, %s93
    %s108 = sphi 0, %s94
    %s114 = sphi 0, %s116
    %s117 = sphi 0, %s114
    %s118 = sphi 0, %s117
    %s134 = sphi 0, %s118
  $region4: #{scalable_vit_forward.23} parent=0 // loop_header_branch
    %13 = sbr.rel (%p11) target = $region8
  $region5: #{scalable_vit_forward.23} parent=0 // loop_body
    %s15 = ssub.s32 %s10, 1
    %s16 = ssub.s32 %s10, 2
    %s17 = sadd.s32 %s10, 1
    %s18 = ssub.s32 %s10, %s17
    %p19 = scmp.eq.s32.totalorder %s18, 0
    %s21 = sadd.s32 %s20, 1
    %s22 = scalar_select %p19, %s20, %s21
    %p25 = pneg %p19
    %p26 = scmp.eq.s32.totalorder %s10, 1
    %p27 = por %p25, %p26
    %p28 = scmp.ne.s32.totalorder %s20, %s23
    %p29 = scmp.eq.s32.totalorder %s10, 0
    %p30 = por %p28, %p29
    %p31 = scmp.ne.s32.totalorder %s20, %s23
    %p32 = scmp.eq.s32.totalorder %s15, 1
    %p33 = por %p31, %p32
    %p34 = scmp.ne.s32.totalorder %s23, %s24
    %p35 = scmp.eq.s32.totalorder %s15, 0
    %p36 = por %p34, %p35
    %p37 = scmp.ne.s32.totalorder %s23, %s24
    %p38 = scmp.eq.s32.totalorder %s16, 1
    %p39 = por %p37, %p38
    %p41 = scmp.ne.s32.totalorder %s24, %s40
    %p42 = scmp.eq.s32.totalorder %s16, 0
    %p43 = por %p41, %p42
    %s44 = ssub.s32 %s10, %s17
    %p45 = scmp.eq.s32.totalorder %s44, 0
    %s47 = sadd.s32 %s46, 1
    %s48 = scalar_select %p45, %s46, %s47
    %p51 = pneg %p45
    %p52 = scmp.eq.s32.totalorder %s10, 1
    %p53 = por %p51, %p52
    %p54 = scmp.ne.s32.totalorder %s46, %s49
    %p55 = scmp.eq.s32.totalorder %s10, 0
    %p56 = por %p54, %p55
    %p57 = scmp.ne.s32.totalorder %s46, %s49
    %p58 = scmp.eq.s32.totalorder %s15, 1
    %p59 = por %p57, %p58
    %p60 = scmp.ne.s32.totalorder %s49, %s50
    %p61 = scmp.eq.s32.totalorder %s15, 0
    %p62 = por %p60, %p61
    %p63 = scmp.ne.s32.totalorder %s49, %s50
    %p64 = scmp.eq.s32.totalorder %s16, 1
    %p65 = por %p63, %p64
    %p67 = scmp.ne.s32.totalorder %s50, %s66
    %p68 = scmp.eq.s32.totalorder %s16, 0
    %p69 = por %p67, %p68
    %s71 = sadd.s32 %s70, 1
    %p74 = scmp.eq.s32.totalorder %s10, 1
    %p75 = scmp.ne.s32.totalorder %s70, %s72
    %p76 = scmp.eq.s32.totalorder %s10, 0
    %p77 = por %p75, %p76
    %p78 = scmp.ne.s32.totalorder %s70, %s72
    %p79 = scmp.eq.s32.totalorder %s15, 1
    %p80 = por %p78, %p79
    %p81 = scmp.ne.s32.totalorder %s72, %s73
    %p82 = scmp.eq.s32.totalorder %s15, 0
    %p83 = por %p81, %p82
    %p84 = scmp.ne.s32.totalorder %s72, %s73
    %p85 = scmp.eq.s32.totalorder %s16, 1
    %p86 = por %p84, %p85
    %p88 = scmp.ne.s32.totalorder %s73, %s87
    %p89 = scmp.eq.s32.totalorder %s16, 0
    %p90 = por %p88, %p89
    %s92 = sadd.s32 %s91, 1
    %p95 = scmp.eq.s32.totalorder %s10, 1
    %p96 = scmp.ne.s32.totalorder %s91, %s93
    %p97 = scmp.eq.s32.totalorder %s10, 0
    %p98 = por %p96, %p97
    %p99 = scmp.ne.s32.totalorder %s91, %s93
    %p100 = scmp.eq.s32.totalorder %s15, 1
    %p101 = por %p99, %p100
    %p102 = scmp.ne.s32.totalorder %s93, %s94
    %p103 = scmp.eq.s32.totalorder %s15, 0
    %p104 = por %p102, %p103
    %p105 = scmp.ne.s32.totalorder %s93, %s94
    %p106 = scmp.eq.s32.totalorder %s16, 1
    %p107 = por %p105, %p106
    %p109 = scmp.ne.s32.totalorder %s94, %s108
    %p110 = scmp.eq.s32.totalorder %s16, 0
    %p111 = por %p109, %p110
    %s112 = ssub.s32 %s10, %s17
    %p113 = scmp.eq.s32.totalorder %s112, 0
    %s115 = sadd.s32 %s114, 1
    %s116 = scalar_select %p113, %s114, %s115
    %p119 = pneg %p113
    %p120 = scmp.eq.s32.totalorder %s10, 1
    %p121 = por %p119, %p120
    %p122 = scmp.ne.s32.totalorder %s114, %s117
    %p123 = scmp.eq.s32.totalorder %s10, 0
    %p124 = por %p122, %p123
    %p125 = scmp.ne.s32.totalorder %s114, %s117
    %p126 = scmp.eq.s32.totalorder %s15, 1
    %p127 = por %p125, %p126
    %p128 = scmp.ne.s32.totalorder %s117, %s118
    %p129 = scmp.eq.s32.totalorder %s15, 0
    %p130 = por %p128, %p129
    %p131 = scmp.ne.s32.totalorder %s117, %s118
    %p132 = scmp.eq.s32.totalorder %s16, 1
    %p133 = por %p131, %p132
    %p135 = scmp.ne.s32.totalorder %s118, %s134
    %p136 = scmp.eq.s32.totalorder %s16, 0
    %p137 = por %p135, %p136
    %p138 = scmp.le.s32.totalorder 1, %s10
    %p139 = scmp.lt.s32.totalorder %s10, 3
    %p140 = pnand %p138, %p139
    %p141 = pneg %p140
    // Predicated region
    $region9: #{scalable_vit_forward.23} parent=5 // pred_check
      _
    $region10: #{scalable_vit_forward.23} parent=5 // pred_check_branch
      %143 = sbr.rel (%p140) target = $region12
    $region11: #{scalable_vit_forward.23} parent=5 // pred_region
      %s144 = ssub.s32 %s10, 1
      // Predicated region
      $region13: #{scalable_vit_forward.23} parent=11 // pred_check
        %p145 = pneg %p83
      $region14: #{scalable_vit_forward.23} parent=11 // pred_check_branch
        %147 = sbr.rel (%p145) target = $region16
      $region15: #{scalable_vit_forward.23} parent=11 // pred_region
        _
      $region16: #{scalable_vit_forward.23} parent=11 // pred_fallthru
        _
      // Predicated region
      $region17: #{scalable_vit_forward.23} parent=11 // pred_check
        %p148 = pneg %p104
      $region18: #{scalable_vit_forward.23} parent=11 // pred_check_branch
        %150 = sbr.rel (%p148) target = $region20
      $region19: #{scalable_vit_forward.23} parent=11 // pred_region
        _
      $region20: #{scalable_vit_forward.23} parent=11 // pred_fallthru
        _
    $region12: #{scalable_vit_forward.23} parent=5 // pred_fallthru
      _
    %p151 = scmp.lt.s32.totalorder %s10, 2
    // Predicated region
    $region21: #{scalable_vit_forward.23} parent=5 // pred_check
      %p152 = pneg %p151
    $region22: #{scalable_vit_forward.23} parent=5 // pred_check_branch
      %154 = sbr.rel (%p152) target = $region24
    $region23: #{scalable_vit_forward.23} parent=5 // pred_region
      // Predicated region
      $region25: #{scalable_vit_forward.23} parent=23 // pred_check
        %p155 = pneg %p30
      $region26: #{scalable_vit_forward.23} parent=23 // pred_check_branch
        %157 = sbr.rel (%p155) target = $region28
      $region27: #{scalable_vit_forward.23} parent=23 // pred_region
        %p158 = scmp.lt.s32.totalorder %s10, 1
        %s159 = scalar_select %p158, %s10, 1
        %s160 = smul.addr %s159, 6
        %s161 = smul.addr %s160, 4
        %s162 = scalar_lea.vmem %s0, %s161
      $region28: #{scalable_vit_forward.23} parent=23 // pred_fallthru
        _
      // Predicated region
      $region29: #{scalable_vit_forward.23} parent=23 // pred_check
        %p163 = pneg %p56
      $region30: #{scalable_vit_forward.23} parent=23 // pred_check_branch
        %165 = sbr.rel (%p163) target = $region32
      $region31: #{scalable_vit_forward.23} parent=23 // pred_region
        %p166 = scmp.lt.s32.totalorder %s10, 1
        %s167 = scalar_select %p166, %s10, 1
        %s168 = smul.addr %s167, 4
        %s169 = smul.addr %s168, 2
        %s170 = scalar_lea.vmem %s1, %s169
      $region32: #{scalable_vit_forward.23} parent=23 // pred_fallthru
        _
    $region24: #{scalable_vit_forward.23} parent=5 // pred_fallthru
      _
    %p171 = scmp.le.s32.totalorder 1, %s10
    %p172 = scmp.lt.s32.totalorder %s10, 3
    %p173 = pnand %p171, %p172
    %p174 = pneg %p173
    // Predicated region
    $region33: #{scalable_vit_forward.23} parent=5 // pred_check
      _
    $region34: #{scalable_vit_forward.23} parent=5 // pred_check_branch
      %176 = sbr.rel (%p173) target = $region36
    $region35: #{scalable_vit_forward.23} parent=5 // pred_region
      %s177 = ssub.s32 %s10, 1
      %p178 = scmp.lt.s32.totalorder %s15, 1
      %s179 = scalar_select %p178, %s15, 1
      %s180 = smul.addr %s179, 6
      %s181 = smul.addr %s180, 4
      %s182 = scalar_lea.vmem %s0, %s181
      %p183 = pneg %p36
      %p184 = pneg %p33
      %p185 = scmp.lt.s32.totalorder %s15, 1
      %s186 = scalar_select %p185, %s15, 1
      %s187 = smul.addr %s186, 4
      %s188 = smul.addr %s187, 2
      %s189 = scalar_lea.vmem %s1, %s188
      %p190 = pneg %p62
      %p191 = pneg %p59
      %p192 = pneg %p83
      %p193 = pneg %p80
      %p194 = pneg %p104
      %p195 = pneg %p101
      %p196 = pneg %p130
      %p197 = pneg %p127
      %p198 = scmp.lt.s32.totalorder %s15, 1
      %s199 = scalar_select %p198, %s15, 1
      %s200 = smul.addr %s199, 4
      %s201 = smul.addr %s200, 2
      %s202 = scalar_lea.vmem %s4, %s201
      %p203 = scmp.lt.s32.totalorder %s15, 1
      %s204 = scalar_select %p203, %s15, 1
      %s205 = smul.addr %s204, 6
      %s206 = smul.addr %s205, 4
      %s207 = scalar_lea.vmem %s0, %s206
      %p208 = scmp.lt.s32.totalorder %s15, 1
      %s209 = scalar_select %p208, %s15, 1
      %s210 = smul.addr %s209, 4
      %s211 = smul.addr %s210, 2
      %s212 = scalar_lea.vmem %s1, %s211
      %p213 = scmp.lt.s32.totalorder %s15, 1
      %s214 = scalar_select %p213, %s15, 1
      %s215 = smul.addr %s214, 4
      %s216 = smul.addr %s215, 2
      %s217 = scalar_lea.vmem %s4, %s216
      %v218 = vld [vmem:[%s212] sm:$0x3]
      %v219 = vld [vmem:[%s212 + $0x2] sm:$0x3]
      %v220 = vld [vmem:[%s212 + $0x4] sm:$0x3]
      %v221 = vld [vmem:[%s212 + $0x6] sm:$0x3]
      %v222 = vunpack.c.l.bf16 %v218
      %v223 = vunpack.c.l.bf16 %v219
      %v224 = vunpack.c.l.bf16 %v220
      %v225 = vunpack.c.l.bf16 %v221
      %v226 = vld [vmem:[%s3] sm:$0x1]
      %v228 = vlaneseq
      %v229 = vshrl.u32 %v228, 7
      %v230 = vsub.s32 0, %v229
      %v231 = vrot.slane %v226, %v230
      %v233 = vadd.f32 %v222, %v231
      %v234 = vadd.f32 %v223, %v231
      %v235 = vadd.f32 %v224, %v231
      %v236 = vadd.f32 %v225, %v231
      %v237 = vld [vmem:[%s207] sm:$0x3]
      %v238 = vld [vmem:[%s207 + $0x4] sm:$0x3]
      %v239 = vld [vmem:[%s207 + $0x8] sm:$0x3]
      %v240 = vld [vmem:[%s207 + $0xc] sm:$0x3]
      %v241 = vunpack.c.l.bf16 %v237
      %v242 = vunpack.c.l.bf16 %v238
      %v243 = vunpack.c.l.bf16 %v239
      %v244 = vunpack.c.l.bf16 %v240
      %v245 = vld [vmem:[%s2] sm:$0x1]
      %v246 = vlaneseq
      %v247 = vshrl.u32 %v246, 7
      %v248 = vsub.s32 0, %v247
      %v249 = vrot.slane %v245, %v248
      %v250 = vmul.f32 %v241, %v249
      %v251 = vmul.f32 %v242, %v249
      %v252 = vmul.f32 %v243, %v249
      %v253 = vmul.f32 %v244, %v249
      %v254 = vadd.f32 %v233, %v250
      %v255 = vadd.f32 %v234, %v251
      %v256 = vadd.f32 %v235, %v252
      %v257 = vadd.f32 %v236, %v253
      %v258 = vld [vmem:[%s207] sm:$0x7]
      %v259 = vld [vmem:[%s207 + $0x4] sm:$0x7]
      %v260 = vld [vmem:[%s207 + $0x8] sm:$0x7]
      %v261 = vld [vmem:[%s207 + $0xc] sm:$0x7]
      %v262 = vunpack.c.l.bf16 %v258
      %v263 = vunpack.c.l.bf16 %v259
      %v264 = vunpack.c.l.bf16 %v260
      %v265 = vunpack.c.l.bf16 %v261
      %v266 = vld [vmem:[%s2 + $0x1] sm:$0x1]
      %v267 = vlaneseq
      %v268 = vshrl.u32 %v267, 7
      %v269 = vsub.s32 0, %v268
      %v270 = vrot.slane %v266, %v269
      %v271 = vmul.f32 %v262, %v270
      %v272 = vmul.f32 %v263, %v270
      %v273 = vmul.f32 %v264, %v270
      %v274 = vmul.f32 %v265, %v270
      %v279 = vcombine.high %v271, %v271
      %v280 = vcombine.high %v272, %v272
      %v281 = vcombine.high %v273, %v273
      %v282 = vcombine.high %v274, %v274
      %vm283 = vcmask 1042432
      %vm284 = vcmask 1046532
      %vm285 = vmor %vm283, %vm284
      %v286 = vrot.slane %v271, 5
      %v287 = vrot.slane %v286, 4
      %v288 = vrot.slane %v279, 5
      %v289 = vsel %vm285, %v287, %v288
      %v290 = vrot.slane %v272, 5
      %v291 = vrot.slane %v290, 4
      %v292 = vrot.slane %v280, 5
      %v293 = vsel %vm285, %v291, %v292
      %v294 = vrot.slane %v273, 5
      %v295 = vrot.slane %v294, 4
      %v296 = vrot.slane %v281, 5
      %v297 = vsel %vm285, %v295, %v296
      %v298 = vrot.slane %v274, 5
      %v299 = vrot.slane %v298, 4
      %v300 = vrot.slane %v282, 5
      %v301 = vsel %vm285, %v299, %v300
      %v306 = vadd.f32 %v254, %v289
      %v307 = vadd.f32 %v255, %v293
      %v308 = vadd.f32 %v256, %v297
      %v309 = vadd.f32 %v257, %v301
      %v310 = vld [vmem:[%s207] sm:$0x6]
      %v311 = vld [vmem:[%s207 + $0x4] sm:$0x6]
      %v312 = vld [vmem:[%s207 + $0x8] sm:$0x6]
      %v313 = vld [vmem:[%s207 + $0xc] sm:$0x6]
      %v314 = vunpack.c.l.bf16 %v310
      %v315 = vunpack.c.l.bf16 %v311
      %v316 = vunpack.c.l.bf16 %v312
      %v317 = vunpack.c.l.bf16 %v313
      %v318 = vld [vmem:[%s2 + $0x2] sm:$0x1]
      %v319 = vlaneseq
      %v320 = vshrl.u32 %v319, 7
      %v321 = vsub.s32 0, %v320
      %v322 = vrot.slane %v318, %v321
      %v323 = vmul.f32 %v314, %v322
      %v324 = vmul.f32 %v315, %v322
      %v325 = vmul.f32 %v316, %v322
      %v326 = vmul.f32 %v317, %v322
      %v331 = vcombine.high %v323, %v323
      %v332 = vcombine.high %v324, %v324
      %v333 = vcombine.high %v325, %v325
      %v334 = vcombine.high %v326, %v326
      %vm335 = vcmask 1041408
      %vm336 = vcmask 1045508
      %vm337 = vmor %vm335, %vm336
      %v338 = vrot.slane %v323, 6
      %v339 = vrot.slane %v338, 4
      %v340 = vrot.slane %v331, 6
      %v341 = vsel %vm337, %v339, %v340
      %v342 = vrot.slane %v324, 6
      %v343 = vrot.slane %v342, 4
      %v344 = vrot.slane %v332, 6
      %v345 = vsel %vm337, %v343, %v344
      %v346 = vrot.slane %v325, 6
      %v347 = vrot.slane %v346, 4
      %v348 = vrot.slane %v333, 6
      %v349 = vsel %vm337, %v347, %v348
      %v350 = vrot.slane %v326, 6
      %v351 = vrot.slane %v350, 4
      %v352 = vrot.slane %v334, 6
      %v353 = vsel %vm337, %v351, %v352
      %v358 = vadd.f32 %v306, %v341
      %v359 = vadd.f32 %v307, %v345
      %v360 = vadd.f32 %v308, %v349
      %v361 = vadd.f32 %v309, %v353
      %s362 = scalar_lea.vmem %s207, 4
      %v363 = vld [vmem:[%s362] sm:$0x3]
      %v364 = vld [vmem:[%s362 + $0x4] sm:$0x3]
      %v365 = vld [vmem:[%s362 + $0x8] sm:$0x3]
      %v366 = vld [vmem:[%s362 + $0xc] sm:$0x3]
      %v367 = vunpack.c.l.bf16 %v363
      %v368 = vunpack.c.l.bf16 %v364
      %v369 = vunpack.c.l.bf16 %v365
      %v370 = vunpack.c.l.bf16 %v366
      %v371 = vld [vmem:[%s2 + $0x3] sm:$0x1]
      %v372 = vlaneseq
      %v373 = vshrl.u32 %v372, 7
      %v374 = vsub.s32 0, %v373
      %v375 = vrot.slane %v371, %v374
      %v376 = vmul.f32 %v367, %v375
      %v377 = vmul.f32 %v368, %v375
      %v378 = vmul.f32 %v369, %v375
      %v379 = vmul.f32 %v370, %v375
      %v380 = vadd.f32 %v358, %v376
      %v381 = vadd.f32 %v359, %v377
      %v382 = vadd.f32 %v360, %v378
      %v383 = vadd.f32 %v361, %v379
      %v384 = vld [vmem:[%s362] sm:$0x7]
      %v385 = vld [vmem:[%s362 + $0x4] sm:$0x7]
      %v386 = vld [vmem:[%s362 + $0x8] sm:$0x7]
      %v387 = vld [vmem:[%s362 + $0xc] sm:$0x7]
      %v388 = vunpack.c.l.bf16 %v384
      %v389 = vunpack.c.l.bf16 %v385
      %v390 = vunpack.c.l.bf16 %v386
      %v391 = vunpack.c.l.bf16 %v387
      %v392 = vld [vmem:[%s2 + $0x4] sm:$0x1]
      %v393 = vlaneseq
      %v394 = vshrl.u32 %v393, 7
      %v395 = vsub.s32 0, %v394
      %v396 = vrot.slane %v392, %v395
      %v397 = vmul.f32 %v388, %v396
      %v398 = vmul.f32 %v389, %v396
      %v399 = vmul.f32 %v390, %v396
      %v400 = vmul.f32 %v391, %v396
      %v405 = vcombine.high %v397, %v397
      %v406 = vcombine.high %v398, %v398
      %v407 = vcombine.high %v399, %v399
      %v408 = vcombine.high %v400, %v400
      %v409 = vrot.slane %v397, 5
      %v410 = vrot.slane %v409, 4
      %v411 = vrot.slane %v405, 5
      %v412 = vsel %vm285, %v410, %v411
      %v413 = vrot.slane %v398, 5
      %v414 = vrot.slane %v413, 4
      %v415 = vrot.slane %v406, 5
      %v416 = vsel %vm285, %v414, %v415
      %v417 = vrot.slane %v399, 5
      %v418 = vrot.slane %v417, 4
      %v419 = vrot.slane %v407, 5
      %v420 = vsel %vm285, %v418, %v419
      %v421 = vrot.slane %v400, 5
      %v422 = vrot.slane %v421, 4
      %v423 = vrot.slane %v408, 5
      %v424 = vsel %vm285, %v422, %v423
      %v429 = vadd.f32 %v380, %v412
      %v430 = vadd.f32 %v381, %v416
      %v431 = vadd.f32 %v382, %v420
      %v432 = vadd.f32 %v383, %v424
      %v433 = vld [vmem:[%s362] sm:$0x6]
      %v434 = vld [vmem:[%s362 + $0x4] sm:$0x6]
      %v435 = vld [vmem:[%s362 + $0x8] sm:$0x6]
      %v436 = vld [vmem:[%s362 + $0xc] sm:$0x6]
      %v437 = vunpack.c.l.bf16 %v433
      %v438 = vunpack.c.l.bf16 %v434
      %v439 = vunpack.c.l.bf16 %v435
      %v440 = vunpack.c.l.bf16 %v436
      %v441 = vld [vmem:[%s2 + $0x5] sm:$0x1]
      %v442 = vlaneseq
      %v443 = vshrl.u32 %v442, 7
      %v444 = vsub.s32 0, %v443
      %v445 = vrot.slane %v441, %v444
      %v446 = vmul.f32 %v437, %v445
      %v447 = vmul.f32 %v438, %v445
      %v448 = vmul.f32 %v439, %v445
      %v449 = vmul.f32 %v440, %v445
      %v454 = vcombine.high %v446, %v446
      %v455 = vcombine.high %v447, %v447
      %v456 = vcombine.high %v448, %v448
      %v457 = vcombine.high %v449, %v449
      %v458 = vrot.slane %v446, 6
      %v459 = vrot.slane %v458, 4
      %v460 = vrot.slane %v454, 6
      %v461 = vsel %vm337, %v459, %v460
      %v462 = vrot.slane %v447, 6
      %v463 = vrot.slane %v462, 4
      %v464 = vrot.slane %v455, 6
      %v465 = vsel %vm337, %v463, %v464
      %v466 = vrot.slane %v448, 6
      %v467 = vrot.slane %v466, 4
      %v468 = vrot.slane %v456, 6
      %v469 = vsel %vm337, %v467, %v468
      %v470 = vrot.slane %v449, 6
      %v471 = vrot.slane %v470, 4
      %v472 = vrot.slane %v457, 6
      %v473 = vsel %vm337, %v471, %v472
      %v478 = vadd.f32 %v429, %v461
      %v479 = vadd.f32 %v430, %v465
      %v480 = vadd.f32 %v431, %v469
      %v481 = vadd.f32 %v432, %v473
      %s482 = scalar_lea.vmem %s207, 8
      %v483 = vld [vmem:[%s482] sm:$0x3]
      %v484 = vld [vmem:[%s482 + $0x4] sm:$0x3]
      %v485 = vld [vmem:[%s482 + $0x8] sm:$0x3]
      %v486 = vld [vmem:[%s482 + $0xc] sm:$0x3]
      %v487 = vunpack.c.l.bf16 %v483
      %v488 = vunpack.c.l.bf16 %v484
      %v489 = vunpack.c.l.bf16 %v485
      %v490 = vunpack.c.l.bf16 %v486
      %v491 = vld [vmem:[%s2 + $0x6] sm:$0x1]
      %v492 = vlaneseq
      %v493 = vshrl.u32 %v492, 7
      %v494 = vsub.s32 0, %v493
      %v495 = vrot.slane %v491, %v494
      %v496 = vmul.f32 %v487, %v495
      %v497 = vmul.f32 %v488, %v495
      %v498 = vmul.f32 %v489, %v495
      %v499 = vmul.f32 %v490, %v495
      %v500 = vadd.f32 %v478, %v496
      %v501 = vadd.f32 %v479, %v497
      %v502 = vadd.f32 %v480, %v498
      %v503 = vadd.f32 %v481, %v499
      %v504 = vld [vmem:[%s482] sm:$0x7]
      %v505 = vld [vmem:[%s482 + $0x4] sm:$0x7]
      %v506 = vld [vmem:[%s482 + $0x8] sm:$0x7]
      %v507 = vld [vmem:[%s482 + $0xc] sm:$0x7]
      %v508 = vunpack.c.l.bf16 %v504
      %v509 = vunpack.c.l.bf16 %v505
      %v510 = vunpack.c.l.bf16 %v506
      %v511 = vunpack.c.l.bf16 %v507
      %v512 = vld [vmem:[%s2 + $0x7] sm:$0x1]
      %v513 = vlaneseq
      %v514 = vshrl.u32 %v513, 7
      %v515 = vsub.s32 0, %v514
      %v516 = vrot.slane %v512, %v515
      %v517 = vmul.f32 %v508, %v516
      %v518 = vmul.f32 %v509, %v516
      %v519 = vmul.f32 %v510, %v516
      %v520 = vmul.f32 %v511, %v516
      %v525 = vcombine.high %v517, %v517
      %v526 = vcombine.high %v518, %v518
      %v527 = vcombine.high %v519, %v519
      %v528 = vcombine.high %v520, %v520
      %v529 = vrot.slane %v517, 5
      %v530 = vrot.slane %v529, 4
      %v531 = vrot.slane %v525, 5
      %v532 = vsel %vm285, %v530, %v531
      %v533 = vrot.slane %v518, 5
      %v534 = vrot.slane %v533, 4
      %v535 = vrot.slane %v526, 5
      %v536 = vsel %vm285, %v534, %v535
      %v537 = vrot.slane %v519, 5
      %v538 = vrot.slane %v537, 4
      %v539 = vrot.slane %v527, 5
      %v540 = vsel %vm285, %v538, %v539
      %v541 = vrot.slane %v520, 5
      %v542 = vrot.slane %v541, 4
      %v543 = vrot.slane %v528, 5
      %v544 = vsel %vm285, %v542, %v543
      %v549 = vadd.f32 %v500, %v532
      %v550 = vadd.f32 %v501, %v536
      %v551 = vadd.f32 %v502, %v540
      %v552 = vadd.f32 %v503, %v544
      %v553 = vld [vmem:[%s482] sm:$0x6]
      %v554 = vld [vmem:[%s482 + $0x4] sm:$0x6]
      %v555 = vld [vmem:[%s482 + $0x8] sm:$0x6]
      %v556 = vld [vmem:[%s482 + $0xc] sm:$0x6]
      %v557 = vunpack.c.l.bf16 %v553
      %v558 = vunpack.c.l.bf16 %v554
      %v559 = vunpack.c.l.bf16 %v555
      %v560 = vunpack.c.l.bf16 %v556
      %v561 = vld [vmem:[%s2 + $0x8] sm:$0x1]
      %v562 = vlaneseq
      %v563 = vshrl.u32 %v562, 7
      %v564 = vsub.s32 0, %v563
      %v565 = vrot.slane %v561, %v564
      %v566 = vmul.f32 %v557, %v565
      %v567 = vmul.f32 %v558, %v565
      %v568 = vmul.f32 %v559, %v565
      %v569 = vmul.f32 %v560, %v565
      %v574 = vcombine.high %v566, %v566
      %v575 = vcombine.high %v567, %v567
      %v576 = vcombine.high %v568, %v568
      %v577 = vcombine.high %v569, %v569
      %v578 = vrot.slane %v566, 6
      %v579 = vrot.slane %v578, 4
      %v580 = vrot.slane %v574, 6
      %v581 = vsel %vm337, %v579, %v580
      %v582 = vrot.slane %v567, 6
      %v583 = vrot.slane %v582, 4
      %v584 = vrot.slane %v575, 6
      %v585 = vsel %vm337, %v583, %v584
      %v586 = vrot.slane %v568, 6
      %v587 = vrot.slane %v586, 4
      %v588 = vrot.slane %v576, 6
      %v589 = vsel %vm337, %v587, %v588
      %v590 = vrot.slane %v569, 6
      %v591 = vrot.slane %v590, 4
      %v592 = vrot.slane %v577, 6
      %v593 = vsel %vm337, %v591, %v592
      %v598 = vadd.f32 %v549, %v581
      %v599 = vadd.f32 %v550, %v585
      %v600 = vadd.f32 %v551, %v589
      %v601 = vadd.f32 %v552, %v593
      %v602 = vpack.c.bf16 %v598, %v598
      %v603 = vpack.c.bf16 %v599, %v599
      %v604 = vpack.c.bf16 %v600, %v600
      %v605 = vpack.c.bf16 %v601, %v601
      %vm606 = vcmask 123904
      %607 = vst.msk [vmem:[%s217] sm:$0x3] %vm606, %v602
      %608 = vst.msk [vmem:[%s217 + $0x2] sm:$0x3] %vm606, %v603
      %609 = vst.msk [vmem:[%s217 + $0x4] sm:$0x3] %vm606, %v604
      %610 = vst.msk [vmem:[%s217 + $0x6] sm:$0x3] %vm606, %v605
      %p611 = scmp.lt.s32.totalorder %s15, 1
      %s612 = scalar_select %p611, %s15, 1
      %s613 = smul.addr %s612, 4
      %s614 = smul.addr %s613, 2
      %s615 = scalar_lea.vmem %s4, %s614
      // Predicated region
      $region37: #{scalable_vit_forward.23} parent=35 // pred_check
        %p616 = pneg %p127
      $region38: #{scalable_vit_forward.23} parent=35 // pred_check_branch
        %618 = sbr.rel (%p616) target = $region40
      $region39: #{scalable_vit_forward.23} parent=35 // pred_region
        _
      $region40: #{scalable_vit_forward.23} parent=35 // pred_fallthru
        _
    $region36: #{scalable_vit_forward.23} parent=5 // pred_fallthru
      _
    %p619 = scmp.le.s32.totalorder 2, %s10
    // Predicated region
    $region41: #{scalable_vit_forward.23} parent=5 // pred_check
      %p620 = pneg %p619
    $region42: #{scalable_vit_forward.23} parent=5 // pred_check_branch
      %622 = sbr.rel (%p620) target = $region44
    $region43: #{scalable_vit_forward.23} parent=5 // pred_region
      %s623 = ssub.s32 %s10, 2
      // Predicated region
      $region45: #{scalable_vit_forward.23} parent=43 // pred_check
        %p624 = pneg %p133
      $region46: #{scalable_vit_forward.23} parent=43 // pred_check_branch
        %626 = sbr.rel (%p624) target = $region48
      $region47: #{scalable_vit_forward.23} parent=43 // pred_region
        %p627 = scmp.lt.s32.totalorder %s16, 1
        %s628 = scalar_select %p627, %s16, 1
        %s629 = smul.addr %s628, 4
        %s630 = smul.addr %s629, 2
        %s631 = scalar_lea.vmem %s4, %s630
      $region48: #{scalable_vit_forward.23} parent=43 // pred_fallthru
        _
    $region44: #{scalable_vit_forward.23} parent=5 // pred_fallthru
      _
  $region6: #{scalable_vit_forward.23} parent=0 // loop_footer
    %s14 = sadd.s32 1, %s10
  $region7: #{scalable_vit_forward.23} parent=0 // loop_footer_branch
    %9 = sbr.rel target = $region3
  $region8: #{scalable_vit_forward.23} parent=0 // loop_exit
    _

// kernel: scalable_vit_forward.25
$region0: #{scalable_vit_forward.25}
  #allocation0 [shape = 'u32[]', space=smem, size = 0x4, offset = 0x4, fixed_abs, tag = 'smem constant byte address 0x4 - core index']
  #allocation1 [shape = 'u32[144,128]{1,0:T(1,128)}', space=vmem, size = 0x12000, scoped, tag = 'internal scratch']
  #allocation2 [shape = 'f32[8,128]{1,0:T(8,128)}', space=vmem, size = 0x1000, scoped, tag = 'scratch operand']
  %s0 = inlined_call_operand.vmem [shape: bf16[8,128], index: 0, kind: input, shape index: {}]
  %s1 = inlined_call_operand.vmem [shape: bf16[128,128], index: 1, kind: input, shape index: {}]
  %s2 = inlined_call_operand.vmem [shape: f32[1,128], index: 2, kind: input, shape index: {}]
  %s3 = inlined_call_operand.vmem [shape: f32[8,128], index: 3, kind: output, shape index: {}]
  %s4 = sld [smem:[#allocation0]]
  $region30: #{scalable_vit_forward.25} parent=0
    _
  %s6 = ssub.s32 1, %s4
  %s7 = scalar_select 0, %s6, %s4
  // Predicated region
  $region2: #{scalable_vit_forward.25} parent=0 // pred_check
    _
  $region3: #{scalable_vit_forward.25} parent=0 // pred_check_branch
    %9 = sbr.rel (0) target = $region5
  $region4: #{scalable_vit_forward.25} parent=0 // pred_region
    _
  $region5: #{scalable_vit_forward.25} parent=0 // pred_fallthru
    _
  // Predicated region
  $region6: #{scalable_vit_forward.25} parent=0 // pred_check
    _
  $region7: #{scalable_vit_forward.25} parent=0 // pred_check_branch
    %11 = sbr.rel (0) target = $region9
  $region8: #{scalable_vit_forward.25} parent=0 // pred_region
    _
  $region9: #{scalable_vit_forward.25} parent=0 // pred_fallthru
    _
  // Predicated region
  $region10: #{scalable_vit_forward.25} parent=0 // pred_check
    _
  $region11: #{scalable_vit_forward.25} parent=0 // pred_check_branch
    %13 = sbr.rel (0) target = $region13
  $region12: #{scalable_vit_forward.25} parent=0 // pred_region
    _
  $region13: #{scalable_vit_forward.25} parent=0 // pred_fallthru
    _
  %p15 = scmp.eq.s32.totalorder 0, 0
  // Predicated region
  $region14: #{scalable_vit_forward.25} parent=0 // pred_check
    %p16 = pneg %p15
  $region15: #{scalable_vit_forward.25} parent=0 // pred_check_branch
    %18 = sbr.rel (%p16) target = $region17
  $region16: #{scalable_vit_forward.25} parent=0 // pred_region
    %19 = vst [vmem:[#allocation2] sm:$0xff] 0.0
  $region17: #{scalable_vit_forward.25} parent=0 // pred_fallthru
    _
  %v20 = vld [vmem:[#allocation2] sm:$0xff]
  %v21 = vld [vmem:[%s0] sm:$0xf]
  %v22 = vld [vmem:[%s1] sm:$0xf]
  %v23 = vld [vmem:[%s1 + $0x4] sm:$0xf]
  %v24 = vld [vmem:[%s1 + $0x8] sm:$0xf]
  %v25 = vld [vmem:[%s1 + $0xc] sm:$0xf]
  %v26 = vld [vmem:[%s1 + $0x10] sm:$0xf]
  %v27 = vld [vmem:[%s1 + $0x14] sm:$0xf]
  %v28 = vld [vmem:[%s1 + $0x18] sm:$0xf]
  %v29 = vld [vmem:[%s1 + $0x1c] sm:$0xf]
  %v30 = vld [vmem:[%s1 + $0x20] sm:$0xf]
  %v31 = vld [vmem:[%s1 + $0x24] sm:$0xf]
  %v32 = vld [vmem:[%s1 + $0x28] sm:$0xf]
  %v33 = vld [vmem:[%s1 + $0x2c] sm:$0xf]
  %v34 = vld [vmem:[%s1 + $0x30] sm:$0xf]
  %v35 = vld [vmem:[%s1 + $0x34] sm:$0xf]
  %v36 = vld [vmem:[%s1 + $0x38] sm:$0xf]
  %v37 = vld [vmem:[%s1 + $0x3c] sm:$0xf]
  %v54 = vunpack.c.l.b16 %v22
  %v55 = vunpack.c.l.b16 %v23
  %v56 = vunpack.c.l.b16 %v24
  %v57 = vunpack.c.l.b16 %v25
  %v58 = vunpack.c.l.b16 %v26
  %v59 = vunpack.c.l.b16 %v27
  %v60 = vunpack.c.l.b16 %v28
  %v61 = vunpack.c.l.b16 %v29
  %v62 = vunpack.c.l.b16 %v30
  %v63 = vunpack.c.l.b16 %v31
  %v64 = vunpack.c.l.b16 %v32
  %v65 = vunpack.c.l.b16 %v33
  %v66 = vunpack.c.l.b16 %v34
  %v67 = vunpack.c.l.b16 %v35
  %v68 = vunpack.c.l.b16 %v36
  %v69 = vunpack.c.l.b16 %v37
  %v70 = vpack.c.b16 %v55, %v54
  %v71 = vpack.c.b16 %v57, %v56
  %v72 = vpack.c.b16 %v59, %v58
  %v73 = vpack.c.b16 %v61, %v60
  %v74 = vpack.c.b16 %v63, %v62
  %v75 = vpack.c.b16 %v65, %v64
  %v76 = vpack.c.b16 %v67, %v66
  %v77 = vpack.c.b16 %v69, %v68
  %86 = vmatprep.subr.bf16.mxu0 0
  %87 = vmatpush1.bf16.msra.mxu0 %v77
  %88 = vmatprep.subr.bf16.mxu0 0
  %89 = vmatpush1.bf16.msra.mxu0 %v76
  %90 = vmatprep.subr.bf16.mxu0 0
  %91 = vmatpush1.bf16.msra.mxu0 %v75
  %92 = vmatprep.subr.bf16.mxu0 0
  %93 = vmatpush1.bf16.msra.mxu0 %v74
  %94 = vmatprep.subr.bf16.mxu0 0
  %95 = vmatpush1.bf16.msra.mxu0 %v73
  %96 = vmatprep.subr.bf16.mxu0 0
  %97 = vmatpush1.bf16.msra.mxu0 %v72
  %98 = vmatprep.subr.bf16.mxu0 0
  %99 = vmatpush1.bf16.msra.mxu0 %v71
  %100 = vmatprep.subr.bf16.mxu0 0
  %101 = vmatpush1.bf16.msra.mxu0 %v70
  %102 = vmatprep.subr.bf16.mxu0 0
  %103 = vmatpush2.bf16.msra.mxu0 0
  %104 = vmatprep.subr.bf16.mxu0 0
  %105 = vmatpush2.bf16.msra.mxu0 0
  %106 = vmatprep.subr.bf16.mxu0 0
  %107 = vmatpush2.bf16.msra.mxu0 0
  %108 = vmatprep.subr.bf16.mxu0 0
  %109 = vmatpush2.bf16.msra.mxu0 0
  %110 = vmatprep.subr.bf16.mxu0 0
  %111 = vmatpush2.bf16.msra.mxu0 0
  %112 = vmatprep.subr.bf16.mxu0 0
  %113 = vmatpush2.bf16.msra.mxu0 0
  %114 = vmatprep.subr.bf16.mxu0 0
  %115 = vmatpush2.bf16.msra.mxu0 0
  %116 = vmatprep.subr.bf16.mxu0 0
  %117 = vmatpush2.bf16.msra.mxu0 0
  %118 = vmatprep.mubr.bf16.mxu0 0
  %119 = vmatmul.mubr.bf16.gmra.mxu0 %v21
  %v120 = vpop.f32.mrf.mxu0
  %v121 = vadd.f32 0.0, %v120
  %v122 = vpop.f32.mrf.mxu0
  %v123 = vpop.f32.mrf.mxu0
  %v124 = vpop.f32.mrf.mxu0
  %125 = vdwg.mxu0
  %v126 = vadd.f32 %v20, %v121
  %127 = vst [vmem:[#allocation2] sm:$0xff] %v126
  // Predicated region
  $region18: #{scalable_vit_forward.25} parent=0 // pred_check
    %p128 = pneg %p15
  $region19: #{scalable_vit_forward.25} parent=0 // pred_check_branch
    %130 = sbr.rel (%p128) target = $region21
  $region20: #{scalable_vit_forward.25} parent=0 // pred_region
    %v131 = vld [vmem:[#allocation2] sm:$0xff]
    %v132 = vld [vmem:[%s2] sm:$0x1]
    %v134 = vlaneseq
    %v135 = vshrl.u32 %v134, 7
    %v136 = vsub.s32 0, %v135
    %v137 = vrot.slane %v132, %v136
    %v139 = vadd.f32 %v131, %v137
    %140 = vst [vmem:[%s3] sm:$0xff] %v139
  $region21: #{scalable_vit_forward.25} parent=0 // pred_fallthru
    _
  // Predicated region
  $region22: #{scalable_vit_forward.25} parent=0 // pred_check
    _
  $region23: #{scalable_vit_forward.25} parent=0 // pred_check_branch
    %142 = sbr.rel (0) target = $region25
  $region24: #{scalable_vit_forward.25} parent=0 // pred_region
    _
  $region25: #{scalable_vit_forward.25} parent=0 // pred_fallthru
    _
  // Predicated region
  $region26: #{scalable_vit_forward.25} parent=0 // pred_check
    _
  $region27: #{scalable_vit_forward.25} parent=0 // pred_check_branch
    %144 = sbr.rel (0) target = $region29
  $region28: #{scalable_vit_forward.25} parent=0 // pred_region
    _
  $region29: #{scalable_vit_forward.25} parent=0 // pred_fallthru
    _

// kernel: scalable_vit_forward.24
$region0: #{scalable_vit_forward.24}
  #allocation0 [shape = 'u32[]', space=smem, size = 0x4, offset = 0x4, fixed_abs, tag = 'smem constant byte address 0x4 - core index']
  #allocation1 [shape = 'u32[144,128]{1,0:T(1,128)}', space=vmem, size = 0x12000, scoped, tag = 'internal scratch']
  %s0 = inlined_call_operand.vmem [shape: f32[8,16], index: 0, kind: input, shape index: {}]
  %s1 = inlined_call_operand.vmem [shape: f32[1,16], index: 1, kind: input, shape index: {}]
  %s2 = inlined_call_operand.vmem [shape: f32[1,16], index: 2, kind: input, shape index: {}]
  %s3 = inlined_call_operand.vmem [shape: f32[8,16], index: 3, kind: output, shape index: {}]
  %s4 = sld [smem:[#allocation0]]
  $region22: #{scalable_vit_forward.24} parent=0
    _
  %s6 = ssub.s32 1, %s4
  %s7 = scalar_select 0, %s6, %s4
  // Predicated region
  $region2: #{scalable_vit_forward.24} parent=0 // pred_check
    _
  $region3: #{scalable_vit_forward.24} parent=0 // pred_check_branch
    %9 = sbr.rel (0) target = $region5
  $region4: #{scalable_vit_forward.24} parent=0 // pred_region
    _
  $region5: #{scalable_vit_forward.24} parent=0 // pred_fallthru
    _
  // Predicated region
  $region6: #{scalable_vit_forward.24} parent=0 // pred_check
    _
  $region7: #{scalable_vit_forward.24} parent=0 // pred_check_branch
    %11 = sbr.rel (0) target = $region9
  $region8: #{scalable_vit_forward.24} parent=0 // pred_region
    _
  $region9: #{scalable_vit_forward.24} parent=0 // pred_fallthru
    _
  // Predicated region
  $region10: #{scalable_vit_forward.24} parent=0 // pred_check
    _
  $region11: #{scalable_vit_forward.24} parent=0 // pred_check_branch
    %13 = sbr.rel (0) target = $region13
  $region12: #{scalable_vit_forward.24} parent=0 // pred_region
    _
  $region13: #{scalable_vit_forward.24} parent=0 // pred_fallthru
    _
  %v14 = vld [vmem:[%s0] sm:$0xff]
  %vm15 = vcmask 130048
  %v16 = vsel %vm15, %v14, 0.0
  %17 = vadd.xlane.f32.xlu0 %v16
  %v18 = vpop.xlane.xlu0 %17
  %v19 = vrcp.pop 16.0
  %v20 = vmul.f32 %v18, %v19
  %v21 = vmul.f32 %v14, %v14
  %v22 = vsel %vm15, %v21, 0.0
  %23 = vadd.xlane.f32.xlu0 %v22
  %v24 = vpop.xlane.xlu0 %23
  %v25 = vmul.f32 %v24, %v19
  %v26 = vmul.f32 %v20, %v20
  %v27 = vsub.f32 %v25, %v26
  %v28 = vsub.f32 %v14, %v20
  %v29 = vadd.f32 %v27, 1e-05
  %v30 = vrsqrt.pop %v29
  %v31 = vmul.f32 %v28, %v30
  %v32 = vld [vmem:[%s1] sm:$0x1]
  %v34 = vlaneseq
  %v35 = vshrl.u32 %v34, 7
  %v36 = vsub.s32 0, %v35
  %v37 = vrot.slane %v32, %v36
  %v39 = vmul.f32 %v31, %v37
  %v40 = vld [vmem:[%s2] sm:$0x1]
  %v42 = vlaneseq
  %v43 = vshrl.u32 %v42, 7
  %v44 = vsub.s32 0, %v43
  %v45 = vrot.slane %v40, %v44
  %v47 = vadd.f32 %v39, %v45
  %48 = vst.msk [vmem:[%s3] sm:$0xff] %vm15, %v47
  // Predicated region
  $region14: #{scalable_vit_forward.24} parent=0 // pred_check
    _
  $region15: #{scalable_vit_forward.24} parent=0 // pred_check_branch
    %50 = sbr.rel (0) target = $region17
  $region16: #{scalable_vit_forward.24} parent=0 // pred_region
    _
  $region17: #{scalable_vit_forward.24} parent=0 // pred_fallthru
    _
  // Predicated region
  $region18: #{scalable_vit_forward.24} parent=0 // pred_check
    _
  $region19: #{scalable_vit_forward.24} parent=0 // pred_check_branch
    %52 = sbr.rel (0) target = $region21
  $region20: #{scalable_vit_forward.24} parent=0 // pred_region
    _
  $region21: #{scalable_vit_forward.24} parent=0 // pred_fallthru
    _

</llo_original>
